<compile_context>
chip_gen: v7x
topology: tpu7x:2x2x1
jax: 0.10.0
libtpu: 0.0.40
codegen_flags: <defaults>
</compile_context>

<pallas_src>
import functools

import jax
import jax.numpy as jnp
import numpy as np
from jax.experimental import pallas as pl
from jax.experimental.pallas import tpu as pltpu

NEG_SLOPE = 0.01  # torch.nn.LeakyReLU / F.leaky_relu default


def _lrelu(x):
    return jnp.where(x >= 0, x, NEG_SLOPE * x)


# ------------------------------ fused kernel -------------------------------- #

def _make_resblock_kernel(TH, W, C, Ch, fuse_gate):
    """Fused AttentionResBlock kernel (optionally + final attention gating)."""

    def kernel(*refs):
        if fuse_gate:
            (x_ref, xt_ref, xb_ref, trunk_ref, x0_ref,
             w1_ref, b1_ref, w3_ref, b3_ref, w2_ref, b2_ref,
             wa_ref, ba_ref, o_ref, h1p_ref) = refs
        else:
            (x_ref, xt_ref, xb_ref,
             w1_ref, b1_ref, w3_ref, b3_ref, w2_ref, b2_ref,
             o_ref, h1p_ref) = refs

        w1 = w1_ref[...]
        b1 = b1_ref[...]

        def conv1(x3d):  # (R, W, C) -> (R, W, Ch): 1x1 conv + LeakyReLU
            r = x3d.shape[0]
            h = jnp.dot(x3d.reshape(r * W, C), w1,
                        preferred_element_type=jnp.float32) + b1
            return _lrelu(h).reshape(r, W, Ch)

        xc = x_ref[0]  # (TH, W, C) rows owned by this tile

        # h1 = LeakyReLU(conv1x1(x)) for the tile rows plus one halo row above
        # and below, written straight into the replication-padded VMEM scratch.
        # (ReplicationPad2d(1) commutes with the pointwise 1x1 conv, so the
        # edge-clamped halo rows already implement the H-direction padding.)
        h1p_ref[1:TH + 1, 1:W + 1, :] = conv1(xc)
        h1p_ref[0:1, 1:W + 1, :] = conv1(xt_ref[0])
        h1p_ref[TH + 1:TH + 2, 1:W + 1, :] = conv1(xb_ref[0])
        # W-direction replication padding, done inside VMEM.
        h1p_ref[:, 0:1, :] = h1p_ref[:, 1:2, :]
        h1p_ref[:, W + 1:W + 2, :] = h1p_ref[:, W:W + 1, :]

        # 3x3 conv as 9 shifted views of the padded h1 scratch, accumulated in
        # f32.  The taps never touch HBM.
        acc = jnp.zeros((TH * W, Ch), jnp.float32)
        for k in range(9):
            ky, kx = divmod(k, 3)
            tap = h1p_ref[ky:ky + TH, kx:kx + W, :]            # (TH, W, Ch)
            acc = acc + jnp.dot(tap.reshape(TH * W, Ch), w3_ref[k],
                                preferred_element_type=jnp.float32)
        h2 = _lrelu(acc + b3_ref[...])                          # (TH*W, Ch)

        y = jnp.dot(h2, w2_ref[...],
                    preferred_element_type=jnp.float32) + b2_ref[...]
        out = _lrelu(xc.reshape(TH * W, C) + y)  # AttentionResBlock residual

        if fuse_gate:
            # Final attention stage fused in: trunk * sigmoid(conv1x1(a)) + x.
            logits = jnp.dot(out, wa_ref[...],
                             preferred_element_type=jnp.float32) + ba_ref[...]
            gate = jax.nn.sigmoid(logits)
            out = trunk_ref[0].reshape(TH * W, C) * gate \
                + x0_ref[0].reshape(TH * W, C)

        o_ref[0] = out.reshape(TH, W, C)

    return kernel


# ------------------------------ pallas wrapper ------------------------------- #

def _halo_rows(x_img, tile_h):
    """Edge-clamped row above / below every row-tile: two (N, T, W, C) arrays."""
    N, H, W, C = x_img.shape
    T = H // tile_h
    top_idx = np.maximum(np.arange(T) * tile_h - 1, 0)
    bot_idx = np.minimum((np.arange(T) + 1) * tile_h, H - 1)
    return x_img[:, top_idx], x_img[:, bot_idx]


def attention_res_block(x_img, p, tile_h, gate=None):
    """One AttentionResBlock as a single row-tiled, pipelined pallas_call.

    gate: optional dict(trunk=..., x0=..., wa=..., ba=...) -- fuses the final
    attention 1x1 conv + sigmoid + trunk*gate + x into this same call.
    """
    N, H, W, C = x_img.shape
    Ch = p["w1"].shape[1]
    TH = int(tile_h)
    assert H % TH == 0, "tile_h must divide H"
    T = H // TH

    xt, xb = _halo_rows(x_img, TH)
    w3f = p["w3"].reshape(9, Ch, Ch)

    tile_spec = pl.BlockSpec((1, TH, W, C), lambda n, j: (n, j, 0, 0))
    halo_spec = pl.BlockSpec((1, 1, W, C), lambda n, j: (n, j, 0, 0))

    def full_spec(arr):
        nd = arr.ndim
        return pl.BlockSpec(arr.shape, lambda n, j: (0,) * nd)

    b1 = p["b1"].reshape(1, Ch)
    b3 = p["b3"].reshape(1, Ch)
    b2 = p["b2"].reshape(1, C)

    args = [x_img, xt, xb]
    in_specs = [tile_spec, halo_spec, halo_spec]
    if gate is not None:
        args += [gate["trunk"], gate["x0"]]
        in_specs += [tile_spec, tile_spec]
    small = [p["w1"], b1, w3f, b3, p["w2"], b2]
    if gate is not None:
        small += [gate["wa"], gate["ba"].reshape(1, C)]
    args += small
    in_specs += [full_spec(a) for a in small]

    kernel = _make_resblock_kernel(TH, W, C, Ch, fuse_gate=gate is not None)
    return pl.pallas_call(
        kernel,
        out_shape=jax.ShapeDtypeStruct((N, H, W, C), jnp.float32),
        grid_spec=pltpu.PrefetchScalarGridSpec(
            num_scalar_prefetch=0,
            grid=(N, T),
            in_specs=in_specs,
            out_specs=tile_spec,
            scratch_shapes=[pltpu.VMEM((TH + 2, W + 2, Ch), jnp.float32)],
        ),
        compiler_params=pltpu.CompilerParams(
            dimension_semantics=("parallel", "parallel"),
            vmem_limit_bytes=64 * 1024 * 1024,
        ),
    )(*args)


# ------------------------------- model glue --------------------------------- #

def _pick_tile_h(H, W, C, target_bytes=2 * 1024 * 1024):
    """Largest divisor of H whose (rows, W, C) f32 tile stays under target."""
    budget_rows = max(1, target_bytes // max(1, W * C * 4))
    th = 1
    for d in range(1, H + 1):
        if H % d == 0 and d <= budget_rows:
            th = d
    return th


def simplified_attention(x_nchw, params, tile_h=None):
    x = jnp.transpose(x_nchw, (0, 2, 3, 1)).astype(jnp.float32)  # NCHW -> NHWC
    N, H, W, C = x.shape
    if tile_h is None:
        tile_h = _pick_tile_h(H, W, C)

    t = x
    for p in params["trunk"]:
        t = attention_res_block(t, p, tile_h)

    a = x
    n_att = len(params["att"])
    for i, p in enumerate(params["att"]):
        g = None
        if i == n_att - 1:  # fuse final conv1x1 + sigmoid + trunk*gate + x
            g = dict(trunk=t, x0=x, wa=params["wa"], ba=params["ba"])
        a = attention_res_block(a, p, tile_h, gate=g)

    return jnp.transpose(a, (0, 3, 1, 2))  # NHWC -> NCHW


# ------------------------------ parameter init ------------------------------ #

def _init_resblock(key, C):
    half = C // 2
    ks = jax.random.split(key, 6)
    return {
        # weights stored as (Cin, Cout) (== torch conv weight[..,0,0].T) and
        # (ky, kx, Cin, Cout) (== torch (Cout,Cin,ky,kx) permuted); synthetic init.
        "w1": 0.3 * jax.random.normal(ks[0], (C, half), jnp.float32),
        "b1": 0.1 * jax.random.normal(ks[1], (half,), jnp.float32),
        "w3": 0.3 * jax.random.normal(ks[2], (3, 3, half, half), jnp.float32),
        "b3": 0.1 * jax.random.normal(ks[3], (half,), jnp.float32),
        "w2": 0.3 * jax.random.normal(ks[4], (half, C), jnp.float32),
        "b2": 0.1 * jax.random.normal(ks[5], (C,), jnp.float32),
    }


def init_params(key, C):
    keys = jax.random.split(key, 8)
    return {
        "trunk": [_init_resblock(keys[i], C) for i in range(3)],
        "att": [_init_resblock(keys[3 + i], C) for i in range(3)],
        "wa": 0.3 * jax.random.normal(keys[6], (C, C), jnp.float32),
        "ba": 0.1 * jax.random.normal(keys[7], (C,), jnp.float32),
    }


# ------------------------------ pure-JAX reference -------------------------- #

def _ref_resblock(x_img, p):
    N, H, W, _ = x_img.shape
    h1 = _lrelu(jnp.einsum("nhwc,cd->nhwd", x_img, p["w1"]) + p["b1"])
    hp = jnp.pad(h1, ((0, 0), (1, 1), (1, 1), (0, 0)), mode="edge")
    acc = 0.0
    for ky in range(3):
        for kx in range(3):
            acc = acc + jnp.einsum("nhwc,cd->nhwd",
                                   hp[:, ky:ky + H, kx:kx + W], p["w3"][ky, kx])
    h2 = _lrelu(acc + p["b3"])
    y = jnp.einsum("nhwc,cd->nhwd", h2, p["w2"]) + p["b2"]
    return _lrelu(x_img + y)


def ref_forward(x_nchw, params):
    x = jnp.transpose(x_nchw, (0, 2, 3, 1))
    t = x
    for p in params["trunk"]:
        t = _ref_resblock(t, p)
    a = x
    for p in params["att"]:
        a = _ref_resblock(a, p)
    gate = jax.nn.sigmoid(jnp.einsum("nhwc,cd->nhwd", a, params["wa"]) + params["ba"])
    return jnp.transpose(t * gate + x, (0, 3, 1, 2))


# ----------------------------------- main ----------------------------------- #

if __name__ == "__main__":
    key = jax.random.PRNGKey(0)
    N, C, H, W = 2, 4, 16, 16
    kx_, kp_ = jax.random.split(key)
    x = jax.random.normal(kx_, (N, C, H, W), jnp.float32)
    params = init_params(kp_, C)

    fwd = jax.jit(functools.partial(simplified_attention, tile_h=8))
    out = jax.block_until_ready(fwd(x, params))

    ref = ref_forward(x, params)
    assert out.shape == (N, C, H, W)
    assert out.dtype == jnp.float32
    max_err = float(jnp.max(jnp.abs(out - ref)))
    assert jnp.allclose(out, ref, atol=2e-4, rtol=2e-4), max_err

    print("KERNEL_OK")
</pallas_src>

<mosaic_0001>
module attributes {stable_mosaic.version = 11 : i64} {
  func.func @kernel(%arg0: i32, %arg1: i32, %arg2: memref<1x8x16x4xf32, #tpu.memory_space<vmem>>, %arg3: memref<1x1x16x4xf32, #tpu.memory_space<vmem>>, %arg4: memref<1x1x16x4xf32, #tpu.memory_space<vmem>>, %arg5: memref<4x2xf32, #tpu.memory_space<vmem>>, %arg6: memref<1x2xf32, #tpu.memory_space<vmem>>, %arg7: memref<9x2x2xf32, #tpu.memory_space<vmem>>, %arg8: memref<1x2xf32, #tpu.memory_space<vmem>>, %arg9: memref<2x4xf32, #tpu.memory_space<vmem>>, %arg10: memref<1x4xf32, #tpu.memory_space<vmem>>, %arg11: memref<1x8x16x4xf32, #tpu.memory_space<vmem>>, %arg12: memref<10x18x2xf32, #tpu.memory_space<vmem>>) attributes {dimension_semantics = [#tpu.dimension_semantics<parallel>, #tpu.dimension_semantics<parallel>], iteration_bounds = array<i64: 2, 2>, scalar_prefetch = 0 : i64, scratch_operands = 1 : i64, tpu.core_type = #tpu.core_type<tc>, window_params = [{transform_indices = @transform_0, window_bounds = array<i64: 1, 8, 16, 4>}, {transform_indices = @transform_1, window_bounds = array<i64: 1, 1, 16, 4>}, {transform_indices = @transform_2, window_bounds = array<i64: 1, 1, 16, 4>}, {pipeline_mode = #tpu.pipeline_mode<synchronous>, transform_indices = @transform_3, window_bounds = array<i64: 4, 2>}, {pipeline_mode = #tpu.pipeline_mode<synchronous>, transform_indices = @transform_4, window_bounds = array<i64: 1, 2>}, {pipeline_mode = #tpu.pipeline_mode<synchronous>, transform_indices = @transform_5, window_bounds = array<i64: 9, 2, 2>}, {pipeline_mode = #tpu.pipeline_mode<synchronous>, transform_indices = @transform_6, window_bounds = array<i64: 1, 2>}, {pipeline_mode = #tpu.pipeline_mode<synchronous>, transform_indices = @transform_7, window_bounds = array<i64: 2, 4>}, {pipeline_mode = #tpu.pipeline_mode<synchronous>, transform_indices = @transform_8, window_bounds = array<i64: 1, 4>}, {transform_indices = @transform_9, window_bounds = array<i64: 1, 8, 16, 4>}]} {
    %c0 = arith.constant 0 : index
    %c0_0 = arith.constant 0 : index
    %0 = vector.load %arg5[%c0, %c0_0] : memref<4x2xf32, #tpu.memory_space<vmem>>, vector<4x2xf32>
    %c0_1 = arith.constant 0 : index
    %c0_2 = arith.constant 0 : index
    %1 = vector.load %arg6[%c0_1, %c0_2] : memref<1x2xf32, #tpu.memory_space<vmem>>, vector<1x2xf32>
    %c0_3 = arith.constant 0 : index
    %c0_4 = arith.constant 0 : index
    %c0_5 = arith.constant 0 : index
    %c0_6 = arith.constant 0 : index
    %2 = vector.load %arg2[%c0_3, %c0_4, %c0_5, %c0_6] : memref<1x8x16x4xf32, #tpu.memory_space<vmem>>, vector<1x8x16x4xf32>
    %3 = vector.shape_cast %2 : vector<1x8x16x4xf32> to vector<8x16x4xf32>
    %4 = vector.shape_cast %3 : vector<8x16x4xf32> to vector<128x4xf32>
    %cst = arith.constant dense<0.000000e+00> : vector<128x2xf32>
    %5 = tpu.matmul %4, %0, %cst {dimension_numbers = #tpu.dot_dimension_numbers<[1], [0], [0], [1], [0, 0, 1, 1], [], []>} : vector<128x4xf32>, vector<4x2xf32>, vector<128x2xf32> -> vector<128x2xf32>
    %6 = vector.broadcast %1 : vector<1x2xf32> to vector<128x2xf32>
    %7 = arith.addf %5, %6 : vector<128x2xf32>
    %cst_7 = arith.constant 0.000000e+00 : f32
    %8 = vector.broadcast %cst_7 : f32 to vector<128x2xf32>
    %9 = arith.cmpf oge, %7, %8 : vector<128x2xf32>
    %cst_8 = arith.constant 0.00999999977 : f32
    %10 = vector.broadcast %cst_8 : f32 to vector<128x2xf32>
    %11 = arith.mulf %10, %7 : vector<128x2xf32>
    %12 = arith.select %9, %7, %11 : vector<128x2xi1>, vector<128x2xf32>
    %13 = vector.shape_cast %12 : vector<128x2xf32> to vector<8x16x2xf32>
    %c1 = arith.constant 1 : index
    %c1_9 = arith.constant 1 : index
    %c0_10 = arith.constant 0 : index
    %14 = vector.load %arg12[%c1, %c1_9, %c0_10] : memref<10x18x2xf32, #tpu.memory_space<vmem>>, vector<8x16x2xf32>
    tpu.vector_store %arg12[%c1, %c1_9, %c0_10], %13 {strides = array<i32>} : memref<10x18x2xf32, #tpu.memory_space<vmem>>, vector<8x16x2xf32>,
    %c0_11 = arith.constant 0 : index
    %c0_12 = arith.constant 0 : index
    %c0_13 = arith.constant 0 : index
    %c0_14 = arith.constant 0 : index
    %15 = vector.load %arg3[%c0_11, %c0_12, %c0_13, %c0_14] : memref<1x1x16x4xf32, #tpu.memory_space<vmem>>, vector<1x1x16x4xf32>
    %16 = vector.shape_cast %15 : vector<1x1x16x4xf32> to vector<1x16x4xf32>
    %17 = vector.shape_cast %16 : vector<1x16x4xf32> to vector<16x4xf32>
    %cst_15 = arith.constant dense<0.000000e+00> : vector<16x2xf32>
    %18 = tpu.matmul %17, %0, %cst_15 {dimension_numbers = #tpu.dot_dimension_numbers<[1], [0], [0], [1], [0, 0, 1, 1], [], []>} : vector<16x4xf32>, vector<4x2xf32>, vector<16x2xf32> -> vector<16x2xf32>
    %19 = vector.broadcast %1 : vector<1x2xf32> to vector<16x2xf32>
    %20 = arith.addf %18, %19 : vector<16x2xf32>
    %cst_16 = arith.constant 0.000000e+00 : f32
    %21 = vector.broadcast %cst_16 : f32 to vector<16x2xf32>
    %22 = arith.cmpf oge, %20, %21 : vector<16x2xf32>
    %cst_17 = arith.constant 0.00999999977 : f32
    %23 = vector.broadcast %cst_17 : f32 to vector<16x2xf32>
    %24 = arith.mulf %23, %20 : vector<16x2xf32>
    %25 = arith.select %22, %20, %24 : vector<16x2xi1>, vector<16x2xf32>
    %26 = vector.shape_cast %25 : vector<16x2xf32> to vector<1x16x2xf32>
    %c0_18 = arith.constant 0 : index
    %c1_19 = arith.constant 1 : index
    %c0_20 = arith.constant 0 : index
    %27 = vector.load %arg12[%c0_18, %c1_19, %c0_20] : memref<10x18x2xf32, #tpu.memory_space<vmem>>, vector<1x16x2xf32>
    tpu.vector_store %arg12[%c0_18, %c1_19, %c0_20], %26 {strides = array<i32>} : memref<10x18x2xf32, #tpu.memory_space<vmem>>, vector<1x16x2xf32>,
    %c0_21 = arith.constant 0 : index
    %c0_22 = arith.constant 0 : index
    %c0_23 = arith.constant 0 : index
    %c0_24 = arith.constant 0 : index
    %28 = vector.load %arg4[%c0_21, %c0_22, %c0_23, %c0_24] : memref<1x1x16x4xf32, #tpu.memory_space<vmem>>, vector<1x1x16x4xf32>
    %29 = vector.shape_cast %28 : vector<1x1x16x4xf32> to vector<1x16x4xf32>
    %30 = vector.shape_cast %29 : vector<1x16x4xf32> to vector<16x4xf32>
    %cst_25 = arith.constant dense<0.000000e+00> : vector<16x2xf32>
    %31 = tpu.matmul %30, %0, %cst_25 {dimension_numbers = #tpu.dot_dimension_numbers<[1], [0], [0], [1], [0, 0, 1, 1], [], []>} : vector<16x4xf32>, vector<4x2xf32>, vector<16x2xf32> -> vector<16x2xf32>
    %32 = vector.broadcast %1 : vector<1x2xf32> to vector<16x2xf32>
    %33 = arith.addf %31, %32 : vector<16x2xf32>
    %cst_26 = arith.constant 0.000000e+00 : f32
    %34 = vector.broadcast %cst_26 : f32 to vector<16x2xf32>
    %35 = arith.cmpf oge, %33, %34 : vector<16x2xf32>
    %cst_27 = arith.constant 0.00999999977 : f32
    %36 = vector.broadcast %cst_27 : f32 to vector<16x2xf32>
    %37 = arith.mulf %36, %33 : vector<16x2xf32>
    %38 = arith.select %35, %33, %37 : vector<16x2xi1>, vector<16x2xf32>
    %39 = vector.shape_cast %38 : vector<16x2xf32> to vector<1x16x2xf32>
    %c9 = arith.constant 9 : index
    %c1_28 = arith.constant 1 : index
    %c0_29 = arith.constant 0 : index
    %40 = vector.load %arg12[%c9, %c1_28, %c0_29] : memref<10x18x2xf32, #tpu.memory_space<vmem>>, vector<1x16x2xf32>
    tpu.vector_store %arg12[%c9, %c1_28, %c0_29], %39 {strides = array<i32>} : memref<10x18x2xf32, #tpu.memory_space<vmem>>, vector<1x16x2xf32>,
    %c0_30 = arith.constant 0 : index
    %c1_31 = arith.constant 1 : index
    %c0_32 = arith.constant 0 : index
    %41 = vector.load %arg12[%c0_30, %c1_31, %c0_32] : memref<10x18x2xf32, #tpu.memory_space<vmem>>, vector<10x1x2xf32>
    %c0_33 = arith.constant 0 : index
    %c0_34 = arith.constant 0 : index
    %c0_35 = arith.constant 0 : index
    %42 = vector.load %arg12[%c0_33, %c0_34, %c0_35] : memref<10x18x2xf32, #tpu.memory_space<vmem>>, vector<10x1x2xf32>
    tpu.vector_store %arg12[%c0_33, %c0_34, %c0_35], %41 {strides = array<i32>} : memref<10x18x2xf32, #tpu.memory_space<vmem>>, vector<10x1x2xf32>,
    %c0_36 = arith.constant 0 : index
    %c16 = arith.constant 16 : index
    %c0_37 = arith.constant 0 : index
    %43 = vector.load %arg12[%c0_36, %c16, %c0_37] : memref<10x18x2xf32, #tpu.memory_space<vmem>>, vector<10x1x2xf32>
    %c0_38 = arith.constant 0 : index
    %c17 = arith.constant 17 : index
    %c0_39 = arith.constant 0 : index
    %44 = vector.load %arg12[%c0_38, %c17, %c0_39] : memref<10x18x2xf32, #tpu.memory_space<vmem>>, vector<10x1x2xf32>
    tpu.vector_store %arg12[%c0_38, %c17, %c0_39], %43 {strides = array<i32>} : memref<10x18x2xf32, #tpu.memory_space<vmem>>, vector<10x1x2xf32>,
    %cst_40 = arith.constant 0.000000e+00 : f32
    %45 = vector.broadcast %cst_40 : f32 to vector<128x2xf32>
    %c0_41 = arith.constant 0 : index
    %c0_42 = arith.constant 0 : index
    %c0_43 = arith.constant 0 : index
    %46 = vector.load %arg12[%c0_41, %c0_42, %c0_43] : memref<10x18x2xf32, #tpu.memory_space<vmem>>, vector<8x16x2xf32>
    %47 = vector.shape_cast %46 : vector<8x16x2xf32> to vector<128x2xf32>
    %c0_44 = arith.constant 0 : index
    %c0_45 = arith.constant 0 : index
    %c0_46 = arith.constant 0 : index
    %48 = vector.load %arg7[%c0_44, %c0_45, %c0_46] : memref<9x2x2xf32, #tpu.memory_space<vmem>>, vector<1x2x2xf32>
    %49 = vector.shape_cast %48 : vector<1x2x2xf32> to vector<2x2xf32>
    %cst_47 = arith.constant dense<0.000000e+00> : vector<128x2xf32>
    %50 = tpu.matmul %47, %49, %cst_47 {dimension_numbers = #tpu.dot_dimension_numbers<[1], [0], [0], [1], [0, 0, 1, 1], [], []>} : vector<128x2xf32>, vector<2x2xf32>, vector<128x2xf32> -> vector<128x2xf32>
    %51 = arith.addf %45, %50 : vector<128x2xf32>
    %c0_48 = arith.constant 0 : index
    %c1_49 = arith.constant 1 : index
    %c0_50 = arith.constant 0 : index
    %52 = vector.load %arg12[%c0_48, %c1_49, %c0_50] : memref<10x18x2xf32, #tpu.memory_space<vmem>>, vector<8x16x2xf32>
    %53 = vector.shape_cast %52 : vector<8x16x2xf32> to vector<128x2xf32>
    %c1_51 = arith.constant 1 : index
    %c0_52 = arith.constant 0 : index
    %c0_53 = arith.constant 0 : index
    %54 = vector.load %arg7[%c1_51, %c0_52, %c0_53] : memref<9x2x2xf32, #tpu.memory_space<vmem>>, vector<1x2x2xf32>
    %55 = vector.shape_cast %54 : vector<1x2x2xf32> to vector<2x2xf32>
    %cst_54 = arith.constant dense<0.000000e+00> : vector<128x2xf32>
    %56 = tpu.matmul %53, %55, %cst_54 {dimension_numbers = #tpu.dot_dimension_numbers<[1], [0], [0], [1], [0, 0, 1, 1], [], []>} : vector<128x2xf32>, vector<2x2xf32>, vector<128x2xf32> -> vector<128x2xf32>
    %57 = arith.addf %51, %56 : vector<128x2xf32>
    %c0_55 = arith.constant 0 : index
    %c2 = arith.constant 2 : index
    %c0_56 = arith.constant 0 : index
    %58 = vector.load %arg12[%c0_55, %c2, %c0_56] : memref<10x18x2xf32, #tpu.memory_space<vmem>>, vector<8x16x2xf32>
    %59 = vector.shape_cast %58 : vector<8x16x2xf32> to vector<128x2xf32>
    %c2_57 = arith.constant 2 : index
    %c0_58 = arith.constant 0 : index
    %c0_59 = arith.constant 0 : index
    %60 = vector.load %arg7[%c2_57, %c0_58, %c0_59] : memref<9x2x2xf32, #tpu.memory_space<vmem>>, vector<1x2x2xf32>
    %61 = vector.shape_cast %60 : vector<1x2x2xf32> to vector<2x2xf32>
    %cst_60 = arith.constant dense<0.000000e+00> : vector<128x2xf32>
    %62 = tpu.matmul %59, %61, %cst_60 {dimension_numbers = #tpu.dot_dimension_numbers<[1], [0], [0], [1], [0, 0, 1, 1], [], []>} : vector<128x2xf32>, vector<2x2xf32>, vector<128x2xf32> -> vector<128x2xf32>
    %63 = arith.addf %57, %62 : vector<128x2xf32>
    %c1_61 = arith.constant 1 : index
    %c0_62 = arith.constant 0 : index
    %c0_63 = arith.constant 0 : index
    %64 = vector.load %arg12[%c1_61, %c0_62, %c0_63] : memref<10x18x2xf32, #tpu.memory_space<vmem>>, vector<8x16x2xf32>
    %65 = vector.shape_cast %64 : vector<8x16x2xf32> to vector<128x2xf32>
    %c3 = arith.constant 3 : index
    %c0_64 = arith.constant 0 : index
    %c0_65 = arith.constant 0 : index
    %66 = vector.load %arg7[%c3, %c0_64, %c0_65] : memref<9x2x2xf32, #tpu.memory_space<vmem>>, vector<1x2x2xf32>
    %67 = vector.shape_cast %66 : vector<1x2x2xf32> to vector<2x2xf32>
    %cst_66 = arith.constant dense<0.000000e+00> : vector<128x2xf32>
    %68 = tpu.matmul %65, %67, %cst_66 {dimension_numbers = #tpu.dot_dimension_numbers<[1], [0], [0], [1], [0, 0, 1, 1], [], []>} : vector<128x2xf32>, vector<2x2xf32>, vector<128x2xf32> -> vector<128x2xf32>
    %69 = arith.addf %63, %68 : vector<128x2xf32>
    %c1_67 = arith.constant 1 : index
    %c1_68 = arith.constant 1 : index
    %c0_69 = arith.constant 0 : index
    %70 = vector.load %arg12[%c1_67, %c1_68, %c0_69] : memref<10x18x2xf32, #tpu.memory_space<vmem>>, vector<8x16x2xf32>
    %71 = vector.shape_cast %70 : vector<8x16x2xf32> to vector<128x2xf32>
    %c4 = arith.constant 4 : index
    %c0_70 = arith.constant 0 : index
    %c0_71 = arith.constant 0 : index
    %72 = vector.load %arg7[%c4, %c0_70, %c0_71] : memref<9x2x2xf32, #tpu.memory_space<vmem>>, vector<1x2x2xf32>
    %73 = vector.shape_cast %72 : vector<1x2x2xf32> to vector<2x2xf32>
    %cst_72 = arith.constant dense<0.000000e+00> : vector<128x2xf32>
    %74 = tpu.matmul %71, %73, %cst_72 {dimension_numbers = #tpu.dot_dimension_numbers<[1], [0], [0], [1], [0, 0, 1, 1], [], []>} : vector<128x2xf32>, vector<2x2xf32>, vector<128x2xf32> -> vector<128x2xf32>
    %75 = arith.addf %69, %74 : vector<128x2xf32>
    %c1_73 = arith.constant 1 : index
    %c2_74 = arith.constant 2 : index
    %c0_75 = arith.constant 0 : index
    %76 = vector.load %arg12[%c1_73, %c2_74, %c0_75] : memref<10x18x2xf32, #tpu.memory_space<vmem>>, vector<8x16x2xf32>
    %77 = vector.shape_cast %76 : vector<8x16x2xf32> to vector<128x2xf32>
    %c5 = arith.constant 5 : index
    %c0_76 = arith.constant 0 : index
    %c0_77 = arith.constant 0 : index
    %78 = vector.load %arg7[%c5, %c0_76, %c0_77] : memref<9x2x2xf32, #tpu.memory_space<vmem>>, vector<1x2x2xf32>
    %79 = vector.shape_cast %78 : vector<1x2x2xf32> to vector<2x2xf32>
    %cst_78 = arith.constant dense<0.000000e+00> : vector<128x2xf32>
    %80 = tpu.matmul %77, %79, %cst_78 {dimension_numbers = #tpu.dot_dimension_numbers<[1], [0], [0], [1], [0, 0, 1, 1], [], []>} : vector<128x2xf32>, vector<2x2xf32>, vector<128x2xf32> -> vector<128x2xf32>
    %81 = arith.addf %75, %80 : vector<128x2xf32>
    %c2_79 = arith.constant 2 : index
    %c0_80 = arith.constant 0 : index
    %c0_81 = arith.constant 0 : index
    %82 = vector.load %arg12[%c2_79, %c0_80, %c0_81] : memref<10x18x2xf32, #tpu.memory_space<vmem>>, vector<8x16x2xf32>
    %83 = vector.shape_cast %82 : vector<8x16x2xf32> to vector<128x2xf32>
    %c6 = arith.constant 6 : index
    %c0_82 = arith.constant 0 : index
    %c0_83 = arith.constant 0 : index
    %84 = vector.load %arg7[%c6, %c0_82, %c0_83] : memref<9x2x2xf32, #tpu.memory_space<vmem>>, vector<1x2x2xf32>
    %85 = vector.shape_cast %84 : vector<1x2x2xf32> to vector<2x2xf32>
    %cst_84 = arith.constant dense<0.000000e+00> : vector<128x2xf32>
    %86 = tpu.matmul %83, %85, %cst_84 {dimension_numbers = #tpu.dot_dimension_numbers<[1], [0], [0], [1], [0, 0, 1, 1], [], []>} : vector<128x2xf32>, vector<2x2xf32>, vector<128x2xf32> -> vector<128x2xf32>
    %87 = arith.addf %81, %86 : vector<128x2xf32>
    %c2_85 = arith.constant 2 : index
    %c1_86 = arith.constant 1 : index
    %c0_87 = arith.constant 0 : index
    %88 = vector.load %arg12[%c2_85, %c1_86, %c0_87] : memref<10x18x2xf32, #tpu.memory_space<vmem>>, vector<8x16x2xf32>
    %89 = vector.shape_cast %88 : vector<8x16x2xf32> to vector<128x2xf32>
    %c7 = arith.constant 7 : index
    %c0_88 = arith.constant 0 : index
    %c0_89 = arith.constant 0 : index
    %90 = vector.load %arg7[%c7, %c0_88, %c0_89] : memref<9x2x2xf32, #tpu.memory_space<vmem>>, vector<1x2x2xf32>
    %91 = vector.shape_cast %90 : vector<1x2x2xf32> to vector<2x2xf32>
    %cst_90 = arith.constant dense<0.000000e+00> : vector<128x2xf32>
    %92 = tpu.matmul %89, %91, %cst_90 {dimension_numbers = #tpu.dot_dimension_numbers<[1], [0], [0], [1], [0, 0, 1, 1], [], []>} : vector<128x2xf32>, vector<2x2xf32>, vector<128x2xf32> -> vector<128x2xf32>
    %93 = arith.addf %87, %92 : vector<128x2xf32>
    %c2_91 = arith.constant 2 : index
    %c2_92 = arith.constant 2 : index
    %c0_93 = arith.constant 0 : index
    %94 = vector.load %arg12[%c2_91, %c2_92, %c0_93] : memref<10x18x2xf32, #tpu.memory_space<vmem>>, vector<8x16x2xf32>
    %95 = vector.shape_cast %94 : vector<8x16x2xf32> to vector<128x2xf32>
    %c8 = arith.constant 8 : index
    %c0_94 = arith.constant 0 : index
    %c0_95 = arith.constant 0 : index
    %96 = vector.load %arg7[%c8, %c0_94, %c0_95] : memref<9x2x2xf32, #tpu.memory_space<vmem>>, vector<1x2x2xf32>
    %97 = vector.shape_cast %96 : vector<1x2x2xf32> to vector<2x2xf32>
    %cst_96 = arith.constant dense<0.000000e+00> : vector<128x2xf32>
    %98 = tpu.matmul %95, %97, %cst_96 {dimension_numbers = #tpu.dot_dimension_numbers<[1], [0], [0], [1], [0, 0, 1, 1], [], []>} : vector<128x2xf32>, vector<2x2xf32>, vector<128x2xf32> -> vector<128x2xf32>
    %99 = arith.addf %93, %98 : vector<128x2xf32>
    %c0_97 = arith.constant 0 : index
    %c0_98 = arith.constant 0 : index
    %100 = vector.load %arg8[%c0_97, %c0_98] : memref<1x2xf32, #tpu.memory_space<vmem>>, vector<1x2xf32>
    %101 = vector.broadcast %100 : vector<1x2xf32> to vector<128x2xf32>
    %102 = arith.addf %99, %101 : vector<128x2xf32>
    %cst_99 = arith.constant 0.000000e+00 : f32
    %103 = vector.broadcast %cst_99 : f32 to vector<128x2xf32>
    %104 = arith.cmpf oge, %102, %103 : vector<128x2xf32>
    %cst_100 = arith.constant 0.00999999977 : f32
    %105 = vector.broadcast %cst_100 : f32 to vector<128x2xf32>
    %106 = arith.mulf %105, %102 : vector<128x2xf32>
    %107 = arith.select %104, %102, %106 : vector<128x2xi1>, vector<128x2xf32>
    %c0_101 = arith.constant 0 : index
    %c0_102 = arith.constant 0 : index
    %108 = vector.load %arg9[%c0_101, %c0_102] : memref<2x4xf32, #tpu.memory_space<vmem>>, vector<2x4xf32>
    %cst_103 = arith.constant dense<0.000000e+00> : vector<128x4xf32>
    %109 = tpu.matmul %107, %108, %cst_103 {dimension_numbers = #tpu.dot_dimension_numbers<[1], [0], [0], [1], [0, 0, 1, 1], [], []>} : vector<128x2xf32>, vector<2x4xf32>, vector<128x4xf32> -> vector<128x4xf32>
    %c0_104 = arith.constant 0 : index
    %c0_105 = arith.constant 0 : index
    %110 = vector.load %arg10[%c0_104, %c0_105] : memref<1x4xf32, #tpu.memory_space<vmem>>, vector<1x4xf32>
    %111 = vector.broadcast %110 : vector<1x4xf32> to vector<128x4xf32>
    %112 = arith.addf %109, %111 : vector<128x4xf32>
    %113 = vector.shape_cast %3 : vector<8x16x4xf32> to vector<128x4xf32>
    %114 = arith.addf %113, %112 : vector<128x4xf32>
    %cst_106 = arith.constant 0.000000e+00 : f32
    %115 = vector.broadcast %cst_106 : f32 to vector<128x4xf32>
    %116 = arith.cmpf oge, %114, %115 : vector<128x4xf32>
    %cst_107 = arith.constant 0.00999999977 : f32
    %117 = vector.broadcast %cst_107 : f32 to vector<128x4xf32>
    %118 = arith.mulf %117, %114 : vector<128x4xf32>
    %119 = arith.select %116, %114, %118 : vector<128x4xi1>, vector<128x4xf32>
    %120 = vector.shape_cast %119 : vector<128x4xf32> to vector<8x16x4xf32>
    %c0_108 = arith.constant 0 : index
    %c0_109 = arith.constant 0 : index
    %c0_110 = arith.constant 0 : index
    %c0_111 = arith.constant 0 : index
    %121 = vector.load %arg11[%c0_108, %c0_109, %c0_110, %c0_111] : memref<1x8x16x4xf32, #tpu.memory_space<vmem>>, vector<1x8x16x4xf32>
    %122 = vector.shape_cast %121 : vector<1x8x16x4xf32> to vector<8x16x4xf32>
    %123 = vector.shape_cast %120 : vector<8x16x4xf32> to vector<1x8x16x4xf32>
    tpu.vector_store %arg11[%c0_108, %c0_109, %c0_110, %c0_111], %123 {strides = array<i32>} : memref<1x8x16x4xf32, #tpu.memory_space<vmem>>, vector<1x8x16x4xf32>,
    return
  }
  func.func @transform_0(%arg0: i32, %arg1: i32) -> (i32, i32, i32, i32) {
    %c0_i32 = arith.constant 0 : i32
    %c0_i32_0 = arith.constant 0 : i32
    %c0_i32_1 = arith.constant 0 : i32
    return %arg0, %arg1, %c0_i32, %c0_i32_0 : i32, i32, i32, i32
  }
  func.func @transform_1(%arg0: i32, %arg1: i32) -> (i32, i32, i32, i32) {
    %c0_i32 = arith.constant 0 : i32
    %c0_i32_0 = arith.constant 0 : i32
    %c0_i32_1 = arith.constant 0 : i32
    return %arg0, %arg1, %c0_i32, %c0_i32_0 : i32, i32, i32, i32
  }
  func.func @transform_2(%arg0: i32, %arg1: i32) -> (i32, i32, i32, i32) {
    %c0_i32 = arith.constant 0 : i32
    %c0_i32_0 = arith.constant 0 : i32
    %c0_i32_1 = arith.constant 0 : i32
    return %arg0, %arg1, %c0_i32, %c0_i32_0 : i32, i32, i32, i32
  }
  func.func @transform_3(%arg0: i32, %arg1: i32) -> (i32, i32) {
    %c0_i32 = arith.constant 0 : i32
    %c0_i32_0 = arith.constant 0 : i32
    %c0_i32_1 = arith.constant 0 : i32
    return %c0_i32, %c0_i32_0 : i32, i32
  }
  func.func @transform_4(%arg0: i32, %arg1: i32) -> (i32, i32) {
    %c0_i32 = arith.constant 0 : i32
    %c0_i32_0 = arith.constant 0 : i32
    %c0_i32_1 = arith.constant 0 : i32
    return %c0_i32, %c0_i32_0 : i32, i32
  }
  func.func @transform_5(%arg0: i32, %arg1: i32) -> (i32, i32, i32) {
    %c0_i32 = arith.constant 0 : i32
    %c0_i32_0 = arith.constant 0 : i32
    %c0_i32_1 = arith.constant 0 : i32
    %c0_i32_2 = arith.constant 0 : i32
    return %c0_i32, %c0_i32_0, %c0_i32_1 : i32, i32, i32
  }
  func.func @transform_6(%arg0: i32, %arg1: i32) -> (i32, i32) {
    %c0_i32 = arith.constant 0 : i32
    %c0_i32_0 = arith.constant 0 : i32
    %c0_i32_1 = arith.constant 0 : i32
    return %c0_i32, %c0_i32_0 : i32, i32
  }
  func.func @transform_7(%arg0: i32, %arg1: i32) -> (i32, i32) {
    %c0_i32 = arith.constant 0 : i32
    %c0_i32_0 = arith.constant 0 : i32
    %c0_i32_1 = arith.constant 0 : i32
    return %c0_i32, %c0_i32_0 : i32, i32
  }
  func.func @transform_8(%arg0: i32, %arg1: i32) -> (i32, i32) {
    %c0_i32 = arith.constant 0 : i32
    %c0_i32_0 = arith.constant 0 : i32
    %c0_i32_1 = arith.constant 0 : i32
    return %c0_i32, %c0_i32_0 : i32, i32
  }
  func.func @transform_9(%arg0: i32, %arg1: i32) -> (i32, i32, i32, i32) {
    %c0_i32 = arith.constant 0 : i32
    %c0_i32_0 = arith.constant 0 : i32
    %c0_i32_1 = arith.constant 0 : i32
    return %arg0, %arg1, %c0_i32, %c0_i32_0 : i32, i32, i32, i32
  }
}

module attributes {stable_mosaic.version = 11 : i64} {
  func.func @kernel(%arg0: i32, %arg1: i32, %arg2: memref<1x8x16x4xf32, #tpu.memory_space<vmem>>, %arg3: memref<1x1x16x4xf32, #tpu.memory_space<vmem>>, %arg4: memref<1x1x16x4xf32, #tpu.memory_space<vmem>>, %arg5: memref<1x8x16x4xf32, #tpu.memory_space<vmem>>, %arg6: memref<1x8x16x4xf32, #tpu.memory_space<vmem>>, %arg7: memref<4x2xf32, #tpu.memory_space<vmem>>, %arg8: memref<1x2xf32, #tpu.memory_space<vmem>>, %arg9: memref<9x2x2xf32, #tpu.memory_space<vmem>>, %arg10: memref<1x2xf32, #tpu.memory_space<vmem>>, %arg11: memref<2x4xf32, #tpu.memory_space<vmem>>, %arg12: memref<1x4xf32, #tpu.memory_space<vmem>>, %arg13: memref<4x4xf32, #tpu.memory_space<vmem>>, %arg14: memref<1x4xf32, #tpu.memory_space<vmem>>, %arg15: memref<1x8x16x4xf32, #tpu.memory_space<vmem>>, %arg16: memref<10x18x2xf32, #tpu.memory_space<vmem>>) attributes {dimension_semantics = [#tpu.dimension_semantics<parallel>, #tpu.dimension_semantics<parallel>], iteration_bounds = array<i64: 2, 2>, scalar_prefetch = 0 : i64, scratch_operands = 1 : i64, tpu.core_type = #tpu.core_type<tc>, window_params = [{transform_indices = @transform_0, window_bounds = array<i64: 1, 8, 16, 4>}, {transform_indices = @transform_1, window_bounds = array<i64: 1, 1, 16, 4>}, {transform_indices = @transform_2, window_bounds = array<i64: 1, 1, 16, 4>}, {transform_indices = @transform_3, window_bounds = array<i64: 1, 8, 16, 4>}, {transform_indices = @transform_4, window_bounds = array<i64: 1, 8, 16, 4>}, {pipeline_mode = #tpu.pipeline_mode<synchronous>, transform_indices = @transform_5, window_bounds = array<i64: 4, 2>}, {pipeline_mode = #tpu.pipeline_mode<synchronous>, transform_indices = @transform_6, window_bounds = array<i64: 1, 2>}, {pipeline_mode = #tpu.pipeline_mode<synchronous>, transform_indices = @transform_7, window_bounds = array<i64: 9, 2, 2>}, {pipeline_mode = #tpu.pipeline_mode<synchronous>, transform_indices = @transform_8, window_bounds = array<i64: 1, 2>}, {pipeline_mode = #tpu.pipeline_mode<synchronous>, transform_indices = @transform_9, window_bounds = array<i64: 2, 4>}, {pipeline_mode = #tpu.pipeline_mode<synchronous>, transform_indices = @transform_10, window_bounds = array<i64: 1, 4>}, {pipeline_mode = #tpu.pipeline_mode<synchronous>, transform_indices = @transform_11, window_bounds = array<i64: 4, 4>}, {pipeline_mode = #tpu.pipeline_mode<synchronous>, transform_indices = @transform_12, window_bounds = array<i64: 1, 4>}, {transform_indices = @transform_13, window_bounds = array<i64: 1, 8, 16, 4>}]} {
    %c0 = arith.constant 0 : index
    %c0_0 = arith.constant 0 : index
    %0 = vector.load %arg7[%c0, %c0_0] : memref<4x2xf32, #tpu.memory_space<vmem>>, vector<4x2xf32>
    %c0_1 = arith.constant 0 : index
    %c0_2 = arith.constant 0 : index
    %1 = vector.load %arg8[%c0_1, %c0_2] : memref<1x2xf32, #tpu.memory_space<vmem>>, vector<1x2xf32>
    %c0_3 = arith.constant 0 : index
    %c0_4 = arith.constant 0 : index
    %c0_5 = arith.constant 0 : index
    %c0_6 = arith.constant 0 : index
    %2 = vector.load %arg2[%c0_3, %c0_4, %c0_5, %c0_6] : memref<1x8x16x4xf32, #tpu.memory_space<vmem>>, vector<1x8x16x4xf32>
    %3 = vector.shape_cast %2 : vector<1x8x16x4xf32> to vector<8x16x4xf32>
    %4 = vector.shape_cast %3 : vector<8x16x4xf32> to vector<128x4xf32>
    %cst = arith.constant dense<0.000000e+00> : vector<128x2xf32>
    %5 = tpu.matmul %4, %0, %cst {dimension_numbers = #tpu.dot_dimension_numbers<[1], [0], [0], [1], [0, 0, 1, 1], [], []>} : vector<128x4xf32>, vector<4x2xf32>, vector<128x2xf32> -> vector<128x2xf32>
    %6 = vector.broadcast %1 : vector<1x2xf32> to vector<128x2xf32>
    %7 = arith.addf %5, %6 : vector<128x2xf32>
    %cst_7 = arith.constant 0.000000e+00 : f32
    %8 = vector.broadcast %cst_7 : f32 to vector<128x2xf32>
    %9 = arith.cmpf oge, %7, %8 : vector<128x2xf32>
    %cst_8 = arith.constant 0.00999999977 : f32
    %10 = vector.broadcast %cst_8 : f32 to vector<128x2xf32>
    %11 = arith.mulf %10, %7 : vector<128x2xf32>
    %12 = arith.select %9, %7, %11 : vector<128x2xi1>, vector<128x2xf32>
    %13 = vector.shape_cast %12 : vector<128x2xf32> to vector<8x16x2xf32>
    %c1 = arith.constant 1 : index
    %c1_9 = arith.constant 1 : index
    %c0_10 = arith.constant 0 : index
    %14 = vector.load %arg16[%c1, %c1_9, %c0_10] : memref<10x18x2xf32, #tpu.memory_space<vmem>>, vector<8x16x2xf32>
    tpu.vector_store %arg16[%c1, %c1_9, %c0_10], %13 {strides = array<i32>} : memref<10x18x2xf32, #tpu.memory_space<vmem>>, vector<8x16x2xf32>,
    %c0_11 = arith.constant 0 : index
    %c0_12 = arith.constant 0 : index
    %c0_13 = arith.constant 0 : index
    %c0_14 = arith.constant 0 : index
    %15 = vector.load %arg3[%c0_11, %c0_12, %c0_13, %c0_14] : memref<1x1x16x4xf32, #tpu.memory_space<vmem>>, vector<1x1x16x4xf32>
    %16 = vector.shape_cast %15 : vector<1x1x16x4xf32> to vector<1x16x4xf32>
    %17 = vector.shape_cast %16 : vector<1x16x4xf32> to vector<16x4xf32>
    %cst_15 = arith.constant dense<0.000000e+00> : vector<16x2xf32>
    %18 = tpu.matmul %17, %0, %cst_15 {dimension_numbers = #tpu.dot_dimension_numbers<[1], [0], [0], [1], [0, 0, 1, 1], [], []>} : vector<16x4xf32>, vector<4x2xf32>, vector<16x2xf32> -> vector<16x2xf32>
    %19 = vector.broadcast %1 : vector<1x2xf32> to vector<16x2xf32>
    %20 = arith.addf %18, %19 : vector<16x2xf32>
    %cst_16 = arith.constant 0.000000e+00 : f32
    %21 = vector.broadcast %cst_16 : f32 to vector<16x2xf32>
    %22 = arith.cmpf oge, %20, %21 : vector<16x2xf32>
    %cst_17 = arith.constant 0.00999999977 : f32
    %23 = vector.broadcast %cst_17 : f32 to vector<16x2xf32>
    %24 = arith.mulf %23, %20 : vector<16x2xf32>
    %25 = arith.select %22, %20, %24 : vector<16x2xi1>, vector<16x2xf32>
    %26 = vector.shape_cast %25 : vector<16x2xf32> to vector<1x16x2xf32>
    %c0_18 = arith.constant 0 : index
    %c1_19 = arith.constant 1 : index
    %c0_20 = arith.constant 0 : index
    %27 = vector.load %arg16[%c0_18, %c1_19, %c0_20] : memref<10x18x2xf32, #tpu.memory_space<vmem>>, vector<1x16x2xf32>
    tpu.vector_store %arg16[%c0_18, %c1_19, %c0_20], %26 {strides = array<i32>} : memref<10x18x2xf32, #tpu.memory_space<vmem>>, vector<1x16x2xf32>,
    %c0_21 = arith.constant 0 : index
    %c0_22 = arith.constant 0 : index
    %c0_23 = arith.constant 0 : index
    %c0_24 = arith.constant 0 : index
    %28 = vector.load %arg4[%c0_21, %c0_22, %c0_23, %c0_24] : memref<1x1x16x4xf32, #tpu.memory_space<vmem>>, vector<1x1x16x4xf32>
    %29 = vector.shape_cast %28 : vector<1x1x16x4xf32> to vector<1x16x4xf32>
    %30 = vector.shape_cast %29 : vector<1x16x4xf32> to vector<16x4xf32>
    %cst_25 = arith.constant dense<0.000000e+00> : vector<16x2xf32>
    %31 = tpu.matmul %30, %0, %cst_25 {dimension_numbers = #tpu.dot_dimension_numbers<[1], [0], [0], [1], [0, 0, 1, 1], [], []>} : vector<16x4xf32>, vector<4x2xf32>, vector<16x2xf32> -> vector<16x2xf32>
    %32 = vector.broadcast %1 : vector<1x2xf32> to vector<16x2xf32>
    %33 = arith.addf %31, %32 : vector<16x2xf32>
    %cst_26 = arith.constant 0.000000e+00 : f32
    %34 = vector.broadcast %cst_26 : f32 to vector<16x2xf32>
    %35 = arith.cmpf oge, %33, %34 : vector<16x2xf32>
    %cst_27 = arith.constant 0.00999999977 : f32
    %36 = vector.broadcast %cst_27 : f32 to vector<16x2xf32>
    %37 = arith.mulf %36, %33 : vector<16x2xf32>
    %38 = arith.select %35, %33, %37 : vector<16x2xi1>, vector<16x2xf32>
    %39 = vector.shape_cast %38 : vector<16x2xf32> to vector<1x16x2xf32>
    %c9 = arith.constant 9 : index
    %c1_28 = arith.constant 1 : index
    %c0_29 = arith.constant 0 : index
    %40 = vector.load %arg16[%c9, %c1_28, %c0_29] : memref<10x18x2xf32, #tpu.memory_space<vmem>>, vector<1x16x2xf32>
    tpu.vector_store %arg16[%c9, %c1_28, %c0_29], %39 {strides = array<i32>} : memref<10x18x2xf32, #tpu.memory_space<vmem>>, vector<1x16x2xf32>,
    %c0_30 = arith.constant 0 : index
    %c1_31 = arith.constant 1 : index
    %c0_32 = arith.constant 0 : index
    %41 = vector.load %arg16[%c0_30, %c1_31, %c0_32] : memref<10x18x2xf32, #tpu.memory_space<vmem>>, vector<10x1x2xf32>
    %c0_33 = arith.constant 0 : index
    %c0_34 = arith.constant 0 : index
    %c0_35 = arith.constant 0 : index
    %42 = vector.load %arg16[%c0_33, %c0_34, %c0_35] : memref<10x18x2xf32, #tpu.memory_space<vmem>>, vector<10x1x2xf32>
    tpu.vector_store %arg16[%c0_33, %c0_34, %c0_35], %41 {strides = array<i32>} : memref<10x18x2xf32, #tpu.memory_space<vmem>>, vector<10x1x2xf32>,
    %c0_36 = arith.constant 0 : index
    %c16 = arith.constant 16 : index
    %c0_37 = arith.constant 0 : index
    %43 = vector.load %arg16[%c0_36, %c16, %c0_37] : memref<10x18x2xf32, #tpu.memory_space<vmem>>, vector<10x1x2xf32>
    %c0_38 = arith.constant 0 : index
    %c17 = arith.constant 17 : index
    %c0_39 = arith.constant 0 : index
    %44 = vector.load %arg16[%c0_38, %c17, %c0_39] : memref<10x18x2xf32, #tpu.memory_space<vmem>>, vector<10x1x2xf32>
    tpu.vector_store %arg16[%c0_38, %c17, %c0_39], %43 {strides = array<i32>} : memref<10x18x2xf32, #tpu.memory_space<vmem>>, vector<10x1x2xf32>,
    %cst_40 = arith.constant 0.000000e+00 : f32
    %45 = vector.broadcast %cst_40 : f32 to vector<128x2xf32>
    %c0_41 = arith.constant 0 : index
    %c0_42 = arith.constant 0 : index
    %c0_43 = arith.constant 0 : index
    %46 = vector.load %arg16[%c0_41, %c0_42, %c0_43] : memref<10x18x2xf32, #tpu.memory_space<vmem>>, vector<8x16x2xf32>
    %47 = vector.shape_cast %46 : vector<8x16x2xf32> to vector<128x2xf32>
    %c0_44 = arith.constant 0 : index
    %c0_45 = arith.constant 0 : index
    %c0_46 = arith.constant 0 : index
    %48 = vector.load %arg9[%c0_44, %c0_45, %c0_46] : memref<9x2x2xf32, #tpu.memory_space<vmem>>, vector<1x2x2xf32>
    %49 = vector.shape_cast %48 : vector<1x2x2xf32> to vector<2x2xf32>
    %cst_47 = arith.constant dense<0.000000e+00> : vector<128x2xf32>
    %50 = tpu.matmul %47, %49, %cst_47 {dimension_numbers = #tpu.dot_dimension_numbers<[1], [0], [0], [1], [0, 0, 1, 1], [], []>} : vector<128x2xf32>, vector<2x2xf32>, vector<128x2xf32> -> vector<128x2xf32>
    %51 = arith.addf %45, %50 : vector<128x2xf32>
    %c0_48 = arith.constant 0 : index
    %c1_49 = arith.constant 1 : index
    %c0_50 = arith.constant 0 : index
    %52 = vector.load %arg16[%c0_48, %c1_49, %c0_50] : memref<10x18x2xf32, #tpu.memory_space<vmem>>, vector<8x16x2xf32>
    %53 = vector.shape_cast %52 : vector<8x16x2xf32> to vector<128x2xf32>
    %c1_51 = arith.constant 1 : index
    %c0_52 = arith.constant 0 : index
    %c0_53 = arith.constant 0 : index
    %54 = vector.load %arg9[%c1_51, %c0_52, %c0_53] : memref<9x2x2xf32, #tpu.memory_space<vmem>>, vector<1x2x2xf32>
    %55 = vector.shape_cast %54 : vector<1x2x2xf32> to vector<2x2xf32>
    %cst_54 = arith.constant dense<0.000000e+00> : vector<128x2xf32>
    %56 = tpu.matmul %53, %55, %cst_54 {dimension_numbers = #tpu.dot_dimension_numbers<[1], [0], [0], [1], [0, 0, 1, 1], [], []>} : vector<128x2xf32>, vector<2x2xf32>, vector<128x2xf32> -> vector<128x2xf32>
    %57 = arith.addf %51, %56 : vector<128x2xf32>
    %c0_55 = arith.constant 0 : index
    %c2 = arith.constant 2 : index
    %c0_56 = arith.constant 0 : index
    %58 = vector.load %arg16[%c0_55, %c2, %c0_56] : memref<10x18x2xf32, #tpu.memory_space<vmem>>, vector<8x16x2xf32>
    %59 = vector.shape_cast %58 : vector<8x16x2xf32> to vector<128x2xf32>
    %c2_57 = arith.constant 2 : index
    %c0_58 = arith.constant 0 : index
    %c0_59 = arith.constant 0 : index
    %60 = vector.load %arg9[%c2_57, %c0_58, %c0_59] : memref<9x2x2xf32, #tpu.memory_space<vmem>>, vector<1x2x2xf32>
    %61 = vector.shape_cast %60 : vector<1x2x2xf32> to vector<2x2xf32>
    %cst_60 = arith.constant dense<0.000000e+00> : vector<128x2xf32>
    %62 = tpu.matmul %59, %61, %cst_60 {dimension_numbers = #tpu.dot_dimension_numbers<[1], [0], [0], [1], [0, 0, 1, 1], [], []>} : vector<128x2xf32>, vector<2x2xf32>, vector<128x2xf32> -> vector<128x2xf32>
    %63 = arith.addf %57, %62 : vector<128x2xf32>
    %c1_61 = arith.constant 1 : index
    %c0_62 = arith.constant 0 : index
    %c0_63 = arith.constant 0 : index
    %64 = vector.load %arg16[%c1_61, %c0_62, %c0_63] : memref<10x18x2xf32, #tpu.memory_space<vmem>>, vector<8x16x2xf32>
    %65 = vector.shape_cast %64 : vector<8x16x2xf32> to vector<128x2xf32>
    %c3 = arith.constant 3 : index
    %c0_64 = arith.constant 0 : index
    %c0_65 = arith.constant 0 : index
    %66 = vector.load %arg9[%c3, %c0_64, %c0_65] : memref<9x2x2xf32, #tpu.memory_space<vmem>>, vector<1x2x2xf32>
    %67 = vector.shape_cast %66 : vector<1x2x2xf32> to vector<2x2xf32>
    %cst_66 = arith.constant dense<0.000000e+00> : vector<128x2xf32>
    %68 = tpu.matmul %65, %67, %cst_66 {dimension_numbers = #tpu.dot_dimension_numbers<[1], [0], [0], [1], [0, 0, 1, 1], [], []>} : vector<128x2xf32>, vector<2x2xf32>, vector<128x2xf32> -> vector<128x2xf32>
    %69 = arith.addf %63, %68 : vector<128x2xf32>
    %c1_67 = arith.constant 1 : index
    %c1_68 = arith.constant 1 : index
    %c0_69 = arith.constant 0 : index
    %70 = vector.load %arg16[%c1_67, %c1_68, %c0_69] : memref<10x18x2xf32, #tpu.memory_space<vmem>>, vector<8x16x2xf32>
    %71 = vector.shape_cast %70 : vector<8x16x2xf32> to vector<128x2xf32>
    %c4 = arith.constant 4 : index
    %c0_70 = arith.constant 0 : index
    %c0_71 = arith.constant 0 : index
    %72 = vector.load %arg9[%c4, %c0_70, %c0_71] : memref<9x2x2xf32, #tpu.memory_space<vmem>>, vector<1x2x2xf32>
    %73 = vector.shape_cast %72 : vector<1x2x2xf32> to vector<2x2xf32>
    %cst_72 = arith.constant dense<0.000000e+00> : vector<128x2xf32>
    %74 = tpu.matmul %71, %73, %cst_72 {dimension_numbers = #tpu.dot_dimension_numbers<[1], [0], [0], [1], [0, 0, 1, 1], [], []>} : vector<128x2xf32>, vector<2x2xf32>, vector<128x2xf32> -> vector<128x2xf32>
    %75 = arith.addf %69, %74 : vector<128x2xf32>
    %c1_73 = arith.constant 1 : index
    %c2_74 = arith.constant 2 : index
    %c0_75 = arith.constant 0 : index
    %76 = vector.load %arg16[%c1_73, %c2_74, %c0_75] : memref<10x18x2xf32, #tpu.memory_space<vmem>>, vector<8x16x2xf32>
    %77 = vector.shape_cast %76 : vector<8x16x2xf32> to vector<128x2xf32>
    %c5 = arith.constant 5 : index
    %c0_76 = arith.constant 0 : index
    %c0_77 = arith.constant 0 : index
    %78 = vector.load %arg9[%c5, %c0_76, %c0_77] : memref<9x2x2xf32, #tpu.memory_space<vmem>>, vector<1x2x2xf32>
    %79 = vector.shape_cast %78 : vector<1x2x2xf32> to vector<2x2xf32>
    %cst_78 = arith.constant dense<0.000000e+00> : vector<128x2xf32>
    %80 = tpu.matmul %77, %79, %cst_78 {dimension_numbers = #tpu.dot_dimension_numbers<[1], [0], [0], [1], [0, 0, 1, 1], [], []>} : vector<128x2xf32>, vector<2x2xf32>, vector<128x2xf32> -> vector<128x2xf32>
    %81 = arith.addf %75, %80 : vector<128x2xf32>
    %c2_79 = arith.constant 2 : index
    %c0_80 = arith.constant 0 : index
    %c0_81 = arith.constant 0 : index
    %82 = vector.load %arg16[%c2_79, %c0_80, %c0_81] : memref<10x18x2xf32, #tpu.memory_space<vmem>>, vector<8x16x2xf32>
    %83 = vector.shape_cast %82 : vector<8x16x2xf32> to vector<128x2xf32>
    %c6 = arith.constant 6 : index
    %c0_82 = arith.constant 0 : index
    %c0_83 = arith.constant 0 : index
    %84 = vector.load %arg9[%c6, %c0_82, %c0_83] : memref<9x2x2xf32, #tpu.memory_space<vmem>>, vector<1x2x2xf32>
    %85 = vector.shape_cast %84 : vector<1x2x2xf32> to vector<2x2xf32>
    %cst_84 = arith.constant dense<0.000000e+00> : vector<128x2xf32>
    %86 = tpu.matmul %83, %85, %cst_84 {dimension_numbers = #tpu.dot_dimension_numbers<[1], [0], [0], [1], [0, 0, 1, 1], [], []>} : vector<128x2xf32>, vector<2x2xf32>, vector<128x2xf32> -> vector<128x2xf32>
    %87 = arith.addf %81, %86 : vector<128x2xf32>
    %c2_85 = arith.constant 2 : index
    %c1_86 = arith.constant 1 : index
    %c0_87 = arith.constant 0 : index
    %88 = vector.load %arg16[%c2_85, %c1_86, %c0_87] : memref<10x18x2xf32, #tpu.memory_space<vmem>>, vector<8x16x2xf32>
    %89 = vector.shape_cast %88 : vector<8x16x2xf32> to vector<128x2xf32>
    %c7 = arith.constant 7 : index
    %c0_88 = arith.constant 0 : index
    %c0_89 = arith.constant 0 : index
    %90 = vector.load %arg9[%c7, %c0_88, %c0_89] : memref<9x2x2xf32, #tpu.memory_space<vmem>>, vector<1x2x2xf32>
    %91 = vector.shape_cast %90 : vector<1x2x2xf32> to vector<2x2xf32>
    %cst_90 = arith.constant dense<0.000000e+00> : vector<128x2xf32>
    %92 = tpu.matmul %89, %91, %cst_90 {dimension_numbers = #tpu.dot_dimension_numbers<[1], [0], [0], [1], [0, 0, 1, 1], [], []>} : vector<128x2xf32>, vector<2x2xf32>, vector<128x2xf32> -> vector<128x2xf32>
    %93 = arith.addf %87, %92 : vector<128x2xf32>
    %c2_91 = arith.constant 2 : index
    %c2_92 = arith.constant 2 : index
    %c0_93 = arith.constant 0 : index
    %94 = vector.load %arg16[%c2_91, %c2_92, %c0_93] : memref<10x18x2xf32, #tpu.memory_space<vmem>>, vector<8x16x2xf32>
    %95 = vector.shape_cast %94 : vector<8x16x2xf32> to vector<128x2xf32>
    %c8 = arith.constant 8 : index
    %c0_94 = arith.constant 0 : index
    %c0_95 = arith.constant 0 : index
    %96 = vector.load %arg9[%c8, %c0_94, %c0_95] : memref<9x2x2xf32, #tpu.memory_space<vmem>>, vector<1x2x2xf32>
    %97 = vector.shape_cast %96 : vector<1x2x2xf32> to vector<2x2xf32>
    %cst_96 = arith.constant dense<0.000000e+00> : vector<128x2xf32>
    %98 = tpu.matmul %95, %97, %cst_96 {dimension_numbers = #tpu.dot_dimension_numbers<[1], [0], [0], [1], [0, 0, 1, 1], [], []>} : vector<128x2xf32>, vector<2x2xf32>, vector<128x2xf32> -> vector<128x2xf32>
    %99 = arith.addf %93, %98 : vector<128x2xf32>
    %c0_97 = arith.constant 0 : index
    %c0_98 = arith.constant 0 : index
    %100 = vector.load %arg10[%c0_97, %c0_98] : memref<1x2xf32, #tpu.memory_space<vmem>>, vector<1x2xf32>
    %101 = vector.broadcast %100 : vector<1x2xf32> to vector<128x2xf32>
    %102 = arith.addf %99, %101 : vector<128x2xf32>
    %cst_99 = arith.constant 0.000000e+00 : f32
    %103 = vector.broadcast %cst_99 : f32 to vector<128x2xf32>
    %104 = arith.cmpf oge, %102, %103 : vector<128x2xf32>
    %cst_100 = arith.constant 0.00999999977 : f32
    %105 = vector.broadcast %cst_100 : f32 to vector<128x2xf32>
    %106 = arith.mulf %105, %102 : vector<128x2xf32>
    %107 = arith.select %104, %102, %106 : vector<128x2xi1>, vector<128x2xf32>
    %c0_101 = arith.constant 0 : index
    %c0_102 = arith.constant 0 : index
    %108 = vector.load %arg11[%c0_101, %c0_102] : memref<2x4xf32, #tpu.memory_space<vmem>>, vector<2x4xf32>
    %cst_103 = arith.constant dense<0.000000e+00> : vector<128x4xf32>
    %109 = tpu.matmul %107, %108, %cst_103 {dimension_numbers = #tpu.dot_dimension_numbers<[1], [0], [0], [1], [0, 0, 1, 1], [], []>} : vector<128x2xf32>, vector<2x4xf32>, vector<128x4xf32> -> vector<128x4xf32>
    %c0_104 = arith.constant 0 : index
    %c0_105 = arith.constant 0 : index
    %110 = vector.load %arg12[%c0_104, %c0_105] : memref<1x4xf32, #tpu.memory_space<vmem>>, vector<1x4xf32>
    %111 = vector.broadcast %110 : vector<1x4xf32> to vector<128x4xf32>
    %112 = arith.addf %109, %111 : vector<128x4xf32>
    %113 = vector.shape_cast %3 : vector<8x16x4xf32> to vector<128x4xf32>
    %114 = arith.addf %113, %112 : vector<128x4xf32>
    %cst_106 = arith.constant 0.000000e+00 : f32
    %115 = vector.broadcast %cst_106 : f32 to vector<128x4xf32>
    %116 = arith.cmpf oge, %114, %115 : vector<128x4xf32>
    %cst_107 = arith.constant 0.00999999977 : f32
    %117 = vector.broadcast %cst_107 : f32 to vector<128x4xf32>
    %118 = arith.mulf %117, %114 : vector<128x4xf32>
    %119 = arith.select %116, %114, %118 : vector<128x4xi1>, vector<128x4xf32>
    %c0_108 = arith.constant 0 : index
    %c0_109 = arith.constant 0 : index
    %120 = vector.load %arg13[%c0_108, %c0_109] : memref<4x4xf32, #tpu.memory_space<vmem>>, vector<4x4xf32>
    %cst_110 = arith.constant dense<0.000000e+00> : vector<128x4xf32>
    %121 = tpu.matmul %119, %120, %cst_110 {dimension_numbers = #tpu.dot_dimension_numbers<[1], [0], [0], [1], [0, 0, 1, 1], [], []>} : vector<128x4xf32>, vector<4x4xf32>, vector<128x4xf32> -> vector<128x4xf32>
    %c0_111 = arith.constant 0 : index
    %c0_112 = arith.constant 0 : index
    %122 = vector.load %arg14[%c0_111, %c0_112] : memref<1x4xf32, #tpu.memory_space<vmem>>, vector<1x4xf32>
    %123 = vector.broadcast %122 : vector<1x4xf32> to vector<128x4xf32>
    %124 = arith.addf %121, %123 : vector<128x4xf32>
    %125 = arith.negf %124 : vector<128x4xf32>
    %126 = math.exp %125 : vector<128x4xf32>
    %cst_113 = arith.constant 1.000000e+00 : f32
    %127 = vector.broadcast %cst_113 : f32 to vector<128x4xf32>
    %128 = arith.addf %127, %126 : vector<128x4xf32>
    %129 = arith.divf %127, %128 : vector<128x4xf32>
    %c0_114 = arith.constant 0 : index
    %c0_115 = arith.constant 0 : index
    %c0_116 = arith.constant 0 : index
    %c0_117 = arith.constant 0 : index
    %130 = vector.load %arg5[%c0_114, %c0_115, %c0_116, %c0_117] : memref<1x8x16x4xf32, #tpu.memory_space<vmem>>, vector<1x8x16x4xf32>
    %131 = vector.shape_cast %130 : vector<1x8x16x4xf32> to vector<8x16x4xf32>
    %132 = vector.shape_cast %131 : vector<8x16x4xf32> to vector<128x4xf32>
    %133 = arith.mulf %132, %129 : vector<128x4xf32>
    %c0_118 = arith.constant 0 : index
    %c0_119 = arith.constant 0 : index
    %c0_120 = arith.constant 0 : index
    %c0_121 = arith.constant 0 : index
    %134 = vector.load %arg6[%c0_118, %c0_119, %c0_120, %c0_121] : memref<1x8x16x4xf32, #tpu.memory_space<vmem>>, vector<1x8x16x4xf32>
    %135 = vector.shape_cast %134 : vector<1x8x16x4xf32> to vector<8x16x4xf32>
    %136 = vector.shape_cast %135 : vector<8x16x4xf32> to vector<128x4xf32>
    %137 = arith.addf %133, %136 : vector<128x4xf32>
    %138 = vector.shape_cast %137 : vector<128x4xf32> to vector<8x16x4xf32>
    %c0_122 = arith.constant 0 : index
    %c0_123 = arith.constant 0 : index
    %c0_124 = arith.constant 0 : index
    %c0_125 = arith.constant 0 : index
    %139 = vector.load %arg15[%c0_122, %c0_123, %c0_124, %c0_125] : memref<1x8x16x4xf32, #tpu.memory_space<vmem>>, vector<1x8x16x4xf32>
    %140 = vector.shape_cast %139 : vector<1x8x16x4xf32> to vector<8x16x4xf32>
    %141 = vector.shape_cast %138 : vector<8x16x4xf32> to vector<1x8x16x4xf32>
    tpu.vector_store %arg15[%c0_122, %c0_123, %c0_124, %c0_125], %141 {strides = array<i32>} : memref<1x8x16x4xf32, #tpu.memory_space<vmem>>, vector<1x8x16x4xf32>,
    return
  }
  func.func @transform_0(%arg0: i32, %arg1: i32) -> (i32, i32, i32, i32) {
    %c0_i32 = arith.constant 0 : i32
    %c0_i32_0 = arith.constant 0 : i32
    %c0_i32_1 = arith.constant 0 : i32
    return %arg0, %arg1, %c0_i32, %c0_i32_0 : i32, i32, i32, i32
  }
  func.func @transform_1(%arg0: i32, %arg1: i32) -> (i32, i32, i32, i32) {
    %c0_i32 = arith.constant 0 : i32
    %c0_i32_0 = arith.constant 0 : i32
    %c0_i32_1 = arith.constant 0 : i32
    return %arg0, %arg1, %c0_i32, %c0_i32_0 : i32, i32, i32, i32
  }
  func.func @transform_2(%arg0: i32, %arg1: i32) -> (i32, i32, i32, i32) {
    %c0_i32 = arith.constant 0 : i32
    %c0_i32_0 = arith.constant 0 : i32
    %c0_i32_1 = arith.constant 0 : i32
    return %arg0, %arg1, %c0_i32, %c0_i32_0 : i32, i32, i32, i32
  }
  func.func @transform_3(%arg0: i32, %arg1: i32) -> (i32, i32, i32, i32) {
    %c0_i32 = arith.constant 0 : i32
    %c0_i32_0 = arith.constant 0 : i32
    %c0_i32_1 = arith.constant 0 : i32
    return %arg0, %arg1, %c0_i32, %c0_i32_0 : i32, i32, i32, i32
  }
  func.func @transform_4(%arg0: i32, %arg1: i32) -> (i32, i32, i32, i32) {
    %c0_i32 = arith.constant 0 : i32
    %c0_i32_0 = arith.constant 0 : i32
    %c0_i32_1 = arith.constant 0 : i32
    return %arg0, %arg1, %c0_i32, %c0_i32_0 : i32, i32, i32, i32
  }
  func.func @transform_5(%arg0: i32, %arg1: i32) -> (i32, i32) {
    %c0_i32 = arith.constant 0 : i32
    %c0_i32_0 = arith.constant 0 : i32
    %c0_i32_1 = arith.constant 0 : i32
    return %c0_i32, %c0_i32_0 : i32, i32
  }
  func.func @transform_6(%arg0: i32, %arg1: i32) -> (i32, i32) {
    %c0_i32 = arith.constant 0 : i32
    %c0_i32_0 = arith.constant 0 : i32
    %c0_i32_1 = arith.constant 0 : i32
    return %c0_i32, %c0_i32_0 : i32, i32
  }
  func.func @transform_7(%arg0: i32, %arg1: i32) -> (i32, i32, i32) {
    %c0_i32 = arith.constant 0 : i32
    %c0_i32_0 = arith.constant 0 : i32
    %c0_i32_1 = arith.constant 0 : i32
    %c0_i32_2 = arith.constant 0 : i32
    return %c0_i32, %c0_i32_0, %c0_i32_1 : i32, i32, i32
  }
  func.func @transform_8(%arg0: i32, %arg1: i32) -> (i32, i32) {
    %c0_i32 = arith.constant 0 : i32
    %c0_i32_0 = arith.constant 0 : i32
    %c0_i32_1 = arith.constant 0 : i32
    return %c0_i32, %c0_i32_0 : i32, i32
  }
  func.func @transform_9(%arg0: i32, %arg1: i32) -> (i32, i32) {
    %c0_i32 = arith.constant 0 : i32
    %c0_i32_0 = arith.constant 0 : i32
    %c0_i32_1 = arith.constant 0 : i32
    return %c0_i32, %c0_i32_0 : i32, i32
  }
  func.func @transform_10(%arg0: i32, %arg1: i32) -> (i32, i32) {
    %c0_i32 = arith.constant 0 : i32
    %c0_i32_0 = arith.constant 0 : i32
    %c0_i32_1 = arith.constant 0 : i32
    return %c0_i32, %c0_i32_0 : i32, i32
  }
  func.func @transform_11(%arg0: i32, %arg1: i32) -> (i32, i32) {
    %c0_i32 = arith.constant 0 : i32
    %c0_i32_0 = arith.constant 0 : i32
    %c0_i32_1 = arith.constant 0 : i32
    return %c0_i32, %c0_i32_0 : i32, i32
  }
  func.func @transform_12(%arg0: i32, %arg1: i32) -> (i32, i32) {
    %c0_i32 = arith.constant 0 : i32
    %c0_i32_0 = arith.constant 0 : i32
    %c0_i32_1 = arith.constant 0 : i32
    return %c0_i32, %c0_i32_0 : i32, i32
  }
  func.func @transform_13(%arg0: i32, %arg1: i32) -> (i32, i32, i32, i32) {
    %c0_i32 = arith.constant 0 : i32
    %c0_i32_0 = arith.constant 0 : i32
    %c0_i32_1 = arith.constant 0 : i32
    return %arg0, %arg1, %c0_i32, %c0_i32_0 : i32, i32, i32, i32
  }
}

</mosaic_0001>

<llo_original>
// kernel: simplified_attention.6
$region0: #{simplified_attention.6}
  #allocation0 [shape = 'u32[]', space=smem, size = 0x4, offset = 0x4, fixed_abs, tag = 'smem constant byte address 0x4 - core index']
  #allocation1 [shape = 'u32[144,128]{1,0:T(1,128)}', space=vmem, size = 0x12000, scoped, tag = 'internal scratch']
  #allocation2 [shape = 'f32[10,18,2]{2,1,0:T(8,128)}', space=vmem, size = 0x1e000, scoped, tag = 'scratch operand']
  %s0 = inlined_call_operand.hbm [shape: f32[2,16,16,4], index: 0, kind: input, shape index: {}]
  %s1 = inlined_call_operand.hbm [shape: f32[2,2,16,4], index: 1, kind: input, shape index: {}]
  %s2 = inlined_call_operand.hbm [shape: f32[2,2,16,4], index: 2, kind: input, shape index: {}]
  %s3 = inlined_call_operand.hbm [shape: f32[4,2], index: 3, kind: input, shape index: {}]
  %s4 = inlined_call_operand.hbm [shape: f32[1,2], index: 4, kind: input, shape index: {}]
  %s5 = inlined_call_operand.hbm [shape: f32[9,2,2], index: 5, kind: input, shape index: {}]
  %s6 = inlined_call_operand.hbm [shape: f32[1,2], index: 6, kind: input, shape index: {}]
  %s7 = inlined_call_operand.hbm [shape: f32[2,4], index: 7, kind: input, shape index: {}]
  %s8 = inlined_call_operand.hbm [shape: f32[1,4], index: 8, kind: input, shape index: {}]
  %s9 = inlined_call_operand.hbm [shape: f32[2,16,16,4], index: 9, kind: output, shape index: {}]
  %s10 = sld [smem:[#allocation0]]
  $region105: #{simplified_attention.6} parent=0
    _
  %s12 = ssub.s32 1, %s10
  %s13 = scalar_select 0, %s12, %s10
  $region1: #{simplified_attention.6} parent=0
    #allocation3 [shape = 'u8[131072]{0}', space=vmem, size = 0x20000, scoped, tag = 'input window, operand 0']
    #allocation4 [shape = 's32[2]{0}', space=sflag, size = 0x8, scoped, tag = 'scoped memory for simplified_attention.6']
    #allocation5 [shape = 's32[2]{0}', space=sflag, size = 0x8, scoped, tag = 'scoped memory for simplified_attention.6']
    #allocation6 [shape = 'u8[16384]{0}', space=vmem, size = 0x4000, scoped, tag = 'input window, operand 1']
    #allocation7 [shape = 's32[2]{0}', space=sflag, size = 0x8, scoped, tag = 'scoped memory for simplified_attention.6']
    #allocation8 [shape = 'u8[16384]{0}', space=vmem, size = 0x4000, scoped, tag = 'input window, operand 2']
    #allocation9 [shape = 'u8[2048]{0}', space=vmem, size = 0x800, scoped, tag = 'input window, operand 3, single buffered']
    #allocation10 [shape = 's32[1]{0}', space=sflag, size = 0x4, scoped, tag = 'scoped memory for simplified_attention.6']
    #allocation11 [shape = 'u8[512]{0}', space=vmem, size = 0x400, scoped, tag = 'input window, operand 4, single buffered']
    #allocation12 [shape = 'u8[9216]{0}', space=vmem, size = 0x2400, scoped, tag = 'input window, operand 5, single buffered']
    #allocation13 [shape = 's32[1]{0}', space=sflag, size = 0x4, scoped, tag = 'scoped memory for simplified_attention.6']
    #allocation14 [shape = 'u8[512]{0}', space=vmem, size = 0x400, scoped, tag = 'input window, operand 6, single buffered']
    #allocation15 [shape = 'u8[1024]{0}', space=vmem, size = 0x400, scoped, tag = 'input window, operand 7, single buffered']
    #allocation16 [shape = 's32[1]{0}', space=sflag, size = 0x4, scoped, tag = 'scoped memory for simplified_attention.6']
    #allocation17 [shape = 'u8[512]{0}', space=vmem, size = 0x400, scoped, tag = 'input window, operand 8, single buffered']
    #allocation18 [shape = 'u8[131072]{0}', space=vmem, size = 0x20000, scoped, tag = 'output window, operand 0']
    %14 = vsyncpa [#allocation4], 0
    %s15 = scalar_lea.sflag [#allocation4], 1
    %16 = vsyncpa %s15, 0
    %17 = vsyncpa [#allocation7], 0
    %s18 = scalar_lea.sflag [#allocation7], 1
    %19 = vsyncpa %s18, 0
    %20 = vsyncpa [#allocation10], 0
    %21 = vsyncpa [#allocation13], 0
    %22 = vsyncpa [#allocation16], 0
    %23 = vsyncpa [#allocation5], 0
    %s24 = scalar_lea.sflag [#allocation5], 1
    %25 = vsyncpa %s24, 0
    loop: start=0, step=1, limit=6
    $region2: #{simplified_attention.6} parent=1 // loop_pre_header
      _
    $region3: #{simplified_attention.6} parent=1 // loop_header
      %s27 = sphi 0, %s31
      %p28 = scmp.ge.s32.totalorder %s27, 6
      %s34 = sphi 0, %s46
      %s35 = sphi 0, %s42
      %s36 = sphi 0, %s34
      %s37 = sphi 0, %s35
      %s38 = sphi 0, %s36
      %s39 = sphi 0, %s37
      %s51 = sphi 0, %s53
      %s54 = sphi 0, %s51
      %s55 = sphi 0, %s54
      %s71 = sphi 0, %s55
      %s79 = sphi 0, %s81
      %s82 = sphi 0, %s79
      %s83 = sphi 0, %s82
      %s99 = sphi 0, %s83
      %s107 = sphi 0, %s109
      %s110 = sphi 0, %s107
      %s111 = sphi 0, %s110
      %s127 = sphi 0, %s111
      %s131 = sphi 0, %s131
      %s133 = sphi 0, %s131
      %s134 = sphi 0, %s133
      %s148 = sphi 0, %s134
      %s152 = sphi 0, %s152
      %s154 = sphi 0, %s152
      %s155 = sphi 0, %s154
      %s169 = sphi 0, %s155
      %s173 = sphi 0, %s173
      %s175 = sphi 0, %s173
      %s176 = sphi 0, %s175
      %s190 = sphi 0, %s176
      %s194 = sphi 0, %s194
      %s196 = sphi 0, %s194
      %s197 = sphi 0, %s196
      %s211 = sphi 0, %s197
      %s215 = sphi 0, %s215
      %s217 = sphi 0, %s215
      %s218 = sphi 0, %s217
      %s232 = sphi 0, %s218
      %s236 = sphi 0, %s236
      %s238 = sphi 0, %s236
      %s239 = sphi 0, %s238
      %s253 = sphi 0, %s239
      %s261 = sphi 0, %s263
      %s264 = sphi 0, %s261
      %s265 = sphi 0, %s264
      %s281 = sphi 0, %s265
    $region4: #{simplified_attention.6} parent=1 // loop_header_branch
      %30 = sbr.rel (%p28) target = $region8
    $region5: #{simplified_attention.6} parent=1 // loop_body
      %s32 = ssub.s32 %s27, 1
      %s33 = ssub.s32 %s27, 2
      %s40 = sadd.s32 1, %s35
      %p41 = scmp.ge.s32.totalorder %s40, 2
      %s42 = scalar_select %p41, 0, %s40
      %s43 = sadd.s32 1, %s34
      %s44 = scalar_select %p41, %s43, %s34
      %p45 = scmp.ge.s32.totalorder %s44, 2
      %s46 = scalar_select %p45, 0, %s44
      %s47 = ssub.s32 %s34, %s46
      %s48 = ssub.s32 %s35, %s42
      %s49 = sor.u32 %s47, %s48
      %p50 = scmp.eq.s32.totalorder %s49, 0
      %s52 = sadd.s32 %s51, 1
      %s53 = scalar_select %p50, %s51, %s52
      %p56 = pneg %p50
      %p57 = scmp.eq.s32.totalorder %s27, 3
      %p58 = por %p56, %p57
      %p59 = scmp.ne.s32.totalorder %s51, %s54
      %p60 = scmp.eq.s32.totalorder %s27, 0
      %p61 = por %p59, %p60
      %p62 = scmp.ne.s32.totalorder %s51, %s54
      %p63 = scmp.eq.s32.totalorder %s32, 3
      %p64 = por %p62, %p63
      %p65 = scmp.ne.s32.totalorder %s54, %s55
      %p66 = scmp.eq.s32.totalorder %s32, 0
      %p67 = por %p65, %p66
      %p68 = scmp.ne.s32.totalorder %s54, %s55
      %p69 = scmp.eq.s32.totalorder %s33, 3
      %p70 = por %p68, %p69
      %p72 = scmp.ne.s32.totalorder %s55, %s71
      %p73 = scmp.eq.s32.totalorder %s33, 0
      %p74 = por %p72, %p73
      %s75 = ssub.s32 %s34, %s46
      %s76 = ssub.s32 %s35, %s42
      %s77 = sor.u32 %s75, %s76
      %p78 = scmp.eq.s32.totalorder %s77, 0
      %s80 = sadd.s32 %s79, 1
      %s81 = scalar_select %p78, %s79, %s80
      %p84 = pneg %p78
      %p85 = scmp.eq.s32.totalorder %s27, 3
      %p86 = por %p84, %p85
      %p87 = scmp.ne.s32.totalorder %s79, %s82
      %p88 = scmp.eq.s32.totalorder %s27, 0
      %p89 = por %p87, %p88
      %p90 = scmp.ne.s32.totalorder %s79, %s82
      %p91 = scmp.eq.s32.totalorder %s32, 3
      %p92 = por %p90, %p91
      %p93 = scmp.ne.s32.totalorder %s82, %s83
      %p94 = scmp.eq.s32.totalorder %s32, 0
      %p95 = por %p93, %p94
      %p96 = scmp.ne.s32.totalorder %s82, %s83
      %p97 = scmp.eq.s32.totalorder %s33, 3
      %p98 = por %p96, %p97
      %p100 = scmp.ne.s32.totalorder %s83, %s99
      %p101 = scmp.eq.s32.totalorder %s33, 0
      %p102 = por %p100, %p101
      %s103 = ssub.s32 %s34, %s46
      %s104 = ssub.s32 %s35, %s42
      %s105 = sor.u32 %s103, %s104
      %p106 = scmp.eq.s32.totalorder %s105, 0
      %s108 = sadd.s32 %s107, 1
      %s109 = scalar_select %p106, %s107, %s108
      %p112 = pneg %p106
      %p113 = scmp.eq.s32.totalorder %s27, 3
      %p114 = por %p112, %p113
      %p115 = scmp.ne.s32.totalorder %s107, %s110
      %p116 = scmp.eq.s32.totalorder %s27, 0
      %p117 = por %p115, %p116
      %p118 = scmp.ne.s32.totalorder %s107, %s110
      %p119 = scmp.eq.s32.totalorder %s32, 3
      %p120 = por %p118, %p119
      %p121 = scmp.ne.s32.totalorder %s110, %s111
      %p122 = scmp.eq.s32.totalorder %s32, 0
      %p123 = por %p121, %p122
      %p124 = scmp.ne.s32.totalorder %s110, %s111
      %p125 = scmp.eq.s32.totalorder %s33, 3
      %p126 = por %p124, %p125
      %p128 = scmp.ne.s32.totalorder %s111, %s127
      %p129 = scmp.eq.s32.totalorder %s33, 0
      %p130 = por %p128, %p129
      %s132 = sadd.s32 %s131, 1
      %p135 = scmp.eq.s32.totalorder %s27, 3
      %p136 = scmp.ne.s32.totalorder %s131, %s133
      %p137 = scmp.eq.s32.totalorder %s27, 0
      %p138 = por %p136, %p137
      %p139 = scmp.ne.s32.totalorder %s131, %s133
      %p140 = scmp.eq.s32.totalorder %s32, 3
      %p141 = por %p139, %p140
      %p142 = scmp.ne.s32.totalorder %s133, %s134
      %p143 = scmp.eq.s32.totalorder %s32, 0
      %p144 = por %p142, %p143
      %p145 = scmp.ne.s32.totalorder %s133, %s134
      %p146 = scmp.eq.s32.totalorder %s33, 3
      %p147 = por %p145, %p146
      %p149 = scmp.ne.s32.totalorder %s134, %s148
      %p150 = scmp.eq.s32.totalorder %s33, 0
      %p151 = por %p149, %p150
      %s153 = sadd.s32 %s152, 1
      %p156 = scmp.eq.s32.totalorder %s27, 3
      %p157 = scmp.ne.s32.totalorder %s152, %s154
      %p158 = scmp.eq.s32.totalorder %s27, 0
      %p159 = por %p157, %p158
      %p160 = scmp.ne.s32.totalorder %s152, %s154
      %p161 = scmp.eq.s32.totalorder %s32, 3
      %p162 = por %p160, %p161
      %p163 = scmp.ne.s32.totalorder %s154, %s155
      %p164 = scmp.eq.s32.totalorder %s32, 0
      %p165 = por %p163, %p164
      %p166 = scmp.ne.s32.totalorder %s154, %s155
      %p167 = scmp.eq.s32.totalorder %s33, 3
      %p168 = por %p166, %p167
      %p170 = scmp.ne.s32.totalorder %s155, %s169
      %p171 = scmp.eq.s32.totalorder %s33, 0
      %p172 = por %p170, %p171
      %s174 = sadd.s32 %s173, 1
      %p177 = scmp.eq.s32.totalorder %s27, 3
      %p178 = scmp.ne.s32.totalorder %s173, %s175
      %p179 = scmp.eq.s32.totalorder %s27, 0
      %p180 = por %p178, %p179
      %p181 = scmp.ne.s32.totalorder %s173, %s175
      %p182 = scmp.eq.s32.totalorder %s32, 3
      %p183 = por %p181, %p182
      %p184 = scmp.ne.s32.totalorder %s175, %s176
      %p185 = scmp.eq.s32.totalorder %s32, 0
      %p186 = por %p184, %p185
      %p187 = scmp.ne.s32.totalorder %s175, %s176
      %p188 = scmp.eq.s32.totalorder %s33, 3
      %p189 = por %p187, %p188
      %p191 = scmp.ne.s32.totalorder %s176, %s190
      %p192 = scmp.eq.s32.totalorder %s33, 0
      %p193 = por %p191, %p192
      %s195 = sadd.s32 %s194, 1
      %p198 = scmp.eq.s32.totalorder %s27, 3
      %p199 = scmp.ne.s32.totalorder %s194, %s196
      %p200 = scmp.eq.s32.totalorder %s27, 0
      %p201 = por %p199, %p200
      %p202 = scmp.ne.s32.totalorder %s194, %s196
      %p203 = scmp.eq.s32.totalorder %s32, 3
      %p204 = por %p202, %p203
      %p205 = scmp.ne.s32.totalorder %s196, %s197
      %p206 = scmp.eq.s32.totalorder %s32, 0
      %p207 = por %p205, %p206
      %p208 = scmp.ne.s32.totalorder %s196, %s197
      %p209 = scmp.eq.s32.totalorder %s33, 3
      %p210 = por %p208, %p209
      %p212 = scmp.ne.s32.totalorder %s197, %s211
      %p213 = scmp.eq.s32.totalorder %s33, 0
      %p214 = por %p212, %p213
      %s216 = sadd.s32 %s215, 1
      %p219 = scmp.eq.s32.totalorder %s27, 3
      %p220 = scmp.ne.s32.totalorder %s215, %s217
      %p221 = scmp.eq.s32.totalorder %s27, 0
      %p222 = por %p220, %p221
      %p223 = scmp.ne.s32.totalorder %s215, %s217
      %p224 = scmp.eq.s32.totalorder %s32, 3
      %p225 = por %p223, %p224
      %p226 = scmp.ne.s32.totalorder %s217, %s218
      %p227 = scmp.eq.s32.totalorder %s32, 0
      %p228 = por %p226, %p227
      %p229 = scmp.ne.s32.totalorder %s217, %s218
      %p230 = scmp.eq.s32.totalorder %s33, 3
      %p231 = por %p229, %p230
      %p233 = scmp.ne.s32.totalorder %s218, %s232
      %p234 = scmp.eq.s32.totalorder %s33, 0
      %p235 = por %p233, %p234
      %s237 = sadd.s32 %s236, 1
      %p240 = scmp.eq.s32.totalorder %s27, 3
      %p241 = scmp.ne.s32.totalorder %s236, %s238
      %p242 = scmp.eq.s32.totalorder %s27, 0
      %p243 = por %p241, %p242
      %p244 = scmp.ne.s32.totalorder %s236, %s238
      %p245 = scmp.eq.s32.totalorder %s32, 3
      %p246 = por %p244, %p245
      %p247 = scmp.ne.s32.totalorder %s238, %s239
      %p248 = scmp.eq.s32.totalorder %s32, 0
      %p249 = por %p247, %p248
      %p250 = scmp.ne.s32.totalorder %s238, %s239
      %p251 = scmp.eq.s32.totalorder %s33, 3
      %p252 = por %p250, %p251
      %p254 = scmp.ne.s32.totalorder %s239, %s253
      %p255 = scmp.eq.s32.totalorder %s33, 0
      %p256 = por %p254, %p255
      %s257 = ssub.s32 %s34, %s46
      %s258 = ssub.s32 %s35, %s42
      %s259 = sor.u32 %s257, %s258
      %p260 = scmp.eq.s32.totalorder %s259, 0
      %s262 = sadd.s32 %s261, 1
      %s263 = scalar_select %p260, %s261, %s262
      %p266 = pneg %p260
      %p267 = scmp.eq.s32.totalorder %s27, 3
      %p268 = por %p266, %p267
      %p269 = scmp.ne.s32.totalorder %s261, %s264
      %p270 = scmp.eq.s32.totalorder %s27, 0
      %p271 = por %p269, %p270
      %p272 = scmp.ne.s32.totalorder %s261, %s264
      %p273 = scmp.eq.s32.totalorder %s32, 3
      %p274 = por %p272, %p273
      %p275 = scmp.ne.s32.totalorder %s264, %s265
      %p276 = scmp.eq.s32.totalorder %s32, 0
      %p277 = por %p275, %p276
      %p278 = scmp.ne.s32.totalorder %s264, %s265
      %p279 = scmp.eq.s32.totalorder %s33, 3
      %p280 = por %p278, %p279
      %p282 = scmp.ne.s32.totalorder %s265, %s281
      %p283 = scmp.eq.s32.totalorder %s33, 0
      %p284 = por %p282, %p283
      %p285 = scmp.le.s32.totalorder 1, %s27
      %p286 = scmp.lt.s32.totalorder %s27, 5
      %p287 = pnand %p285, %p286
      %p288 = pneg %p287
      // Predicated region
      $region9: #{simplified_attention.6} parent=5 // pred_check
        _
      $region10: #{simplified_attention.6} parent=5 // pred_check_branch
        %290 = sbr.rel (%p287) target = $region12
      $region11: #{simplified_attention.6} parent=5 // pred_region
        %s291 = ssub.s32 %s27, 1
        // Predicated region
        $region13: #{simplified_attention.6} parent=11 // pred_check
          %p292 = pneg %p144
        $region14: #{simplified_attention.6} parent=11 // pred_check_branch
          %294 = sbr.rel (%p292) target = $region16
        $region15: #{simplified_attention.6} parent=11 // pred_region
          %s296 = ssub.s32 64, 64
          %297 = vsyncadd [#allocation10], %s296
          %s299 = sshll.u32 [#allocation9], 4
          %s300 = int_to_ptr.vmem [resolvable:$true] %s299
          %302 = dma.hbm_to_vmem [thread:$0]  %s3, 64, %s300, [#allocation10]
        $region16: #{simplified_attention.6} parent=11 // pred_fallthru
          _
        // Predicated region
        $region17: #{simplified_attention.6} parent=11 // pred_check
          %p303 = pneg %p165
        $region18: #{simplified_attention.6} parent=11 // pred_check_branch
          %305 = sbr.rel (%p303) target = $region20
        $region19: #{simplified_attention.6} parent=11 // pred_region
          %s307 = ssub.s32 16, 16
          %308 = vsyncadd [#allocation10], %s307
          %s310 = sshll.u32 [#allocation11], 4
          %s311 = int_to_ptr.vmem [resolvable:$true] %s310
          %313 = dma.hbm_to_vmem [thread:$0]  %s4, 16, %s311, [#allocation10]
        $region20: #{simplified_attention.6} parent=11 // pred_fallthru
          _
        // Predicated region
        $region21: #{simplified_attention.6} parent=11 // pred_check
          %p314 = pneg %p186
        $region22: #{simplified_attention.6} parent=11 // pred_check_branch
          %316 = sbr.rel (%p314) target = $region24
        $region23: #{simplified_attention.6} parent=11 // pred_region
          %s318 = ssub.s32 288, 288
          %319 = vsyncadd [#allocation13], %s318
          %s320 = sshll.u32 [#allocation12], 4
          %s321 = int_to_ptr.vmem [resolvable:$true] %s320
          %326 = dma.hbm_to_vmem [thread:$0]  %s5, 288, %s321, [#allocation13], 32, 32, 2
        $region24: #{simplified_attention.6} parent=11 // pred_fallthru
          _
        // Predicated region
        $region25: #{simplified_attention.6} parent=11 // pred_check
          %p327 = pneg %p207
        $region26: #{simplified_attention.6} parent=11 // pred_check_branch
          %329 = sbr.rel (%p327) target = $region28
        $region27: #{simplified_attention.6} parent=11 // pred_region
          %s331 = ssub.s32 16, 16
          %332 = vsyncadd [#allocation13], %s331
          %s334 = sshll.u32 [#allocation14], 4
          %s335 = int_to_ptr.vmem [resolvable:$true] %s334
          %337 = dma.hbm_to_vmem [thread:$0]  %s6, 16, %s335, [#allocation13]
        $region28: #{simplified_attention.6} parent=11 // pred_fallthru
          _
        // Predicated region
        $region29: #{simplified_attention.6} parent=11 // pred_check
          %p338 = pneg %p228
        $region30: #{simplified_attention.6} parent=11 // pred_check_branch
          %340 = sbr.rel (%p338) target = $region32
        $region31: #{simplified_attention.6} parent=11 // pred_region
          %s342 = ssub.s32 32, 32
          %343 = vsyncadd [#allocation16], %s342
          %s345 = sshll.u32 [#allocation15], 4
          %s346 = int_to_ptr.vmem [resolvable:$true] %s345
          %348 = dma.hbm_to_vmem [thread:$0]  %s7, 32, %s346, [#allocation16]
        $region32: #{simplified_attention.6} parent=11 // pred_fallthru
          _
        // Predicated region
        $region33: #{simplified_attention.6} parent=11 // pred_check
          %p349 = pneg %p249
        $region34: #{simplified_attention.6} parent=11 // pred_check_branch
          %351 = sbr.rel (%p349) target = $region36
        $region35: #{simplified_attention.6} parent=11 // pred_region
          %s353 = ssub.s32 16, 16
          %354 = vsyncadd [#allocation16], %s353
          %s356 = sshll.u32 [#allocation17], 4
          %s357 = int_to_ptr.vmem [resolvable:$true] %s356
          %359 = dma.hbm_to_vmem [thread:$0]  %s8, 16, %s357, [#allocation16]
        $region36: #{simplified_attention.6} parent=11 // pred_fallthru
          _
      $region12: #{simplified_attention.6} parent=5 // pred_fallthru
        _
      %p360 = scmp.lt.s32.totalorder %s27, 4
      // Predicated region
      $region37: #{simplified_attention.6} parent=5 // pred_check
        %p361 = pneg %p360
      $region38: #{simplified_attention.6} parent=5 // pred_check_branch
        %363 = sbr.rel (%p361) target = $region40
      $region39: #{simplified_attention.6} parent=5 // pred_region
        // Predicated region
        $region41: #{simplified_attention.6} parent=39 // pred_check
          %p364 = pneg %p61
        $region42: #{simplified_attention.6} parent=39 // pred_check_branch
          %366 = sbr.rel (%p364) target = $region44
        $region43: #{simplified_attention.6} parent=39 // pred_region
          %s367 = sand.u32 %s51, 1
          %s368 = scalar_lea.sflag [#allocation4], %s367
          %s369 = sand.u32 %s51, 1
          %s370 = smul.addr %s369, 128
          %s371 = scalar_lea.vmem [#allocation3], %s370
          %s372 = smul.u32 8, %s35
          %s374 = ssub.s32 2048, 2048
          %375 = vsyncadd %s368, %s374
          %s376 = smul.addr %s372, 2
          %s377 = smul.addr %s34, 32
          %s378 = sadd.s32 %s376, %s377
          %s379 = smul.addr %s378, 128
          %s380 = scalar_lea.hbm %s0, %s379
          %s381 = sshll.u32 %s371, 4
          %s382 = int_to_ptr.vmem [resolvable:$true] %s381
          %387 = dma.hbm_to_vmem [thread:$0]  %s380, 2048, %s382, %s368, 128, 128, 8
        $region44: #{simplified_attention.6} parent=39 // pred_fallthru
          _
        // Predicated region
        $region45: #{simplified_attention.6} parent=39 // pred_check
          %p388 = pneg %p89
        $region46: #{simplified_attention.6} parent=39 // pred_check_branch
          %390 = sbr.rel (%p388) target = $region48
        $region47: #{simplified_attention.6} parent=39 // pred_region
          %s391 = sand.u32 %s27, 1
          %s392 = scalar_lea.sflag [#allocation7], %s391
          %s393 = sand.u32 %s79, 1
          %s394 = smul.addr %s393, 16
          %s395 = scalar_lea.vmem [#allocation6], %s394
          %s397 = ssub.s32 256, 256
          %398 = vsyncadd %s392, %s397
          %s399 = smul.addr %s35, 2
          %s400 = smul.addr %s34, 4
          %s401 = sadd.s32 %s399, %s400
          %s402 = smul.addr %s401, 128
          %s403 = scalar_lea.hbm %s1, %s402
          %s404 = sshll.u32 %s395, 4
          %s405 = int_to_ptr.vmem [resolvable:$true] %s404
          %410 = dma.hbm_to_vmem [thread:$0]  %s403, 256, %s405, %s392, 128, 128, 8
        $region48: #{simplified_attention.6} parent=39 // pred_fallthru
          _
        // Predicated region
        $region49: #{simplified_attention.6} parent=39 // pred_check
          %p411 = pneg %p117
        $region50: #{simplified_attention.6} parent=39 // pred_check_branch
          %413 = sbr.rel (%p411) target = $region52
        $region51: #{simplified_attention.6} parent=39 // pred_region
          %s414 = sand.u32 %s27, 1
          %s415 = scalar_lea.sflag [#allocation7], %s414
          %s416 = sand.u32 %s107, 1
          %s417 = smul.addr %s416, 16
          %s418 = scalar_lea.vmem [#allocation8], %s417
          %s420 = ssub.s32 256, 256
          %421 = vsyncadd %s415, %s420
          %s422 = smul.addr %s35, 2
          %s423 = smul.addr %s34, 4
          %s424 = sadd.s32 %s422, %s423
          %s425 = smul.addr %s424, 128
          %s426 = scalar_lea.hbm %s2, %s425
          %s427 = sshll.u32 %s418, 4
          %s428 = int_to_ptr.vmem [resolvable:$true] %s427
          %433 = dma.hbm_to_vmem [thread:$0]  %s426, 256, %s428, %s415, 128, 128, 8
        $region52: #{simplified_attention.6} parent=39 // pred_fallthru
          _
      $region40: #{simplified_attention.6} parent=5 // pred_fallthru
        _
      %p434 = scmp.le.s32.totalorder 1, %s27
      %p435 = scmp.lt.s32.totalorder %s27, 5
      %p436 = pnand %p434, %p435
      %p437 = pneg %p436
      // Predicated region
      $region53: #{simplified_attention.6} parent=5 // pred_check
        _
      $region54: #{simplified_attention.6} parent=5 // pred_check_branch
        %439 = sbr.rel (%p436) target = $region56
      $region55: #{simplified_attention.6} parent=5 // pred_region
        %s440 = ssub.s32 %s27, 1
        %s441 = sand.u32 %s54, 1
        %s442 = scalar_lea.sflag [#allocation4], %s441
        %s443 = sand.u32 %s54, 1
        %s444 = smul.addr %s443, 128
        %s445 = scalar_lea.vmem [#allocation3], %s444
        // Predicated region
        $region57: #{simplified_attention.6} parent=55 // pred_check
          %p446 = pneg %p67
        $region58: #{simplified_attention.6} parent=55 // pred_check_branch
          %448 = sbr.rel (%p446) target = $region60
        $region59: #{simplified_attention.6} parent=55 // pred_region
          %449 = dma.done %s442, 2048
        $region60: #{simplified_attention.6} parent=55 // pred_fallthru
          _
        %s450 = sand.u32 %s32, 1
        %s451 = scalar_lea.sflag [#allocation7], %s450
        %s452 = sand.u32 %s82, 1
        %s453 = smul.addr %s452, 16
        %s454 = scalar_lea.vmem [#allocation6], %s453
        // Predicated region
        $region61: #{simplified_attention.6} parent=55 // pred_check
          %p455 = pneg %p95
        $region62: #{simplified_attention.6} parent=55 // pred_check_branch
          %457 = sbr.rel (%p455) target = $region64
        $region63: #{simplified_attention.6} parent=55 // pred_region
          %458 = dma.done %s451, 256
        $region64: #{simplified_attention.6} parent=55 // pred_fallthru
          _
        %s459 = sand.u32 %s32, 1
        %s460 = scalar_lea.sflag [#allocation7], %s459
        %s461 = sand.u32 %s110, 1
        %s462 = smul.addr %s461, 16
        %s463 = scalar_lea.vmem [#allocation8], %s462
        // Predicated region
        $region65: #{simplified_attention.6} parent=55 // pred_check
          %p464 = pneg %p123
        $region66: #{simplified_attention.6} parent=55 // pred_check_branch
          %466 = sbr.rel (%p464) target = $region68
        $region67: #{simplified_attention.6} parent=55 // pred_region
          %467 = dma.done %s460, 256
        $region68: #{simplified_attention.6} parent=55 // pred_fallthru
          _
        // Predicated region
        $region69: #{simplified_attention.6} parent=55 // pred_check
          %p468 = pneg %p144
        $region70: #{simplified_attention.6} parent=55 // pred_check_branch
          %470 = sbr.rel (%p468) target = $region72
        $region71: #{simplified_attention.6} parent=55 // pred_region
          %471 = dma.done [#allocation10], 64
        $region72: #{simplified_attention.6} parent=55 // pred_fallthru
          _
        // Predicated region
        $region73: #{simplified_attention.6} parent=55 // pred_check
          %p472 = pneg %p165
        $region74: #{simplified_attention.6} parent=55 // pred_check_branch
          %474 = sbr.rel (%p472) target = $region76
        $region75: #{simplified_attention.6} parent=55 // pred_region
          %475 = dma.done [#allocation10], 16
        $region76: #{simplified_attention.6} parent=55 // pred_fallthru
          _
        // Predicated region
        $region77: #{simplified_attention.6} parent=55 // pred_check
          %p476 = pneg %p186
        $region78: #{simplified_attention.6} parent=55 // pred_check_branch
          %478 = sbr.rel (%p476) target = $region80
        $region79: #{simplified_attention.6} parent=55 // pred_region
          %479 = dma.done [#allocation13], 288
        $region80: #{simplified_attention.6} parent=55 // pred_fallthru
          _
        // Predicated region
        $region81: #{simplified_attention.6} parent=55 // pred_check
          %p480 = pneg %p207
        $region82: #{simplified_attention.6} parent=55 // pred_check_branch
          %482 = sbr.rel (%p480) target = $region84
        $region83: #{simplified_attention.6} parent=55 // pred_region
          %483 = dma.done [#allocation13], 16
        $region84: #{simplified_attention.6} parent=55 // pred_fallthru
          _
        // Predicated region
        $region85: #{simplified_attention.6} parent=55 // pred_check
          %p484 = pneg %p228
        $region86: #{simplified_attention.6} parent=55 // pred_check_branch
          %486 = sbr.rel (%p484) target = $region88
        $region87: #{simplified_attention.6} parent=55 // pred_region
          %487 = dma.done [#allocation16], 32
        $region88: #{simplified_attention.6} parent=55 // pred_fallthru
          _
        // Predicated region
        $region89: #{simplified_attention.6} parent=55 // pred_check
          %p488 = pneg %p249
        $region90: #{simplified_attention.6} parent=55 // pred_check_branch
          %490 = sbr.rel (%p488) target = $region92
        $region91: #{simplified_attention.6} parent=55 // pred_region
          %491 = dma.done [#allocation16], 16
        $region92: #{simplified_attention.6} parent=55 // pred_fallthru
          _
        %s492 = sand.u32 %s54, 1
        %s493 = scalar_lea.sflag [#allocation4], %s492
        %s494 = sand.u32 %s54, 1
        %s495 = smul.addr %s494, 128
        %s496 = scalar_lea.vmem [#allocation3], %s495
        %p497 = pneg %p67
        %p498 = pneg %p64
        %s499 = sand.u32 %s32, 1
        %s500 = scalar_lea.sflag [#allocation7], %s499
        %s501 = sand.u32 %s82, 1
        %s502 = smul.addr %s501, 16
        %s503 = scalar_lea.vmem [#allocation6], %s502
        %p504 = pneg %p95
        %p505 = pneg %p92
        %s506 = sand.u32 %s32, 1
        %s507 = scalar_lea.sflag [#allocation7], %s506
        %s508 = sand.u32 %s110, 1
        %s509 = smul.addr %s508, 16
        %s510 = scalar_lea.vmem [#allocation8], %s509
        %p511 = pneg %p123
        %p512 = pneg %p120
        %p513 = pneg %p144
        %p514 = pneg %p141
        %p515 = pneg %p165
        %p516 = pneg %p162
        %p517 = pneg %p186
        %p518 = pneg %p183
        %p519 = pneg %p207
        %p520 = pneg %p204
        %p521 = pneg %p228
        %p522 = pneg %p225
        %p523 = pneg %p249
        %p524 = pneg %p246
        %p525 = pneg %p277
        %p526 = pneg %p274
        %s527 = sand.u32 %s264, 1
        %s528 = scalar_lea.sflag [#allocation5], %s527
        %s529 = sand.u32 %s264, 1
        %s530 = smul.addr %s529, 128
        %s531 = scalar_lea.vmem [#allocation18], %s530
        %s532 = smul.u32 8, %s37
        %s533 = smul.u32 8, %s37
        %v534 = vld [vmem:[#allocation9] sm:$0xf]
        %v535 = vld [vmem:[#allocation11] sm:$0x1]
        %v536 = vld [vmem:[%s445] sm:$0xff]
        %v537 = vld [vmem:[%s445 + $0x8] sm:$0xff]
        %v538 = vld [vmem:[%s445 + $0x10] sm:$0xff]
        %v539 = vld [vmem:[%s445 + $0x18] sm:$0xff]
        %v540 = vld [vmem:[%s445 + $0x20] sm:$0xff]
        %v541 = vld [vmem:[%s445 + $0x28] sm:$0xff]
        %v542 = vld [vmem:[%s445 + $0x30] sm:$0xff]
        %v543 = vld [vmem:[%s445 + $0x38] sm:$0xff]
        %v544 = vld [vmem:[%s445 + $0x40] sm:$0xff]
        %v545 = vld [vmem:[%s445 + $0x48] sm:$0xff]
        %v546 = vld [vmem:[%s445 + $0x50] sm:$0xff]
        %v547 = vld [vmem:[%s445 + $0x58] sm:$0xff]
        %v548 = vld [vmem:[%s445 + $0x60] sm:$0xff]
        %v549 = vld [vmem:[%s445 + $0x68] sm:$0xff]
        %v550 = vld [vmem:[%s445 + $0x70] sm:$0xff]
        %v551 = vld [vmem:[%s445 + $0x78] sm:$0xff]
        %v553 = vlaneseq
        %v554 = vshrl.u32 %v553, 7
        %v555 = vsub.s32 0, %v554
        %v556 = vrot.slane %v535, %v555
        %vm558 = vcmask 31744
        %v560 = vsel %vm558, %v536, 0
        %v563 = vsel %vm558, %v537, 0
        %v566 = vsel %vm558, %v538, 0
        %v569 = vsel %vm558, %v539, 0
        %v572 = vsel %vm558, %v540, 0
        %v575 = vsel %vm558, %v541, 0
        %v578 = vsel %vm558, %v542, 0
        %v581 = vsel %vm558, %v543, 0
        %v584 = vsel %vm558, %v544, 0
        %v587 = vsel %vm558, %v545, 0
        %v590 = vsel %vm558, %v546, 0
        %v593 = vsel %vm558, %v547, 0
        %v596 = vsel %vm558, %v548, 0
        %v599 = vsel %vm558, %v549, 0
        %v602 = vsel %vm558, %v550, 0
        %v605 = vsel %vm558, %v551, 0
        %vm607 = vcmask 1043456
        %v609 = vsel %vm607, %v534, 0
        %611 = vmatprep.subr.mxu0 0.0
        %612 = vmatpush1.msra.mxu0 %v609
        %613 = vmatprep.subr.mxu0 0.0
        %614 = vmatpush1.msra.mxu0 0.0
        %615 = vmatprep.subr.mxu0 0.0
        %616 = vmatpush1.msra.mxu0 0.0
        %617 = vmatprep.subr.mxu0 0.0
        %618 = vmatpush1.msra.mxu0 0.0
        %619 = vmatprep.subr.mxu0 0.0
        %620 = vmatpush1.msra.mxu0 0.0
        %621 = vmatprep.subr.mxu0 0.0
        %622 = vmatpush1.msra.mxu0 0.0
        %623 = vmatprep.subr.mxu0 0.0
        %624 = vmatpush1.msra.mxu0 0.0
        %625 = vmatprep.subr.mxu0 0.0
        %626 = vmatpush1.msra.mxu0 0.0
        %627 = vmatprep.subr.mxu0 0.0
        %628 = vmatpush1.msra.mxu0 0.0
        %629 = vmatprep.subr.mxu0 0.0
        %630 = vmatpush1.msra.mxu0 0.0
        %631 = vmatprep.subr.mxu0 0.0
        %632 = vmatpush1.msra.mxu0 0.0
        %633 = vmatprep.subr.mxu0 0.0
        %634 = vmatpush1.msra.mxu0 0.0
        %635 = vmatprep.subr.mxu0 0.0
        %636 = vmatpush1.msra.mxu0 0.0
        %637 = vmatprep.subr.mxu0 0.0
        %638 = vmatpush1.msra.mxu0 0.0
        %639 = vmatprep.subr.mxu0 0.0
        %640 = vmatpush1.msra.mxu0 0.0
        %641 = vmatprep.subr.mxu0 0.0
        %642 = vmatpush1.msra.mxu0 0.0
        %643 = vmatprep.subr.mxu0 0.0
        %644 = vmatpush1.msra.mxu0 0.0
        %645 = vmatprep.subr.mxu0 0.0
        %646 = vmatpush1.msra.mxu0 0.0
        %647 = vmatprep.subr.mxu0 0.0
        %648 = vmatpush1.msra.mxu0 0.0
        %649 = vmatprep.subr.mxu0 0.0
        %650 = vmatpush1.msra.mxu0 0.0
        %651 = vmatprep.subr.mxu0 0.0
        %652 = vmatpush1.msra.mxu0 0.0
        %653 = vmatprep.subr.mxu0 0.0
        %654 = vmatpush1.msra.mxu0 0.0
        %655 = vmatprep.subr.mxu0 0.0
        %656 = vmatpush1.msra.mxu0 0.0
        %657 = vmatprep.subr.mxu0 0.0
        %658 = vmatpush1.msra.mxu0 0.0
        %659 = vmatprep.subr.mxu0 0.0
        %660 = vmatpush1.msra.mxu0 0.0
        %661 = vmatprep.subr.mxu0 0.0
        %662 = vmatpush1.msra.mxu0 0.0
        %663 = vmatprep.subr.mxu0 0.0
        %664 = vmatpush1.msra.mxu0 0.0
        %665 = vmatprep.subr.mxu0 0.0
        %666 = vmatpush1.msra.mxu0 0.0
        %667 = vmatprep.subr.mxu0 0.0
        %668 = vmatpush1.msra.mxu0 0.0
        %669 = vmatprep.subr.mxu0 0.0
        %670 = vmatpush1.msra.mxu0 0.0
        %671 = vmatprep.subr.mxu0 0.0
        %672 = vmatpush1.msra.mxu0 0.0
        %673 = vmatprep.subr.mxu0 0.0
        %674 = vmatpush1.msra.mxu0 0.0
        %675 = vmatprep.mubr.f32.mxu0 0.0
        %676 = vmatmul.mubr.f32.gmra.mrb[0].mxu0 %v560
        %v677 = vpop.f32.mrb[0].mxu0
        %v678 = vadd.f32 %v556, %v677
        %v679 = vpop.f32.mrb[0].mxu0
        %680 = vmatprep.mubr.f32.mxu0 0.0
        %681 = vmatmul.mubr.f32.gmra.mrb[0].mxu0 %v563
        %v682 = vpop.f32.mrb[0].mxu0
        %v683 = vadd.f32 %v556, %v682
        %v684 = vpop.f32.mrb[0].mxu0
        %685 = vmatprep.mubr.f32.mxu0 0.0
        %686 = vmatmul.mubr.f32.gmra.mrb[0].mxu0 %v566
        %v687 = vpop.f32.mrb[0].mxu0
        %v688 = vadd.f32 %v556, %v687
        %v689 = vpop.f32.mrb[0].mxu0
        %690 = vmatprep.mubr.f32.mxu0 0.0
        %691 = vmatmul.mubr.f32.gmra.mrb[0].mxu0 %v569
        %v692 = vpop.f32.mrb[0].mxu0
        %v693 = vadd.f32 %v556, %v692
        %v694 = vpop.f32.mrb[0].mxu0
        %695 = vmatprep.mubr.f32.mxu0 0.0
        %696 = vmatmul.mubr.f32.gmra.mrb[0].mxu0 %v572
        %v697 = vpop.f32.mrb[0].mxu0
        %v698 = vadd.f32 %v556, %v697
        %v699 = vpop.f32.mrb[0].mxu0
        %700 = vmatprep.mubr.f32.mxu0 0.0
        %701 = vmatmul.mubr.f32.gmra.mrb[0].mxu0 %v575
        %v702 = vpop.f32.mrb[0].mxu0
        %v703 = vadd.f32 %v556, %v702
        %v704 = vpop.f32.mrb[0].mxu0
        %705 = vmatprep.mubr.f32.mxu0 0.0
        %706 = vmatmul.mubr.f32.gmra.mrb[0].mxu0 %v578
        %v707 = vpop.f32.mrb[0].mxu0
        %v708 = vadd.f32 %v556, %v707
        %v709 = vpop.f32.mrb[0].mxu0
        %710 = vmatprep.mubr.f32.mxu0 0.0
        %711 = vmatmul.mubr.f32.gmra.mrb[0].mxu0 %v581
        %v712 = vpop.f32.mrb[0].mxu0
        %v713 = vadd.f32 %v556, %v712
        %v714 = vpop.f32.mrb[0].mxu0
        %715 = vmatprep.mubr.f32.mxu0 0.0
        %716 = vmatmul.mubr.f32.gmra.mrb[0].mxu0 %v584
        %v717 = vpop.f32.mrb[0].mxu0
        %v718 = vadd.f32 %v556, %v717
        %v719 = vpop.f32.mrb[0].mxu0
        %720 = vmatprep.mubr.f32.mxu0 0.0
        %721 = vmatmul.mubr.f32.gmra.mrb[0].mxu0 %v587
        %v722 = vpop.f32.mrb[0].mxu0
        %v723 = vadd.f32 %v556, %v722
        %v724 = vpop.f32.mrb[0].mxu0
        %725 = vmatprep.mubr.f32.mxu0 0.0
        %726 = vmatmul.mubr.f32.gmra.mrb[0].mxu0 %v590
        %v727 = vpop.f32.mrb[0].mxu0
        %v728 = vadd.f32 %v556, %v727
        %v729 = vpop.f32.mrb[0].mxu0
        %730 = vmatprep.mubr.f32.mxu0 0.0
        %731 = vmatmul.mubr.f32.gmra.mrb[0].mxu0 %v593
        %v732 = vpop.f32.mrb[0].mxu0
        %v733 = vadd.f32 %v556, %v732
        %v734 = vpop.f32.mrb[0].mxu0
        %735 = vmatprep.mubr.f32.mxu0 0.0
        %736 = vmatmul.mubr.f32.gmra.mrb[0].mxu0 %v596
        %v737 = vpop.f32.mrb[0].mxu0
        %v738 = vadd.f32 %v556, %v737
        %v739 = vpop.f32.mrb[0].mxu0
        %740 = vmatprep.mubr.f32.mxu0 0.0
        %741 = vmatmul.mubr.f32.gmra.mrb[0].mxu0 %v599
        %v742 = vpop.f32.mrb[0].mxu0
        %v743 = vadd.f32 %v556, %v742
        %v744 = vpop.f32.mrb[0].mxu0
        %745 = vmatprep.mubr.f32.mxu0 0.0
        %746 = vmatmul.mubr.f32.gmra.mrb[0].mxu0 %v602
        %v747 = vpop.f32.mrb[0].mxu0
        %v748 = vadd.f32 %v556, %v747
        %v749 = vpop.f32.mrb[0].mxu0
        %750 = vmatprep.mubr.f32.mxu0 0.0
        %751 = vmatmul.mubr.f32.gmra.mrb[0].mxu0 %v605
        %v752 = vpop.f32.mrb[0].mxu0
        %v753 = vadd.f32 %v556, %v752
        %v754 = vpop.f32.mrb[0].mxu0
        %755 = vdwg.mxu0
        %vm756 = vcmp.ge.f32.partialorder %v678, 0.0
        %vm757 = vcmp.ge.f32.partialorder %v683, 0.0
        %vm758 = vcmp.ge.f32.partialorder %v688, 0.0
        %vm759 = vcmp.ge.f32.partialorder %v693, 0.0
        %vm760 = vcmp.ge.f32.partialorder %v698, 0.0
        %vm761 = vcmp.ge.f32.partialorder %v703, 0.0
        %vm762 = vcmp.ge.f32.partialorder %v708, 0.0
        %vm763 = vcmp.ge.f32.partialorder %v713, 0.0
        %vm764 = vcmp.ge.f32.partialorder %v718, 0.0
        %vm765 = vcmp.ge.f32.partialorder %v723, 0.0
        %vm766 = vcmp.ge.f32.partialorder %v728, 0.0
        %vm767 = vcmp.ge.f32.partialorder %v733, 0.0
        %vm768 = vcmp.ge.f32.partialorder %v738, 0.0
        %vm769 = vcmp.ge.f32.partialorder %v743, 0.0
        %vm770 = vcmp.ge.f32.partialorder %v748, 0.0
        %vm771 = vcmp.ge.f32.partialorder %v753, 0.0
        %v772 = vmul.f32 %v678, 0.01
        %v773 = vmul.f32 %v683, 0.01
        %v774 = vmul.f32 %v688, 0.01
        %v775 = vmul.f32 %v693, 0.01
        %v776 = vmul.f32 %v698, 0.01
        %v777 = vmul.f32 %v703, 0.01
        %v778 = vmul.f32 %v708, 0.01
        %v779 = vmul.f32 %v713, 0.01
        %v780 = vmul.f32 %v718, 0.01
        %v781 = vmul.f32 %v723, 0.01
        %v782 = vmul.f32 %v728, 0.01
        %v783 = vmul.f32 %v733, 0.01
        %v784 = vmul.f32 %v738, 0.01
        %v785 = vmul.f32 %v743, 0.01
        %v786 = vmul.f32 %v748, 0.01
        %v787 = vmul.f32 %v753, 0.01
        %v788 = vsel %vm756, %v678, %v772
        %v789 = vsel %vm757, %v683, %v773
        %v790 = vsel %vm758, %v688, %v774
        %v791 = vsel %vm759, %v693, %v775
        %v792 = vsel %vm760, %v698, %v776
        %v793 = vsel %vm761, %v703, %v777
        %v794 = vsel %vm762, %v708, %v778
        %v795 = vsel %vm763, %v713, %v779
        %v796 = vsel %vm764, %v718, %v780
        %v797 = vsel %vm765, %v723, %v781
        %v798 = vsel %vm766, %v728, %v782
        %v799 = vsel %vm767, %v733, %v783
        %v800 = vsel %vm768, %v738, %v784
        %v801 = vsel %vm769, %v743, %v785
        %v802 = vsel %vm770, %v748, %v786
        %v803 = vsel %vm771, %v753, %v787
        %s804 = scalar_lea.vmem [#allocation2], 24
        %vm805 = vcmask 15360
        %806 = vst.msk [vmem:[%s804 + $0x1] sm:$0xff] %vm805, %v788
        %807 = vst.msk [vmem:[%s804 + $0x9] sm:$0xff] %vm805, %v789
        %808 = vst.msk [vmem:[%s804 + $0x19] sm:$0xff] %vm805, %v790
        %809 = vst.msk [vmem:[%s804 + $0x21] sm:$0xff] %vm805, %v791
        %810 = vst.msk [vmem:[%s804 + $0x31] sm:$0xff] %vm805, %v792
        %811 = vst.msk [vmem:[%s804 + $0x39] sm:$0xff] %vm805, %v793
        %812 = vst.msk [vmem:[%s804 + $0x49] sm:$0xff] %vm805, %v794
        %813 = vst.msk [vmem:[%s804 + $0x51] sm:$0xff] %vm805, %v795
        %814 = vst.msk [vmem:[%s804 + $0x61] sm:$0xff] %vm805, %v796
        %815 = vst.msk [vmem:[%s804 + $0x69] sm:$0xff] %vm805, %v797
        %816 = vst.msk [vmem:[%s804 + $0x79] sm:$0xff] %vm805, %v798
        %817 = vst.msk [vmem:[%s804 + $0x81] sm:$0xff] %vm805, %v799
        %818 = vst.msk [vmem:[%s804 + $0x91] sm:$0xff] %vm805, %v800
        %819 = vst.msk [vmem:[%s804 + $0x99] sm:$0xff] %vm805, %v801
        %820 = vst.msk [vmem:[%s804 + $0xa9] sm:$0xff] %vm805, %v802
        %821 = vst.msk [vmem:[%s804 + $0xb1] sm:$0xff] %vm805, %v803
        %v822 = vld [vmem:[%s454] sm:$0xff]
        %v823 = vld [vmem:[%s454 + $0x8] sm:$0xff]
        %v825 = vsel %vm558, %v822, 0
        %v828 = vsel %vm558, %v823, 0
        %830 = vmatprep.subr.mxu0 0.0
        %831 = vmatpush1.msra.mxu0 %v609
        %832 = vmatprep.subr.mxu0 0.0
        %833 = vmatpush1.msra.mxu0 0.0
        %834 = vmatprep.subr.mxu0 0.0
        %835 = vmatpush1.msra.mxu0 0.0
        %836 = vmatprep.subr.mxu0 0.0
        %837 = vmatpush1.msra.mxu0 0.0
        %838 = vmatprep.subr.mxu0 0.0
        %839 = vmatpush1.msra.mxu0 0.0
        %840 = vmatprep.subr.mxu0 0.0
        %841 = vmatpush1.msra.mxu0 0.0
        %842 = vmatprep.subr.mxu0 0.0
        %843 = vmatpush1.msra.mxu0 0.0
        %844 = vmatprep.subr.mxu0 0.0
        %845 = vmatpush1.msra.mxu0 0.0
        %846 = vmatprep.subr.mxu0 0.0
        %847 = vmatpush1.msra.mxu0 0.0
        %848 = vmatprep.subr.mxu0 0.0
        %849 = vmatpush1.msra.mxu0 0.0
        %850 = vmatprep.subr.mxu0 0.0
        %851 = vmatpush1.msra.mxu0 0.0
        %852 = vmatprep.subr.mxu0 0.0
        %853 = vmatpush1.msra.mxu0 0.0
        %854 = vmatprep.subr.mxu0 0.0
        %855 = vmatpush1.msra.mxu0 0.0
        %856 = vmatprep.subr.mxu0 0.0
        %857 = vmatpush1.msra.mxu0 0.0
        %858 = vmatprep.subr.mxu0 0.0
        %859 = vmatpush1.msra.mxu0 0.0
        %860 = vmatprep.subr.mxu0 0.0
        %861 = vmatpush1.msra.mxu0 0.0
        %862 = vmatprep.subr.mxu0 0.0
        %863 = vmatpush1.msra.mxu0 0.0
        %864 = vmatprep.subr.mxu0 0.0
        %865 = vmatpush1.msra.mxu0 0.0
        %866 = vmatprep.subr.mxu0 0.0
        %867 = vmatpush1.msra.mxu0 0.0
        %868 = vmatprep.subr.mxu0 0.0
        %869 = vmatpush1.msra.mxu0 0.0
        %870 = vmatprep.subr.mxu0 0.0
        %871 = vmatpush1.msra.mxu0 0.0
        %872 = vmatprep.subr.mxu0 0.0
        %873 = vmatpush1.msra.mxu0 0.0
        %874 = vmatprep.subr.mxu0 0.0
        %875 = vmatpush1.msra.mxu0 0.0
        %876 = vmatprep.subr.mxu0 0.0
        %877 = vmatpush1.msra.mxu0 0.0
        %878 = vmatprep.subr.mxu0 0.0
        %879 = vmatpush1.msra.mxu0 0.0
        %880 = vmatprep.subr.mxu0 0.0
        %881 = vmatpush1.msra.mxu0 0.0
        %882 = vmatprep.subr.mxu0 0.0
        %883 = vmatpush1.msra.mxu0 0.0
        %884 = vmatprep.subr.mxu0 0.0
        %885 = vmatpush1.msra.mxu0 0.0
        %886 = vmatprep.subr.mxu0 0.0
        %887 = vmatpush1.msra.mxu0 0.0
        %888 = vmatprep.subr.mxu0 0.0
        %889 = vmatpush1.msra.mxu0 0.0
        %890 = vmatprep.subr.mxu0 0.0
        %891 = vmatpush1.msra.mxu0 0.0
        %892 = vmatprep.subr.mxu0 0.0
        %893 = vmatpush1.msra.mxu0 0.0
        %894 = vmatprep.mubr.f32.mxu0 0.0
        %895 = vmatmul.mubr.f32.gmra.mrb[0].mxu0 %v825
        %v896 = vpop.f32.mrb[0].mxu0
        %v897 = vadd.f32 %v556, %v896
        %v898 = vpop.f32.mrb[0].mxu0
        %899 = vmatprep.mubr.f32.mxu0 0.0
        %900 = vmatmul.mubr.f32.gmra.mrb[0].mxu0 %v828
        %v901 = vpop.f32.mrb[0].mxu0
        %v902 = vadd.f32 %v556, %v901
        %v903 = vpop.f32.mrb[0].mxu0
        %904 = vdwg.mxu0
        %vm905 = vcmp.ge.f32.partialorder %v897, 0.0
        %vm906 = vcmp.ge.f32.partialorder %v902, 0.0
        %v907 = vmul.f32 %v897, 0.01
        %v908 = vmul.f32 %v902, 0.01
        %v909 = vsel %vm905, %v897, %v907
        %v910 = vsel %vm906, %v902, %v908
        %911 = vst.msk [vmem:[#allocation2 + $0x1] sm:$0xff] %vm805, %v909
        %912 = vst.msk [vmem:[#allocation2 + $0x9] sm:$0xff] %vm805, %v910
        %v913 = vld [vmem:[%s463] sm:$0xff]
        %v914 = vld [vmem:[%s463 + $0x8] sm:$0xff]
        %v916 = vsel %vm558, %v913, 0
        %v919 = vsel %vm558, %v914, 0
        %921 = vmatprep.subr.mxu0 0.0
        %922 = vmatpush1.msra.mxu0 %v609
        %923 = vmatprep.subr.mxu0 0.0
        %924 = vmatpush1.msra.mxu0 0.0
        %925 = vmatprep.subr.mxu0 0.0
        %926 = vmatpush1.msra.mxu0 0.0
        %927 = vmatprep.subr.mxu0 0.0
        %928 = vmatpush1.msra.mxu0 0.0
        %929 = vmatprep.subr.mxu0 0.0
        %930 = vmatpush1.msra.mxu0 0.0
        %931 = vmatprep.subr.mxu0 0.0
        %932 = vmatpush1.msra.mxu0 0.0
        %933 = vmatprep.subr.mxu0 0.0
        %934 = vmatpush1.msra.mxu0 0.0
        %935 = vmatprep.subr.mxu0 0.0
        %936 = vmatpush1.msra.mxu0 0.0
        %937 = vmatprep.subr.mxu0 0.0
        %938 = vmatpush1.msra.mxu0 0.0
        %939 = vmatprep.subr.mxu0 0.0
        %940 = vmatpush1.msra.mxu0 0.0
        %941 = vmatprep.subr.mxu0 0.0
        %942 = vmatpush1.msra.mxu0 0.0
        %943 = vmatprep.subr.mxu0 0.0
        %944 = vmatpush1.msra.mxu0 0.0
        %945 = vmatprep.subr.mxu0 0.0
        %946 = vmatpush1.msra.mxu0 0.0
        %947 = vmatprep.subr.mxu0 0.0
        %948 = vmatpush1.msra.mxu0 0.0
        %949 = vmatprep.subr.mxu0 0.0
        %950 = vmatpush1.msra.mxu0 0.0
        %951 = vmatprep.subr.mxu0 0.0
        %952 = vmatpush1.msra.mxu0 0.0
        %953 = vmatprep.subr.mxu0 0.0
        %954 = vmatpush1.msra.mxu0 0.0
        %955 = vmatprep.subr.mxu0 0.0
        %956 = vmatpush1.msra.mxu0 0.0
        %957 = vmatprep.subr.mxu0 0.0
        %958 = vmatpush1.msra.mxu0 0.0
        %959 = vmatprep.subr.mxu0 0.0
        %960 = vmatpush1.msra.mxu0 0.0
        %961 = vmatprep.subr.mxu0 0.0
        %962 = vmatpush1.msra.mxu0 0.0
        %963 = vmatprep.subr.mxu0 0.0
        %964 = vmatpush1.msra.mxu0 0.0
        %965 = vmatprep.subr.mxu0 0.0
        %966 = vmatpush1.msra.mxu0 0.0
        %967 = vmatprep.subr.mxu0 0.0
        %968 = vmatpush1.msra.mxu0 0.0
        %969 = vmatprep.subr.mxu0 0.0
        %970 = vmatpush1.msra.mxu0 0.0
        %971 = vmatprep.subr.mxu0 0.0
        %972 = vmatpush1.msra.mxu0 0.0
        %973 = vmatprep.subr.mxu0 0.0
        %974 = vmatpush1.msra.mxu0 0.0
        %975 = vmatprep.subr.mxu0 0.0
        %976 = vmatpush1.msra.mxu0 0.0
        %977 = vmatprep.subr.mxu0 0.0
        %978 = vmatpush1.msra.mxu0 0.0
        %979 = vmatprep.subr.mxu0 0.0
        %980 = vmatpush1.msra.mxu0 0.0
        %981 = vmatprep.subr.mxu0 0.0
        %982 = vmatpush1.msra.mxu0 0.0
        %983 = vmatprep.subr.mxu0 0.0
        %984 = vmatpush1.msra.mxu0 0.0
        %985 = vmatprep.mubr.f32.mxu0 0.0
        %986 = vmatmul.mubr.f32.gmra.mrb[0].mxu0 %v916
        %v987 = vpop.f32.mrb[0].mxu0
        %v988 = vadd.f32 %v556, %v987
        %v989 = vpop.f32.mrb[0].mxu0
        %990 = vmatprep.mubr.f32.mxu0 0.0
        %991 = vmatmul.mubr.f32.gmra.mrb[0].mxu0 %v919
        %v992 = vpop.f32.mrb[0].mxu0
        %v993 = vadd.f32 %v556, %v992
        %v994 = vpop.f32.mrb[0].mxu0
        %995 = vdwg.mxu0
        %vm996 = vcmp.ge.f32.partialorder %v988, 0.0
        %vm997 = vcmp.ge.f32.partialorder %v993, 0.0
        %v998 = vmul.f32 %v988, 0.01
        %v999 = vmul.f32 %v993, 0.01
        %v1000 = vsel %vm996, %v988, %v998
        %v1001 = vsel %vm997, %v993, %v999
        %s1002 = scalar_lea.vmem [#allocation2], 216
        %1003 = vst.msk [vmem:[%s1002 + $0x1] sm:$0xff] %vm805, %v1000
        %1004 = vst.msk [vmem:[%s1002 + $0x9] sm:$0xff] %vm805, %v1001
        %v1005 = vld [vmem:[#allocation2 + $0x1] sm:$0x1]
        %v1006 = vld [vmem:[#allocation2 + $0x19] sm:$0x1]
        %v1007 = vld [vmem:[#allocation2 + $0x31] sm:$0x1]
        %v1008 = vld [vmem:[#allocation2 + $0x49] sm:$0x1]
        %v1009 = vld [vmem:[#allocation2 + $0x61] sm:$0x1]
        %v1010 = vld [vmem:[#allocation2 + $0x79] sm:$0x1]
        %v1011 = vld [vmem:[#allocation2 + $0x91] sm:$0x1]
        %v1012 = vld [vmem:[#allocation2 + $0xa9] sm:$0x1]
        %v1013 = vld [vmem:[#allocation2 + $0xc1] sm:$0x1]
        %v1014 = vld [vmem:[#allocation2 + $0xd9] sm:$0x1]
        %vm1015 = vcmask 8192
        %1016 = vst.msk [vmem:[#allocation2] sm:$0x1] %vm1015, %v1005
        %1017 = vst.msk [vmem:[#allocation2 + $0x18] sm:$0x1] %vm1015, %v1006
        %1018 = vst.msk [vmem:[#allocation2 + $0x30] sm:$0x1] %vm1015, %v1007
        %1019 = vst.msk [vmem:[#allocation2 + $0x48] sm:$0x1] %vm1015, %v1008
        %1020 = vst.msk [vmem:[#allocation2 + $0x60] sm:$0x1] %vm1015, %v1009
        %1021 = vst.msk [vmem:[#allocation2 + $0x78] sm:$0x1] %vm1015, %v1010
        %1022 = vst.msk [vmem:[#allocation2 + $0x90] sm:$0x1] %vm1015, %v1011
        %1023 = vst.msk [vmem:[#allocation2 + $0xa8] sm:$0x1] %vm1015, %v1012
        %1024 = vst.msk [vmem:[#allocation2 + $0xc0] sm:$0x1] %vm1015, %v1013
        %1025 = vst.msk [vmem:[#allocation2 + $0xd8] sm:$0x1] %vm1015, %v1014
        %v1026 = vld [vmem:[#allocation2 + $0x10] sm:$0x1]
        %v1027 = vld [vmem:[#allocation2 + $0x28] sm:$0x1]
        %v1028 = vld [vmem:[#allocation2 + $0x40] sm:$0x1]
        %v1029 = vld [vmem:[#allocation2 + $0x58] sm:$0x1]
        %v1030 = vld [vmem:[#allocation2 + $0x70] sm:$0x1]
        %v1031 = vld [vmem:[#allocation2 + $0x88] sm:$0x1]
        %v1032 = vld [vmem:[#allocation2 + $0xa0] sm:$0x1]
        %v1033 = vld [vmem:[#allocation2 + $0xb8] sm:$0x1]
        %v1034 = vld [vmem:[#allocation2 + $0xd0] sm:$0x1]
        %v1035 = vld [vmem:[#allocation2 + $0xe8] sm:$0x1]
        %1036 = vst.msk [vmem:[#allocation2 + $0x11] sm:$0x1] %vm1015, %v1026
        %1037 = vst.msk [vmem:[#allocation2 + $0x29] sm:$0x1] %vm1015, %v1027
        %1038 = vst.msk [vmem:[#allocation2 + $0x41] sm:$0x1] %vm1015, %v1028
        %1039 = vst.msk [vmem:[#allocation2 + $0x59] sm:$0x1] %vm1015, %v1029
        %1040 = vst.msk [vmem:[#allocation2 + $0x71] sm:$0x1] %vm1015, %v1030
        %1041 = vst.msk [vmem:[#allocation2 + $0x89] sm:$0x1] %vm1015, %v1031
        %1042 = vst.msk [vmem:[#allocation2 + $0xa1] sm:$0x1] %vm1015, %v1032
        %1043 = vst.msk [vmem:[#allocation2 + $0xb9] sm:$0x1] %vm1015, %v1033
        %1044 = vst.msk [vmem:[#allocation2 + $0xd1] sm:$0x1] %vm1015, %v1034
        %1045 = vst.msk [vmem:[#allocation2 + $0xe9] sm:$0x1] %vm1015, %v1035
        %v1046 = vld [vmem:[#allocation2] sm:$0xff]
        %v1047 = vld [vmem:[#allocation2 + $0x8] sm:$0xff]
        %v1048 = vld [vmem:[#allocation2 + $0x18] sm:$0xff]
        %v1049 = vld [vmem:[#allocation2 + $0x20] sm:$0xff]
        %v1050 = vld [vmem:[#allocation2 + $0x30] sm:$0xff]
        %v1051 = vld [vmem:[#allocation2 + $0x38] sm:$0xff]
        %v1052 = vld [vmem:[#allocation2 + $0x48] sm:$0xff]
        %v1053 = vld [vmem:[#allocation2 + $0x50] sm:$0xff]
        %v1054 = vld [vmem:[#allocation2 + $0x60] sm:$0xff]
        %v1055 = vld [vmem:[#allocation2 + $0x68] sm:$0xff]
        %v1056 = vld [vmem:[#allocation2 + $0x78] sm:$0xff]
        %v1057 = vld [vmem:[#allocation2 + $0x80] sm:$0xff]
        %v1058 = vld [vmem:[#allocation2 + $0x90] sm:$0xff]
        %v1059 = vld [vmem:[#allocation2 + $0x98] sm:$0xff]
        %v1060 = vld [vmem:[#allocation2 + $0xa8] sm:$0xff]
        %v1061 = vld [vmem:[#allocation2 + $0xb0] sm:$0xff]
        %v1062 = vld [vmem:[#allocation12] sm:$0x3]
        %v1063 = vld [vmem:[#allocation2 + $0x1] sm:$0xff]
        %v1064 = vld [vmem:[#allocation2 + $0x9] sm:$0xff]
        %v1065 = vld [vmem:[#allocation2 + $0x19] sm:$0xff]
        %v1066 = vld [vmem:[#allocation2 + $0x21] sm:$0xff]
        %v1067 = vld [vmem:[#allocation2 + $0x31] sm:$0xff]
        %v1068 = vld [vmem:[#allocation2 + $0x39] sm:$0xff]
        %v1069 = vld [vmem:[#allocation2 + $0x49] sm:$0xff]
        %v1070 = vld [vmem:[#allocation2 + $0x51] sm:$0xff]
        %v1071 = vld [vmem:[#allocation2 + $0x61] sm:$0xff]
        %v1072 = vld [vmem:[#allocation2 + $0x69] sm:$0xff]
        %v1073 = vld [vmem:[#allocation2 + $0x79] sm:$0xff]
        %v1074 = vld [vmem:[#allocation2 + $0x81] sm:$0xff]
        %v1075 = vld [vmem:[#allocation2 + $0x91] sm:$0xff]
        %v1076 = vld [vmem:[#allocation2 + $0x99] sm:$0xff]
        %v1077 = vld [vmem:[#allocation2 + $0xa9] sm:$0xff]
        %v1078 = vld [vmem:[#allocation2 + $0xb1] sm:$0xff]
        %s1079 = scalar_lea.vmem [#allocation12], 2
        %v1080 = vld [vmem:[%s1079] sm:$0x3]
        %v1082 = vsel %vm805, %v1063, 0
        %v1085 = vsel %vm805, %v1064, 0
        %v1088 = vsel %vm805, %v1065, 0
        %v1091 = vsel %vm805, %v1066, 0
        %v1094 = vsel %vm805, %v1067, 0
        %v1097 = vsel %vm805, %v1068, 0
        %v1100 = vsel %vm805, %v1069, 0
        %v1103 = vsel %vm805, %v1070, 0
        %v1106 = vsel %vm805, %v1071, 0
        %v1109 = vsel %vm805, %v1072, 0
        %v1112 = vsel %vm805, %v1073, 0
        %v1115 = vsel %vm805, %v1074, 0
        %v1118 = vsel %vm805, %v1075, 0
        %v1121 = vsel %vm805, %v1076, 0
        %v1124 = vsel %vm805, %v1077, 0
        %v1127 = vsel %vm805, %v1078, 0
        %vm1129 = vcmask 1041408
        %v1131 = vsel %vm1129, %v1080, 0
        %1133 = vmatprep.subr.mxu0 0.0
        %1134 = vmatpush1.msra.mxu0 %v1131
        %1135 = vmatprep.subr.mxu0 0.0
        %1136 = vmatpush1.msra.mxu0 0.0
        %1137 = vmatprep.subr.mxu0 0.0
        %1138 = vmatpush1.msra.mxu0 0.0
        %1139 = vmatprep.subr.mxu0 0.0
        %1140 = vmatpush1.msra.mxu0 0.0
        %1141 = vmatprep.subr.mxu0 0.0
        %1142 = vmatpush1.msra.mxu0 0.0
        %1143 = vmatprep.subr.mxu0 0.0
        %1144 = vmatpush1.msra.mxu0 0.0
        %1145 = vmatprep.subr.mxu0 0.0
        %1146 = vmatpush1.msra.mxu0 0.0
        %1147 = vmatprep.subr.mxu0 0.0
        %1148 = vmatpush1.msra.mxu0 0.0
        %1149 = vmatprep.subr.mxu0 0.0
        %1150 = vmatpush1.msra.mxu0 0.0
        %1151 = vmatprep.subr.mxu0 0.0
        %1152 = vmatpush1.msra.mxu0 0.0
        %1153 = vmatprep.subr.mxu0 0.0
        %1154 = vmatpush1.msra.mxu0 0.0
        %1155 = vmatprep.subr.mxu0 0.0
        %1156 = vmatpush1.msra.mxu0 0.0
        %1157 = vmatprep.subr.mxu0 0.0
        %1158 = vmatpush1.msra.mxu0 0.0
        %1159 = vmatprep.subr.mxu0 0.0
        %1160 = vmatpush1.msra.mxu0 0.0
        %1161 = vmatprep.subr.mxu0 0.0
        %1162 = vmatpush1.msra.mxu0 0.0
        %1163 = vmatprep.subr.mxu0 0.0
        %1164 = vmatpush1.msra.mxu0 0.0
        %1165 = vmatprep.subr.mxu0 0.0
        %1166 = vmatpush1.msra.mxu0 0.0
        %1167 = vmatprep.subr.mxu0 0.0
        %1168 = vmatpush1.msra.mxu0 0.0
        %1169 = vmatprep.subr.mxu0 0.0
        %1170 = vmatpush1.msra.mxu0 0.0
        %1171 = vmatprep.subr.mxu0 0.0
        %1172 = vmatpush1.msra.mxu0 0.0
        %1173 = vmatprep.subr.mxu0 0.0
        %1174 = vmatpush1.msra.mxu0 0.0
        %1175 = vmatprep.subr.mxu0 0.0
        %1176 = vmatpush1.msra.mxu0 0.0
        %1177 = vmatprep.subr.mxu0 0.0
        %1178 = vmatpush1.msra.mxu0 0.0
        %1179 = vmatprep.subr.mxu0 0.0
        %1180 = vmatpush1.msra.mxu0 0.0
        %1181 = vmatprep.subr.mxu0 0.0
        %1182 = vmatpush1.msra.mxu0 0.0
        %1183 = vmatprep.subr.mxu0 0.0
        %1184 = vmatpush1.msra.mxu0 0.0
        %1185 = vmatprep.subr.mxu0 0.0
        %1186 = vmatpush1.msra.mxu0 0.0
        %1187 = vmatprep.subr.mxu0 0.0
        %1188 = vmatpush1.msra.mxu0 0.0
        %1189 = vmatprep.subr.mxu0 0.0
        %1190 = vmatpush1.msra.mxu0 0.0
        %1191 = vmatprep.subr.mxu0 0.0
        %1192 = vmatpush1.msra.mxu0 0.0
        %1193 = vmatprep.subr.mxu0 0.0
        %1194 = vmatpush1.msra.mxu0 0.0
        %1195 = vmatprep.subr.mxu0 0.0
        %1196 = vmatpush1.msra.mxu0 0.0
        %1197 = vmatprep.mubr.f32.mxu0 0.0
        %1198 = vmatmul.mubr.f32.gmra.mrb[0].mxu0 %v1082
        %v1199 = vpop.f32.mrb[0].mxu0
        %v1200 = vadd.f32 0.0, %v1199
        %v1201 = vpop.f32.mrb[0].mxu0
        %1202 = vmatprep.mubr.f32.mxu0 0.0
        %1203 = vmatmul.mubr.f32.gmra.mrb[0].mxu0 %v1085
        %v1204 = vpop.f32.mrb[0].mxu0
        %v1205 = vadd.f32 0.0, %v1204
        %v1206 = vpop.f32.mrb[0].mxu0
        %1207 = vmatprep.mubr.f32.mxu0 0.0
        %1208 = vmatmul.mubr.f32.gmra.mrb[0].mxu0 %v1088
        %v1209 = vpop.f32.mrb[0].mxu0
        %v1210 = vadd.f32 0.0, %v1209
        %v1211 = vpop.f32.mrb[0].mxu0
        %1212 = vmatprep.mubr.f32.mxu0 0.0
        %1213 = vmatmul.mubr.f32.gmra.mrb[0].mxu0 %v1091
        %v1214 = vpop.f32.mrb[0].mxu0
        %v1215 = vadd.f32 0.0, %v1214
        %v1216 = vpop.f32.mrb[0].mxu0
        %1217 = vmatprep.mubr.f32.mxu0 0.0
        %1218 = vmatmul.mubr.f32.gmra.mrb[0].mxu0 %v1094
        %v1219 = vpop.f32.mrb[0].mxu0
        %v1220 = vadd.f32 0.0, %v1219
        %v1221 = vpop.f32.mrb[0].mxu0
        %1222 = vmatprep.mubr.f32.mxu0 0.0
        %1223 = vmatmul.mubr.f32.gmra.mrb[0].mxu0 %v1097
        %v1224 = vpop.f32.mrb[0].mxu0
        %v1225 = vadd.f32 0.0, %v1224
        %v1226 = vpop.f32.mrb[0].mxu0
        %1227 = vmatprep.mubr.f32.mxu0 0.0
        %1228 = vmatmul.mubr.f32.gmra.mrb[0].mxu0 %v1100
        %v1229 = vpop.f32.mrb[0].mxu0
        %v1230 = vadd.f32 0.0, %v1229
        %v1231 = vpop.f32.mrb[0].mxu0
        %1232 = vmatprep.mubr.f32.mxu0 0.0
        %1233 = vmatmul.mubr.f32.gmra.mrb[0].mxu0 %v1103
        %v1234 = vpop.f32.mrb[0].mxu0
        %v1235 = vadd.f32 0.0, %v1234
        %v1236 = vpop.f32.mrb[0].mxu0
        %1237 = vmatprep.mubr.f32.mxu0 0.0
        %1238 = vmatmul.mubr.f32.gmra.mrb[0].mxu0 %v1106
        %v1239 = vpop.f32.mrb[0].mxu0
        %v1240 = vadd.f32 0.0, %v1239
        %v1241 = vpop.f32.mrb[0].mxu0
        %1242 = vmatprep.mubr.f32.mxu0 0.0
        %1243 = vmatmul.mubr.f32.gmra.mrb[0].mxu0 %v1109
        %v1244 = vpop.f32.mrb[0].mxu0
        %v1245 = vadd.f32 0.0, %v1244
        %v1246 = vpop.f32.mrb[0].mxu0
        %1247 = vmatprep.mubr.f32.mxu0 0.0
        %1248 = vmatmul.mubr.f32.gmra.mrb[0].mxu0 %v1112
        %v1249 = vpop.f32.mrb[0].mxu0
        %v1250 = vadd.f32 0.0, %v1249
        %v1251 = vpop.f32.mrb[0].mxu0
        %1252 = vmatprep.mubr.f32.mxu0 0.0
        %1253 = vmatmul.mubr.f32.gmra.mrb[0].mxu0 %v1115
        %v1254 = vpop.f32.mrb[0].mxu0
        %v1255 = vadd.f32 0.0, %v1254
        %v1256 = vpop.f32.mrb[0].mxu0
        %1257 = vmatprep.mubr.f32.mxu0 0.0
        %1258 = vmatmul.mubr.f32.gmra.mrb[0].mxu0 %v1118
        %v1259 = vpop.f32.mrb[0].mxu0
        %v1260 = vadd.f32 0.0, %v1259
        %v1261 = vpop.f32.mrb[0].mxu0
        %1262 = vmatprep.mubr.f32.mxu0 0.0
        %1263 = vmatmul.mubr.f32.gmra.mrb[0].mxu0 %v1121
        %v1264 = vpop.f32.mrb[0].mxu0
        %v1265 = vadd.f32 0.0, %v1264
        %v1266 = vpop.f32.mrb[0].mxu0
        %1267 = vmatprep.mubr.f32.mxu0 0.0
        %1268 = vmatmul.mubr.f32.gmra.mrb[0].mxu0 %v1124
        %v1269 = vpop.f32.mrb[0].mxu0
        %v1270 = vadd.f32 0.0, %v1269
        %v1271 = vpop.f32.mrb[0].mxu0
        %1272 = vmatprep.mubr.f32.mxu0 0.0
        %1273 = vmatmul.mubr.f32.gmra.mrb[0].mxu0 %v1127
        %v1274 = vpop.f32.mrb[0].mxu0
        %v1275 = vadd.f32 0.0, %v1274
        %v1276 = vpop.f32.mrb[0].mxu0
        %1277 = vdwg.mxu0
        %v1279 = vsel %vm805, %v1046, 0
        %v1282 = vsel %vm805, %v1047, 0
        %v1285 = vsel %vm805, %v1048, 0
        %v1288 = vsel %vm805, %v1049, 0
        %v1291 = vsel %vm805, %v1050, 0
        %v1294 = vsel %vm805, %v1051, 0
        %v1297 = vsel %vm805, %v1052, 0
        %v1300 = vsel %vm805, %v1053, 0
        %v1303 = vsel %vm805, %v1054, 0
        %v1306 = vsel %vm805, %v1055, 0
        %v1309 = vsel %vm805, %v1056, 0
        %v1312 = vsel %vm805, %v1057, 0
        %v1315 = vsel %vm805, %v1058, 0
        %v1318 = vsel %vm805, %v1059, 0
        %v1321 = vsel %vm805, %v1060, 0
        %v1324 = vsel %vm805, %v1061, 0
        %v1327 = vsel %vm1129, %v1062, 0
        %1329 = vmatprep.subr.mxu0 0.0
        %1330 = vmatpush1.msra.mxu0 %v1327
        %1331 = vmatprep.subr.mxu0 0.0
        %1332 = vmatpush1.msra.mxu0 0.0
        %1333 = vmatprep.subr.mxu0 0.0
        %1334 = vmatpush1.msra.mxu0 0.0
        %1335 = vmatprep.subr.mxu0 0.0
        %1336 = vmatpush1.msra.mxu0 0.0
        %1337 = vmatprep.subr.mxu0 0.0
        %1338 = vmatpush1.msra.mxu0 0.0
        %1339 = vmatprep.subr.mxu0 0.0
        %1340 = vmatpush1.msra.mxu0 0.0
        %1341 = vmatprep.subr.mxu0 0.0
        %1342 = vmatpush1.msra.mxu0 0.0
        %1343 = vmatprep.subr.mxu0 0.0
        %1344 = vmatpush1.msra.mxu0 0.0
        %1345 = vmatprep.subr.mxu0 0.0
        %1346 = vmatpush1.msra.mxu0 0.0
        %1347 = vmatprep.subr.mxu0 0.0
        %1348 = vmatpush1.msra.mxu0 0.0
        %1349 = vmatprep.subr.mxu0 0.0
        %1350 = vmatpush1.msra.mxu0 0.0
        %1351 = vmatprep.subr.mxu0 0.0
        %1352 = vmatpush1.msra.mxu0 0.0
        %1353 = vmatprep.subr.mxu0 0.0
        %1354 = vmatpush1.msra.mxu0 0.0
        %1355 = vmatprep.subr.mxu0 0.0
        %1356 = vmatpush1.msra.mxu0 0.0
        %1357 = vmatprep.subr.mxu0 0.0
        %1358 = vmatpush1.msra.mxu0 0.0
        %1359 = vmatprep.subr.mxu0 0.0
        %1360 = vmatpush1.msra.mxu0 0.0
        %1361 = vmatprep.subr.mxu0 0.0
        %1362 = vmatpush1.msra.mxu0 0.0
        %1363 = vmatprep.subr.mxu0 0.0
        %1364 = vmatpush1.msra.mxu0 0.0
        %1365 = vmatprep.subr.mxu0 0.0
        %1366 = vmatpush1.msra.mxu0 0.0
        %1367 = vmatprep.subr.mxu0 0.0
        %1368 = vmatpush1.msra.mxu0 0.0
        %1369 = vmatprep.subr.mxu0 0.0
        %1370 = vmatpush1.msra.mxu0 0.0
        %1371 = vmatprep.subr.mxu0 0.0
        %1372 = vmatpush1.msra.mxu0 0.0
        %1373 = vmatprep.subr.mxu0 0.0
        %1374 = vmatpush1.msra.mxu0 0.0
        %1375 = vmatprep.subr.mxu0 0.0
        %1376 = vmatpush1.msra.mxu0 0.0
        %1377 = vmatprep.subr.mxu0 0.0
        %1378 = vmatpush1.msra.mxu0 0.0
        %1379 = vmatprep.subr.mxu0 0.0
        %1380 = vmatpush1.msra.mxu0 0.0
        %1381 = vmatprep.subr.mxu0 0.0
        %1382 = vmatpush1.msra.mxu0 0.0
        %1383 = vmatprep.subr.mxu0 0.0
        %1384 = vmatpush1.msra.mxu0 0.0
        %1385 = vmatprep.subr.mxu0 0.0
        %1386 = vmatpush1.msra.mxu0 0.0
        %1387 = vmatprep.subr.mxu0 0.0
        %1388 = vmatpush1.msra.mxu0 0.0
        %1389 = vmatprep.subr.mxu0 0.0
        %1390 = vmatpush1.msra.mxu0 0.0
        %1391 = vmatprep.subr.mxu0 0.0
        %1392 = vmatpush1.msra.mxu0 0.0
        %1393 = vmatprep.mubr.f32.mxu0 0.0
        %1394 = vmatmul.mubr.f32.gmra.mrb[0].mxu0 %v1279
        %v1395 = vpop.f32.mrb[0].mxu0
        %v1396 = vadd.f32 %v1200, %v1395
        %v1397 = vpop.f32.mrb[0].mxu0
        %1398 = vmatprep.mubr.f32.mxu0 0.0
        %1399 = vmatmul.mubr.f32.gmra.mrb[0].mxu0 %v1282
        %v1400 = vpop.f32.mrb[0].mxu0
        %v1401 = vadd.f32 %v1205, %v1400
        %v1402 = vpop.f32.mrb[0].mxu0
        %1403 = vmatprep.mubr.f32.mxu0 0.0
        %1404 = vmatmul.mubr.f32.gmra.mrb[0].mxu0 %v1285
        %v1405 = vpop.f32.mrb[0].mxu0
        %v1406 = vadd.f32 %v1210, %v1405
        %v1407 = vpop.f32.mrb[0].mxu0
        %1408 = vmatprep.mubr.f32.mxu0 0.0
        %1409 = vmatmul.mubr.f32.gmra.mrb[0].mxu0 %v1288
        %v1410 = vpop.f32.mrb[0].mxu0
        %v1411 = vadd.f32 %v1215, %v1410
        %v1412 = vpop.f32.mrb[0].mxu0
        %1413 = vmatprep.mubr.f32.mxu0 0.0
        %1414 = vmatmul.mubr.f32.gmra.mrb[0].mxu0 %v1291
        %v1415 = vpop.f32.mrb[0].mxu0
        %v1416 = vadd.f32 %v1220, %v1415
        %v1417 = vpop.f32.mrb[0].mxu0
        %1418 = vmatprep.mubr.f32.mxu0 0.0
        %1419 = vmatmul.mubr.f32.gmra.mrb[0].mxu0 %v1294
        %v1420 = vpop.f32.mrb[0].mxu0
        %v1421 = vadd.f32 %v1225, %v1420
        %v1422 = vpop.f32.mrb[0].mxu0
        %1423 = vmatprep.mubr.f32.mxu0 0.0
        %1424 = vmatmul.mubr.f32.gmra.mrb[0].mxu0 %v1297
        %v1425 = vpop.f32.mrb[0].mxu0
        %v1426 = vadd.f32 %v1230, %v1425
        %v1427 = vpop.f32.mrb[0].mxu0
        %1428 = vmatprep.mubr.f32.mxu0 0.0
        %1429 = vmatmul.mubr.f32.gmra.mrb[0].mxu0 %v1300
        %v1430 = vpop.f32.mrb[0].mxu0
        %v1431 = vadd.f32 %v1235, %v1430
        %v1432 = vpop.f32.mrb[0].mxu0
        %1433 = vmatprep.mubr.f32.mxu0 0.0
        %1434 = vmatmul.mubr.f32.gmra.mrb[0].mxu0 %v1303
        %v1435 = vpop.f32.mrb[0].mxu0
        %v1436 = vadd.f32 %v1240, %v1435
        %v1437 = vpop.f32.mrb[0].mxu0
        %1438 = vmatprep.mubr.f32.mxu0 0.0
        %1439 = vmatmul.mubr.f32.gmra.mrb[0].mxu0 %v1306
        %v1440 = vpop.f32.mrb[0].mxu0
        %v1441 = vadd.f32 %v1245, %v1440
        %v1442 = vpop.f32.mrb[0].mxu0
        %1443 = vmatprep.mubr.f32.mxu0 0.0
        %1444 = vmatmul.mubr.f32.gmra.mrb[0].mxu0 %v1309
        %v1445 = vpop.f32.mrb[0].mxu0
        %v1446 = vadd.f32 %v1250, %v1445
        %v1447 = vpop.f32.mrb[0].mxu0
        %1448 = vmatprep.mubr.f32.mxu0 0.0
        %1449 = vmatmul.mubr.f32.gmra.mrb[0].mxu0 %v1312
        %v1450 = vpop.f32.mrb[0].mxu0
        %v1451 = vadd.f32 %v1255, %v1450
        %v1452 = vpop.f32.mrb[0].mxu0
        %1453 = vmatprep.mubr.f32.mxu0 0.0
        %1454 = vmatmul.mubr.f32.gmra.mrb[0].mxu0 %v1315
        %v1455 = vpop.f32.mrb[0].mxu0
        %v1456 = vadd.f32 %v1260, %v1455
        %v1457 = vpop.f32.mrb[0].mxu0
        %1458 = vmatprep.mubr.f32.mxu0 0.0
        %1459 = vmatmul.mubr.f32.gmra.mrb[0].mxu0 %v1318
        %v1460 = vpop.f32.mrb[0].mxu0
        %v1461 = vadd.f32 %v1265, %v1460
        %v1462 = vpop.f32.mrb[0].mxu0
        %1463 = vmatprep.mubr.f32.mxu0 0.0
        %1464 = vmatmul.mubr.f32.gmra.mrb[0].mxu0 %v1321
        %v1465 = vpop.f32.mrb[0].mxu0
        %v1466 = vadd.f32 %v1270, %v1465
        %v1467 = vpop.f32.mrb[0].mxu0
        %1468 = vmatprep.mubr.f32.mxu0 0.0
        %1469 = vmatmul.mubr.f32.gmra.mrb[0].mxu0 %v1324
        %v1470 = vpop.f32.mrb[0].mxu0
        %v1471 = vadd.f32 %v1275, %v1470
        %v1472 = vpop.f32.mrb[0].mxu0
        %1473 = vdwg.mxu0
        %v1474 = vld [vmem:[#allocation2 + $0x2] sm:$0xff]
        %v1475 = vld [vmem:[#allocation2 + $0xa] sm:$0xff]
        %v1476 = vld [vmem:[#allocation2 + $0x1a] sm:$0xff]
        %v1477 = vld [vmem:[#allocation2 + $0x22] sm:$0xff]
        %v1478 = vld [vmem:[#allocation2 + $0x32] sm:$0xff]
        %v1479 = vld [vmem:[#allocation2 + $0x3a] sm:$0xff]
        %v1480 = vld [vmem:[#allocation2 + $0x4a] sm:$0xff]
        %v1481 = vld [vmem:[#allocation2 + $0x52] sm:$0xff]
        %v1482 = vld [vmem:[#allocation2 + $0x62] sm:$0xff]
        %v1483 = vld [vmem:[#allocation2 + $0x6a] sm:$0xff]
        %v1484 = vld [vmem:[#allocation2 + $0x7a] sm:$0xff]
        %v1485 = vld [vmem:[#allocation2 + $0x82] sm:$0xff]
        %v1486 = vld [vmem:[#allocation2 + $0x92] sm:$0xff]
        %v1487 = vld [vmem:[#allocation2 + $0x9a] sm:$0xff]
        %v1488 = vld [vmem:[#allocation2 + $0xaa] sm:$0xff]
        %v1489 = vld [vmem:[#allocation2 + $0xb2] sm:$0xff]
        %s1490 = scalar_lea.vmem [#allocation12], 4
        %v1491 = vld [vmem:[%s1490] sm:$0x3]
        %v1493 = vsel %vm805, %v1474, 0
        %v1496 = vsel %vm805, %v1475, 0
        %v1499 = vsel %vm805, %v1476, 0
        %v1502 = vsel %vm805, %v1477, 0
        %v1505 = vsel %vm805, %v1478, 0
        %v1508 = vsel %vm805, %v1479, 0
        %v1511 = vsel %vm805, %v1480, 0
        %v1514 = vsel %vm805, %v1481, 0
        %v1517 = vsel %vm805, %v1482, 0
        %v1520 = vsel %vm805, %v1483, 0
        %v1523 = vsel %vm805, %v1484, 0
        %v1526 = vsel %vm805, %v1485, 0
        %v1529 = vsel %vm805, %v1486, 0
        %v1532 = vsel %vm805, %v1487, 0
        %v1535 = vsel %vm805, %v1488, 0
        %v1538 = vsel %vm805, %v1489, 0
        %v1541 = vsel %vm1129, %v1491, 0
        %1543 = vmatprep.subr.mxu0 0.0
        %1544 = vmatpush1.msra.mxu0 %v1541
        %1545 = vmatprep.subr.mxu0 0.0
        %1546 = vmatpush1.msra.mxu0 0.0
        %1547 = vmatprep.subr.mxu0 0.0
        %1548 = vmatpush1.msra.mxu0 0.0
        %1549 = vmatprep.subr.mxu0 0.0
        %1550 = vmatpush1.msra.mxu0 0.0
        %1551 = vmatprep.subr.mxu0 0.0
        %1552 = vmatpush1.msra.mxu0 0.0
        %1553 = vmatprep.subr.mxu0 0.0
        %1554 = vmatpush1.msra.mxu0 0.0
        %1555 = vmatprep.subr.mxu0 0.0
        %1556 = vmatpush1.msra.mxu0 0.0
        %1557 = vmatprep.subr.mxu0 0.0
        %1558 = vmatpush1.msra.mxu0 0.0
        %1559 = vmatprep.subr.mxu0 0.0
        %1560 = vmatpush1.msra.mxu0 0.0
        %1561 = vmatprep.subr.mxu0 0.0
        %1562 = vmatpush1.msra.mxu0 0.0
        %1563 = vmatprep.subr.mxu0 0.0
        %1564 = vmatpush1.msra.mxu0 0.0
        %1565 = vmatprep.subr.mxu0 0.0
        %1566 = vmatpush1.msra.mxu0 0.0
        %1567 = vmatprep.subr.mxu0 0.0
        %1568 = vmatpush1.msra.mxu0 0.0
        %1569 = vmatprep.subr.mxu0 0.0
        %1570 = vmatpush1.msra.mxu0 0.0
        %1571 = vmatprep.subr.mxu0 0.0
        %1572 = vmatpush1.msra.mxu0 0.0
        %1573 = vmatprep.subr.mxu0 0.0
        %1574 = vmatpush1.msra.mxu0 0.0
        %1575 = vmatprep.subr.mxu0 0.0
        %1576 = vmatpush1.msra.mxu0 0.0
        %1577 = vmatprep.subr.mxu0 0.0
        %1578 = vmatpush1.msra.mxu0 0.0
        %1579 = vmatprep.subr.mxu0 0.0
        %1580 = vmatpush1.msra.mxu0 0.0
        %1581 = vmatprep.subr.mxu0 0.0
        %1582 = vmatpush1.msra.mxu0 0.0
        %1583 = vmatprep.subr.mxu0 0.0
        %1584 = vmatpush1.msra.mxu0 0.0
        %1585 = vmatprep.subr.mxu0 0.0
        %1586 = vmatpush1.msra.mxu0 0.0
        %1587 = vmatprep.subr.mxu0 0.0
        %1588 = vmatpush1.msra.mxu0 0.0
        %1589 = vmatprep.subr.mxu0 0.0
        %1590 = vmatpush1.msra.mxu0 0.0
        %1591 = vmatprep.subr.mxu0 0.0
        %1592 = vmatpush1.msra.mxu0 0.0
        %1593 = vmatprep.subr.mxu0 0.0
        %1594 = vmatpush1.msra.mxu0 0.0
        %1595 = vmatprep.subr.mxu0 0.0
        %1596 = vmatpush1.msra.mxu0 0.0
        %1597 = vmatprep.subr.mxu0 0.0
        %1598 = vmatpush1.msra.mxu0 0.0
        %1599 = vmatprep.subr.mxu0 0.0
        %1600 = vmatpush1.msra.mxu0 0.0
        %1601 = vmatprep.subr.mxu0 0.0
        %1602 = vmatpush1.msra.mxu0 0.0
        %1603 = vmatprep.subr.mxu0 0.0
        %1604 = vmatpush1.msra.mxu0 0.0
        %1605 = vmatprep.subr.mxu0 0.0
        %1606 = vmatpush1.msra.mxu0 0.0
        %1607 = vmatprep.mubr.f32.mxu0 0.0
        %1608 = vmatmul.mubr.f32.gmra.mrb[0].mxu0 %v1493
        %v1609 = vpop.f32.mrb[0].mxu0
        %v1610 = vadd.f32 0.0, %v1609
        %v1611 = vpop.f32.mrb[0].mxu0
        %1612 = vmatprep.mubr.f32.mxu0 0.0
        %1613 = vmatmul.mubr.f32.gmra.mrb[0].mxu0 %v1496
        %v1614 = vpop.f32.mrb[0].mxu0
        %v1615 = vadd.f32 0.0, %v1614
        %v1616 = vpop.f32.mrb[0].mxu0
        %1617 = vmatprep.mubr.f32.mxu0 0.0
        %1618 = vmatmul.mubr.f32.gmra.mrb[0].mxu0 %v1499
        %v1619 = vpop.f32.mrb[0].mxu0
        %v1620 = vadd.f32 0.0, %v1619
        %v1621 = vpop.f32.mrb[0].mxu0
        %1622 = vmatprep.mubr.f32.mxu0 0.0
        %1623 = vmatmul.mubr.f32.gmra.mrb[0].mxu0 %v1502
        %v1624 = vpop.f32.mrb[0].mxu0
        %v1625 = vadd.f32 0.0, %v1624
        %v1626 = vpop.f32.mrb[0].mxu0
        %1627 = vmatprep.mubr.f32.mxu0 0.0
        %1628 = vmatmul.mubr.f32.gmra.mrb[0].mxu0 %v1505
        %v1629 = vpop.f32.mrb[0].mxu0
        %v1630 = vadd.f32 0.0, %v1629
        %v1631 = vpop.f32.mrb[0].mxu0
        %1632 = vmatprep.mubr.f32.mxu0 0.0
        %1633 = vmatmul.mubr.f32.gmra.mrb[0].mxu0 %v1508
        %v1634 = vpop.f32.mrb[0].mxu0
        %v1635 = vadd.f32 0.0, %v1634
        %v1636 = vpop.f32.mrb[0].mxu0
        %1637 = vmatprep.mubr.f32.mxu0 0.0
        %1638 = vmatmul.mubr.f32.gmra.mrb[0].mxu0 %v1511
        %v1639 = vpop.f32.mrb[0].mxu0
        %v1640 = vadd.f32 0.0, %v1639
        %v1641 = vpop.f32.mrb[0].mxu0
        %1642 = vmatprep.mubr.f32.mxu0 0.0
        %1643 = vmatmul.mubr.f32.gmra.mrb[0].mxu0 %v1514
        %v1644 = vpop.f32.mrb[0].mxu0
        %v1645 = vadd.f32 0.0, %v1644
        %v1646 = vpop.f32.mrb[0].mxu0
        %1647 = vmatprep.mubr.f32.mxu0 0.0
        %1648 = vmatmul.mubr.f32.gmra.mrb[0].mxu0 %v1517
        %v1649 = vpop.f32.mrb[0].mxu0
        %v1650 = vadd.f32 0.0, %v1649
        %v1651 = vpop.f32.mrb[0].mxu0
        %1652 = vmatprep.mubr.f32.mxu0 0.0
        %1653 = vmatmul.mubr.f32.gmra.mrb[0].mxu0 %v1520
        %v1654 = vpop.f32.mrb[0].mxu0
        %v1655 = vadd.f32 0.0, %v1654
        %v1656 = vpop.f32.mrb[0].mxu0
        %1657 = vmatprep.mubr.f32.mxu0 0.0
        %1658 = vmatmul.mubr.f32.gmra.mrb[0].mxu0 %v1523
        %v1659 = vpop.f32.mrb[0].mxu0
        %v1660 = vadd.f32 0.0, %v1659
        %v1661 = vpop.f32.mrb[0].mxu0
        %1662 = vmatprep.mubr.f32.mxu0 0.0
        %1663 = vmatmul.mubr.f32.gmra.mrb[0].mxu0 %v1526
        %v1664 = vpop.f32.mrb[0].mxu0
        %v1665 = vadd.f32 0.0, %v1664
        %v1666 = vpop.f32.mrb[0].mxu0
        %1667 = vmatprep.mubr.f32.mxu0 0.0
        %1668 = vmatmul.mubr.f32.gmra.mrb[0].mxu0 %v1529
        %v1669 = vpop.f32.mrb[0].mxu0
        %v1670 = vadd.f32 0.0, %v1669
        %v1671 = vpop.f32.mrb[0].mxu0
        %1672 = vmatprep.mubr.f32.mxu0 0.0
        %1673 = vmatmul.mubr.f32.gmra.mrb[0].mxu0 %v1532
        %v1674 = vpop.f32.mrb[0].mxu0
        %v1675 = vadd.f32 0.0, %v1674
        %v1676 = vpop.f32.mrb[0].mxu0
        %1677 = vmatprep.mubr.f32.mxu0 0.0
        %1678 = vmatmul.mubr.f32.gmra.mrb[0].mxu0 %v1535
        %v1679 = vpop.f32.mrb[0].mxu0
        %v1680 = vadd.f32 0.0, %v1679
        %v1681 = vpop.f32.mrb[0].mxu0
        %1682 = vmatprep.mubr.f32.mxu0 0.0
        %1683 = vmatmul.mubr.f32.gmra.mrb[0].mxu0 %v1538
        %v1684 = vpop.f32.mrb[0].mxu0
        %v1685 = vadd.f32 0.0, %v1684
        %v1686 = vpop.f32.mrb[0].mxu0
        %1687 = vdwg.mxu0
        %v1688 = vadd.f32 %v1396, %v1610
        %v1689 = vadd.f32 %v1401, %v1615
        %v1690 = vadd.f32 %v1406, %v1620
        %v1691 = vadd.f32 %v1411, %v1625
        %v1692 = vadd.f32 %v1416, %v1630
        %v1693 = vadd.f32 %v1421, %v1635
        %v1694 = vadd.f32 %v1426, %v1640
        %v1695 = vadd.f32 %v1431, %v1645
        %v1696 = vadd.f32 %v1436, %v1650
        %v1697 = vadd.f32 %v1441, %v1655
        %v1698 = vadd.f32 %v1446, %v1660
        %v1699 = vadd.f32 %v1451, %v1665
        %v1700 = vadd.f32 %v1456, %v1670
        %v1701 = vadd.f32 %v1461, %v1675
        %v1702 = vadd.f32 %v1466, %v1680
        %v1703 = vadd.f32 %v1471, %v1685
        %v1704 = vld [vmem:[%s804] sm:$0xff]
        %v1705 = vld [vmem:[%s804 + $0x8] sm:$0xff]
        %v1706 = vld [vmem:[%s804 + $0x18] sm:$0xff]
        %v1707 = vld [vmem:[%s804 + $0x20] sm:$0xff]
        %v1708 = vld [vmem:[%s804 + $0x30] sm:$0xff]
        %v1709 = vld [vmem:[%s804 + $0x38] sm:$0xff]
        %v1710 = vld [vmem:[%s804 + $0x48] sm:$0xff]
        %v1711 = vld [vmem:[%s804 + $0x50] sm:$0xff]
        %v1712 = vld [vmem:[%s804 + $0x60] sm:$0xff]
        %v1713 = vld [vmem:[%s804 + $0x68] sm:$0xff]
        %v1714 = vld [vmem:[%s804 + $0x78] sm:$0xff]
        %v1715 = vld [vmem:[%s804 + $0x80] sm:$0xff]
        %v1716 = vld [vmem:[%s804 + $0x90] sm:$0xff]
        %v1717 = vld [vmem:[%s804 + $0x98] sm:$0xff]
        %v1718 = vld [vmem:[%s804 + $0xa8] sm:$0xff]
        %v1719 = vld [vmem:[%s804 + $0xb0] sm:$0xff]
        %s1720 = scalar_lea.vmem [#allocation12], 6
        %v1721 = vld [vmem:[%s1720] sm:$0x3]
        %v1723 = vsel %vm805, %v1704, 0
        %v1726 = vsel %vm805, %v1705, 0
        %v1729 = vsel %vm805, %v1706, 0
        %v1732 = vsel %vm805, %v1707, 0
        %v1735 = vsel %vm805, %v1708, 0
        %v1738 = vsel %vm805, %v1709, 0
        %v1741 = vsel %vm805, %v1710, 0
        %v1744 = vsel %vm805, %v1711, 0
        %v1747 = vsel %vm805, %v1712, 0
        %v1750 = vsel %vm805, %v1713, 0
        %v1753 = vsel %vm805, %v1714, 0
        %v1756 = vsel %vm805, %v1715, 0
        %v1759 = vsel %vm805, %v1716, 0
        %v1762 = vsel %vm805, %v1717, 0
        %v1765 = vsel %vm805, %v1718, 0
        %v1768 = vsel %vm805, %v1719, 0
        %v1771 = vsel %vm1129, %v1721, 0
        %1773 = vmatprep.subr.mxu0 0.0
        %1774 = vmatpush1.msra.mxu0 %v1771
        %1775 = vmatprep.subr.mxu0 0.0
        %1776 = vmatpush1.msra.mxu0 0.0
        %1777 = vmatprep.subr.mxu0 0.0
        %1778 = vmatpush1.msra.mxu0 0.0
        %1779 = vmatprep.subr.mxu0 0.0
        %1780 = vmatpush1.msra.mxu0 0.0
        %1781 = vmatprep.subr.mxu0 0.0
        %1782 = vmatpush1.msra.mxu0 0.0
        %1783 = vmatprep.subr.mxu0 0.0
        %1784 = vmatpush1.msra.mxu0 0.0
        %1785 = vmatprep.subr.mxu0 0.0
        %1786 = vmatpush1.msra.mxu0 0.0
        %1787 = vmatprep.subr.mxu0 0.0
        %1788 = vmatpush1.msra.mxu0 0.0
        %1789 = vmatprep.subr.mxu0 0.0
        %1790 = vmatpush1.msra.mxu0 0.0
        %1791 = vmatprep.subr.mxu0 0.0
        %1792 = vmatpush1.msra.mxu0 0.0
        %1793 = vmatprep.subr.mxu0 0.0
        %1794 = vmatpush1.msra.mxu0 0.0
        %1795 = vmatprep.subr.mxu0 0.0
        %1796 = vmatpush1.msra.mxu0 0.0
        %1797 = vmatprep.subr.mxu0 0.0
        %1798 = vmatpush1.msra.mxu0 0.0
        %1799 = vmatprep.subr.mxu0 0.0
        %1800 = vmatpush1.msra.mxu0 0.0
        %1801 = vmatprep.subr.mxu0 0.0
        %1802 = vmatpush1.msra.mxu0 0.0
        %1803 = vmatprep.subr.mxu0 0.0
        %1804 = vmatpush1.msra.mxu0 0.0
        %1805 = vmatprep.subr.mxu0 0.0
        %1806 = vmatpush1.msra.mxu0 0.0
        %1807 = vmatprep.subr.mxu0 0.0
        %1808 = vmatpush1.msra.mxu0 0.0
        %1809 = vmatprep.subr.mxu0 0.0
        %1810 = vmatpush1.msra.mxu0 0.0
        %1811 = vmatprep.subr.mxu0 0.0
        %1812 = vmatpush1.msra.mxu0 0.0
        %1813 = vmatprep.subr.mxu0 0.0
        %1814 = vmatpush1.msra.mxu0 0.0
        %1815 = vmatprep.subr.mxu0 0.0
        %1816 = vmatpush1.msra.mxu0 0.0
        %1817 = vmatprep.subr.mxu0 0.0
        %1818 = vmatpush1.msra.mxu0 0.0
        %1819 = vmatprep.subr.mxu0 0.0
        %1820 = vmatpush1.msra.mxu0 0.0
        %1821 = vmatprep.subr.mxu0 0.0
        %1822 = vmatpush1.msra.mxu0 0.0
        %1823 = vmatprep.subr.mxu0 0.0
        %1824 = vmatpush1.msra.mxu0 0.0
        %1825 = vmatprep.subr.mxu0 0.0
        %1826 = vmatpush1.msra.mxu0 0.0
        %1827 = vmatprep.subr.mxu0 0.0
        %1828 = vmatpush1.msra.mxu0 0.0
        %1829 = vmatprep.subr.mxu0 0.0
        %1830 = vmatpush1.msra.mxu0 0.0
        %1831 = vmatprep.subr.mxu0 0.0
        %1832 = vmatpush1.msra.mxu0 0.0
        %1833 = vmatprep.subr.mxu0 0.0
        %1834 = vmatpush1.msra.mxu0 0.0
        %1835 = vmatprep.subr.mxu0 0.0
        %1836 = vmatpush1.msra.mxu0 0.0
        %1837 = vmatprep.mubr.f32.mxu0 0.0
        %1838 = vmatmul.mubr.f32.gmra.mrb[0].mxu0 %v1723
        %v1839 = vpop.f32.mrb[0].mxu0
        %v1840 = vadd.f32 0.0, %v1839
        %v1841 = vpop.f32.mrb[0].mxu0
        %1842 = vmatprep.mubr.f32.mxu0 0.0
        %1843 = vmatmul.mubr.f32.gmra.mrb[0].mxu0 %v1726
        %v1844 = vpop.f32.mrb[0].mxu0
        %v1845 = vadd.f32 0.0, %v1844
        %v1846 = vpop.f32.mrb[0].mxu0
        %1847 = vmatprep.mubr.f32.mxu0 0.0
        %1848 = vmatmul.mubr.f32.gmra.mrb[0].mxu0 %v1729
        %v1849 = vpop.f32.mrb[0].mxu0
        %v1850 = vadd.f32 0.0, %v1849
        %v1851 = vpop.f32.mrb[0].mxu0
        %1852 = vmatprep.mubr.f32.mxu0 0.0
        %1853 = vmatmul.mubr.f32.gmra.mrb[0].mxu0 %v1732
        %v1854 = vpop.f32.mrb[0].mxu0
        %v1855 = vadd.f32 0.0, %v1854
        %v1856 = vpop.f32.mrb[0].mxu0
        %1857 = vmatprep.mubr.f32.mxu0 0.0
        %1858 = vmatmul.mubr.f32.gmra.mrb[0].mxu0 %v1735
        %v1859 = vpop.f32.mrb[0].mxu0
        %v1860 = vadd.f32 0.0, %v1859
        %v1861 = vpop.f32.mrb[0].mxu0
        %1862 = vmatprep.mubr.f32.mxu0 0.0
        %1863 = vmatmul.mubr.f32.gmra.mrb[0].mxu0 %v1738
        %v1864 = vpop.f32.mrb[0].mxu0
        %v1865 = vadd.f32 0.0, %v1864
        %v1866 = vpop.f32.mrb[0].mxu0
        %1867 = vmatprep.mubr.f32.mxu0 0.0
        %1868 = vmatmul.mubr.f32.gmra.mrb[0].mxu0 %v1741
        %v1869 = vpop.f32.mrb[0].mxu0
        %v1870 = vadd.f32 0.0, %v1869
        %v1871 = vpop.f32.mrb[0].mxu0
        %1872 = vmatprep.mubr.f32.mxu0 0.0
        %1873 = vmatmul.mubr.f32.gmra.mrb[0].mxu0 %v1744
        %v1874 = vpop.f32.mrb[0].mxu0
        %v1875 = vadd.f32 0.0, %v1874
        %v1876 = vpop.f32.mrb[0].mxu0
        %1877 = vmatprep.mubr.f32.mxu0 0.0
        %1878 = vmatmul.mubr.f32.gmra.mrb[0].mxu0 %v1747
        %v1879 = vpop.f32.mrb[0].mxu0
        %v1880 = vadd.f32 0.0, %v1879
        %v1881 = vpop.f32.mrb[0].mxu0
        %1882 = vmatprep.mubr.f32.mxu0 0.0
        %1883 = vmatmul.mubr.f32.gmra.mrb[0].mxu0 %v1750
        %v1884 = vpop.f32.mrb[0].mxu0
        %v1885 = vadd.f32 0.0, %v1884
        %v1886 = vpop.f32.mrb[0].mxu0
        %1887 = vmatprep.mubr.f32.mxu0 0.0
        %1888 = vmatmul.mubr.f32.gmra.mrb[0].mxu0 %v1753
        %v1889 = vpop.f32.mrb[0].mxu0
        %v1890 = vadd.f32 0.0, %v1889
        %v1891 = vpop.f32.mrb[0].mxu0
        %1892 = vmatprep.mubr.f32.mxu0 0.0
        %1893 = vmatmul.mubr.f32.gmra.mrb[0].mxu0 %v1756
        %v1894 = vpop.f32.mrb[0].mxu0
        %v1895 = vadd.f32 0.0, %v1894
        %v1896 = vpop.f32.mrb[0].mxu0
        %1897 = vmatprep.mubr.f32.mxu0 0.0
        %1898 = vmatmul.mubr.f32.gmra.mrb[0].mxu0 %v1759
        %v1899 = vpop.f32.mrb[0].mxu0
        %v1900 = vadd.f32 0.0, %v1899
        %v1901 = vpop.f32.mrb[0].mxu0
        %1902 = vmatprep.mubr.f32.mxu0 0.0
        %1903 = vmatmul.mubr.f32.gmra.mrb[0].mxu0 %v1762
        %v1904 = vpop.f32.mrb[0].mxu0
        %v1905 = vadd.f32 0.0, %v1904
        %v1906 = vpop.f32.mrb[0].mxu0
        %1907 = vmatprep.mubr.f32.mxu0 0.0
        %1908 = vmatmul.mubr.f32.gmra.mrb[0].mxu0 %v1765
        %v1909 = vpop.f32.mrb[0].mxu0
        %v1910 = vadd.f32 0.0, %v1909
        %v1911 = vpop.f32.mrb[0].mxu0
        %1912 = vmatprep.mubr.f32.mxu0 0.0
        %1913 = vmatmul.mubr.f32.gmra.mrb[0].mxu0 %v1768
        %v1914 = vpop.f32.mrb[0].mxu0
        %v1915 = vadd.f32 0.0, %v1914
        %v1916 = vpop.f32.mrb[0].mxu0
        %1917 = vdwg.mxu0
        %v1918 = vadd.f32 %v1688, %v1840
        %v1919 = vadd.f32 %v1689, %v1845
        %v1920 = vadd.f32 %v1690, %v1850
        %v1921 = vadd.f32 %v1691, %v1855
        %v1922 = vadd.f32 %v1692, %v1860
        %v1923 = vadd.f32 %v1693, %v1865
        %v1924 = vadd.f32 %v1694, %v1870
        %v1925 = vadd.f32 %v1695, %v1875
        %v1926 = vadd.f32 %v1696, %v1880
        %v1927 = vadd.f32 %v1697, %v1885
        %v1928 = vadd.f32 %v1698, %v1890
        %v1929 = vadd.f32 %v1699, %v1895
        %v1930 = vadd.f32 %v1700, %v1900
        %v1931 = vadd.f32 %v1701, %v1905
        %v1932 = vadd.f32 %v1702, %v1910
        %v1933 = vadd.f32 %v1703, %v1915
        %v1934 = vld [vmem:[%s804 + $0x1] sm:$0xff]
        %v1935 = vld [vmem:[%s804 + $0x9] sm:$0xff]
        %v1936 = vld [vmem:[%s804 + $0x19] sm:$0xff]
        %v1937 = vld [vmem:[%s804 + $0x21] sm:$0xff]
        %v1938 = vld [vmem:[%s804 + $0x31] sm:$0xff]
        %v1939 = vld [vmem:[%s804 + $0x39] sm:$0xff]
        %v1940 = vld [vmem:[%s804 + $0x49] sm:$0xff]
        %v1941 = vld [vmem:[%s804 + $0x51] sm:$0xff]
        %v1942 = vld [vmem:[%s804 + $0x61] sm:$0xff]
        %v1943 = vld [vmem:[%s804 + $0x69] sm:$0xff]
        %v1944 = vld [vmem:[%s804 + $0x79] sm:$0xff]
        %v1945 = vld [vmem:[%s804 + $0x81] sm:$0xff]
        %v1946 = vld [vmem:[%s804 + $0x91] sm:$0xff]
        %v1947 = vld [vmem:[%s804 + $0x99] sm:$0xff]
        %v1948 = vld [vmem:[%s804 + $0xa9] sm:$0xff]
        %v1949 = vld [vmem:[%s804 + $0xb1] sm:$0xff]
        %s1950 = scalar_lea.vmem [#allocation12], 8
        %v1951 = vld [vmem:[%s1950] sm:$0x3]
        %v1953 = vsel %vm805, %v1934, 0
        %v1956 = vsel %vm805, %v1935, 0
        %v1959 = vsel %vm805, %v1936, 0
        %v1962 = vsel %vm805, %v1937, 0
        %v1965 = vsel %vm805, %v1938, 0
        %v1968 = vsel %vm805, %v1939, 0
        %v1971 = vsel %vm805, %v1940, 0
        %v1974 = vsel %vm805, %v1941, 0
        %v1977 = vsel %vm805, %v1942, 0
        %v1980 = vsel %vm805, %v1943, 0
        %v1983 = vsel %vm805, %v1944, 0
        %v1986 = vsel %vm805, %v1945, 0
        %v1989 = vsel %vm805, %v1946, 0
        %v1992 = vsel %vm805, %v1947, 0
        %v1995 = vsel %vm805, %v1948, 0
        %v1998 = vsel %vm805, %v1949, 0
        %v2001 = vsel %vm1129, %v1951, 0
        %2003 = vmatprep.subr.mxu0 0.0
        %2004 = vmatpush1.msra.mxu0 %v2001
        %2005 = vmatprep.subr.mxu0 0.0
        %2006 = vmatpush1.msra.mxu0 0.0
        %2007 = vmatprep.subr.mxu0 0.0
        %2008 = vmatpush1.msra.mxu0 0.0
        %2009 = vmatprep.subr.mxu0 0.0
        %2010 = vmatpush1.msra.mxu0 0.0
        %2011 = vmatprep.subr.mxu0 0.0
        %2012 = vmatpush1.msra.mxu0 0.0
        %2013 = vmatprep.subr.mxu0 0.0
        %2014 = vmatpush1.msra.mxu0 0.0
        %2015 = vmatprep.subr.mxu0 0.0
        %2016 = vmatpush1.msra.mxu0 0.0
        %2017 = vmatprep.subr.mxu0 0.0
        %2018 = vmatpush1.msra.mxu0 0.0
        %2019 = vmatprep.subr.mxu0 0.0
        %2020 = vmatpush1.msra.mxu0 0.0
        %2021 = vmatprep.subr.mxu0 0.0
        %2022 = vmatpush1.msra.mxu0 0.0
        %2023 = vmatprep.subr.mxu0 0.0
        %2024 = vmatpush1.msra.mxu0 0.0
        %2025 = vmatprep.subr.mxu0 0.0
        %2026 = vmatpush1.msra.mxu0 0.0
        %2027 = vmatprep.subr.mxu0 0.0
        %2028 = vmatpush1.msra.mxu0 0.0
        %2029 = vmatprep.subr.mxu0 0.0
        %2030 = vmatpush1.msra.mxu0 0.0
        %2031 = vmatprep.subr.mxu0 0.0
        %2032 = vmatpush1.msra.mxu0 0.0
        %2033 = vmatprep.subr.mxu0 0.0
        %2034 = vmatpush1.msra.mxu0 0.0
        %2035 = vmatprep.subr.mxu0 0.0
        %2036 = vmatpush1.msra.mxu0 0.0
        %2037 = vmatprep.subr.mxu0 0.0
        %2038 = vmatpush1.msra.mxu0 0.0
        %2039 = vmatprep.subr.mxu0 0.0
        %2040 = vmatpush1.msra.mxu0 0.0
        %2041 = vmatprep.subr.mxu0 0.0
        %2042 = vmatpush1.msra.mxu0 0.0
        %2043 = vmatprep.subr.mxu0 0.0
        %2044 = vmatpush1.msra.mxu0 0.0
        %2045 = vmatprep.subr.mxu0 0.0
        %2046 = vmatpush1.msra.mxu0 0.0
        %2047 = vmatprep.subr.mxu0 0.0
        %2048 = vmatpush1.msra.mxu0 0.0
        %2049 = vmatprep.subr.mxu0 0.0
        %2050 = vmatpush1.msra.mxu0 0.0
        %2051 = vmatprep.subr.mxu0 0.0
        %2052 = vmatpush1.msra.mxu0 0.0
        %2053 = vmatprep.subr.mxu0 0.0
        %2054 = vmatpush1.msra.mxu0 0.0
        %2055 = vmatprep.subr.mxu0 0.0
        %2056 = vmatpush1.msra.mxu0 0.0
        %2057 = vmatprep.subr.mxu0 0.0
        %2058 = vmatpush1.msra.mxu0 0.0
        %2059 = vmatprep.subr.mxu0 0.0
        %2060 = vmatpush1.msra.mxu0 0.0
        %2061 = vmatprep.subr.mxu0 0.0
        %2062 = vmatpush1.msra.mxu0 0.0
        %2063 = vmatprep.subr.mxu0 0.0
        %2064 = vmatpush1.msra.mxu0 0.0
        %2065 = vmatprep.subr.mxu0 0.0
        %2066 = vmatpush1.msra.mxu0 0.0
        %2067 = vmatprep.mubr.f32.mxu0 0.0
        %2068 = vmatmul.mubr.f32.gmra.mrb[0].mxu0 %v1953
        %v2069 = vpop.f32.mrb[0].mxu0
        %v2070 = vadd.f32 0.0, %v2069
        %v2071 = vpop.f32.mrb[0].mxu0
        %2072 = vmatprep.mubr.f32.mxu0 0.0
        %2073 = vmatmul.mubr.f32.gmra.mrb[0].mxu0 %v1956
        %v2074 = vpop.f32.mrb[0].mxu0
        %v2075 = vadd.f32 0.0, %v2074
        %v2076 = vpop.f32.mrb[0].mxu0
        %2077 = vmatprep.mubr.f32.mxu0 0.0
        %2078 = vmatmul.mubr.f32.gmra.mrb[0].mxu0 %v1959
        %v2079 = vpop.f32.mrb[0].mxu0
        %v2080 = vadd.f32 0.0, %v2079
        %v2081 = vpop.f32.mrb[0].mxu0
        %2082 = vmatprep.mubr.f32.mxu0 0.0
        %2083 = vmatmul.mubr.f32.gmra.mrb[0].mxu0 %v1962
        %v2084 = vpop.f32.mrb[0].mxu0
        %v2085 = vadd.f32 0.0, %v2084
        %v2086 = vpop.f32.mrb[0].mxu0
        %2087 = vmatprep.mubr.f32.mxu0 0.0
        %2088 = vmatmul.mubr.f32.gmra.mrb[0].mxu0 %v1965
        %v2089 = vpop.f32.mrb[0].mxu0
        %v2090 = vadd.f32 0.0, %v2089
        %v2091 = vpop.f32.mrb[0].mxu0
        %2092 = vmatprep.mubr.f32.mxu0 0.0
        %2093 = vmatmul.mubr.f32.gmra.mrb[0].mxu0 %v1968
        %v2094 = vpop.f32.mrb[0].mxu0
        %v2095 = vadd.f32 0.0, %v2094
        %v2096 = vpop.f32.mrb[0].mxu0
        %2097 = vmatprep.mubr.f32.mxu0 0.0
        %2098 = vmatmul.mubr.f32.gmra.mrb[0].mxu0 %v1971
        %v2099 = vpop.f32.mrb[0].mxu0
        %v2100 = vadd.f32 0.0, %v2099
        %v2101 = vpop.f32.mrb[0].mxu0
        %2102 = vmatprep.mubr.f32.mxu0 0.0
        %2103 = vmatmul.mubr.f32.gmra.mrb[0].mxu0 %v1974
        %v2104 = vpop.f32.mrb[0].mxu0
        %v2105 = vadd.f32 0.0, %v2104
        %v2106 = vpop.f32.mrb[0].mxu0
        %2107 = vmatprep.mubr.f32.mxu0 0.0
        %2108 = vmatmul.mubr.f32.gmra.mrb[0].mxu0 %v1977
        %v2109 = vpop.f32.mrb[0].mxu0
        %v2110 = vadd.f32 0.0, %v2109
        %v2111 = vpop.f32.mrb[0].mxu0
        %2112 = vmatprep.mubr.f32.mxu0 0.0
        %2113 = vmatmul.mubr.f32.gmra.mrb[0].mxu0 %v1980
        %v2114 = vpop.f32.mrb[0].mxu0
        %v2115 = vadd.f32 0.0, %v2114
        %v2116 = vpop.f32.mrb[0].mxu0
        %2117 = vmatprep.mubr.f32.mxu0 0.0
        %2118 = vmatmul.mubr.f32.gmra.mrb[0].mxu0 %v1983
        %v2119 = vpop.f32.mrb[0].mxu0
        %v2120 = vadd.f32 0.0, %v2119
        %v2121 = vpop.f32.mrb[0].mxu0
        %2122 = vmatprep.mubr.f32.mxu0 0.0
        %2123 = vmatmul.mubr.f32.gmra.mrb[0].mxu0 %v1986
        %v2124 = vpop.f32.mrb[0].mxu0
        %v2125 = vadd.f32 0.0, %v2124
        %v2126 = vpop.f32.mrb[0].mxu0
        %2127 = vmatprep.mubr.f32.mxu0 0.0
        %2128 = vmatmul.mubr.f32.gmra.mrb[0].mxu0 %v1989
        %v2129 = vpop.f32.mrb[0].mxu0
        %v2130 = vadd.f32 0.0, %v2129
        %v2131 = vpop.f32.mrb[0].mxu0
        %2132 = vmatprep.mubr.f32.mxu0 0.0
        %2133 = vmatmul.mubr.f32.gmra.mrb[0].mxu0 %v1992
        %v2134 = vpop.f32.mrb[0].mxu0
        %v2135 = vadd.f32 0.0, %v2134
        %v2136 = vpop.f32.mrb[0].mxu0
        %2137 = vmatprep.mubr.f32.mxu0 0.0
        %2138 = vmatmul.mubr.f32.gmra.mrb[0].mxu0 %v1995
        %v2139 = vpop.f32.mrb[0].mxu0
        %v2140 = vadd.f32 0.0, %v2139
        %v2141 = vpop.f32.mrb[0].mxu0
        %2142 = vmatprep.mubr.f32.mxu0 0.0
        %2143 = vmatmul.mubr.f32.gmra.mrb[0].mxu0 %v1998
        %v2144 = vpop.f32.mrb[0].mxu0
        %v2145 = vadd.f32 0.0, %v2144
        %v2146 = vpop.f32.mrb[0].mxu0
        %2147 = vdwg.mxu0
        %v2148 = vadd.f32 %v1918, %v2070
        %v2149 = vadd.f32 %v1919, %v2075
        %v2150 = vadd.f32 %v1920, %v2080
        %v2151 = vadd.f32 %v1921, %v2085
        %v2152 = vadd.f32 %v1922, %v2090
        %v2153 = vadd.f32 %v1923, %v2095
        %v2154 = vadd.f32 %v1924, %v2100
        %v2155 = vadd.f32 %v1925, %v2105
        %v2156 = vadd.f32 %v1926, %v2110
        %v2157 = vadd.f32 %v1927, %v2115
        %v2158 = vadd.f32 %v1928, %v2120
        %v2159 = vadd.f32 %v1929, %v2125
        %v2160 = vadd.f32 %v1930, %v2130
        %v2161 = vadd.f32 %v1931, %v2135
        %v2162 = vadd.f32 %v1932, %v2140
        %v2163 = vadd.f32 %v1933, %v2145
        %v2164 = vld [vmem:[%s804 + $0x2] sm:$0xff]
        %v2165 = vld [vmem:[%s804 + $0xa] sm:$0xff]
        %v2166 = vld [vmem:[%s804 + $0x1a] sm:$0xff]
        %v2167 = vld [vmem:[%s804 + $0x22] sm:$0xff]
        %v2168 = vld [vmem:[%s804 + $0x32] sm:$0xff]
        %v2169 = vld [vmem:[%s804 + $0x3a] sm:$0xff]
        %v2170 = vld [vmem:[%s804 + $0x4a] sm:$0xff]
        %v2171 = vld [vmem:[%s804 + $0x52] sm:$0xff]
        %v2172 = vld [vmem:[%s804 + $0x62] sm:$0xff]
        %v2173 = vld [vmem:[%s804 + $0x6a] sm:$0xff]
        %v2174 = vld [vmem:[%s804 + $0x7a] sm:$0xff]
        %v2175 = vld [vmem:[%s804 + $0x82] sm:$0xff]
        %v2176 = vld [vmem:[%s804 + $0x92] sm:$0xff]
        %v2177 = vld [vmem:[%s804 + $0x9a] sm:$0xff]
        %v2178 = vld [vmem:[%s804 + $0xaa] sm:$0xff]
        %v2179 = vld [vmem:[%s804 + $0xb2] sm:$0xff]
        %s2180 = scalar_lea.vmem [#allocation12], 10
        %v2181 = vld [vmem:[%s2180] sm:$0x3]
        %v2183 = vsel %vm805, %v2164, 0
        %v2186 = vsel %vm805, %v2165, 0
        %v2189 = vsel %vm805, %v2166, 0
        %v2192 = vsel %vm805, %v2167, 0
        %v2195 = vsel %vm805, %v2168, 0
        %v2198 = vsel %vm805, %v2169, 0
        %v2201 = vsel %vm805, %v2170, 0
        %v2204 = vsel %vm805, %v2171, 0
        %v2207 = vsel %vm805, %v2172, 0
        %v2210 = vsel %vm805, %v2173, 0
        %v2213 = vsel %vm805, %v2174, 0
        %v2216 = vsel %vm805, %v2175, 0
        %v2219 = vsel %vm805, %v2176, 0
        %v2222 = vsel %vm805, %v2177, 0
        %v2225 = vsel %vm805, %v2178, 0
        %v2228 = vsel %vm805, %v2179, 0
        %v2231 = vsel %vm1129, %v2181, 0
        %2233 = vmatprep.subr.mxu0 0.0
        %2234 = vmatpush1.msra.mxu0 %v2231
        %2235 = vmatprep.subr.mxu0 0.0
        %2236 = vmatpush1.msra.mxu0 0.0
        %2237 = vmatprep.subr.mxu0 0.0
        %2238 = vmatpush1.msra.mxu0 0.0
        %2239 = vmatprep.subr.mxu0 0.0
        %2240 = vmatpush1.msra.mxu0 0.0
        %2241 = vmatprep.subr.mxu0 0.0
        %2242 = vmatpush1.msra.mxu0 0.0
        %2243 = vmatprep.subr.mxu0 0.0
        %2244 = vmatpush1.msra.mxu0 0.0
        %2245 = vmatprep.subr.mxu0 0.0
        %2246 = vmatpush1.msra.mxu0 0.0
        %2247 = vmatprep.subr.mxu0 0.0
        %2248 = vmatpush1.msra.mxu0 0.0
        %2249 = vmatprep.subr.mxu0 0.0
        %2250 = vmatpush1.msra.mxu0 0.0
        %2251 = vmatprep.subr.mxu0 0.0
        %2252 = vmatpush1.msra.mxu0 0.0
        %2253 = vmatprep.subr.mxu0 0.0
        %2254 = vmatpush1.msra.mxu0 0.0
        %2255 = vmatprep.subr.mxu0 0.0
        %2256 = vmatpush1.msra.mxu0 0.0
        %2257 = vmatprep.subr.mxu0 0.0
        %2258 = vmatpush1.msra.mxu0 0.0
        %2259 = vmatprep.subr.mxu0 0.0
        %2260 = vmatpush1.msra.mxu0 0.0
        %2261 = vmatprep.subr.mxu0 0.0
        %2262 = vmatpush1.msra.mxu0 0.0
        %2263 = vmatprep.subr.mxu0 0.0
        %2264 = vmatpush1.msra.mxu0 0.0
        %2265 = vmatprep.subr.mxu0 0.0
        %2266 = vmatpush1.msra.mxu0 0.0
        %2267 = vmatprep.subr.mxu0 0.0
        %2268 = vmatpush1.msra.mxu0 0.0
        %2269 = vmatprep.subr.mxu0 0.0
        %2270 = vmatpush1.msra.mxu0 0.0
        %2271 = vmatprep.subr.mxu0 0.0
        %2272 = vmatpush1.msra.mxu0 0.0
        %2273 = vmatprep.subr.mxu0 0.0
        %2274 = vmatpush1.msra.mxu0 0.0
        %2275 = vmatprep.subr.mxu0 0.0
        %2276 = vmatpush1.msra.mxu0 0.0
        %2277 = vmatprep.subr.mxu0 0.0
        %2278 = vmatpush1.msra.mxu0 0.0
        %2279 = vmatprep.subr.mxu0 0.0
        %2280 = vmatpush1.msra.mxu0 0.0
        %2281 = vmatprep.subr.mxu0 0.0
        %2282 = vmatpush1.msra.mxu0 0.0
        %2283 = vmatprep.subr.mxu0 0.0
        %2284 = vmatpush1.msra.mxu0 0.0
        %2285 = vmatprep.subr.mxu0 0.0
        %2286 = vmatpush1.msra.mxu0 0.0
        %2287 = vmatprep.subr.mxu0 0.0
        %2288 = vmatpush1.msra.mxu0 0.0
        %2289 = vmatprep.subr.mxu0 0.0
        %2290 = vmatpush1.msra.mxu0 0.0
        %2291 = vmatprep.subr.mxu0 0.0
        %2292 = vmatpush1.msra.mxu0 0.0
        %2293 = vmatprep.subr.mxu0 0.0
        %2294 = vmatpush1.msra.mxu0 0.0
        %2295 = vmatprep.subr.mxu0 0.0
        %2296 = vmatpush1.msra.mxu0 0.0
        %2297 = vmatprep.mubr.f32.mxu0 0.0
        %2298 = vmatmul.mubr.f32.gmra.mrb[0].mxu0 %v2183
        %v2299 = vpop.f32.mrb[0].mxu0
        %v2300 = vadd.f32 0.0, %v2299
        %v2301 = vpop.f32.mrb[0].mxu0
        %2302 = vmatprep.mubr.f32.mxu0 0.0
        %2303 = vmatmul.mubr.f32.gmra.mrb[0].mxu0 %v2186
        %v2304 = vpop.f32.mrb[0].mxu0
        %v2305 = vadd.f32 0.0, %v2304
        %v2306 = vpop.f32.mrb[0].mxu0
        %2307 = vmatprep.mubr.f32.mxu0 0.0
        %2308 = vmatmul.mubr.f32.gmra.mrb[0].mxu0 %v2189
        %v2309 = vpop.f32.mrb[0].mxu0
        %v2310 = vadd.f32 0.0, %v2309
        %v2311 = vpop.f32.mrb[0].mxu0
        %2312 = vmatprep.mubr.f32.mxu0 0.0
        %2313 = vmatmul.mubr.f32.gmra.mrb[0].mxu0 %v2192
        %v2314 = vpop.f32.mrb[0].mxu0
        %v2315 = vadd.f32 0.0, %v2314
        %v2316 = vpop.f32.mrb[0].mxu0
        %2317 = vmatprep.mubr.f32.mxu0 0.0
        %2318 = vmatmul.mubr.f32.gmra.mrb[0].mxu0 %v2195
        %v2319 = vpop.f32.mrb[0].mxu0
        %v2320 = vadd.f32 0.0, %v2319
        %v2321 = vpop.f32.mrb[0].mxu0
        %2322 = vmatprep.mubr.f32.mxu0 0.0
        %2323 = vmatmul.mubr.f32.gmra.mrb[0].mxu0 %v2198
        %v2324 = vpop.f32.mrb[0].mxu0
        %v2325 = vadd.f32 0.0, %v2324
        %v2326 = vpop.f32.mrb[0].mxu0
        %2327 = vmatprep.mubr.f32.mxu0 0.0
        %2328 = vmatmul.mubr.f32.gmra.mrb[0].mxu0 %v2201
        %v2329 = vpop.f32.mrb[0].mxu0
        %v2330 = vadd.f32 0.0, %v2329
        %v2331 = vpop.f32.mrb[0].mxu0
        %2332 = vmatprep.mubr.f32.mxu0 0.0
        %2333 = vmatmul.mubr.f32.gmra.mrb[0].mxu0 %v2204
        %v2334 = vpop.f32.mrb[0].mxu0
        %v2335 = vadd.f32 0.0, %v2334
        %v2336 = vpop.f32.mrb[0].mxu0
        %2337 = vmatprep.mubr.f32.mxu0 0.0
        %2338 = vmatmul.mubr.f32.gmra.mrb[0].mxu0 %v2207
        %v2339 = vpop.f32.mrb[0].mxu0
        %v2340 = vadd.f32 0.0, %v2339
        %v2341 = vpop.f32.mrb[0].mxu0
        %2342 = vmatprep.mubr.f32.mxu0 0.0
        %2343 = vmatmul.mubr.f32.gmra.mrb[0].mxu0 %v2210
        %v2344 = vpop.f32.mrb[0].mxu0
        %v2345 = vadd.f32 0.0, %v2344
        %v2346 = vpop.f32.mrb[0].mxu0
        %2347 = vmatprep.mubr.f32.mxu0 0.0
        %2348 = vmatmul.mubr.f32.gmra.mrb[0].mxu0 %v2213
        %v2349 = vpop.f32.mrb[0].mxu0
        %v2350 = vadd.f32 0.0, %v2349
        %v2351 = vpop.f32.mrb[0].mxu0
        %2352 = vmatprep.mubr.f32.mxu0 0.0
        %2353 = vmatmul.mubr.f32.gmra.mrb[0].mxu0 %v2216
        %v2354 = vpop.f32.mrb[0].mxu0
        %v2355 = vadd.f32 0.0, %v2354
        %v2356 = vpop.f32.mrb[0].mxu0
        %2357 = vmatprep.mubr.f32.mxu0 0.0
        %2358 = vmatmul.mubr.f32.gmra.mrb[0].mxu0 %v2219
        %v2359 = vpop.f32.mrb[0].mxu0
        %v2360 = vadd.f32 0.0, %v2359
        %v2361 = vpop.f32.mrb[0].mxu0
        %2362 = vmatprep.mubr.f32.mxu0 0.0
        %2363 = vmatmul.mubr.f32.gmra.mrb[0].mxu0 %v2222
        %v2364 = vpop.f32.mrb[0].mxu0
        %v2365 = vadd.f32 0.0, %v2364
        %v2366 = vpop.f32.mrb[0].mxu0
        %2367 = vmatprep.mubr.f32.mxu0 0.0
        %2368 = vmatmul.mubr.f32.gmra.mrb[0].mxu0 %v2225
        %v2369 = vpop.f32.mrb[0].mxu0
        %v2370 = vadd.f32 0.0, %v2369
        %v2371 = vpop.f32.mrb[0].mxu0
        %2372 = vmatprep.mubr.f32.mxu0 0.0
        %2373 = vmatmul.mubr.f32.gmra.mrb[0].mxu0 %v2228
        %v2374 = vpop.f32.mrb[0].mxu0
        %v2375 = vadd.f32 0.0, %v2374
        %v2376 = vpop.f32.mrb[0].mxu0
        %2377 = vdwg.mxu0
        %v2378 = vadd.f32 %v2148, %v2300
        %v2379 = vadd.f32 %v2149, %v2305
        %v2380 = vadd.f32 %v2150, %v2310
        %v2381 = vadd.f32 %v2151, %v2315
        %v2382 = vadd.f32 %v2152, %v2320
        %v2383 = vadd.f32 %v2153, %v2325
        %v2384 = vadd.f32 %v2154, %v2330
        %v2385 = vadd.f32 %v2155, %v2335
        %v2386 = vadd.f32 %v2156, %v2340
        %v2387 = vadd.f32 %v2157, %v2345
        %v2388 = vadd.f32 %v2158, %v2350
        %v2389 = vadd.f32 %v2159, %v2355
        %v2390 = vadd.f32 %v2160, %v2360
        %v2391 = vadd.f32 %v2161, %v2365
        %v2392 = vadd.f32 %v2162, %v2370
        %v2393 = vadd.f32 %v2163, %v2375
        %s2394 = scalar_lea.vmem [#allocation2], 48
        %v2395 = vld [vmem:[%s2394] sm:$0xff]
        %v2396 = vld [vmem:[%s2394 + $0x8] sm:$0xff]
        %v2397 = vld [vmem:[%s2394 + $0x18] sm:$0xff]
        %v2398 = vld [vmem:[%s2394 + $0x20] sm:$0xff]
        %v2399 = vld [vmem:[%s2394 + $0x30] sm:$0xff]
        %v2400 = vld [vmem:[%s2394 + $0x38] sm:$0xff]
        %v2401 = vld [vmem:[%s2394 + $0x48] sm:$0xff]
        %v2402 = vld [vmem:[%s2394 + $0x50] sm:$0xff]
        %v2403 = vld [vmem:[%s2394 + $0x60] sm:$0xff]
        %v2404 = vld [vmem:[%s2394 + $0x68] sm:$0xff]
        %v2405 = vld [vmem:[%s2394 + $0x78] sm:$0xff]
        %v2406 = vld [vmem:[%s2394 + $0x80] sm:$0xff]
        %v2407 = vld [vmem:[%s2394 + $0x90] sm:$0xff]
        %v2408 = vld [vmem:[%s2394 + $0x98] sm:$0xff]
        %v2409 = vld [vmem:[%s2394 + $0xa8] sm:$0xff]
        %v2410 = vld [vmem:[%s2394 + $0xb0] sm:$0xff]
        %s2411 = scalar_lea.vmem [#allocation12], 12
        %v2412 = vld [vmem:[%s2411] sm:$0x3]
        %v2414 = vsel %vm805, %v2395, 0
        %v2417 = vsel %vm805, %v2396, 0
        %v2420 = vsel %vm805, %v2397, 0
        %v2423 = vsel %vm805, %v2398, 0
        %v2426 = vsel %vm805, %v2399, 0
        %v2429 = vsel %vm805, %v2400, 0
        %v2432 = vsel %vm805, %v2401, 0
        %v2435 = vsel %vm805, %v2402, 0
        %v2438 = vsel %vm805, %v2403, 0
        %v2441 = vsel %vm805, %v2404, 0
        %v2444 = vsel %vm805, %v2405, 0
        %v2447 = vsel %vm805, %v2406, 0
        %v2450 = vsel %vm805, %v2407, 0
        %v2453 = vsel %vm805, %v2408, 0
        %v2456 = vsel %vm805, %v2409, 0
        %v2459 = vsel %vm805, %v2410, 0
        %v2462 = vsel %vm1129, %v2412, 0
        %2464 = vmatprep.subr.mxu0 0.0
        %2465 = vmatpush1.msra.mxu0 %v2462
        %2466 = vmatprep.subr.mxu0 0.0
        %2467 = vmatpush1.msra.mxu0 0.0
        %2468 = vmatprep.subr.mxu0 0.0
        %2469 = vmatpush1.msra.mxu0 0.0
        %2470 = vmatprep.subr.mxu0 0.0
        %2471 = vmatpush1.msra.mxu0 0.0
        %2472 = vmatprep.subr.mxu0 0.0
        %2473 = vmatpush1.msra.mxu0 0.0
        %2474 = vmatprep.subr.mxu0 0.0
        %2475 = vmatpush1.msra.mxu0 0.0
        %2476 = vmatprep.subr.mxu0 0.0
        %2477 = vmatpush1.msra.mxu0 0.0
        %2478 = vmatprep.subr.mxu0 0.0
        %2479 = vmatpush1.msra.mxu0 0.0
        %2480 = vmatprep.subr.mxu0 0.0
        %2481 = vmatpush1.msra.mxu0 0.0
        %2482 = vmatprep.subr.mxu0 0.0
        %2483 = vmatpush1.msra.mxu0 0.0
        %2484 = vmatprep.subr.mxu0 0.0
        %2485 = vmatpush1.msra.mxu0 0.0
        %2486 = vmatprep.subr.mxu0 0.0
        %2487 = vmatpush1.msra.mxu0 0.0
        %2488 = vmatprep.subr.mxu0 0.0
        %2489 = vmatpush1.msra.mxu0 0.0
        %2490 = vmatprep.subr.mxu0 0.0
        %2491 = vmatpush1.msra.mxu0 0.0
        %2492 = vmatprep.subr.mxu0 0.0
        %2493 = vmatpush1.msra.mxu0 0.0
        %2494 = vmatprep.subr.mxu0 0.0
        %2495 = vmatpush1.msra.mxu0 0.0
        %2496 = vmatprep.subr.mxu0 0.0
        %2497 = vmatpush1.msra.mxu0 0.0
        %2498 = vmatprep.subr.mxu0 0.0
        %2499 = vmatpush1.msra.mxu0 0.0
        %2500 = vmatprep.subr.mxu0 0.0
        %2501 = vmatpush1.msra.mxu0 0.0
        %2502 = vmatprep.subr.mxu0 0.0
        %2503 = vmatpush1.msra.mxu0 0.0
        %2504 = vmatprep.subr.mxu0 0.0
        %2505 = vmatpush1.msra.mxu0 0.0
        %2506 = vmatprep.subr.mxu0 0.0
        %2507 = vmatpush1.msra.mxu0 0.0
        %2508 = vmatprep.subr.mxu0 0.0
        %2509 = vmatpush1.msra.mxu0 0.0
        %2510 = vmatprep.subr.mxu0 0.0
        %2511 = vmatpush1.msra.mxu0 0.0
        %2512 = vmatprep.subr.mxu0 0.0
        %2513 = vmatpush1.msra.mxu0 0.0
        %2514 = vmatprep.subr.mxu0 0.0
        %2515 = vmatpush1.msra.mxu0 0.0
        %2516 = vmatprep.subr.mxu0 0.0
        %2517 = vmatpush1.msra.mxu0 0.0
        %2518 = vmatprep.subr.mxu0 0.0
        %2519 = vmatpush1.msra.mxu0 0.0
        %2520 = vmatprep.subr.mxu0 0.0
        %2521 = vmatpush1.msra.mxu0 0.0
        %2522 = vmatprep.subr.mxu0 0.0
        %2523 = vmatpush1.msra.mxu0 0.0
        %2524 = vmatprep.subr.mxu0 0.0
        %2525 = vmatpush1.msra.mxu0 0.0
        %2526 = vmatprep.subr.mxu0 0.0
        %2527 = vmatpush1.msra.mxu0 0.0
        %2528 = vmatprep.mubr.f32.mxu0 0.0
        %2529 = vmatmul.mubr.f32.gmra.mrb[0].mxu0 %v2414
        %v2530 = vpop.f32.mrb[0].mxu0
        %v2531 = vadd.f32 0.0, %v2530
        %v2532 = vpop.f32.mrb[0].mxu0
        %2533 = vmatprep.mubr.f32.mxu0 0.0
        %2534 = vmatmul.mubr.f32.gmra.mrb[0].mxu0 %v2417
        %v2535 = vpop.f32.mrb[0].mxu0
        %v2536 = vadd.f32 0.0, %v2535
        %v2537 = vpop.f32.mrb[0].mxu0
        %2538 = vmatprep.mubr.f32.mxu0 0.0
        %2539 = vmatmul.mubr.f32.gmra.mrb[0].mxu0 %v2420
        %v2540 = vpop.f32.mrb[0].mxu0
        %v2541 = vadd.f32 0.0, %v2540
        %v2542 = vpop.f32.mrb[0].mxu0
        %2543 = vmatprep.mubr.f32.mxu0 0.0
        %2544 = vmatmul.mubr.f32.gmra.mrb[0].mxu0 %v2423
        %v2545 = vpop.f32.mrb[0].mxu0
        %v2546 = vadd.f32 0.0, %v2545
        %v2547 = vpop.f32.mrb[0].mxu0
        %2548 = vmatprep.mubr.f32.mxu0 0.0
        %2549 = vmatmul.mubr.f32.gmra.mrb[0].mxu0 %v2426
        %v2550 = vpop.f32.mrb[0].mxu0
        %v2551 = vadd.f32 0.0, %v2550
        %v2552 = vpop.f32.mrb[0].mxu0
        %2553 = vmatprep.mubr.f32.mxu0 0.0
        %2554 = vmatmul.mubr.f32.gmra.mrb[0].mxu0 %v2429
        %v2555 = vpop.f32.mrb[0].mxu0
        %v2556 = vadd.f32 0.0, %v2555
        %v2557 = vpop.f32.mrb[0].mxu0
        %2558 = vmatprep.mubr.f32.mxu0 0.0
        %2559 = vmatmul.mubr.f32.gmra.mrb[0].mxu0 %v2432
        %v2560 = vpop.f32.mrb[0].mxu0
        %v2561 = vadd.f32 0.0, %v2560
        %v2562 = vpop.f32.mrb[0].mxu0
        %2563 = vmatprep.mubr.f32.mxu0 0.0
        %2564 = vmatmul.mubr.f32.gmra.mrb[0].mxu0 %v2435
        %v2565 = vpop.f32.mrb[0].mxu0
        %v2566 = vadd.f32 0.0, %v2565
        %v2567 = vpop.f32.mrb[0].mxu0
        %2568 = vmatprep.mubr.f32.mxu0 0.0
        %2569 = vmatmul.mubr.f32.gmra.mrb[0].mxu0 %v2438
        %v2570 = vpop.f32.mrb[0].mxu0
        %v2571 = vadd.f32 0.0, %v2570
        %v2572 = vpop.f32.mrb[0].mxu0
        %2573 = vmatprep.mubr.f32.mxu0 0.0
        %2574 = vmatmul.mubr.f32.gmra.mrb[0].mxu0 %v2441
        %v2575 = vpop.f32.mrb[0].mxu0
        %v2576 = vadd.f32 0.0, %v2575
        %v2577 = vpop.f32.mrb[0].mxu0
        %2578 = vmatprep.mubr.f32.mxu0 0.0
        %2579 = vmatmul.mubr.f32.gmra.mrb[0].mxu0 %v2444
        %v2580 = vpop.f32.mrb[0].mxu0
        %v2581 = vadd.f32 0.0, %v2580
        %v2582 = vpop.f32.mrb[0].mxu0
        %2583 = vmatprep.mubr.f32.mxu0 0.0
        %2584 = vmatmul.mubr.f32.gmra.mrb[0].mxu0 %v2447
        %v2585 = vpop.f32.mrb[0].mxu0
        %v2586 = vadd.f32 0.0, %v2585
        %v2587 = vpop.f32.mrb[0].mxu0
        %2588 = vmatprep.mubr.f32.mxu0 0.0
        %2589 = vmatmul.mubr.f32.gmra.mrb[0].mxu0 %v2450
        %v2590 = vpop.f32.mrb[0].mxu0
        %v2591 = vadd.f32 0.0, %v2590
        %v2592 = vpop.f32.mrb[0].mxu0
        %2593 = vmatprep.mubr.f32.mxu0 0.0
        %2594 = vmatmul.mubr.f32.gmra.mrb[0].mxu0 %v2453
        %v2595 = vpop.f32.mrb[0].mxu0
        %v2596 = vadd.f32 0.0, %v2595
        %v2597 = vpop.f32.mrb[0].mxu0
        %2598 = vmatprep.mubr.f32.mxu0 0.0
        %2599 = vmatmul.mubr.f32.gmra.mrb[0].mxu0 %v2456
        %v2600 = vpop.f32.mrb[0].mxu0
        %v2601 = vadd.f32 0.0, %v2600
        %v2602 = vpop.f32.mrb[0].mxu0
        %2603 = vmatprep.mubr.f32.mxu0 0.0
        %2604 = vmatmul.mubr.f32.gmra.mrb[0].mxu0 %v2459
        %v2605 = vpop.f32.mrb[0].mxu0
        %v2606 = vadd.f32 0.0, %v2605
        %v2607 = vpop.f32.mrb[0].mxu0
        %2608 = vdwg.mxu0
        %v2609 = vadd.f32 %v2378, %v2531
        %v2610 = vadd.f32 %v2379, %v2536
        %v2611 = vadd.f32 %v2380, %v2541
        %v2612 = vadd.f32 %v2381, %v2546
        %v2613 = vadd.f32 %v2382, %v2551
        %v2614 = vadd.f32 %v2383, %v2556
        %v2615 = vadd.f32 %v2384, %v2561
        %v2616 = vadd.f32 %v2385, %v2566
        %v2617 = vadd.f32 %v2386, %v2571
        %v2618 = vadd.f32 %v2387, %v2576
        %v2619 = vadd.f32 %v2388, %v2581
        %v2620 = vadd.f32 %v2389, %v2586
        %v2621 = vadd.f32 %v2390, %v2591
        %v2622 = vadd.f32 %v2391, %v2596
        %v2623 = vadd.f32 %v2392, %v2601
        %v2624 = vadd.f32 %v2393, %v2606
        %v2625 = vld [vmem:[%s2394 + $0x1] sm:$0xff]
        %v2626 = vld [vmem:[%s2394 + $0x9] sm:$0xff]
        %v2627 = vld [vmem:[%s2394 + $0x19] sm:$0xff]
        %v2628 = vld [vmem:[%s2394 + $0x21] sm:$0xff]
        %v2629 = vld [vmem:[%s2394 + $0x31] sm:$0xff]
        %v2630 = vld [vmem:[%s2394 + $0x39] sm:$0xff]
        %v2631 = vld [vmem:[%s2394 + $0x49] sm:$0xff]
        %v2632 = vld [vmem:[%s2394 + $0x51] sm:$0xff]
        %v2633 = vld [vmem:[%s2394 + $0x61] sm:$0xff]
        %v2634 = vld [vmem:[%s2394 + $0x69] sm:$0xff]
        %v2635 = vld [vmem:[%s2394 + $0x79] sm:$0xff]
        %v2636 = vld [vmem:[%s2394 + $0x81] sm:$0xff]
        %v2637 = vld [vmem:[%s2394 + $0x91] sm:$0xff]
        %v2638 = vld [vmem:[%s2394 + $0x99] sm:$0xff]
        %v2639 = vld [vmem:[%s2394 + $0xa9] sm:$0xff]
        %v2640 = vld [vmem:[%s2394 + $0xb1] sm:$0xff]
        %s2641 = scalar_lea.vmem [#allocation12], 14
        %v2642 = vld [vmem:[%s2641] sm:$0x3]
        %v2644 = vsel %vm805, %v2625, 0
        %v2647 = vsel %vm805, %v2626, 0
        %v2650 = vsel %vm805, %v2627, 0
        %v2653 = vsel %vm805, %v2628, 0
        %v2656 = vsel %vm805, %v2629, 0
        %v2659 = vsel %vm805, %v2630, 0
        %v2662 = vsel %vm805, %v2631, 0
        %v2665 = vsel %vm805, %v2632, 0
        %v2668 = vsel %vm805, %v2633, 0
        %v2671 = vsel %vm805, %v2634, 0
        %v2674 = vsel %vm805, %v2635, 0
        %v2677 = vsel %vm805, %v2636, 0
        %v2680 = vsel %vm805, %v2637, 0
        %v2683 = vsel %vm805, %v2638, 0
        %v2686 = vsel %vm805, %v2639, 0
        %v2689 = vsel %vm805, %v2640, 0
        %v2692 = vsel %vm1129, %v2642, 0
        %2694 = vmatprep.subr.mxu0 0.0
        %2695 = vmatpush1.msra.mxu0 %v2692
        %2696 = vmatprep.subr.mxu0 0.0
        %2697 = vmatpush1.msra.mxu0 0.0
        %2698 = vmatprep.subr.mxu0 0.0
        %2699 = vmatpush1.msra.mxu0 0.0
        %2700 = vmatprep.subr.mxu0 0.0
        %2701 = vmatpush1.msra.mxu0 0.0
        %2702 = vmatprep.subr.mxu0 0.0
        %2703 = vmatpush1.msra.mxu0 0.0
        %2704 = vmatprep.subr.mxu0 0.0
        %2705 = vmatpush1.msra.mxu0 0.0
        %2706 = vmatprep.subr.mxu0 0.0
        %2707 = vmatpush1.msra.mxu0 0.0
        %2708 = vmatprep.subr.mxu0 0.0
        %2709 = vmatpush1.msra.mxu0 0.0
        %2710 = vmatprep.subr.mxu0 0.0
        %2711 = vmatpush1.msra.mxu0 0.0
        %2712 = vmatprep.subr.mxu0 0.0
        %2713 = vmatpush1.msra.mxu0 0.0
        %2714 = vmatprep.subr.mxu0 0.0
        %2715 = vmatpush1.msra.mxu0 0.0
        %2716 = vmatprep.subr.mxu0 0.0
        %2717 = vmatpush1.msra.mxu0 0.0
        %2718 = vmatprep.subr.mxu0 0.0
        %2719 = vmatpush1.msra.mxu0 0.0
        %2720 = vmatprep.subr.mxu0 0.0
        %2721 = vmatpush1.msra.mxu0 0.0
        %2722 = vmatprep.subr.mxu0 0.0
        %2723 = vmatpush1.msra.mxu0 0.0
        %2724 = vmatprep.subr.mxu0 0.0
        %2725 = vmatpush1.msra.mxu0 0.0
        %2726 = vmatprep.subr.mxu0 0.0
        %2727 = vmatpush1.msra.mxu0 0.0
        %2728 = vmatprep.subr.mxu0 0.0
        %2729 = vmatpush1.msra.mxu0 0.0
        %2730 = vmatprep.subr.mxu0 0.0
        %2731 = vmatpush1.msra.mxu0 0.0
        %2732 = vmatprep.subr.mxu0 0.0
        %2733 = vmatpush1.msra.mxu0 0.0
        %2734 = vmatprep.subr.mxu0 0.0
        %2735 = vmatpush1.msra.mxu0 0.0
        %2736 = vmatprep.subr.mxu0 0.0
        %2737 = vmatpush1.msra.mxu0 0.0
        %2738 = vmatprep.subr.mxu0 0.0
        %2739 = vmatpush1.msra.mxu0 0.0
        %2740 = vmatprep.subr.mxu0 0.0
        %2741 = vmatpush1.msra.mxu0 0.0
        %2742 = vmatprep.subr.mxu0 0.0
        %2743 = vmatpush1.msra.mxu0 0.0
        %2744 = vmatprep.subr.mxu0 0.0
        %2745 = vmatpush1.msra.mxu0 0.0
        %2746 = vmatprep.subr.mxu0 0.0
        %2747 = vmatpush1.msra.mxu0 0.0
        %2748 = vmatprep.subr.mxu0 0.0
        %2749 = vmatpush1.msra.mxu0 0.0
        %2750 = vmatprep.subr.mxu0 0.0
        %2751 = vmatpush1.msra.mxu0 0.0
        %2752 = vmatprep.subr.mxu0 0.0
        %2753 = vmatpush1.msra.mxu0 0.0
        %2754 = vmatprep.subr.mxu0 0.0
        %2755 = vmatpush1.msra.mxu0 0.0
        %2756 = vmatprep.subr.mxu0 0.0
        %2757 = vmatpush1.msra.mxu0 0.0
        %2758 = vmatprep.mubr.f32.mxu0 0.0
        %2759 = vmatmul.mubr.f32.gmra.mrb[0].mxu0 %v2644
        %v2760 = vpop.f32.mrb[0].mxu0
        %v2761 = vadd.f32 0.0, %v2760
        %v2762 = vpop.f32.mrb[0].mxu0
        %2763 = vmatprep.mubr.f32.mxu0 0.0
        %2764 = vmatmul.mubr.f32.gmra.mrb[0].mxu0 %v2647
        %v2765 = vpop.f32.mrb[0].mxu0
        %v2766 = vadd.f32 0.0, %v2765
        %v2767 = vpop.f32.mrb[0].mxu0
        %2768 = vmatprep.mubr.f32.mxu0 0.0
        %2769 = vmatmul.mubr.f32.gmra.mrb[0].mxu0 %v2650
        %v2770 = vpop.f32.mrb[0].mxu0
        %v2771 = vadd.f32 0.0, %v2770
        %v2772 = vpop.f32.mrb[0].mxu0
        %2773 = vmatprep.mubr.f32.mxu0 0.0
        %2774 = vmatmul.mubr.f32.gmra.mrb[0].mxu0 %v2653
        %v2775 = vpop.f32.mrb[0].mxu0
        %v2776 = vadd.f32 0.0, %v2775
        %v2777 = vpop.f32.mrb[0].mxu0
        %2778 = vmatprep.mubr.f32.mxu0 0.0
        %2779 = vmatmul.mubr.f32.gmra.mrb[0].mxu0 %v2656
        %v2780 = vpop.f32.mrb[0].mxu0
        %v2781 = vadd.f32 0.0, %v2780
        %v2782 = vpop.f32.mrb[0].mxu0
        %2783 = vmatprep.mubr.f32.mxu0 0.0
        %2784 = vmatmul.mubr.f32.gmra.mrb[0].mxu0 %v2659
        %v2785 = vpop.f32.mrb[0].mxu0
        %v2786 = vadd.f32 0.0, %v2785
        %v2787 = vpop.f32.mrb[0].mxu0
        %2788 = vmatprep.mubr.f32.mxu0 0.0
        %2789 = vmatmul.mubr.f32.gmra.mrb[0].mxu0 %v2662
        %v2790 = vpop.f32.mrb[0].mxu0
        %v2791 = vadd.f32 0.0, %v2790
        %v2792 = vpop.f32.mrb[0].mxu0
        %2793 = vmatprep.mubr.f32.mxu0 0.0
        %2794 = vmatmul.mubr.f32.gmra.mrb[0].mxu0 %v2665
        %v2795 = vpop.f32.mrb[0].mxu0
        %v2796 = vadd.f32 0.0, %v2795
        %v2797 = vpop.f32.mrb[0].mxu0
        %2798 = vmatprep.mubr.f32.mxu0 0.0
        %2799 = vmatmul.mubr.f32.gmra.mrb[0].mxu0 %v2668
        %v2800 = vpop.f32.mrb[0].mxu0
        %v2801 = vadd.f32 0.0, %v2800
        %v2802 = vpop.f32.mrb[0].mxu0
        %2803 = vmatprep.mubr.f32.mxu0 0.0
        %2804 = vmatmul.mubr.f32.gmra.mrb[0].mxu0 %v2671
        %v2805 = vpop.f32.mrb[0].mxu0
        %v2806 = vadd.f32 0.0, %v2805
        %v2807 = vpop.f32.mrb[0].mxu0
        %2808 = vmatprep.mubr.f32.mxu0 0.0
        %2809 = vmatmul.mubr.f32.gmra.mrb[0].mxu0 %v2674
        %v2810 = vpop.f32.mrb[0].mxu0
        %v2811 = vadd.f32 0.0, %v2810
        %v2812 = vpop.f32.mrb[0].mxu0
        %2813 = vmatprep.mubr.f32.mxu0 0.0
        %2814 = vmatmul.mubr.f32.gmra.mrb[0].mxu0 %v2677
        %v2815 = vpop.f32.mrb[0].mxu0
        %v2816 = vadd.f32 0.0, %v2815
        %v2817 = vpop.f32.mrb[0].mxu0
        %2818 = vmatprep.mubr.f32.mxu0 0.0
        %2819 = vmatmul.mubr.f32.gmra.mrb[0].mxu0 %v2680
        %v2820 = vpop.f32.mrb[0].mxu0
        %v2821 = vadd.f32 0.0, %v2820
        %v2822 = vpop.f32.mrb[0].mxu0
        %2823 = vmatprep.mubr.f32.mxu0 0.0
        %2824 = vmatmul.mubr.f32.gmra.mrb[0].mxu0 %v2683
        %v2825 = vpop.f32.mrb[0].mxu0
        %v2826 = vadd.f32 0.0, %v2825
        %v2827 = vpop.f32.mrb[0].mxu0
        %2828 = vmatprep.mubr.f32.mxu0 0.0
        %2829 = vmatmul.mubr.f32.gmra.mrb[0].mxu0 %v2686
        %v2830 = vpop.f32.mrb[0].mxu0
        %v2831 = vadd.f32 0.0, %v2830
        %v2832 = vpop.f32.mrb[0].mxu0
        %2833 = vmatprep.mubr.f32.mxu0 0.0
        %2834 = vmatmul.mubr.f32.gmra.mrb[0].mxu0 %v2689
        %v2835 = vpop.f32.mrb[0].mxu0
        %v2836 = vadd.f32 0.0, %v2835
        %v2837 = vpop.f32.mrb[0].mxu0
        %2838 = vdwg.mxu0
        %v2839 = vadd.f32 %v2609, %v2761
        %v2840 = vadd.f32 %v2610, %v2766
        %v2841 = vadd.f32 %v2611, %v2771
        %v2842 = vadd.f32 %v2612, %v2776
        %v2843 = vadd.f32 %v2613, %v2781
        %v2844 = vadd.f32 %v2614, %v2786
        %v2845 = vadd.f32 %v2615, %v2791
        %v2846 = vadd.f32 %v2616, %v2796
        %v2847 = vadd.f32 %v2617, %v2801
        %v2848 = vadd.f32 %v2618, %v2806
        %v2849 = vadd.f32 %v2619, %v2811
        %v2850 = vadd.f32 %v2620, %v2816
        %v2851 = vadd.f32 %v2621, %v2821
        %v2852 = vadd.f32 %v2622, %v2826
        %v2853 = vadd.f32 %v2623, %v2831
        %v2854 = vadd.f32 %v2624, %v2836
        %v2855 = vld [vmem:[%s2394 + $0x2] sm:$0xff]
        %v2856 = vld [vmem:[%s2394 + $0xa] sm:$0xff]
        %v2857 = vld [vmem:[%s2394 + $0x1a] sm:$0xff]
        %v2858 = vld [vmem:[%s2394 + $0x22] sm:$0xff]
        %v2859 = vld [vmem:[%s2394 + $0x32] sm:$0xff]
        %v2860 = vld [vmem:[%s2394 + $0x3a] sm:$0xff]
        %v2861 = vld [vmem:[%s2394 + $0x4a] sm:$0xff]
        %v2862 = vld [vmem:[%s2394 + $0x52] sm:$0xff]
        %v2863 = vld [vmem:[%s2394 + $0x62] sm:$0xff]
        %v2864 = vld [vmem:[%s2394 + $0x6a] sm:$0xff]
        %v2865 = vld [vmem:[%s2394 + $0x7a] sm:$0xff]
        %v2866 = vld [vmem:[%s2394 + $0x82] sm:$0xff]
        %v2867 = vld [vmem:[%s2394 + $0x92] sm:$0xff]
        %v2868 = vld [vmem:[%s2394 + $0x9a] sm:$0xff]
        %v2869 = vld [vmem:[%s2394 + $0xaa] sm:$0xff]
        %v2870 = vld [vmem:[%s2394 + $0xb2] sm:$0xff]
        %s2871 = scalar_lea.vmem [#allocation12], 16
        %v2872 = vld [vmem:[%s2871] sm:$0x3]
        %v2874 = vsel %vm805, %v2855, 0
        %v2877 = vsel %vm805, %v2856, 0
        %v2880 = vsel %vm805, %v2857, 0
        %v2883 = vsel %vm805, %v2858, 0
        %v2886 = vsel %vm805, %v2859, 0
        %v2889 = vsel %vm805, %v2860, 0
        %v2892 = vsel %vm805, %v2861, 0
        %v2895 = vsel %vm805, %v2862, 0
        %v2898 = vsel %vm805, %v2863, 0
        %v2901 = vsel %vm805, %v2864, 0
        %v2904 = vsel %vm805, %v2865, 0
        %v2907 = vsel %vm805, %v2866, 0
        %v2910 = vsel %vm805, %v2867, 0
        %v2913 = vsel %vm805, %v2868, 0
        %v2916 = vsel %vm805, %v2869, 0
        %v2919 = vsel %vm805, %v2870, 0
        %v2922 = vsel %vm1129, %v2872, 0
        %2924 = vmatprep.subr.mxu0 0.0
        %2925 = vmatpush1.msra.mxu0 %v2922
        %2926 = vmatprep.subr.mxu0 0.0
        %2927 = vmatpush1.msra.mxu0 0.0
        %2928 = vmatprep.subr.mxu0 0.0
        %2929 = vmatpush1.msra.mxu0 0.0
        %2930 = vmatprep.subr.mxu0 0.0
        %2931 = vmatpush1.msra.mxu0 0.0
        %2932 = vmatprep.subr.mxu0 0.0
        %2933 = vmatpush1.msra.mxu0 0.0
        %2934 = vmatprep.subr.mxu0 0.0
        %2935 = vmatpush1.msra.mxu0 0.0
        %2936 = vmatprep.subr.mxu0 0.0
        %2937 = vmatpush1.msra.mxu0 0.0
        %2938 = vmatprep.subr.mxu0 0.0
        %2939 = vmatpush1.msra.mxu0 0.0
        %2940 = vmatprep.subr.mxu0 0.0
        %2941 = vmatpush1.msra.mxu0 0.0
        %2942 = vmatprep.subr.mxu0 0.0
        %2943 = vmatpush1.msra.mxu0 0.0
        %2944 = vmatprep.subr.mxu0 0.0
        %2945 = vmatpush1.msra.mxu0 0.0
        %2946 = vmatprep.subr.mxu0 0.0
        %2947 = vmatpush1.msra.mxu0 0.0
        %2948 = vmatprep.subr.mxu0 0.0
        %2949 = vmatpush1.msra.mxu0 0.0
        %2950 = vmatprep.subr.mxu0 0.0
        %2951 = vmatpush1.msra.mxu0 0.0
        %2952 = vmatprep.subr.mxu0 0.0
        %2953 = vmatpush1.msra.mxu0 0.0
        %2954 = vmatprep.subr.mxu0 0.0
        %2955 = vmatpush1.msra.mxu0 0.0
        %2956 = vmatprep.subr.mxu0 0.0
        %2957 = vmatpush1.msra.mxu0 0.0
        %2958 = vmatprep.subr.mxu0 0.0
        %2959 = vmatpush1.msra.mxu0 0.0
        %2960 = vmatprep.subr.mxu0 0.0
        %2961 = vmatpush1.msra.mxu0 0.0
        %2962 = vmatprep.subr.mxu0 0.0
        %2963 = vmatpush1.msra.mxu0 0.0
        %2964 = vmatprep.subr.mxu0 0.0
        %2965 = vmatpush1.msra.mxu0 0.0
        %2966 = vmatprep.subr.mxu0 0.0
        %2967 = vmatpush1.msra.mxu0 0.0
        %2968 = vmatprep.subr.mxu0 0.0
        %2969 = vmatpush1.msra.mxu0 0.0
        %2970 = vmatprep.subr.mxu0 0.0
        %2971 = vmatpush1.msra.mxu0 0.0
        %2972 = vmatprep.subr.mxu0 0.0
        %2973 = vmatpush1.msra.mxu0 0.0
        %2974 = vmatprep.subr.mxu0 0.0
        %2975 = vmatpush1.msra.mxu0 0.0
        %2976 = vmatprep.subr.mxu0 0.0
        %2977 = vmatpush1.msra.mxu0 0.0
        %2978 = vmatprep.subr.mxu0 0.0
        %2979 = vmatpush1.msra.mxu0 0.0
        %2980 = vmatprep.subr.mxu0 0.0
        %2981 = vmatpush1.msra.mxu0 0.0
        %2982 = vmatprep.subr.mxu0 0.0
        %2983 = vmatpush1.msra.mxu0 0.0
        %2984 = vmatprep.subr.mxu0 0.0
        %2985 = vmatpush1.msra.mxu0 0.0
        %2986 = vmatprep.subr.mxu0 0.0
        %2987 = vmatpush1.msra.mxu0 0.0
        %2988 = vmatprep.mubr.f32.mxu0 0.0
        %2989 = vmatmul.mubr.f32.gmra.mrb[0].mxu0 %v2874
        %v2990 = vpop.f32.mrb[0].mxu0
        %v2991 = vadd.f32 0.0, %v2990
        %v2992 = vpop.f32.mrb[0].mxu0
        %2993 = vmatprep.mubr.f32.mxu0 0.0
        %2994 = vmatmul.mubr.f32.gmra.mrb[0].mxu0 %v2877
        %v2995 = vpop.f32.mrb[0].mxu0
        %v2996 = vadd.f32 0.0, %v2995
        %v2997 = vpop.f32.mrb[0].mxu0
        %2998 = vmatprep.mubr.f32.mxu0 0.0
        %2999 = vmatmul.mubr.f32.gmra.mrb[0].mxu0 %v2880
        %v3000 = vpop.f32.mrb[0].mxu0
        %v3001 = vadd.f32 0.0, %v3000
        %v3002 = vpop.f32.mrb[0].mxu0
        %3003 = vmatprep.mubr.f32.mxu0 0.0
        %3004 = vmatmul.mubr.f32.gmra.mrb[0].mxu0 %v2883
        %v3005 = vpop.f32.mrb[0].mxu0
        %v3006 = vadd.f32 0.0, %v3005
        %v3007 = vpop.f32.mrb[0].mxu0
        %3008 = vmatprep.mubr.f32.mxu0 0.0
        %3009 = vmatmul.mubr.f32.gmra.mrb[0].mxu0 %v2886
        %v3010 = vpop.f32.mrb[0].mxu0
        %v3011 = vadd.f32 0.0, %v3010
        %v3012 = vpop.f32.mrb[0].mxu0
        %3013 = vmatprep.mubr.f32.mxu0 0.0
        %3014 = vmatmul.mubr.f32.gmra.mrb[0].mxu0 %v2889
        %v3015 = vpop.f32.mrb[0].mxu0
        %v3016 = vadd.f32 0.0, %v3015
        %v3017 = vpop.f32.mrb[0].mxu0
        %3018 = vmatprep.mubr.f32.mxu0 0.0
        %3019 = vmatmul.mubr.f32.gmra.mrb[0].mxu0 %v2892
        %v3020 = vpop.f32.mrb[0].mxu0
        %v3021 = vadd.f32 0.0, %v3020
        %v3022 = vpop.f32.mrb[0].mxu0
        %3023 = vmatprep.mubr.f32.mxu0 0.0
        %3024 = vmatmul.mubr.f32.gmra.mrb[0].mxu0 %v2895
        %v3025 = vpop.f32.mrb[0].mxu0
        %v3026 = vadd.f32 0.0, %v3025
        %v3027 = vpop.f32.mrb[0].mxu0
        %3028 = vmatprep.mubr.f32.mxu0 0.0
        %3029 = vmatmul.mubr.f32.gmra.mrb[0].mxu0 %v2898
        %v3030 = vpop.f32.mrb[0].mxu0
        %v3031 = vadd.f32 0.0, %v3030
        %v3032 = vpop.f32.mrb[0].mxu0
        %3033 = vmatprep.mubr.f32.mxu0 0.0
        %3034 = vmatmul.mubr.f32.gmra.mrb[0].mxu0 %v2901
        %v3035 = vpop.f32.mrb[0].mxu0
        %v3036 = vadd.f32 0.0, %v3035
        %v3037 = vpop.f32.mrb[0].mxu0
        %3038 = vmatprep.mubr.f32.mxu0 0.0
        %3039 = vmatmul.mubr.f32.gmra.mrb[0].mxu0 %v2904
        %v3040 = vpop.f32.mrb[0].mxu0
        %v3041 = vadd.f32 0.0, %v3040
        %v3042 = vpop.f32.mrb[0].mxu0
        %3043 = vmatprep.mubr.f32.mxu0 0.0
        %3044 = vmatmul.mubr.f32.gmra.mrb[0].mxu0 %v2907
        %v3045 = vpop.f32.mrb[0].mxu0
        %v3046 = vadd.f32 0.0, %v3045
        %v3047 = vpop.f32.mrb[0].mxu0
        %3048 = vmatprep.mubr.f32.mxu0 0.0
        %3049 = vmatmul.mubr.f32.gmra.mrb[0].mxu0 %v2910
        %v3050 = vpop.f32.mrb[0].mxu0
        %v3051 = vadd.f32 0.0, %v3050
        %v3052 = vpop.f32.mrb[0].mxu0
        %3053 = vmatprep.mubr.f32.mxu0 0.0
        %3054 = vmatmul.mubr.f32.gmra.mrb[0].mxu0 %v2913
        %v3055 = vpop.f32.mrb[0].mxu0
        %v3056 = vadd.f32 0.0, %v3055
        %v3057 = vpop.f32.mrb[0].mxu0
        %3058 = vmatprep.mubr.f32.mxu0 0.0
        %3059 = vmatmul.mubr.f32.gmra.mrb[0].mxu0 %v2916
        %v3060 = vpop.f32.mrb[0].mxu0
        %v3061 = vadd.f32 0.0, %v3060
        %v3062 = vpop.f32.mrb[0].mxu0
        %3063 = vmatprep.mubr.f32.mxu0 0.0
        %3064 = vmatmul.mubr.f32.gmra.mrb[0].mxu0 %v2919
        %v3065 = vpop.f32.mrb[0].mxu0
        %v3066 = vadd.f32 0.0, %v3065
        %v3067 = vpop.f32.mrb[0].mxu0
        %3068 = vdwg.mxu0
        %v3069 = vadd.f32 %v2839, %v2991
        %v3070 = vadd.f32 %v2840, %v2996
        %v3071 = vadd.f32 %v2841, %v3001
        %v3072 = vadd.f32 %v2842, %v3006
        %v3073 = vadd.f32 %v2843, %v3011
        %v3074 = vadd.f32 %v2844, %v3016
        %v3075 = vadd.f32 %v2845, %v3021
        %v3076 = vadd.f32 %v2846, %v3026
        %v3077 = vadd.f32 %v2847, %v3031
        %v3078 = vadd.f32 %v2848, %v3036
        %v3079 = vadd.f32 %v2849, %v3041
        %v3080 = vadd.f32 %v2850, %v3046
        %v3081 = vadd.f32 %v2851, %v3051
        %v3082 = vadd.f32 %v2852, %v3056
        %v3083 = vadd.f32 %v2853, %v3061
        %v3084 = vadd.f32 %v2854, %v3066
        %v3085 = vld [vmem:[#allocation14] sm:$0x1]
        %v3087 = vlaneseq
        %v3088 = vshrl.u32 %v3087, 7
        %v3089 = vsub.s32 0, %v3088
        %v3090 = vrot.slane %v3085, %v3089
        %v3092 = vadd.f32 %v3069, %v3090
        %v3093 = vadd.f32 %v3070, %v3090
        %v3094 = vadd.f32 %v3071, %v3090
        %v3095 = vadd.f32 %v3072, %v3090
        %v3096 = vadd.f32 %v3073, %v3090
        %v3097 = vadd.f32 %v3074, %v3090
        %v3098 = vadd.f32 %v3075, %v3090
        %v3099 = vadd.f32 %v3076, %v3090
        %v3100 = vadd.f32 %v3077, %v3090
        %v3101 = vadd.f32 %v3078, %v3090
        %v3102 = vadd.f32 %v3079, %v3090
        %v3103 = vadd.f32 %v3080, %v3090
        %v3104 = vadd.f32 %v3081, %v3090
        %v3105 = vadd.f32 %v3082, %v3090
        %v3106 = vadd.f32 %v3083, %v3090
        %v3107 = vadd.f32 %v3084, %v3090
        %vm3108 = vcmp.ge.f32.partialorder %v3092, 0.0
        %vm3109 = vcmp.ge.f32.partialorder %v3093, 0.0
        %vm3110 = vcmp.ge.f32.partialorder %v3094, 0.0
        %vm3111 = vcmp.ge.f32.partialorder %v3095, 0.0
        %vm3112 = vcmp.ge.f32.partialorder %v3096, 0.0
        %vm3113 = vcmp.ge.f32.partialorder %v3097, 0.0
        %vm3114 = vcmp.ge.f32.partialorder %v3098, 0.0
        %vm3115 = vcmp.ge.f32.partialorder %v3099, 0.0
        %vm3116 = vcmp.ge.f32.partialorder %v3100, 0.0
        %vm3117 = vcmp.ge.f32.partialorder %v3101, 0.0
        %vm3118 = vcmp.ge.f32.partialorder %v3102, 0.0
        %vm3119 = vcmp.ge.f32.partialorder %v3103, 0.0
        %vm3120 = vcmp.ge.f32.partialorder %v3104, 0.0
        %vm3121 = vcmp.ge.f32.partialorder %v3105, 0.0
        %vm3122 = vcmp.ge.f32.partialorder %v3106, 0.0
        %vm3123 = vcmp.ge.f32.partialorder %v3107, 0.0
        %v3124 = vmul.f32 %v3092, 0.01
        %v3125 = vmul.f32 %v3093, 0.01
        %v3126 = vmul.f32 %v3094, 0.01
        %v3127 = vmul.f32 %v3095, 0.01
        %v3128 = vmul.f32 %v3096, 0.01
        %v3129 = vmul.f32 %v3097, 0.01
        %v3130 = vmul.f32 %v3098, 0.01
        %v3131 = vmul.f32 %v3099, 0.01
        %v3132 = vmul.f32 %v3100, 0.01
        %v3133 = vmul.f32 %v3101, 0.01
        %v3134 = vmul.f32 %v3102, 0.01
        %v3135 = vmul.f32 %v3103, 0.01
        %v3136 = vmul.f32 %v3104, 0.01
        %v3137 = vmul.f32 %v3105, 0.01
        %v3138 = vmul.f32 %v3106, 0.01
        %v3139 = vmul.f32 %v3107, 0.01
        %v3140 = vsel %vm3108, %v3092, %v3124
        %v3141 = vsel %vm3109, %v3093, %v3125
        %v3142 = vsel %vm3110, %v3094, %v3126
        %v3143 = vsel %vm3111, %v3095, %v3127
        %v3144 = vsel %vm3112, %v3096, %v3128
        %v3145 = vsel %vm3113, %v3097, %v3129
        %v3146 = vsel %vm3114, %v3098, %v3130
        %v3147 = vsel %vm3115, %v3099, %v3131
        %v3148 = vsel %vm3116, %v3100, %v3132
        %v3149 = vsel %vm3117, %v3101, %v3133
        %v3150 = vsel %vm3118, %v3102, %v3134
        %v3151 = vsel %vm3119, %v3103, %v3135
        %v3152 = vsel %vm3120, %v3104, %v3136
        %v3153 = vsel %vm3121, %v3105, %v3137
        %v3154 = vsel %vm3122, %v3106, %v3138
        %v3155 = vsel %vm3123, %v3107, %v3139
        %v3156 = vld [vmem:[#allocation15] sm:$0x3]
        %v3157 = vld [vmem:[#allocation17] sm:$0x1]
        %v3159 = vlaneseq
        %v3160 = vshrl.u32 %v3159, 7
        %v3161 = vsub.s32 0, %v3160
        %v3162 = vrot.slane %v3157, %v3161
        %v3165 = vsel %vm805, %v3140, 0
        %v3168 = vsel %vm805, %v3141, 0
        %v3171 = vsel %vm805, %v3142, 0
        %v3174 = vsel %vm805, %v3143, 0
        %v3177 = vsel %vm805, %v3144, 0
        %v3180 = vsel %vm805, %v3145, 0
        %v3183 = vsel %vm805, %v3146, 0
        %v3186 = vsel %vm805, %v3147, 0
        %v3189 = vsel %vm805, %v3148, 0
        %v3192 = vsel %vm805, %v3149, 0
        %v3195 = vsel %vm805, %v3150, 0
        %v3198 = vsel %vm805, %v3151, 0
        %v3201 = vsel %vm805, %v3152, 0
        %v3204 = vsel %vm805, %v3153, 0
        %v3207 = vsel %vm805, %v3154, 0
        %v3210 = vsel %vm805, %v3155, 0
        %v3213 = vsel %vm1129, %v3156, 0
        %3215 = vmatprep.subr.mxu0 0.0
        %3216 = vmatpush1.msra.mxu0 %v3213
        %3217 = vmatprep.subr.mxu0 0.0
        %3218 = vmatpush1.msra.mxu0 0.0
        %3219 = vmatprep.subr.mxu0 0.0
        %3220 = vmatpush1.msra.mxu0 0.0
        %3221 = vmatprep.subr.mxu0 0.0
        %3222 = vmatpush1.msra.mxu0 0.0
        %3223 = vmatprep.subr.mxu0 0.0
        %3224 = vmatpush1.msra.mxu0 0.0
        %3225 = vmatprep.subr.mxu0 0.0
        %3226 = vmatpush1.msra.mxu0 0.0
        %3227 = vmatprep.subr.mxu0 0.0
        %3228 = vmatpush1.msra.mxu0 0.0
        %3229 = vmatprep.subr.mxu0 0.0
        %3230 = vmatpush1.msra.mxu0 0.0
        %3231 = vmatprep.subr.mxu0 0.0
        %3232 = vmatpush1.msra.mxu0 0.0
        %3233 = vmatprep.subr.mxu0 0.0
        %3234 = vmatpush1.msra.mxu0 0.0
        %3235 = vmatprep.subr.mxu0 0.0
        %3236 = vmatpush1.msra.mxu0 0.0
        %3237 = vmatprep.subr.mxu0 0.0
        %3238 = vmatpush1.msra.mxu0 0.0
        %3239 = vmatprep.subr.mxu0 0.0
        %3240 = vmatpush1.msra.mxu0 0.0
        %3241 = vmatprep.subr.mxu0 0.0
        %3242 = vmatpush1.msra.mxu0 0.0
        %3243 = vmatprep.subr.mxu0 0.0
        %3244 = vmatpush1.msra.mxu0 0.0
        %3245 = vmatprep.subr.mxu0 0.0
        %3246 = vmatpush1.msra.mxu0 0.0
        %3247 = vmatprep.subr.mxu0 0.0
        %3248 = vmatpush1.msra.mxu0 0.0
        %3249 = vmatprep.subr.mxu0 0.0
        %3250 = vmatpush1.msra.mxu0 0.0
        %3251 = vmatprep.subr.mxu0 0.0
        %3252 = vmatpush1.msra.mxu0 0.0
        %3253 = vmatprep.subr.mxu0 0.0
        %3254 = vmatpush1.msra.mxu0 0.0
        %3255 = vmatprep.subr.mxu0 0.0
        %3256 = vmatpush1.msra.mxu0 0.0
        %3257 = vmatprep.subr.mxu0 0.0
        %3258 = vmatpush1.msra.mxu0 0.0
        %3259 = vmatprep.subr.mxu0 0.0
        %3260 = vmatpush1.msra.mxu0 0.0
        %3261 = vmatprep.subr.mxu0 0.0
        %3262 = vmatpush1.msra.mxu0 0.0
        %3263 = vmatprep.subr.mxu0 0.0
        %3264 = vmatpush1.msra.mxu0 0.0
        %3265 = vmatprep.subr.mxu0 0.0
        %3266 = vmatpush1.msra.mxu0 0.0
        %3267 = vmatprep.subr.mxu0 0.0
        %3268 = vmatpush1.msra.mxu0 0.0
        %3269 = vmatprep.subr.mxu0 0.0
        %3270 = vmatpush1.msra.mxu0 0.0
        %3271 = vmatprep.subr.mxu0 0.0
        %3272 = vmatpush1.msra.mxu0 0.0
        %3273 = vmatprep.subr.mxu0 0.0
        %3274 = vmatpush1.msra.mxu0 0.0
        %3275 = vmatprep.subr.mxu0 0.0
        %3276 = vmatpush1.msra.mxu0 0.0
        %3277 = vmatprep.subr.mxu0 0.0
        %3278 = vmatpush1.msra.mxu0 0.0
        %3279 = vmatprep.mubr.f32.mxu0 0.0
        %3280 = vmatmul.mubr.f32.gmra.mrb[0].mxu0 %v3165
        %v3281 = vpop.f32.mrb[0].mxu0
        %v3282 = vadd.f32 %v3162, %v3281
        %v3283 = vpop.f32.mrb[0].mxu0
        %3284 = vmatprep.mubr.f32.mxu0 0.0
        %3285 = vmatmul.mubr.f32.gmra.mrb[0].mxu0 %v3168
        %v3286 = vpop.f32.mrb[0].mxu0
        %v3287 = vadd.f32 %v3162, %v3286
        %v3288 = vpop.f32.mrb[0].mxu0
        %3289 = vmatprep.mubr.f32.mxu0 0.0
        %3290 = vmatmul.mubr.f32.gmra.mrb[0].mxu0 %v3171
        %v3291 = vpop.f32.mrb[0].mxu0
        %v3292 = vadd.f32 %v3162, %v3291
        %v3293 = vpop.f32.mrb[0].mxu0
        %3294 = vmatprep.mubr.f32.mxu0 0.0
        %3295 = vmatmul.mubr.f32.gmra.mrb[0].mxu0 %v3174
        %v3296 = vpop.f32.mrb[0].mxu0
        %v3297 = vadd.f32 %v3162, %v3296
        %v3298 = vpop.f32.mrb[0].mxu0
        %3299 = vmatprep.mubr.f32.mxu0 0.0
        %3300 = vmatmul.mubr.f32.gmra.mrb[0].mxu0 %v3177
        %v3301 = vpop.f32.mrb[0].mxu0
        %v3302 = vadd.f32 %v3162, %v3301
        %v3303 = vpop.f32.mrb[0].mxu0
        %3304 = vmatprep.mubr.f32.mxu0 0.0
        %3305 = vmatmul.mubr.f32.gmra.mrb[0].mxu0 %v3180
        %v3306 = vpop.f32.mrb[0].mxu0
        %v3307 = vadd.f32 %v3162, %v3306
        %v3308 = vpop.f32.mrb[0].mxu0
        %3309 = vmatprep.mubr.f32.mxu0 0.0
        %3310 = vmatmul.mubr.f32.gmra.mrb[0].mxu0 %v3183
        %v3311 = vpop.f32.mrb[0].mxu0
        %v3312 = vadd.f32 %v3162, %v3311
        %v3313 = vpop.f32.mrb[0].mxu0
        %3314 = vmatprep.mubr.f32.mxu0 0.0
        %3315 = vmatmul.mubr.f32.gmra.mrb[0].mxu0 %v3186
        %v3316 = vpop.f32.mrb[0].mxu0
        %v3317 = vadd.f32 %v3162, %v3316
        %v3318 = vpop.f32.mrb[0].mxu0
        %3319 = vmatprep.mubr.f32.mxu0 0.0
        %3320 = vmatmul.mubr.f32.gmra.mrb[0].mxu0 %v3189
        %v3321 = vpop.f32.mrb[0].mxu0
        %v3322 = vadd.f32 %v3162, %v3321
        %v3323 = vpop.f32.mrb[0].mxu0
        %3324 = vmatprep.mubr.f32.mxu0 0.0
        %3325 = vmatmul.mubr.f32.gmra.mrb[0].mxu0 %v3192
        %v3326 = vpop.f32.mrb[0].mxu0
        %v3327 = vadd.f32 %v3162, %v3326
        %v3328 = vpop.f32.mrb[0].mxu0
        %3329 = vmatprep.mubr.f32.mxu0 0.0
        %3330 = vmatmul.mubr.f32.gmra.mrb[0].mxu0 %v3195
        %v3331 = vpop.f32.mrb[0].mxu0
        %v3332 = vadd.f32 %v3162, %v3331
        %v3333 = vpop.f32.mrb[0].mxu0
        %3334 = vmatprep.mubr.f32.mxu0 0.0
        %3335 = vmatmul.mubr.f32.gmra.mrb[0].mxu0 %v3198
        %v3336 = vpop.f32.mrb[0].mxu0
        %v3337 = vadd.f32 %v3162, %v3336
        %v3338 = vpop.f32.mrb[0].mxu0
        %3339 = vmatprep.mubr.f32.mxu0 0.0
        %3340 = vmatmul.mubr.f32.gmra.mrb[0].mxu0 %v3201
        %v3341 = vpop.f32.mrb[0].mxu0
        %v3342 = vadd.f32 %v3162, %v3341
        %v3343 = vpop.f32.mrb[0].mxu0
        %3344 = vmatprep.mubr.f32.mxu0 0.0
        %3345 = vmatmul.mubr.f32.gmra.mrb[0].mxu0 %v3204
        %v3346 = vpop.f32.mrb[0].mxu0
        %v3347 = vadd.f32 %v3162, %v3346
        %v3348 = vpop.f32.mrb[0].mxu0
        %3349 = vmatprep.mubr.f32.mxu0 0.0
        %3350 = vmatmul.mubr.f32.gmra.mrb[0].mxu0 %v3207
        %v3351 = vpop.f32.mrb[0].mxu0
        %v3352 = vadd.f32 %v3162, %v3351
        %v3353 = vpop.f32.mrb[0].mxu0
        %3354 = vmatprep.mubr.f32.mxu0 0.0
        %3355 = vmatmul.mubr.f32.gmra.mrb[0].mxu0 %v3210
        %v3356 = vpop.f32.mrb[0].mxu0
        %v3357 = vadd.f32 %v3162, %v3356
        %v3358 = vpop.f32.mrb[0].mxu0
        %3359 = vdwg.mxu0
        %v3360 = vadd.f32 %v536, %v3282
        %v3361 = vadd.f32 %v537, %v3287
        %v3362 = vadd.f32 %v538, %v3292
        %v3363 = vadd.f32 %v539, %v3297
        %v3364 = vadd.f32 %v540, %v3302
        %v3365 = vadd.f32 %v541, %v3307
        %v3366 = vadd.f32 %v542, %v3312
        %v3367 = vadd.f32 %v543, %v3317
        %v3368 = vadd.f32 %v544, %v3322
        %v3369 = vadd.f32 %v545, %v3327
        %v3370 = vadd.f32 %v546, %v3332
        %v3371 = vadd.f32 %v547, %v3337
        %v3372 = vadd.f32 %v548, %v3342
        %v3373 = vadd.f32 %v549, %v3347
        %v3374 = vadd.f32 %v550, %v3352
        %v3375 = vadd.f32 %v551, %v3357
        %vm3376 = vcmp.ge.f32.partialorder %v3360, 0.0
        %vm3377 = vcmp.ge.f32.partialorder %v3361, 0.0
        %vm3378 = vcmp.ge.f32.partialorder %v3362, 0.0
        %vm3379 = vcmp.ge.f32.partialorder %v3363, 0.0
        %vm3380 = vcmp.ge.f32.partialorder %v3364, 0.0
        %vm3381 = vcmp.ge.f32.partialorder %v3365, 0.0
        %vm3382 = vcmp.ge.f32.partialorder %v3366, 0.0
        %vm3383 = vcmp.ge.f32.partialorder %v3367, 0.0
        %vm3384 = vcmp.ge.f32.partialorder %v3368, 0.0
        %vm3385 = vcmp.ge.f32.partialorder %v3369, 0.0
        %vm3386 = vcmp.ge.f32.partialorder %v3370, 0.0
        %vm3387 = vcmp.ge.f32.partialorder %v3371, 0.0
        %vm3388 = vcmp.ge.f32.partialorder %v3372, 0.0
        %vm3389 = vcmp.ge.f32.partialorder %v3373, 0.0
        %vm3390 = vcmp.ge.f32.partialorder %v3374, 0.0
        %vm3391 = vcmp.ge.f32.partialorder %v3375, 0.0
        %v3392 = vmul.f32 %v3360, 0.01
        %v3393 = vmul.f32 %v3361, 0.01
        %v3394 = vmul.f32 %v3362, 0.01
        %v3395 = vmul.f32 %v3363, 0.01
        %v3396 = vmul.f32 %v3364, 0.01
        %v3397 = vmul.f32 %v3365, 0.01
        %v3398 = vmul.f32 %v3366, 0.01
        %v3399 = vmul.f32 %v3367, 0.01
        %v3400 = vmul.f32 %v3368, 0.01
        %v3401 = vmul.f32 %v3369, 0.01
        %v3402 = vmul.f32 %v3370, 0.01
        %v3403 = vmul.f32 %v3371, 0.01
        %v3404 = vmul.f32 %v3372, 0.01
        %v3405 = vmul.f32 %v3373, 0.01
        %v3406 = vmul.f32 %v3374, 0.01
        %v3407 = vmul.f32 %v3375, 0.01
        %v3408 = vsel %vm3376, %v3360, %v3392
        %v3409 = vsel %vm3377, %v3361, %v3393
        %v3410 = vsel %vm3378, %v3362, %v3394
        %v3411 = vsel %vm3379, %v3363, %v3395
        %v3412 = vsel %vm3380, %v3364, %v3396
        %v3413 = vsel %vm3381, %v3365, %v3397
        %v3414 = vsel %vm3382, %v3366, %v3398
        %v3415 = vsel %vm3383, %v3367, %v3399
        %v3416 = vsel %vm3384, %v3368, %v3400
        %v3417 = vsel %vm3385, %v3369, %v3401
        %v3418 = vsel %vm3386, %v3370, %v3402
        %v3419 = vsel %vm3387, %v3371, %v3403
        %v3420 = vsel %vm3388, %v3372, %v3404
        %v3421 = vsel %vm3389, %v3373, %v3405
        %v3422 = vsel %vm3390, %v3374, %v3406
        %v3423 = vsel %vm3391, %v3375, %v3407
        %3424 = vst.msk [vmem:[%s531] sm:$0xff] %vm558, %v3408
        %3425 = vst.msk [vmem:[%s531 + $0x8] sm:$0xff] %vm558, %v3409
        %3426 = vst.msk [vmem:[%s531 + $0x10] sm:$0xff] %vm558, %v3410
        %3427 = vst.msk [vmem:[%s531 + $0x18] sm:$0xff] %vm558, %v3411
        %3428 = vst.msk [vmem:[%s531 + $0x20] sm:$0xff] %vm558, %v3412
        %3429 = vst.msk [vmem:[%s531 + $0x28] sm:$0xff] %vm558, %v3413
        %3430 = vst.msk [vmem:[%s531 + $0x30] sm:$0xff] %vm558, %v3414
        %3431 = vst.msk [vmem:[%s531 + $0x38] sm:$0xff] %vm558, %v3415
        %3432 = vst.msk [vmem:[%s531 + $0x40] sm:$0xff] %vm558, %v3416
        %3433 = vst.msk [vmem:[%s531 + $0x48] sm:$0xff] %vm558, %v3417
        %3434 = vst.msk [vmem:[%s531 + $0x50] sm:$0xff] %vm558, %v3418
        %3435 = vst.msk [vmem:[%s531 + $0x58] sm:$0xff] %vm558, %v3419
        %3436 = vst.msk [vmem:[%s531 + $0x60] sm:$0xff] %vm558, %v3420
        %3437 = vst.msk [vmem:[%s531 + $0x68] sm:$0xff] %vm558, %v3421
        %3438 = vst.msk [vmem:[%s531 + $0x70] sm:$0xff] %vm558, %v3422
        %3439 = vst.msk [vmem:[%s531 + $0x78] sm:$0xff] %vm558, %v3423
        %s3440 = sand.u32 %s264, 1
        %s3441 = scalar_lea.sflag [#allocation5], %s3440
        %s3442 = sand.u32 %s264, 1
        %s3443 = smul.addr %s3442, 128
        %s3444 = scalar_lea.vmem [#allocation18], %s3443
        // Predicated region
        $region93: #{simplified_attention.6} parent=55 // pred_check
          %p3445 = pneg %p274
        $region94: #{simplified_attention.6} parent=55 // pred_check_branch
          %3447 = sbr.rel (%p3445) target = $region96
        $region95: #{simplified_attention.6} parent=55 // pred_region
          %s3448 = smul.u32 8, %s37
          %s3450 = ssub.s32 2048, 2048
          %3451 = vsyncadd %s3441, %s3450
          %s3452 = smul.addr %s3448, 2
          %s3453 = smul.addr %s36, 32
          %s3454 = sadd.s32 %s3452, %s3453
          %s3455 = smul.addr %s3454, 128
          %s3456 = scalar_lea.hbm %s9, %s3455
          %s3457 = sshll.u32 %s3444, 4
          %s3458 = int_to_ptr.vmem [resolvable:$true] %s3457
          %3463 = dma.vmem_to_hbm [thread:$0]  %s3458, 2048, %s3456, %s3441, 128, 128, 8
        $region96: #{simplified_attention.6} parent=55 // pred_fallthru
          _
      $region56: #{simplified_attention.6} parent=5 // pred_fallthru
        _
      %p3464 = scmp.le.s32.totalorder 2, %s27
      // Predicated region
      $region97: #{simplified_attention.6} parent=5 // pred_check
        %p3465 = pneg %p3464
      $region98: #{simplified_attention.6} parent=5 // pred_check_branch
        %3467 = sbr.rel (%p3465) target = $region100
      $region99: #{simplified_attention.6} parent=5 // pred_region
        %s3468 = ssub.s32 %s27, 2
        // Predicated region
        $region101: #{simplified_attention.6} parent=99 // pred_check
          %p3469 = pneg %p280
        $region102: #{simplified_attention.6} parent=99 // pred_check_branch
          %3471 = sbr.rel (%p3469) target = $region104
        $region103: #{simplified_attention.6} parent=99 // pred_region
          %s3472 = sand.u32 %s265, 1
          %s3473 = scalar_lea.sflag [#allocation5], %s3472
          %s3474 = sand.u32 %s265, 1
          %s3475 = smul.addr %s3474, 128
          %s3476 = scalar_lea.vmem [#allocation18], %s3475
          %3477 = dma.done %s3473, 2048
        $region104: #{simplified_attention.6} parent=99 // pred_fallthru
          _
      $region100: #{simplified_attention.6} parent=5 // pred_fallthru
        _
    $region6: #{simplified_attention.6} parent=1 // loop_footer
      %s31 = sadd.s32 1, %s27
    $region7: #{simplified_attention.6} parent=1 // loop_footer_branch
      %26 = sbr.rel target = $region3
    $region8: #{simplified_attention.6} parent=1 // loop_exit
      _
    %3478 = vsyncpa [#allocation4], 1
    %s3479 = scalar_lea.sflag [#allocation4], 1
    %3480 = vsyncpa %s3479, 1
    %3481 = vsyncpa [#allocation7], 1
    %s3482 = scalar_lea.sflag [#allocation7], 1
    %3483 = vsyncpa %s3482, 1
    %3484 = vsyncpa [#allocation10], 1
    %3485 = vsyncpa [#allocation13], 1
    %3486 = vsyncpa [#allocation16], 1
    %3487 = vsyncpa [#allocation5], 1
    %s3488 = scalar_lea.sflag [#allocation5], 1
    %3489 = vsyncpa %s3488, 1

// kernel: simplified_attention.11
$region0: #{simplified_attention.11}
  #allocation0 [shape = 'u32[]', space=smem, size = 0x4, offset = 0x4, fixed_abs, tag = 'smem constant byte address 0x4 - core index']
  #allocation1 [shape = 'u32[144,128]{1,0:T(1,128)}', space=vmem, size = 0x12000, scoped, tag = 'internal scratch']
  #allocation2 [shape = 'f32[10,18,2]{2,1,0:T(8,128)}', space=vmem, size = 0x1e000, scoped, tag = 'scratch operand']
  %s0 = inlined_call_operand.hbm [shape: f32[2,16,16,4], index: 0, kind: input, shape index: {}]
  %s1 = inlined_call_operand.hbm [shape: f32[2,2,16,4], index: 1, kind: input, shape index: {}]
  %s2 = inlined_call_operand.hbm [shape: f32[2,2,16,4], index: 2, kind: input, shape index: {}]
  %s3 = inlined_call_operand.hbm [shape: f32[2,16,16,4], index: 3, kind: input, shape index: {}]
  %s4 = inlined_call_operand.hbm [shape: f32[2,16,16,4], index: 4, kind: input, shape index: {}]
  %s5 = inlined_call_operand.hbm [shape: f32[4,2], index: 5, kind: input, shape index: {}]
  %s6 = inlined_call_operand.hbm [shape: f32[1,2], index: 6, kind: input, shape index: {}]
  %s7 = inlined_call_operand.hbm [shape: f32[9,2,2], index: 7, kind: input, shape index: {}]
  %s8 = inlined_call_operand.hbm [shape: f32[1,2], index: 8, kind: input, shape index: {}]
  %s9 = inlined_call_operand.hbm [shape: f32[2,4], index: 9, kind: input, shape index: {}]
  %s10 = inlined_call_operand.hbm [shape: f32[1,4], index: 10, kind: input, shape index: {}]
  %s11 = inlined_call_operand.hbm [shape: f32[4,4], index: 11, kind: input, shape index: {}]
  %s12 = inlined_call_operand.hbm [shape: f32[1,4], index: 12, kind: input, shape index: {}]
  %s13 = inlined_call_operand.hbm [shape: f32[2,16,16,4], index: 13, kind: output, shape index: {}]
  %s14 = sld [smem:[#allocation0]]
  $region137: #{simplified_attention.11} parent=0
    _
  %s16 = ssub.s32 1, %s14
  %s17 = scalar_select 0, %s16, %s14
  $region1: #{simplified_attention.11} parent=0
    #allocation3 [shape = 'u8[131072]{0}', space=vmem, size = 0x20000, scoped, tag = 'input window, operand 0']
    #allocation4 [shape = 's32[2]{0}', space=sflag, size = 0x8, scoped, tag = 'scoped memory for simplified_attention.11']
    #allocation5 [shape = 's32[2]{0}', space=sflag, size = 0x8, scoped, tag = 'scoped memory for simplified_attention.11']
    #allocation6 [shape = 'u8[16384]{0}', space=vmem, size = 0x4000, scoped, tag = 'input window, operand 1']
    #allocation7 [shape = 's32[2]{0}', space=sflag, size = 0x8, scoped, tag = 'scoped memory for simplified_attention.11']
    #allocation8 [shape = 'u8[16384]{0}', space=vmem, size = 0x4000, scoped, tag = 'input window, operand 2']
    #allocation9 [shape = 'u8[131072]{0}', space=vmem, size = 0x20000, scoped, tag = 'input window, operand 3']
    #allocation10 [shape = 's32[2]{0}', space=sflag, size = 0x8, scoped, tag = 'scoped memory for simplified_attention.11']
    #allocation11 [shape = 'u8[131072]{0}', space=vmem, size = 0x20000, scoped, tag = 'input window, operand 4']
    #allocation12 [shape = 'u8[2048]{0}', space=vmem, size = 0x800, scoped, tag = 'input window, operand 5, single buffered']
    #allocation13 [shape = 's32[1]{0}', space=sflag, size = 0x4, scoped, tag = 'scoped memory for simplified_attention.11']
    #allocation14 [shape = 'u8[512]{0}', space=vmem, size = 0x400, scoped, tag = 'input window, operand 6, single buffered']
    #allocation15 [shape = 'u8[9216]{0}', space=vmem, size = 0x2400, scoped, tag = 'input window, operand 7, single buffered']
    #allocation16 [shape = 's32[1]{0}', space=sflag, size = 0x4, scoped, tag = 'scoped memory for simplified_attention.11']
    #allocation17 [shape = 'u8[512]{0}', space=vmem, size = 0x400, scoped, tag = 'input window, operand 8, single buffered']
    #allocation18 [shape = 'u8[1024]{0}', space=vmem, size = 0x400, scoped, tag = 'input window, operand 9, single buffered']
    #allocation19 [shape = 's32[1]{0}', space=sflag, size = 0x4, scoped, tag = 'scoped memory for simplified_attention.11']
    #allocation20 [shape = 'u8[512]{0}', space=vmem, size = 0x400, scoped, tag = 'input window, operand 10, single buffered']
    #allocation21 [shape = 'u8[2048]{0}', space=vmem, size = 0x800, scoped, tag = 'input window, operand 11, single buffered']
    #allocation22 [shape = 's32[1]{0}', space=sflag, size = 0x4, scoped, tag = 'scoped memory for simplified_attention.11']
    #allocation23 [shape = 'u8[512]{0}', space=vmem, size = 0x400, scoped, tag = 'input window, operand 12, single buffered']
    #allocation24 [shape = 'u8[131072]{0}', space=vmem, size = 0x20000, scoped, tag = 'output window, operand 0']
    %18 = vsyncpa [#allocation4], 0
    %s19 = scalar_lea.sflag [#allocation4], 1
    %20 = vsyncpa %s19, 0
    %21 = vsyncpa [#allocation7], 0
    %s22 = scalar_lea.sflag [#allocation7], 1
    %23 = vsyncpa %s22, 0
    %24 = vsyncpa [#allocation10], 0
    %s25 = scalar_lea.sflag [#allocation10], 1
    %26 = vsyncpa %s25, 0
    %27 = vsyncpa [#allocation13], 0
    %28 = vsyncpa [#allocation16], 0
    %29 = vsyncpa [#allocation19], 0
    %30 = vsyncpa [#allocation22], 0
    %31 = vsyncpa [#allocation5], 0
    %s32 = scalar_lea.sflag [#allocation5], 1
    %33 = vsyncpa %s32, 0
    loop: start=0, step=1, limit=6
    $region2: #{simplified_attention.11} parent=1 // loop_pre_header
      _
    $region3: #{simplified_attention.11} parent=1 // loop_header
      %s35 = sphi 0, %s39
      %p36 = scmp.ge.s32.totalorder %s35, 6
      %s42 = sphi 0, %s54
      %s43 = sphi 0, %s50
      %s44 = sphi 0, %s42
      %s45 = sphi 0, %s43
      %s46 = sphi 0, %s44
      %s47 = sphi 0, %s45
      %s59 = sphi 0, %s61
      %s62 = sphi 0, %s59
      %s63 = sphi 0, %s62
      %s79 = sphi 0, %s63
      %s87 = sphi 0, %s89
      %s90 = sphi 0, %s87
      %s91 = sphi 0, %s90
      %s107 = sphi 0, %s91
      %s115 = sphi 0, %s117
      %s118 = sphi 0, %s115
      %s119 = sphi 0, %s118
      %s135 = sphi 0, %s119
      %s143 = sphi 0, %s145
      %s146 = sphi 0, %s143
      %s147 = sphi 0, %s146
      %s163 = sphi 0, %s147
      %s171 = sphi 0, %s173
      %s174 = sphi 0, %s171
      %s175 = sphi 0, %s174
      %s191 = sphi 0, %s175
      %s195 = sphi 0, %s195
      %s197 = sphi 0, %s195
      %s198 = sphi 0, %s197
      %s212 = sphi 0, %s198
      %s216 = sphi 0, %s216
      %s218 = sphi 0, %s216
      %s219 = sphi 0, %s218
      %s233 = sphi 0, %s219
      %s237 = sphi 0, %s237
      %s239 = sphi 0, %s237
      %s240 = sphi 0, %s239
      %s254 = sphi 0, %s240
      %s258 = sphi 0, %s258
      %s260 = sphi 0, %s258
      %s261 = sphi 0, %s260
      %s275 = sphi 0, %s261
      %s279 = sphi 0, %s279
      %s281 = sphi 0, %s279
      %s282 = sphi 0, %s281
      %s296 = sphi 0, %s282
      %s300 = sphi 0, %s300
      %s302 = sphi 0, %s300
      %s303 = sphi 0, %s302
      %s317 = sphi 0, %s303
      %s321 = sphi 0, %s321
      %s323 = sphi 0, %s321
      %s324 = sphi 0, %s323
      %s338 = sphi 0, %s324
      %s342 = sphi 0, %s342
      %s344 = sphi 0, %s342
      %s345 = sphi 0, %s344
      %s359 = sphi 0, %s345
      %s367 = sphi 0, %s369
      %s370 = sphi 0, %s367
      %s371 = sphi 0, %s370
      %s387 = sphi 0, %s371
    $region4: #{simplified_attention.11} parent=1 // loop_header_branch
      %38 = sbr.rel (%p36) target = $region8
    $region5: #{simplified_attention.11} parent=1 // loop_body
      %s40 = ssub.s32 %s35, 1
      %s41 = ssub.s32 %s35, 2
      %s48 = sadd.s32 1, %s43
      %p49 = scmp.ge.s32.totalorder %s48, 2
      %s50 = scalar_select %p49, 0, %s48
      %s51 = sadd.s32 1, %s42
      %s52 = scalar_select %p49, %s51, %s42
      %p53 = scmp.ge.s32.totalorder %s52, 2
      %s54 = scalar_select %p53, 0, %s52
      %s55 = ssub.s32 %s42, %s54
      %s56 = ssub.s32 %s43, %s50
      %s57 = sor.u32 %s55, %s56
      %p58 = scmp.eq.s32.totalorder %s57, 0
      %s60 = sadd.s32 %s59, 1
      %s61 = scalar_select %p58, %s59, %s60
      %p64 = pneg %p58
      %p65 = scmp.eq.s32.totalorder %s35, 3
      %p66 = por %p64, %p65
      %p67 = scmp.ne.s32.totalorder %s59, %s62
      %p68 = scmp.eq.s32.totalorder %s35, 0
      %p69 = por %p67, %p68
      %p70 = scmp.ne.s32.totalorder %s59, %s62
      %p71 = scmp.eq.s32.totalorder %s40, 3
      %p72 = por %p70, %p71
      %p73 = scmp.ne.s32.totalorder %s62, %s63
      %p74 = scmp.eq.s32.totalorder %s40, 0
      %p75 = por %p73, %p74
      %p76 = scmp.ne.s32.totalorder %s62, %s63
      %p77 = scmp.eq.s32.totalorder %s41, 3
      %p78 = por %p76, %p77
      %p80 = scmp.ne.s32.totalorder %s63, %s79
      %p81 = scmp.eq.s32.totalorder %s41, 0
      %p82 = por %p80, %p81
      %s83 = ssub.s32 %s42, %s54
      %s84 = ssub.s32 %s43, %s50
      %s85 = sor.u32 %s83, %s84
      %p86 = scmp.eq.s32.totalorder %s85, 0
      %s88 = sadd.s32 %s87, 1
      %s89 = scalar_select %p86, %s87, %s88
      %p92 = pneg %p86
      %p93 = scmp.eq.s32.totalorder %s35, 3
      %p94 = por %p92, %p93
      %p95 = scmp.ne.s32.totalorder %s87, %s90
      %p96 = scmp.eq.s32.totalorder %s35, 0
      %p97 = por %p95, %p96
      %p98 = scmp.ne.s32.totalorder %s87, %s90
      %p99 = scmp.eq.s32.totalorder %s40, 3
      %p100 = por %p98, %p99
      %p101 = scmp.ne.s32.totalorder %s90, %s91
      %p102 = scmp.eq.s32.totalorder %s40, 0
      %p103 = por %p101, %p102
      %p104 = scmp.ne.s32.totalorder %s90, %s91
      %p105 = scmp.eq.s32.totalorder %s41, 3
      %p106 = por %p104, %p105
      %p108 = scmp.ne.s32.totalorder %s91, %s107
      %p109 = scmp.eq.s32.totalorder %s41, 0
      %p110 = por %p108, %p109
      %s111 = ssub.s32 %s42, %s54
      %s112 = ssub.s32 %s43, %s50
      %s113 = sor.u32 %s111, %s112
      %p114 = scmp.eq.s32.totalorder %s113, 0
      %s116 = sadd.s32 %s115, 1
      %s117 = scalar_select %p114, %s115, %s116
      %p120 = pneg %p114
      %p121 = scmp.eq.s32.totalorder %s35, 3
      %p122 = por %p120, %p121
      %p123 = scmp.ne.s32.totalorder %s115, %s118
      %p124 = scmp.eq.s32.totalorder %s35, 0
      %p125 = por %p123, %p124
      %p126 = scmp.ne.s32.totalorder %s115, %s118
      %p127 = scmp.eq.s32.totalorder %s40, 3
      %p128 = por %p126, %p127
      %p129 = scmp.ne.s32.totalorder %s118, %s119
      %p130 = scmp.eq.s32.totalorder %s40, 0
      %p131 = por %p129, %p130
      %p132 = scmp.ne.s32.totalorder %s118, %s119
      %p133 = scmp.eq.s32.totalorder %s41, 3
      %p134 = por %p132, %p133
      %p136 = scmp.ne.s32.totalorder %s119, %s135
      %p137 = scmp.eq.s32.totalorder %s41, 0
      %p138 = por %p136, %p137
      %s139 = ssub.s32 %s42, %s54
      %s140 = ssub.s32 %s43, %s50
      %s141 = sor.u32 %s139, %s140
      %p142 = scmp.eq.s32.totalorder %s141, 0
      %s144 = sadd.s32 %s143, 1
      %s145 = scalar_select %p142, %s143, %s144
      %p148 = pneg %p142
      %p149 = scmp.eq.s32.totalorder %s35, 3
      %p150 = por %p148, %p149
      %p151 = scmp.ne.s32.totalorder %s143, %s146
      %p152 = scmp.eq.s32.totalorder %s35, 0
      %p153 = por %p151, %p152
      %p154 = scmp.ne.s32.totalorder %s143, %s146
      %p155 = scmp.eq.s32.totalorder %s40, 3
      %p156 = por %p154, %p155
      %p157 = scmp.ne.s32.totalorder %s146, %s147
      %p158 = scmp.eq.s32.totalorder %s40, 0
      %p159 = por %p157, %p158
      %p160 = scmp.ne.s32.totalorder %s146, %s147
      %p161 = scmp.eq.s32.totalorder %s41, 3
      %p162 = por %p160, %p161
      %p164 = scmp.ne.s32.totalorder %s147, %s163
      %p165 = scmp.eq.s32.totalorder %s41, 0
      %p166 = por %p164, %p165
      %s167 = ssub.s32 %s42, %s54
      %s168 = ssub.s32 %s43, %s50
      %s169 = sor.u32 %s167, %s168
      %p170 = scmp.eq.s32.totalorder %s169, 0
      %s172 = sadd.s32 %s171, 1
      %s173 = scalar_select %p170, %s171, %s172
      %p176 = pneg %p170
      %p177 = scmp.eq.s32.totalorder %s35, 3
      %p178 = por %p176, %p177
      %p179 = scmp.ne.s32.totalorder %s171, %s174
      %p180 = scmp.eq.s32.totalorder %s35, 0
      %p181 = por %p179, %p180
      %p182 = scmp.ne.s32.totalorder %s171, %s174
      %p183 = scmp.eq.s32.totalorder %s40, 3
      %p184 = por %p182, %p183
      %p185 = scmp.ne.s32.totalorder %s174, %s175
      %p186 = scmp.eq.s32.totalorder %s40, 0
      %p187 = por %p185, %p186
      %p188 = scmp.ne.s32.totalorder %s174, %s175
      %p189 = scmp.eq.s32.totalorder %s41, 3
      %p190 = por %p188, %p189
      %p192 = scmp.ne.s32.totalorder %s175, %s191
      %p193 = scmp.eq.s32.totalorder %s41, 0
      %p194 = por %p192, %p193
      %s196 = sadd.s32 %s195, 1
      %p199 = scmp.eq.s32.totalorder %s35, 3
      %p200 = scmp.ne.s32.totalorder %s195, %s197
      %p201 = scmp.eq.s32.totalorder %s35, 0
      %p202 = por %p200, %p201
      %p203 = scmp.ne.s32.totalorder %s195, %s197
      %p204 = scmp.eq.s32.totalorder %s40, 3
      %p205 = por %p203, %p204
      %p206 = scmp.ne.s32.totalorder %s197, %s198
      %p207 = scmp.eq.s32.totalorder %s40, 0
      %p208 = por %p206, %p207
      %p209 = scmp.ne.s32.totalorder %s197, %s198
      %p210 = scmp.eq.s32.totalorder %s41, 3
      %p211 = por %p209, %p210
      %p213 = scmp.ne.s32.totalorder %s198, %s212
      %p214 = scmp.eq.s32.totalorder %s41, 0
      %p215 = por %p213, %p214
      %s217 = sadd.s32 %s216, 1
      %p220 = scmp.eq.s32.totalorder %s35, 3
      %p221 = scmp.ne.s32.totalorder %s216, %s218
      %p222 = scmp.eq.s32.totalorder %s35, 0
      %p223 = por %p221, %p222
      %p224 = scmp.ne.s32.totalorder %s216, %s218
      %p225 = scmp.eq.s32.totalorder %s40, 3
      %p226 = por %p224, %p225
      %p227 = scmp.ne.s32.totalorder %s218, %s219
      %p228 = scmp.eq.s32.totalorder %s40, 0
      %p229 = por %p227, %p228
      %p230 = scmp.ne.s32.totalorder %s218, %s219
      %p231 = scmp.eq.s32.totalorder %s41, 3
      %p232 = por %p230, %p231
      %p234 = scmp.ne.s32.totalorder %s219, %s233
      %p235 = scmp.eq.s32.totalorder %s41, 0
      %p236 = por %p234, %p235
      %s238 = sadd.s32 %s237, 1
      %p241 = scmp.eq.s32.totalorder %s35, 3
      %p242 = scmp.ne.s32.totalorder %s237, %s239
      %p243 = scmp.eq.s32.totalorder %s35, 0
      %p244 = por %p242, %p243
      %p245 = scmp.ne.s32.totalorder %s237, %s239
      %p246 = scmp.eq.s32.totalorder %s40, 3
      %p247 = por %p245, %p246
      %p248 = scmp.ne.s32.totalorder %s239, %s240
      %p249 = scmp.eq.s32.totalorder %s40, 0
      %p250 = por %p248, %p249
      %p251 = scmp.ne.s32.totalorder %s239, %s240
      %p252 = scmp.eq.s32.totalorder %s41, 3
      %p253 = por %p251, %p252
      %p255 = scmp.ne.s32.totalorder %s240, %s254
      %p256 = scmp.eq.s32.totalorder %s41, 0
      %p257 = por %p255, %p256
      %s259 = sadd.s32 %s258, 1
      %p262 = scmp.eq.s32.totalorder %s35, 3
      %p263 = scmp.ne.s32.totalorder %s258, %s260
      %p264 = scmp.eq.s32.totalorder %s35, 0
      %p265 = por %p263, %p264
      %p266 = scmp.ne.s32.totalorder %s258, %s260
      %p267 = scmp.eq.s32.totalorder %s40, 3
      %p268 = por %p266, %p267
      %p269 = scmp.ne.s32.totalorder %s260, %s261
      %p270 = scmp.eq.s32.totalorder %s40, 0
      %p271 = por %p269, %p270
      %p272 = scmp.ne.s32.totalorder %s260, %s261
      %p273 = scmp.eq.s32.totalorder %s41, 3
      %p274 = por %p272, %p273
      %p276 = scmp.ne.s32.totalorder %s261, %s275
      %p277 = scmp.eq.s32.totalorder %s41, 0
      %p278 = por %p276, %p277
      %s280 = sadd.s32 %s279, 1
      %p283 = scmp.eq.s32.totalorder %s35, 3
      %p284 = scmp.ne.s32.totalorder %s279, %s281
      %p285 = scmp.eq.s32.totalorder %s35, 0
      %p286 = por %p284, %p285
      %p287 = scmp.ne.s32.totalorder %s279, %s281
      %p288 = scmp.eq.s32.totalorder %s40, 3
      %p289 = por %p287, %p288
      %p290 = scmp.ne.s32.totalorder %s281, %s282
      %p291 = scmp.eq.s32.totalorder %s40, 0
      %p292 = por %p290, %p291
      %p293 = scmp.ne.s32.totalorder %s281, %s282
      %p294 = scmp.eq.s32.totalorder %s41, 3
      %p295 = por %p293, %p294
      %p297 = scmp.ne.s32.totalorder %s282, %s296
      %p298 = scmp.eq.s32.totalorder %s41, 0
      %p299 = por %p297, %p298
      %s301 = sadd.s32 %s300, 1
      %p304 = scmp.eq.s32.totalorder %s35, 3
      %p305 = scmp.ne.s32.totalorder %s300, %s302
      %p306 = scmp.eq.s32.totalorder %s35, 0
      %p307 = por %p305, %p306
      %p308 = scmp.ne.s32.totalorder %s300, %s302
      %p309 = scmp.eq.s32.totalorder %s40, 3
      %p310 = por %p308, %p309
      %p311 = scmp.ne.s32.totalorder %s302, %s303
      %p312 = scmp.eq.s32.totalorder %s40, 0
      %p313 = por %p311, %p312
      %p314 = scmp.ne.s32.totalorder %s302, %s303
      %p315 = scmp.eq.s32.totalorder %s41, 3
      %p316 = por %p314, %p315
      %p318 = scmp.ne.s32.totalorder %s303, %s317
      %p319 = scmp.eq.s32.totalorder %s41, 0
      %p320 = por %p318, %p319
      %s322 = sadd.s32 %s321, 1
      %p325 = scmp.eq.s32.totalorder %s35, 3
      %p326 = scmp.ne.s32.totalorder %s321, %s323
      %p327 = scmp.eq.s32.totalorder %s35, 0
      %p328 = por %p326, %p327
      %p329 = scmp.ne.s32.totalorder %s321, %s323
      %p330 = scmp.eq.s32.totalorder %s40, 3
      %p331 = por %p329, %p330
      %p332 = scmp.ne.s32.totalorder %s323, %s324
      %p333 = scmp.eq.s32.totalorder %s40, 0
      %p334 = por %p332, %p333
      %p335 = scmp.ne.s32.totalorder %s323, %s324
      %p336 = scmp.eq.s32.totalorder %s41, 3
      %p337 = por %p335, %p336
      %p339 = scmp.ne.s32.totalorder %s324, %s338
      %p340 = scmp.eq.s32.totalorder %s41, 0
      %p341 = por %p339, %p340
      %s343 = sadd.s32 %s342, 1
      %p346 = scmp.eq.s32.totalorder %s35, 3
      %p347 = scmp.ne.s32.totalorder %s342, %s344
      %p348 = scmp.eq.s32.totalorder %s35, 0
      %p349 = por %p347, %p348
      %p350 = scmp.ne.s32.totalorder %s342, %s344
      %p351 = scmp.eq.s32.totalorder %s40, 3
      %p352 = por %p350, %p351
      %p353 = scmp.ne.s32.totalorder %s344, %s345
      %p354 = scmp.eq.s32.totalorder %s40, 0
      %p355 = por %p353, %p354
      %p356 = scmp.ne.s32.totalorder %s344, %s345
      %p357 = scmp.eq.s32.totalorder %s41, 3
      %p358 = por %p356, %p357
      %p360 = scmp.ne.s32.totalorder %s345, %s359
      %p361 = scmp.eq.s32.totalorder %s41, 0
      %p362 = por %p360, %p361
      %s363 = ssub.s32 %s42, %s54
      %s364 = ssub.s32 %s43, %s50
      %s365 = sor.u32 %s363, %s364
      %p366 = scmp.eq.s32.totalorder %s365, 0
      %s368 = sadd.s32 %s367, 1
      %s369 = scalar_select %p366, %s367, %s368
      %p372 = pneg %p366
      %p373 = scmp.eq.s32.totalorder %s35, 3
      %p374 = por %p372, %p373
      %p375 = scmp.ne.s32.totalorder %s367, %s370
      %p376 = scmp.eq.s32.totalorder %s35, 0
      %p377 = por %p375, %p376
      %p378 = scmp.ne.s32.totalorder %s367, %s370
      %p379 = scmp.eq.s32.totalorder %s40, 3
      %p380 = por %p378, %p379
      %p381 = scmp.ne.s32.totalorder %s370, %s371
      %p382 = scmp.eq.s32.totalorder %s40, 0
      %p383 = por %p381, %p382
      %p384 = scmp.ne.s32.totalorder %s370, %s371
      %p385 = scmp.eq.s32.totalorder %s41, 3
      %p386 = por %p384, %p385
      %p388 = scmp.ne.s32.totalorder %s371, %s387
      %p389 = scmp.eq.s32.totalorder %s41, 0
      %p390 = por %p388, %p389
      %p391 = scmp.le.s32.totalorder 1, %s35
      %p392 = scmp.lt.s32.totalorder %s35, 5
      %p393 = pnand %p391, %p392
      %p394 = pneg %p393
      // Predicated region
      $region9: #{simplified_attention.11} parent=5 // pred_check
        _
      $region10: #{simplified_attention.11} parent=5 // pred_check_branch
        %396 = sbr.rel (%p393) target = $region12
      $region11: #{simplified_attention.11} parent=5 // pred_region
        %s397 = ssub.s32 %s35, 1
        // Predicated region
        $region13: #{simplified_attention.11} parent=11 // pred_check
          %p398 = pneg %p208
        $region14: #{simplified_attention.11} parent=11 // pred_check_branch
          %400 = sbr.rel (%p398) target = $region16
        $region15: #{simplified_attention.11} parent=11 // pred_region
          %s402 = ssub.s32 64, 64
          %403 = vsyncadd [#allocation13], %s402
          %s405 = sshll.u32 [#allocation12], 4
          %s406 = int_to_ptr.vmem [resolvable:$true] %s405
          %408 = dma.hbm_to_vmem [thread:$0]  %s5, 64, %s406, [#allocation13]
        $region16: #{simplified_attention.11} parent=11 // pred_fallthru
          _
        // Predicated region
        $region17: #{simplified_attention.11} parent=11 // pred_check
          %p409 = pneg %p229
        $region18: #{simplified_attention.11} parent=11 // pred_check_branch
          %411 = sbr.rel (%p409) target = $region20
        $region19: #{simplified_attention.11} parent=11 // pred_region
          %s413 = ssub.s32 16, 16
          %414 = vsyncadd [#allocation13], %s413
          %s416 = sshll.u32 [#allocation14], 4
          %s417 = int_to_ptr.vmem [resolvable:$true] %s416
          %419 = dma.hbm_to_vmem [thread:$0]  %s6, 16, %s417, [#allocation13]
        $region20: #{simplified_attention.11} parent=11 // pred_fallthru
          _
        // Predicated region
        $region21: #{simplified_attention.11} parent=11 // pred_check
          %p420 = pneg %p250
        $region22: #{simplified_attention.11} parent=11 // pred_check_branch
          %422 = sbr.rel (%p420) target = $region24
        $region23: #{simplified_attention.11} parent=11 // pred_region
          %s424 = ssub.s32 288, 288
          %425 = vsyncadd [#allocation16], %s424
          %s426 = sshll.u32 [#allocation15], 4
          %s427 = int_to_ptr.vmem [resolvable:$true] %s426
          %432 = dma.hbm_to_vmem [thread:$0]  %s7, 288, %s427, [#allocation16], 32, 32, 2
        $region24: #{simplified_attention.11} parent=11 // pred_fallthru
          _
        // Predicated region
        $region25: #{simplified_attention.11} parent=11 // pred_check
          %p433 = pneg %p271
        $region26: #{simplified_attention.11} parent=11 // pred_check_branch
          %435 = sbr.rel (%p433) target = $region28
        $region27: #{simplified_attention.11} parent=11 // pred_region
          %s437 = ssub.s32 16, 16
          %438 = vsyncadd [#allocation16], %s437
          %s440 = sshll.u32 [#allocation17], 4
          %s441 = int_to_ptr.vmem [resolvable:$true] %s440
          %443 = dma.hbm_to_vmem [thread:$0]  %s8, 16, %s441, [#allocation16]
        $region28: #{simplified_attention.11} parent=11 // pred_fallthru
          _
        // Predicated region
        $region29: #{simplified_attention.11} parent=11 // pred_check
          %p444 = pneg %p292
        $region30: #{simplified_attention.11} parent=11 // pred_check_branch
          %446 = sbr.rel (%p444) target = $region32
        $region31: #{simplified_attention.11} parent=11 // pred_region
          %s448 = ssub.s32 32, 32
          %449 = vsyncadd [#allocation19], %s448
          %s451 = sshll.u32 [#allocation18], 4
          %s452 = int_to_ptr.vmem [resolvable:$true] %s451
          %454 = dma.hbm_to_vmem [thread:$0]  %s9, 32, %s452, [#allocation19]
        $region32: #{simplified_attention.11} parent=11 // pred_fallthru
          _
        // Predicated region
        $region33: #{simplified_attention.11} parent=11 // pred_check
          %p455 = pneg %p313
        $region34: #{simplified_attention.11} parent=11 // pred_check_branch
          %457 = sbr.rel (%p455) target = $region36
        $region35: #{simplified_attention.11} parent=11 // pred_region
          %s459 = ssub.s32 16, 16
          %460 = vsyncadd [#allocation19], %s459
          %s462 = sshll.u32 [#allocation20], 4
          %s463 = int_to_ptr.vmem [resolvable:$true] %s462
          %465 = dma.hbm_to_vmem [thread:$0]  %s10, 16, %s463, [#allocation19]
        $region36: #{simplified_attention.11} parent=11 // pred_fallthru
          _
        // Predicated region
        $region37: #{simplified_attention.11} parent=11 // pred_check
          %p466 = pneg %p334
        $region38: #{simplified_attention.11} parent=11 // pred_check_branch
          %468 = sbr.rel (%p466) target = $region40
        $region39: #{simplified_attention.11} parent=11 // pred_region
          %s470 = ssub.s32 64, 64
          %471 = vsyncadd [#allocation22], %s470
          %s473 = sshll.u32 [#allocation21], 4
          %s474 = int_to_ptr.vmem [resolvable:$true] %s473
          %476 = dma.hbm_to_vmem [thread:$0]  %s11, 64, %s474, [#allocation22]
        $region40: #{simplified_attention.11} parent=11 // pred_fallthru
          _
        // Predicated region
        $region41: #{simplified_attention.11} parent=11 // pred_check
          %p477 = pneg %p355
        $region42: #{simplified_attention.11} parent=11 // pred_check_branch
          %479 = sbr.rel (%p477) target = $region44
        $region43: #{simplified_attention.11} parent=11 // pred_region
          %s481 = ssub.s32 16, 16
          %482 = vsyncadd [#allocation22], %s481
          %s484 = sshll.u32 [#allocation23], 4
          %s485 = int_to_ptr.vmem [resolvable:$true] %s484
          %487 = dma.hbm_to_vmem [thread:$0]  %s12, 16, %s485, [#allocation22]
        $region44: #{simplified_attention.11} parent=11 // pred_fallthru
          _
      $region12: #{simplified_attention.11} parent=5 // pred_fallthru
        _
      %p488 = scmp.lt.s32.totalorder %s35, 4
      // Predicated region
      $region45: #{simplified_attention.11} parent=5 // pred_check
        %p489 = pneg %p488
      $region46: #{simplified_attention.11} parent=5 // pred_check_branch
        %491 = sbr.rel (%p489) target = $region48
      $region47: #{simplified_attention.11} parent=5 // pred_region
        // Predicated region
        $region49: #{simplified_attention.11} parent=47 // pred_check
          %p492 = pneg %p69
        $region50: #{simplified_attention.11} parent=47 // pred_check_branch
          %494 = sbr.rel (%p492) target = $region52
        $region51: #{simplified_attention.11} parent=47 // pred_region
          %s495 = sand.u32 %s59, 1
          %s496 = scalar_lea.sflag [#allocation4], %s495
          %s497 = sand.u32 %s59, 1
          %s498 = smul.addr %s497, 128
          %s499 = scalar_lea.vmem [#allocation3], %s498
          %s500 = smul.u32 8, %s43
          %s502 = ssub.s32 2048, 2048
          %503 = vsyncadd %s496, %s502
          %s504 = smul.addr %s500, 2
          %s505 = smul.addr %s42, 32
          %s506 = sadd.s32 %s504, %s505
          %s507 = smul.addr %s506, 128
          %s508 = scalar_lea.hbm %s0, %s507
          %s509 = sshll.u32 %s499, 4
          %s510 = int_to_ptr.vmem [resolvable:$true] %s509
          %515 = dma.hbm_to_vmem [thread:$0]  %s508, 2048, %s510, %s496, 128, 128, 8
        $region52: #{simplified_attention.11} parent=47 // pred_fallthru
          _
        // Predicated region
        $region53: #{simplified_attention.11} parent=47 // pred_check
          %p516 = pneg %p97
        $region54: #{simplified_attention.11} parent=47 // pred_check_branch
          %518 = sbr.rel (%p516) target = $region56
        $region55: #{simplified_attention.11} parent=47 // pred_region
          %s519 = sand.u32 %s35, 1
          %s520 = scalar_lea.sflag [#allocation7], %s519
          %s521 = sand.u32 %s87, 1
          %s522 = smul.addr %s521, 16
          %s523 = scalar_lea.vmem [#allocation6], %s522
          %s525 = ssub.s32 256, 256
          %526 = vsyncadd %s520, %s525
          %s527 = smul.addr %s43, 2
          %s528 = smul.addr %s42, 4
          %s529 = sadd.s32 %s527, %s528
          %s530 = smul.addr %s529, 128
          %s531 = scalar_lea.hbm %s1, %s530
          %s532 = sshll.u32 %s523, 4
          %s533 = int_to_ptr.vmem [resolvable:$true] %s532
          %538 = dma.hbm_to_vmem [thread:$0]  %s531, 256, %s533, %s520, 128, 128, 8
        $region56: #{simplified_attention.11} parent=47 // pred_fallthru
          _
        // Predicated region
        $region57: #{simplified_attention.11} parent=47 // pred_check
          %p539 = pneg %p125
        $region58: #{simplified_attention.11} parent=47 // pred_check_branch
          %541 = sbr.rel (%p539) target = $region60
        $region59: #{simplified_attention.11} parent=47 // pred_region
          %s542 = sand.u32 %s35, 1
          %s543 = scalar_lea.sflag [#allocation7], %s542
          %s544 = sand.u32 %s115, 1
          %s545 = smul.addr %s544, 16
          %s546 = scalar_lea.vmem [#allocation8], %s545
          %s548 = ssub.s32 256, 256
          %549 = vsyncadd %s543, %s548
          %s550 = smul.addr %s43, 2
          %s551 = smul.addr %s42, 4
          %s552 = sadd.s32 %s550, %s551
          %s553 = smul.addr %s552, 128
          %s554 = scalar_lea.hbm %s2, %s553
          %s555 = sshll.u32 %s546, 4
          %s556 = int_to_ptr.vmem [resolvable:$true] %s555
          %561 = dma.hbm_to_vmem [thread:$0]  %s554, 256, %s556, %s543, 128, 128, 8
        $region60: #{simplified_attention.11} parent=47 // pred_fallthru
          _
        // Predicated region
        $region61: #{simplified_attention.11} parent=47 // pred_check
          %p562 = pneg %p153
        $region62: #{simplified_attention.11} parent=47 // pred_check_branch
          %564 = sbr.rel (%p562) target = $region64
        $region63: #{simplified_attention.11} parent=47 // pred_region
          %s565 = sand.u32 %s35, 1
          %s566 = scalar_lea.sflag [#allocation10], %s565
          %s567 = sand.u32 %s143, 1
          %s568 = smul.addr %s567, 128
          %s569 = scalar_lea.vmem [#allocation9], %s568
          %s570 = smul.u32 8, %s43
          %s572 = ssub.s32 2048, 2048
          %573 = vsyncadd %s566, %s572
          %s574 = smul.addr %s570, 2
          %s575 = smul.addr %s42, 32
          %s576 = sadd.s32 %s574, %s575
          %s577 = smul.addr %s576, 128
          %s578 = scalar_lea.hbm %s3, %s577
          %s579 = sshll.u32 %s569, 4
          %s580 = int_to_ptr.vmem [resolvable:$true] %s579
          %585 = dma.hbm_to_vmem [thread:$0]  %s578, 2048, %s580, %s566, 128, 128, 8
        $region64: #{simplified_attention.11} parent=47 // pred_fallthru
          _
        // Predicated region
        $region65: #{simplified_attention.11} parent=47 // pred_check
          %p586 = pneg %p181
        $region66: #{simplified_attention.11} parent=47 // pred_check_branch
          %588 = sbr.rel (%p586) target = $region68
        $region67: #{simplified_attention.11} parent=47 // pred_region
          %s589 = sand.u32 %s35, 1
          %s590 = scalar_lea.sflag [#allocation10], %s589
          %s591 = sand.u32 %s171, 1
          %s592 = smul.addr %s591, 128
          %s593 = scalar_lea.vmem [#allocation11], %s592
          %s594 = smul.u32 8, %s43
          %s596 = ssub.s32 2048, 2048
          %597 = vsyncadd %s590, %s596
          %s598 = smul.addr %s594, 2
          %s599 = smul.addr %s42, 32
          %s600 = sadd.s32 %s598, %s599
          %s601 = smul.addr %s600, 128
          %s602 = scalar_lea.hbm %s4, %s601
          %s603 = sshll.u32 %s593, 4
          %s604 = int_to_ptr.vmem [resolvable:$true] %s603
          %609 = dma.hbm_to_vmem [thread:$0]  %s602, 2048, %s604, %s590, 128, 128, 8
        $region68: #{simplified_attention.11} parent=47 // pred_fallthru
          _
      $region48: #{simplified_attention.11} parent=5 // pred_fallthru
        _
      %p610 = scmp.le.s32.totalorder 1, %s35
      %p611 = scmp.lt.s32.totalorder %s35, 5
      %p612 = pnand %p610, %p611
      %p613 = pneg %p612
      // Predicated region
      $region69: #{simplified_attention.11} parent=5 // pred_check
        _
      $region70: #{simplified_attention.11} parent=5 // pred_check_branch
        %615 = sbr.rel (%p612) target = $region72
      $region71: #{simplified_attention.11} parent=5 // pred_region
        %s616 = ssub.s32 %s35, 1
        %s617 = sand.u32 %s62, 1
        %s618 = scalar_lea.sflag [#allocation4], %s617
        %s619 = sand.u32 %s62, 1
        %s620 = smul.addr %s619, 128
        %s621 = scalar_lea.vmem [#allocation3], %s620
        // Predicated region
        $region73: #{simplified_attention.11} parent=71 // pred_check
          %p622 = pneg %p75
        $region74: #{simplified_attention.11} parent=71 // pred_check_branch
          %624 = sbr.rel (%p622) target = $region76
        $region75: #{simplified_attention.11} parent=71 // pred_region
          %625 = dma.done %s618, 2048
        $region76: #{simplified_attention.11} parent=71 // pred_fallthru
          _
        %s626 = sand.u32 %s40, 1
        %s627 = scalar_lea.sflag [#allocation7], %s626
        %s628 = sand.u32 %s90, 1
        %s629 = smul.addr %s628, 16
        %s630 = scalar_lea.vmem [#allocation6], %s629
        // Predicated region
        $region77: #{simplified_attention.11} parent=71 // pred_check
          %p631 = pneg %p103
        $region78: #{simplified_attention.11} parent=71 // pred_check_branch
          %633 = sbr.rel (%p631) target = $region80
        $region79: #{simplified_attention.11} parent=71 // pred_region
          %634 = dma.done %s627, 256
        $region80: #{simplified_attention.11} parent=71 // pred_fallthru
          _
        %s635 = sand.u32 %s40, 1
        %s636 = scalar_lea.sflag [#allocation7], %s635
        %s637 = sand.u32 %s118, 1
        %s638 = smul.addr %s637, 16
        %s639 = scalar_lea.vmem [#allocation8], %s638
        // Predicated region
        $region81: #{simplified_attention.11} parent=71 // pred_check
          %p640 = pneg %p131
        $region82: #{simplified_attention.11} parent=71 // pred_check_branch
          %642 = sbr.rel (%p640) target = $region84
        $region83: #{simplified_attention.11} parent=71 // pred_region
          %643 = dma.done %s636, 256
        $region84: #{simplified_attention.11} parent=71 // pred_fallthru
          _
        %s644 = sand.u32 %s40, 1
        %s645 = scalar_lea.sflag [#allocation10], %s644
        %s646 = sand.u32 %s146, 1
        %s647 = smul.addr %s646, 128
        %s648 = scalar_lea.vmem [#allocation9], %s647
        // Predicated region
        $region85: #{simplified_attention.11} parent=71 // pred_check
          %p649 = pneg %p159
        $region86: #{simplified_attention.11} parent=71 // pred_check_branch
          %651 = sbr.rel (%p649) target = $region88
        $region87: #{simplified_attention.11} parent=71 // pred_region
          %652 = dma.done %s645, 2048
        $region88: #{simplified_attention.11} parent=71 // pred_fallthru
          _
        %s653 = sand.u32 %s40, 1
        %s654 = scalar_lea.sflag [#allocation10], %s653
        %s655 = sand.u32 %s174, 1
        %s656 = smul.addr %s655, 128
        %s657 = scalar_lea.vmem [#allocation11], %s656
        // Predicated region
        $region89: #{simplified_attention.11} parent=71 // pred_check
          %p658 = pneg %p187
        $region90: #{simplified_attention.11} parent=71 // pred_check_branch
          %660 = sbr.rel (%p658) target = $region92
        $region91: #{simplified_attention.11} parent=71 // pred_region
          %661 = dma.done %s654, 2048
        $region92: #{simplified_attention.11} parent=71 // pred_fallthru
          _
        // Predicated region
        $region93: #{simplified_attention.11} parent=71 // pred_check
          %p662 = pneg %p208
        $region94: #{simplified_attention.11} parent=71 // pred_check_branch
          %664 = sbr.rel (%p662) target = $region96
        $region95: #{simplified_attention.11} parent=71 // pred_region
          %665 = dma.done [#allocation13], 64
        $region96: #{simplified_attention.11} parent=71 // pred_fallthru
          _
        // Predicated region
        $region97: #{simplified_attention.11} parent=71 // pred_check
          %p666 = pneg %p229
        $region98: #{simplified_attention.11} parent=71 // pred_check_branch
          %668 = sbr.rel (%p666) target = $region100
        $region99: #{simplified_attention.11} parent=71 // pred_region
          %669 = dma.done [#allocation13], 16
        $region100: #{simplified_attention.11} parent=71 // pred_fallthru
          _
        // Predicated region
        $region101: #{simplified_attention.11} parent=71 // pred_check
          %p670 = pneg %p250
        $region102: #{simplified_attention.11} parent=71 // pred_check_branch
          %672 = sbr.rel (%p670) target = $region104
        $region103: #{simplified_attention.11} parent=71 // pred_region
          %673 = dma.done [#allocation16], 288
        $region104: #{simplified_attention.11} parent=71 // pred_fallthru
          _
        // Predicated region
        $region105: #{simplified_attention.11} parent=71 // pred_check
          %p674 = pneg %p271
        $region106: #{simplified_attention.11} parent=71 // pred_check_branch
          %676 = sbr.rel (%p674) target = $region108
        $region107: #{simplified_attention.11} parent=71 // pred_region
          %677 = dma.done [#allocation16], 16
        $region108: #{simplified_attention.11} parent=71 // pred_fallthru
          _
        // Predicated region
        $region109: #{simplified_attention.11} parent=71 // pred_check
          %p678 = pneg %p292
        $region110: #{simplified_attention.11} parent=71 // pred_check_branch
          %680 = sbr.rel (%p678) target = $region112
        $region111: #{simplified_attention.11} parent=71 // pred_region
          %681 = dma.done [#allocation19], 32
        $region112: #{simplified_attention.11} parent=71 // pred_fallthru
          _
        // Predicated region
        $region113: #{simplified_attention.11} parent=71 // pred_check
          %p682 = pneg %p313
        $region114: #{simplified_attention.11} parent=71 // pred_check_branch
          %684 = sbr.rel (%p682) target = $region116
        $region115: #{simplified_attention.11} parent=71 // pred_region
          %685 = dma.done [#allocation19], 16
        $region116: #{simplified_attention.11} parent=71 // pred_fallthru
          _
        // Predicated region
        $region117: #{simplified_attention.11} parent=71 // pred_check
          %p686 = pneg %p334
        $region118: #{simplified_attention.11} parent=71 // pred_check_branch
          %688 = sbr.rel (%p686) target = $region120
        $region119: #{simplified_attention.11} parent=71 // pred_region
          %689 = dma.done [#allocation22], 64
        $region120: #{simplified_attention.11} parent=71 // pred_fallthru
          _
        // Predicated region
        $region121: #{simplified_attention.11} parent=71 // pred_check
          %p690 = pneg %p355
        $region122: #{simplified_attention.11} parent=71 // pred_check_branch
          %692 = sbr.rel (%p690) target = $region124
        $region123: #{simplified_attention.11} parent=71 // pred_region
          %693 = dma.done [#allocation22], 16
        $region124: #{simplified_attention.11} parent=71 // pred_fallthru
          _
        %s694 = sand.u32 %s62, 1
        %s695 = scalar_lea.sflag [#allocation4], %s694
        %s696 = sand.u32 %s62, 1
        %s697 = smul.addr %s696, 128
        %s698 = scalar_lea.vmem [#allocation3], %s697
        %p699 = pneg %p75
        %p700 = pneg %p72
        %s701 = sand.u32 %s40, 1
        %s702 = scalar_lea.sflag [#allocation7], %s701
        %s703 = sand.u32 %s90, 1
        %s704 = smul.addr %s703, 16
        %s705 = scalar_lea.vmem [#allocation6], %s704
        %p706 = pneg %p103
        %p707 = pneg %p100
        %s708 = sand.u32 %s40, 1
        %s709 = scalar_lea.sflag [#allocation7], %s708
        %s710 = sand.u32 %s118, 1
        %s711 = smul.addr %s710, 16
        %s712 = scalar_lea.vmem [#allocation8], %s711
        %p713 = pneg %p131
        %p714 = pneg %p128
        %s715 = sand.u32 %s40, 1
        %s716 = scalar_lea.sflag [#allocation10], %s715
        %s717 = sand.u32 %s146, 1
        %s718 = smul.addr %s717, 128
        %s719 = scalar_lea.vmem [#allocation9], %s718
        %p720 = pneg %p159
        %p721 = pneg %p156
        %s722 = sand.u32 %s40, 1
        %s723 = scalar_lea.sflag [#allocation10], %s722
        %s724 = sand.u32 %s174, 1
        %s725 = smul.addr %s724, 128
        %s726 = scalar_lea.vmem [#allocation11], %s725
        %p727 = pneg %p187
        %p728 = pneg %p184
        %p729 = pneg %p208
        %p730 = pneg %p205
        %p731 = pneg %p229
        %p732 = pneg %p226
        %p733 = pneg %p250
        %p734 = pneg %p247
        %p735 = pneg %p271
        %p736 = pneg %p268
        %p737 = pneg %p292
        %p738 = pneg %p289
        %p739 = pneg %p313
        %p740 = pneg %p310
        %p741 = pneg %p334
        %p742 = pneg %p331
        %p743 = pneg %p355
        %p744 = pneg %p352
        %p745 = pneg %p383
        %p746 = pneg %p380
        %s747 = sand.u32 %s370, 1
        %s748 = scalar_lea.sflag [#allocation5], %s747
        %s749 = sand.u32 %s370, 1
        %s750 = smul.addr %s749, 128
        %s751 = scalar_lea.vmem [#allocation24], %s750
        %s752 = smul.u32 8, %s45
        %s753 = smul.u32 8, %s45
        %s754 = smul.u32 8, %s45
        %s755 = smul.u32 8, %s45
        %v756 = vld [vmem:[#allocation12] sm:$0xf]
        %v757 = vld [vmem:[#allocation14] sm:$0x1]
        %v758 = vld [vmem:[%s621] sm:$0xff]
        %v759 = vld [vmem:[%s621 + $0x8] sm:$0xff]
        %v760 = vld [vmem:[%s621 + $0x10] sm:$0xff]
        %v761 = vld [vmem:[%s621 + $0x18] sm:$0xff]
        %v762 = vld [vmem:[%s621 + $0x20] sm:$0xff]
        %v763 = vld [vmem:[%s621 + $0x28] sm:$0xff]
        %v764 = vld [vmem:[%s621 + $0x30] sm:$0xff]
        %v765 = vld [vmem:[%s621 + $0x38] sm:$0xff]
        %v766 = vld [vmem:[%s621 + $0x40] sm:$0xff]
        %v767 = vld [vmem:[%s621 + $0x48] sm:$0xff]
        %v768 = vld [vmem:[%s621 + $0x50] sm:$0xff]
        %v769 = vld [vmem:[%s621 + $0x58] sm:$0xff]
        %v770 = vld [vmem:[%s621 + $0x60] sm:$0xff]
        %v771 = vld [vmem:[%s621 + $0x68] sm:$0xff]
        %v772 = vld [vmem:[%s621 + $0x70] sm:$0xff]
        %v773 = vld [vmem:[%s621 + $0x78] sm:$0xff]
        %v775 = vlaneseq
        %v776 = vshrl.u32 %v775, 7
        %v777 = vsub.s32 0, %v776
        %v778 = vrot.slane %v757, %v777
        %vm780 = vcmask 31744
        %v782 = vsel %vm780, %v758, 0
        %v785 = vsel %vm780, %v759, 0
        %v788 = vsel %vm780, %v760, 0
        %v791 = vsel %vm780, %v761, 0
        %v794 = vsel %vm780, %v762, 0
        %v797 = vsel %vm780, %v763, 0
        %v800 = vsel %vm780, %v764, 0
        %v803 = vsel %vm780, %v765, 0
        %v806 = vsel %vm780, %v766, 0
        %v809 = vsel %vm780, %v767, 0
        %v812 = vsel %vm780, %v768, 0
        %v815 = vsel %vm780, %v769, 0
        %v818 = vsel %vm780, %v770, 0
        %v821 = vsel %vm780, %v771, 0
        %v824 = vsel %vm780, %v772, 0
        %v827 = vsel %vm780, %v773, 0
        %vm829 = vcmask 1043456
        %v831 = vsel %vm829, %v756, 0
        %833 = vmatprep.subr.mxu0 0.0
        %834 = vmatpush1.msra.mxu0 %v831
        %835 = vmatprep.subr.mxu0 0.0
        %836 = vmatpush1.msra.mxu0 0.0
        %837 = vmatprep.subr.mxu0 0.0
        %838 = vmatpush1.msra.mxu0 0.0
        %839 = vmatprep.subr.mxu0 0.0
        %840 = vmatpush1.msra.mxu0 0.0
        %841 = vmatprep.subr.mxu0 0.0
        %842 = vmatpush1.msra.mxu0 0.0
        %843 = vmatprep.subr.mxu0 0.0
        %844 = vmatpush1.msra.mxu0 0.0
        %845 = vmatprep.subr.mxu0 0.0
        %846 = vmatpush1.msra.mxu0 0.0
        %847 = vmatprep.subr.mxu0 0.0
        %848 = vmatpush1.msra.mxu0 0.0
        %849 = vmatprep.subr.mxu0 0.0
        %850 = vmatpush1.msra.mxu0 0.0
        %851 = vmatprep.subr.mxu0 0.0
        %852 = vmatpush1.msra.mxu0 0.0
        %853 = vmatprep.subr.mxu0 0.0
        %854 = vmatpush1.msra.mxu0 0.0
        %855 = vmatprep.subr.mxu0 0.0
        %856 = vmatpush1.msra.mxu0 0.0
        %857 = vmatprep.subr.mxu0 0.0
        %858 = vmatpush1.msra.mxu0 0.0
        %859 = vmatprep.subr.mxu0 0.0
        %860 = vmatpush1.msra.mxu0 0.0
        %861 = vmatprep.subr.mxu0 0.0
        %862 = vmatpush1.msra.mxu0 0.0
        %863 = vmatprep.subr.mxu0 0.0
        %864 = vmatpush1.msra.mxu0 0.0
        %865 = vmatprep.subr.mxu0 0.0
        %866 = vmatpush1.msra.mxu0 0.0
        %867 = vmatprep.subr.mxu0 0.0
        %868 = vmatpush1.msra.mxu0 0.0
        %869 = vmatprep.subr.mxu0 0.0
        %870 = vmatpush1.msra.mxu0 0.0
        %871 = vmatprep.subr.mxu0 0.0
        %872 = vmatpush1.msra.mxu0 0.0
        %873 = vmatprep.subr.mxu0 0.0
        %874 = vmatpush1.msra.mxu0 0.0
        %875 = vmatprep.subr.mxu0 0.0
        %876 = vmatpush1.msra.mxu0 0.0
        %877 = vmatprep.subr.mxu0 0.0
        %878 = vmatpush1.msra.mxu0 0.0
        %879 = vmatprep.subr.mxu0 0.0
        %880 = vmatpush1.msra.mxu0 0.0
        %881 = vmatprep.subr.mxu0 0.0
        %882 = vmatpush1.msra.mxu0 0.0
        %883 = vmatprep.subr.mxu0 0.0
        %884 = vmatpush1.msra.mxu0 0.0
        %885 = vmatprep.subr.mxu0 0.0
        %886 = vmatpush1.msra.mxu0 0.0
        %887 = vmatprep.subr.mxu0 0.0
        %888 = vmatpush1.msra.mxu0 0.0
        %889 = vmatprep.subr.mxu0 0.0
        %890 = vmatpush1.msra.mxu0 0.0
        %891 = vmatprep.subr.mxu0 0.0
        %892 = vmatpush1.msra.mxu0 0.0
        %893 = vmatprep.subr.mxu0 0.0
        %894 = vmatpush1.msra.mxu0 0.0
        %895 = vmatprep.subr.mxu0 0.0
        %896 = vmatpush1.msra.mxu0 0.0
        %897 = vmatprep.mubr.f32.mxu0 0.0
        %898 = vmatmul.mubr.f32.gmra.mrb[0].mxu0 %v782
        %v899 = vpop.f32.mrb[0].mxu0
        %v900 = vadd.f32 %v778, %v899
        %v901 = vpop.f32.mrb[0].mxu0
        %902 = vmatprep.mubr.f32.mxu0 0.0
        %903 = vmatmul.mubr.f32.gmra.mrb[0].mxu0 %v785
        %v904 = vpop.f32.mrb[0].mxu0
        %v905 = vadd.f32 %v778, %v904
        %v906 = vpop.f32.mrb[0].mxu0
        %907 = vmatprep.mubr.f32.mxu0 0.0
        %908 = vmatmul.mubr.f32.gmra.mrb[0].mxu0 %v788
        %v909 = vpop.f32.mrb[0].mxu0
        %v910 = vadd.f32 %v778, %v909
        %v911 = vpop.f32.mrb[0].mxu0
        %912 = vmatprep.mubr.f32.mxu0 0.0
        %913 = vmatmul.mubr.f32.gmra.mrb[0].mxu0 %v791
        %v914 = vpop.f32.mrb[0].mxu0
        %v915 = vadd.f32 %v778, %v914
        %v916 = vpop.f32.mrb[0].mxu0
        %917 = vmatprep.mubr.f32.mxu0 0.0
        %918 = vmatmul.mubr.f32.gmra.mrb[0].mxu0 %v794
        %v919 = vpop.f32.mrb[0].mxu0
        %v920 = vadd.f32 %v778, %v919
        %v921 = vpop.f32.mrb[0].mxu0
        %922 = vmatprep.mubr.f32.mxu0 0.0
        %923 = vmatmul.mubr.f32.gmra.mrb[0].mxu0 %v797
        %v924 = vpop.f32.mrb[0].mxu0
        %v925 = vadd.f32 %v778, %v924
        %v926 = vpop.f32.mrb[0].mxu0
        %927 = vmatprep.mubr.f32.mxu0 0.0
        %928 = vmatmul.mubr.f32.gmra.mrb[0].mxu0 %v800
        %v929 = vpop.f32.mrb[0].mxu0
        %v930 = vadd.f32 %v778, %v929
        %v931 = vpop.f32.mrb[0].mxu0
        %932 = vmatprep.mubr.f32.mxu0 0.0
        %933 = vmatmul.mubr.f32.gmra.mrb[0].mxu0 %v803
        %v934 = vpop.f32.mrb[0].mxu0
        %v935 = vadd.f32 %v778, %v934
        %v936 = vpop.f32.mrb[0].mxu0
        %937 = vmatprep.mubr.f32.mxu0 0.0
        %938 = vmatmul.mubr.f32.gmra.mrb[0].mxu0 %v806
        %v939 = vpop.f32.mrb[0].mxu0
        %v940 = vadd.f32 %v778, %v939
        %v941 = vpop.f32.mrb[0].mxu0
        %942 = vmatprep.mubr.f32.mxu0 0.0
        %943 = vmatmul.mubr.f32.gmra.mrb[0].mxu0 %v809
        %v944 = vpop.f32.mrb[0].mxu0
        %v945 = vadd.f32 %v778, %v944
        %v946 = vpop.f32.mrb[0].mxu0
        %947 = vmatprep.mubr.f32.mxu0 0.0
        %948 = vmatmul.mubr.f32.gmra.mrb[0].mxu0 %v812
        %v949 = vpop.f32.mrb[0].mxu0
        %v950 = vadd.f32 %v778, %v949
        %v951 = vpop.f32.mrb[0].mxu0
        %952 = vmatprep.mubr.f32.mxu0 0.0
        %953 = vmatmul.mubr.f32.gmra.mrb[0].mxu0 %v815
        %v954 = vpop.f32.mrb[0].mxu0
        %v955 = vadd.f32 %v778, %v954
        %v956 = vpop.f32.mrb[0].mxu0
        %957 = vmatprep.mubr.f32.mxu0 0.0
        %958 = vmatmul.mubr.f32.gmra.mrb[0].mxu0 %v818
        %v959 = vpop.f32.mrb[0].mxu0
        %v960 = vadd.f32 %v778, %v959
        %v961 = vpop.f32.mrb[0].mxu0
        %962 = vmatprep.mubr.f32.mxu0 0.0
        %963 = vmatmul.mubr.f32.gmra.mrb[0].mxu0 %v821
        %v964 = vpop.f32.mrb[0].mxu0
        %v965 = vadd.f32 %v778, %v964
        %v966 = vpop.f32.mrb[0].mxu0
        %967 = vmatprep.mubr.f32.mxu0 0.0
        %968 = vmatmul.mubr.f32.gmra.mrb[0].mxu0 %v824
        %v969 = vpop.f32.mrb[0].mxu0
        %v970 = vadd.f32 %v778, %v969
        %v971 = vpop.f32.mrb[0].mxu0
        %972 = vmatprep.mubr.f32.mxu0 0.0
        %973 = vmatmul.mubr.f32.gmra.mrb[0].mxu0 %v827
        %v974 = vpop.f32.mrb[0].mxu0
        %v975 = vadd.f32 %v778, %v974
        %v976 = vpop.f32.mrb[0].mxu0
        %977 = vdwg.mxu0
        %vm978 = vcmp.ge.f32.partialorder %v900, 0.0
        %vm979 = vcmp.ge.f32.partialorder %v905, 0.0
        %vm980 = vcmp.ge.f32.partialorder %v910, 0.0
        %vm981 = vcmp.ge.f32.partialorder %v915, 0.0
        %vm982 = vcmp.ge.f32.partialorder %v920, 0.0
        %vm983 = vcmp.ge.f32.partialorder %v925, 0.0
        %vm984 = vcmp.ge.f32.partialorder %v930, 0.0
        %vm985 = vcmp.ge.f32.partialorder %v935, 0.0
        %vm986 = vcmp.ge.f32.partialorder %v940, 0.0
        %vm987 = vcmp.ge.f32.partialorder %v945, 0.0
        %vm988 = vcmp.ge.f32.partialorder %v950, 0.0
        %vm989 = vcmp.ge.f32.partialorder %v955, 0.0
        %vm990 = vcmp.ge.f32.partialorder %v960, 0.0
        %vm991 = vcmp.ge.f32.partialorder %v965, 0.0
        %vm992 = vcmp.ge.f32.partialorder %v970, 0.0
        %vm993 = vcmp.ge.f32.partialorder %v975, 0.0
        %v994 = vmul.f32 %v900, 0.01
        %v995 = vmul.f32 %v905, 0.01
        %v996 = vmul.f32 %v910, 0.01
        %v997 = vmul.f32 %v915, 0.01
        %v998 = vmul.f32 %v920, 0.01
        %v999 = vmul.f32 %v925, 0.01
        %v1000 = vmul.f32 %v930, 0.01
        %v1001 = vmul.f32 %v935, 0.01
        %v1002 = vmul.f32 %v940, 0.01
        %v1003 = vmul.f32 %v945, 0.01
        %v1004 = vmul.f32 %v950, 0.01
        %v1005 = vmul.f32 %v955, 0.01
        %v1006 = vmul.f32 %v960, 0.01
        %v1007 = vmul.f32 %v965, 0.01
        %v1008 = vmul.f32 %v970, 0.01
        %v1009 = vmul.f32 %v975, 0.01
        %v1010 = vsel %vm978, %v900, %v994
        %v1011 = vsel %vm979, %v905, %v995
        %v1012 = vsel %vm980, %v910, %v996
        %v1013 = vsel %vm981, %v915, %v997
        %v1014 = vsel %vm982, %v920, %v998
        %v1015 = vsel %vm983, %v925, %v999
        %v1016 = vsel %vm984, %v930, %v1000
        %v1017 = vsel %vm985, %v935, %v1001
        %v1018 = vsel %vm986, %v940, %v1002
        %v1019 = vsel %vm987, %v945, %v1003
        %v1020 = vsel %vm988, %v950, %v1004
        %v1021 = vsel %vm989, %v955, %v1005
        %v1022 = vsel %vm990, %v960, %v1006
        %v1023 = vsel %vm991, %v965, %v1007
        %v1024 = vsel %vm992, %v970, %v1008
        %v1025 = vsel %vm993, %v975, %v1009
        %s1026 = scalar_lea.vmem [#allocation2], 24
        %vm1027 = vcmask 15360
        %1028 = vst.msk [vmem:[%s1026 + $0x1] sm:$0xff] %vm1027, %v1010
        %1029 = vst.msk [vmem:[%s1026 + $0x9] sm:$0xff] %vm1027, %v1011
        %1030 = vst.msk [vmem:[%s1026 + $0x19] sm:$0xff] %vm1027, %v1012
        %1031 = vst.msk [vmem:[%s1026 + $0x21] sm:$0xff] %vm1027, %v1013
        %1032 = vst.msk [vmem:[%s1026 + $0x31] sm:$0xff] %vm1027, %v1014
        %1033 = vst.msk [vmem:[%s1026 + $0x39] sm:$0xff] %vm1027, %v1015
        %1034 = vst.msk [vmem:[%s1026 + $0x49] sm:$0xff] %vm1027, %v1016
        %1035 = vst.msk [vmem:[%s1026 + $0x51] sm:$0xff] %vm1027, %v1017
        %1036 = vst.msk [vmem:[%s1026 + $0x61] sm:$0xff] %vm1027, %v1018
        %1037 = vst.msk [vmem:[%s1026 + $0x69] sm:$0xff] %vm1027, %v1019
        %1038 = vst.msk [vmem:[%s1026 + $0x79] sm:$0xff] %vm1027, %v1020
        %1039 = vst.msk [vmem:[%s1026 + $0x81] sm:$0xff] %vm1027, %v1021
        %1040 = vst.msk [vmem:[%s1026 + $0x91] sm:$0xff] %vm1027, %v1022
        %1041 = vst.msk [vmem:[%s1026 + $0x99] sm:$0xff] %vm1027, %v1023
        %1042 = vst.msk [vmem:[%s1026 + $0xa9] sm:$0xff] %vm1027, %v1024
        %1043 = vst.msk [vmem:[%s1026 + $0xb1] sm:$0xff] %vm1027, %v1025
        %v1044 = vld [vmem:[%s630] sm:$0xff]
        %v1045 = vld [vmem:[%s630 + $0x8] sm:$0xff]
        %v1047 = vsel %vm780, %v1044, 0
        %v1050 = vsel %vm780, %v1045, 0
        %1052 = vmatprep.subr.mxu0 0.0
        %1053 = vmatpush1.msra.mxu0 %v831
        %1054 = vmatprep.subr.mxu0 0.0
        %1055 = vmatpush1.msra.mxu0 0.0
        %1056 = vmatprep.subr.mxu0 0.0
        %1057 = vmatpush1.msra.mxu0 0.0
        %1058 = vmatprep.subr.mxu0 0.0
        %1059 = vmatpush1.msra.mxu0 0.0
        %1060 = vmatprep.subr.mxu0 0.0
        %1061 = vmatpush1.msra.mxu0 0.0
        %1062 = vmatprep.subr.mxu0 0.0
        %1063 = vmatpush1.msra.mxu0 0.0
        %1064 = vmatprep.subr.mxu0 0.0
        %1065 = vmatpush1.msra.mxu0 0.0
        %1066 = vmatprep.subr.mxu0 0.0
        %1067 = vmatpush1.msra.mxu0 0.0
        %1068 = vmatprep.subr.mxu0 0.0
        %1069 = vmatpush1.msra.mxu0 0.0
        %1070 = vmatprep.subr.mxu0 0.0
        %1071 = vmatpush1.msra.mxu0 0.0
        %1072 = vmatprep.subr.mxu0 0.0
        %1073 = vmatpush1.msra.mxu0 0.0
        %1074 = vmatprep.subr.mxu0 0.0
        %1075 = vmatpush1.msra.mxu0 0.0
        %1076 = vmatprep.subr.mxu0 0.0
        %1077 = vmatpush1.msra.mxu0 0.0
        %1078 = vmatprep.subr.mxu0 0.0
        %1079 = vmatpush1.msra.mxu0 0.0
        %1080 = vmatprep.subr.mxu0 0.0
        %1081 = vmatpush1.msra.mxu0 0.0
        %1082 = vmatprep.subr.mxu0 0.0
        %1083 = vmatpush1.msra.mxu0 0.0
        %1084 = vmatprep.subr.mxu0 0.0
        %1085 = vmatpush1.msra.mxu0 0.0
        %1086 = vmatprep.subr.mxu0 0.0
        %1087 = vmatpush1.msra.mxu0 0.0
        %1088 = vmatprep.subr.mxu0 0.0
        %1089 = vmatpush1.msra.mxu0 0.0
        %1090 = vmatprep.subr.mxu0 0.0
        %1091 = vmatpush1.msra.mxu0 0.0
        %1092 = vmatprep.subr.mxu0 0.0
        %1093 = vmatpush1.msra.mxu0 0.0
        %1094 = vmatprep.subr.mxu0 0.0
        %1095 = vmatpush1.msra.mxu0 0.0
        %1096 = vmatprep.subr.mxu0 0.0
        %1097 = vmatpush1.msra.mxu0 0.0
        %1098 = vmatprep.subr.mxu0 0.0
        %1099 = vmatpush1.msra.mxu0 0.0
        %1100 = vmatprep.subr.mxu0 0.0
        %1101 = vmatpush1.msra.mxu0 0.0
        %1102 = vmatprep.subr.mxu0 0.0
        %1103 = vmatpush1.msra.mxu0 0.0
        %1104 = vmatprep.subr.mxu0 0.0
        %1105 = vmatpush1.msra.mxu0 0.0
        %1106 = vmatprep.subr.mxu0 0.0
        %1107 = vmatpush1.msra.mxu0 0.0
        %1108 = vmatprep.subr.mxu0 0.0
        %1109 = vmatpush1.msra.mxu0 0.0
        %1110 = vmatprep.subr.mxu0 0.0
        %1111 = vmatpush1.msra.mxu0 0.0
        %1112 = vmatprep.subr.mxu0 0.0
        %1113 = vmatpush1.msra.mxu0 0.0
        %1114 = vmatprep.subr.mxu0 0.0
        %1115 = vmatpush1.msra.mxu0 0.0
        %1116 = vmatprep.mubr.f32.mxu0 0.0
        %1117 = vmatmul.mubr.f32.gmra.mrb[0].mxu0 %v1047
        %v1118 = vpop.f32.mrb[0].mxu0
        %v1119 = vadd.f32 %v778, %v1118
        %v1120 = vpop.f32.mrb[0].mxu0
        %1121 = vmatprep.mubr.f32.mxu0 0.0
        %1122 = vmatmul.mubr.f32.gmra.mrb[0].mxu0 %v1050
        %v1123 = vpop.f32.mrb[0].mxu0
        %v1124 = vadd.f32 %v778, %v1123
        %v1125 = vpop.f32.mrb[0].mxu0
        %1126 = vdwg.mxu0
        %vm1127 = vcmp.ge.f32.partialorder %v1119, 0.0
        %vm1128 = vcmp.ge.f32.partialorder %v1124, 0.0
        %v1129 = vmul.f32 %v1119, 0.01
        %v1130 = vmul.f32 %v1124, 0.01
        %v1131 = vsel %vm1127, %v1119, %v1129
        %v1132 = vsel %vm1128, %v1124, %v1130
        %1133 = vst.msk [vmem:[#allocation2 + $0x1] sm:$0xff] %vm1027, %v1131
        %1134 = vst.msk [vmem:[#allocation2 + $0x9] sm:$0xff] %vm1027, %v1132
        %v1135 = vld [vmem:[%s639] sm:$0xff]
        %v1136 = vld [vmem:[%s639 + $0x8] sm:$0xff]
        %v1138 = vsel %vm780, %v1135, 0
        %v1141 = vsel %vm780, %v1136, 0
        %1143 = vmatprep.subr.mxu0 0.0
        %1144 = vmatpush1.msra.mxu0 %v831
        %1145 = vmatprep.subr.mxu0 0.0
        %1146 = vmatpush1.msra.mxu0 0.0
        %1147 = vmatprep.subr.mxu0 0.0
        %1148 = vmatpush1.msra.mxu0 0.0
        %1149 = vmatprep.subr.mxu0 0.0
        %1150 = vmatpush1.msra.mxu0 0.0
        %1151 = vmatprep.subr.mxu0 0.0
        %1152 = vmatpush1.msra.mxu0 0.0
        %1153 = vmatprep.subr.mxu0 0.0
        %1154 = vmatpush1.msra.mxu0 0.0
        %1155 = vmatprep.subr.mxu0 0.0
        %1156 = vmatpush1.msra.mxu0 0.0
        %1157 = vmatprep.subr.mxu0 0.0
        %1158 = vmatpush1.msra.mxu0 0.0
        %1159 = vmatprep.subr.mxu0 0.0
        %1160 = vmatpush1.msra.mxu0 0.0
        %1161 = vmatprep.subr.mxu0 0.0
        %1162 = vmatpush1.msra.mxu0 0.0
        %1163 = vmatprep.subr.mxu0 0.0
        %1164 = vmatpush1.msra.mxu0 0.0
        %1165 = vmatprep.subr.mxu0 0.0
        %1166 = vmatpush1.msra.mxu0 0.0
        %1167 = vmatprep.subr.mxu0 0.0
        %1168 = vmatpush1.msra.mxu0 0.0
        %1169 = vmatprep.subr.mxu0 0.0
        %1170 = vmatpush1.msra.mxu0 0.0
        %1171 = vmatprep.subr.mxu0 0.0
        %1172 = vmatpush1.msra.mxu0 0.0
        %1173 = vmatprep.subr.mxu0 0.0
        %1174 = vmatpush1.msra.mxu0 0.0
        %1175 = vmatprep.subr.mxu0 0.0
        %1176 = vmatpush1.msra.mxu0 0.0
        %1177 = vmatprep.subr.mxu0 0.0
        %1178 = vmatpush1.msra.mxu0 0.0
        %1179 = vmatprep.subr.mxu0 0.0
        %1180 = vmatpush1.msra.mxu0 0.0
        %1181 = vmatprep.subr.mxu0 0.0
        %1182 = vmatpush1.msra.mxu0 0.0
        %1183 = vmatprep.subr.mxu0 0.0
        %1184 = vmatpush1.msra.mxu0 0.0
        %1185 = vmatprep.subr.mxu0 0.0
        %1186 = vmatpush1.msra.mxu0 0.0
        %1187 = vmatprep.subr.mxu0 0.0
        %1188 = vmatpush1.msra.mxu0 0.0
        %1189 = vmatprep.subr.mxu0 0.0
        %1190 = vmatpush1.msra.mxu0 0.0
        %1191 = vmatprep.subr.mxu0 0.0
        %1192 = vmatpush1.msra.mxu0 0.0
        %1193 = vmatprep.subr.mxu0 0.0
        %1194 = vmatpush1.msra.mxu0 0.0
        %1195 = vmatprep.subr.mxu0 0.0
        %1196 = vmatpush1.msra.mxu0 0.0
        %1197 = vmatprep.subr.mxu0 0.0
        %1198 = vmatpush1.msra.mxu0 0.0
        %1199 = vmatprep.subr.mxu0 0.0
        %1200 = vmatpush1.msra.mxu0 0.0
        %1201 = vmatprep.subr.mxu0 0.0
        %1202 = vmatpush1.msra.mxu0 0.0
        %1203 = vmatprep.subr.mxu0 0.0
        %1204 = vmatpush1.msra.mxu0 0.0
        %1205 = vmatprep.subr.mxu0 0.0
        %1206 = vmatpush1.msra.mxu0 0.0
        %1207 = vmatprep.mubr.f32.mxu0 0.0
        %1208 = vmatmul.mubr.f32.gmra.mrb[0].mxu0 %v1138
        %v1209 = vpop.f32.mrb[0].mxu0
        %v1210 = vadd.f32 %v778, %v1209
        %v1211 = vpop.f32.mrb[0].mxu0
        %1212 = vmatprep.mubr.f32.mxu0 0.0
        %1213 = vmatmul.mubr.f32.gmra.mrb[0].mxu0 %v1141
        %v1214 = vpop.f32.mrb[0].mxu0
        %v1215 = vadd.f32 %v778, %v1214
        %v1216 = vpop.f32.mrb[0].mxu0
        %1217 = vdwg.mxu0
        %vm1218 = vcmp.ge.f32.partialorder %v1210, 0.0
        %vm1219 = vcmp.ge.f32.partialorder %v1215, 0.0
        %v1220 = vmul.f32 %v1210, 0.01
        %v1221 = vmul.f32 %v1215, 0.01
        %v1222 = vsel %vm1218, %v1210, %v1220
        %v1223 = vsel %vm1219, %v1215, %v1221
        %s1224 = scalar_lea.vmem [#allocation2], 216
        %1225 = vst.msk [vmem:[%s1224 + $0x1] sm:$0xff] %vm1027, %v1222
        %1226 = vst.msk [vmem:[%s1224 + $0x9] sm:$0xff] %vm1027, %v1223
        %v1227 = vld [vmem:[#allocation2 + $0x1] sm:$0x1]
        %v1228 = vld [vmem:[#allocation2 + $0x19] sm:$0x1]
        %v1229 = vld [vmem:[#allocation2 + $0x31] sm:$0x1]
        %v1230 = vld [vmem:[#allocation2 + $0x49] sm:$0x1]
        %v1231 = vld [vmem:[#allocation2 + $0x61] sm:$0x1]
        %v1232 = vld [vmem:[#allocation2 + $0x79] sm:$0x1]
        %v1233 = vld [vmem:[#allocation2 + $0x91] sm:$0x1]
        %v1234 = vld [vmem:[#allocation2 + $0xa9] sm:$0x1]
        %v1235 = vld [vmem:[#allocation2 + $0xc1] sm:$0x1]
        %v1236 = vld [vmem:[#allocation2 + $0xd9] sm:$0x1]
        %vm1237 = vcmask 8192
        %1238 = vst.msk [vmem:[#allocation2] sm:$0x1] %vm1237, %v1227
        %1239 = vst.msk [vmem:[#allocation2 + $0x18] sm:$0x1] %vm1237, %v1228
        %1240 = vst.msk [vmem:[#allocation2 + $0x30] sm:$0x1] %vm1237, %v1229
        %1241 = vst.msk [vmem:[#allocation2 + $0x48] sm:$0x1] %vm1237, %v1230
        %1242 = vst.msk [vmem:[#allocation2 + $0x60] sm:$0x1] %vm1237, %v1231
        %1243 = vst.msk [vmem:[#allocation2 + $0x78] sm:$0x1] %vm1237, %v1232
        %1244 = vst.msk [vmem:[#allocation2 + $0x90] sm:$0x1] %vm1237, %v1233
        %1245 = vst.msk [vmem:[#allocation2 + $0xa8] sm:$0x1] %vm1237, %v1234
        %1246 = vst.msk [vmem:[#allocation2 + $0xc0] sm:$0x1] %vm1237, %v1235
        %1247 = vst.msk [vmem:[#allocation2 + $0xd8] sm:$0x1] %vm1237, %v1236
        %v1248 = vld [vmem:[#allocation2 + $0x10] sm:$0x1]
        %v1249 = vld [vmem:[#allocation2 + $0x28] sm:$0x1]
        %v1250 = vld [vmem:[#allocation2 + $0x40] sm:$0x1]
        %v1251 = vld [vmem:[#allocation2 + $0x58] sm:$0x1]
        %v1252 = vld [vmem:[#allocation2 + $0x70] sm:$0x1]
        %v1253 = vld [vmem:[#allocation2 + $0x88] sm:$0x1]
        %v1254 = vld [vmem:[#allocation2 + $0xa0] sm:$0x1]
        %v1255 = vld [vmem:[#allocation2 + $0xb8] sm:$0x1]
        %v1256 = vld [vmem:[#allocation2 + $0xd0] sm:$0x1]
        %v1257 = vld [vmem:[#allocation2 + $0xe8] sm:$0x1]
        %1258 = vst.msk [vmem:[#allocation2 + $0x11] sm:$0x1] %vm1237, %v1248
        %1259 = vst.msk [vmem:[#allocation2 + $0x29] sm:$0x1] %vm1237, %v1249
        %1260 = vst.msk [vmem:[#allocation2 + $0x41] sm:$0x1] %vm1237, %v1250
        %1261 = vst.msk [vmem:[#allocation2 + $0x59] sm:$0x1] %vm1237, %v1251
        %1262 = vst.msk [vmem:[#allocation2 + $0x71] sm:$0x1] %vm1237, %v1252
        %1263 = vst.msk [vmem:[#allocation2 + $0x89] sm:$0x1] %vm1237, %v1253
        %1264 = vst.msk [vmem:[#allocation2 + $0xa1] sm:$0x1] %vm1237, %v1254
        %1265 = vst.msk [vmem:[#allocation2 + $0xb9] sm:$0x1] %vm1237, %v1255
        %1266 = vst.msk [vmem:[#allocation2 + $0xd1] sm:$0x1] %vm1237, %v1256
        %1267 = vst.msk [vmem:[#allocation2 + $0xe9] sm:$0x1] %vm1237, %v1257
        %v1268 = vld [vmem:[#allocation2] sm:$0xff]
        %v1269 = vld [vmem:[#allocation2 + $0x8] sm:$0xff]
        %v1270 = vld [vmem:[#allocation2 + $0x18] sm:$0xff]
        %v1271 = vld [vmem:[#allocation2 + $0x20] sm:$0xff]
        %v1272 = vld [vmem:[#allocation2 + $0x30] sm:$0xff]
        %v1273 = vld [vmem:[#allocation2 + $0x38] sm:$0xff]
        %v1274 = vld [vmem:[#allocation2 + $0x48] sm:$0xff]
        %v1275 = vld [vmem:[#allocation2 + $0x50] sm:$0xff]
        %v1276 = vld [vmem:[#allocation2 + $0x60] sm:$0xff]
        %v1277 = vld [vmem:[#allocation2 + $0x68] sm:$0xff]
        %v1278 = vld [vmem:[#allocation2 + $0x78] sm:$0xff]
        %v1279 = vld [vmem:[#allocation2 + $0x80] sm:$0xff]
        %v1280 = vld [vmem:[#allocation2 + $0x90] sm:$0xff]
        %v1281 = vld [vmem:[#allocation2 + $0x98] sm:$0xff]
        %v1282 = vld [vmem:[#allocation2 + $0xa8] sm:$0xff]
        %v1283 = vld [vmem:[#allocation2 + $0xb0] sm:$0xff]
        %v1284 = vld [vmem:[#allocation15] sm:$0x3]
        %v1285 = vld [vmem:[#allocation2 + $0x1] sm:$0xff]
        %v1286 = vld [vmem:[#allocation2 + $0x9] sm:$0xff]
        %v1287 = vld [vmem:[#allocation2 + $0x19] sm:$0xff]
        %v1288 = vld [vmem:[#allocation2 + $0x21] sm:$0xff]
        %v1289 = vld [vmem:[#allocation2 + $0x31] sm:$0xff]
        %v1290 = vld [vmem:[#allocation2 + $0x39] sm:$0xff]
        %v1291 = vld [vmem:[#allocation2 + $0x49] sm:$0xff]
        %v1292 = vld [vmem:[#allocation2 + $0x51] sm:$0xff]
        %v1293 = vld [vmem:[#allocation2 + $0x61] sm:$0xff]
        %v1294 = vld [vmem:[#allocation2 + $0x69] sm:$0xff]
        %v1295 = vld [vmem:[#allocation2 + $0x79] sm:$0xff]
        %v1296 = vld [vmem:[#allocation2 + $0x81] sm:$0xff]
        %v1297 = vld [vmem:[#allocation2 + $0x91] sm:$0xff]
        %v1298 = vld [vmem:[#allocation2 + $0x99] sm:$0xff]
        %v1299 = vld [vmem:[#allocation2 + $0xa9] sm:$0xff]
        %v1300 = vld [vmem:[#allocation2 + $0xb1] sm:$0xff]
        %s1301 = scalar_lea.vmem [#allocation15], 2
        %v1302 = vld [vmem:[%s1301] sm:$0x3]
        %v1304 = vsel %vm1027, %v1285, 0
        %v1307 = vsel %vm1027, %v1286, 0
        %v1310 = vsel %vm1027, %v1287, 0
        %v1313 = vsel %vm1027, %v1288, 0
        %v1316 = vsel %vm1027, %v1289, 0
        %v1319 = vsel %vm1027, %v1290, 0
        %v1322 = vsel %vm1027, %v1291, 0
        %v1325 = vsel %vm1027, %v1292, 0
        %v1328 = vsel %vm1027, %v1293, 0
        %v1331 = vsel %vm1027, %v1294, 0
        %v1334 = vsel %vm1027, %v1295, 0
        %v1337 = vsel %vm1027, %v1296, 0
        %v1340 = vsel %vm1027, %v1297, 0
        %v1343 = vsel %vm1027, %v1298, 0
        %v1346 = vsel %vm1027, %v1299, 0
        %v1349 = vsel %vm1027, %v1300, 0
        %vm1351 = vcmask 1041408
        %v1353 = vsel %vm1351, %v1302, 0
        %1355 = vmatprep.subr.mxu0 0.0
        %1356 = vmatpush1.msra.mxu0 %v1353
        %1357 = vmatprep.subr.mxu0 0.0
        %1358 = vmatpush1.msra.mxu0 0.0
        %1359 = vmatprep.subr.mxu0 0.0
        %1360 = vmatpush1.msra.mxu0 0.0
        %1361 = vmatprep.subr.mxu0 0.0
        %1362 = vmatpush1.msra.mxu0 0.0
        %1363 = vmatprep.subr.mxu0 0.0
        %1364 = vmatpush1.msra.mxu0 0.0
        %1365 = vmatprep.subr.mxu0 0.0
        %1366 = vmatpush1.msra.mxu0 0.0
        %1367 = vmatprep.subr.mxu0 0.0
        %1368 = vmatpush1.msra.mxu0 0.0
        %1369 = vmatprep.subr.mxu0 0.0
        %1370 = vmatpush1.msra.mxu0 0.0
        %1371 = vmatprep.subr.mxu0 0.0
        %1372 = vmatpush1.msra.mxu0 0.0
        %1373 = vmatprep.subr.mxu0 0.0
        %1374 = vmatpush1.msra.mxu0 0.0
        %1375 = vmatprep.subr.mxu0 0.0
        %1376 = vmatpush1.msra.mxu0 0.0
        %1377 = vmatprep.subr.mxu0 0.0
        %1378 = vmatpush1.msra.mxu0 0.0
        %1379 = vmatprep.subr.mxu0 0.0
        %1380 = vmatpush1.msra.mxu0 0.0
        %1381 = vmatprep.subr.mxu0 0.0
        %1382 = vmatpush1.msra.mxu0 0.0
        %1383 = vmatprep.subr.mxu0 0.0
        %1384 = vmatpush1.msra.mxu0 0.0
        %1385 = vmatprep.subr.mxu0 0.0
        %1386 = vmatpush1.msra.mxu0 0.0
        %1387 = vmatprep.subr.mxu0 0.0
        %1388 = vmatpush1.msra.mxu0 0.0
        %1389 = vmatprep.subr.mxu0 0.0
        %1390 = vmatpush1.msra.mxu0 0.0
        %1391 = vmatprep.subr.mxu0 0.0
        %1392 = vmatpush1.msra.mxu0 0.0
        %1393 = vmatprep.subr.mxu0 0.0
        %1394 = vmatpush1.msra.mxu0 0.0
        %1395 = vmatprep.subr.mxu0 0.0
        %1396 = vmatpush1.msra.mxu0 0.0
        %1397 = vmatprep.subr.mxu0 0.0
        %1398 = vmatpush1.msra.mxu0 0.0
        %1399 = vmatprep.subr.mxu0 0.0
        %1400 = vmatpush1.msra.mxu0 0.0
        %1401 = vmatprep.subr.mxu0 0.0
        %1402 = vmatpush1.msra.mxu0 0.0
        %1403 = vmatprep.subr.mxu0 0.0
        %1404 = vmatpush1.msra.mxu0 0.0
        %1405 = vmatprep.subr.mxu0 0.0
        %1406 = vmatpush1.msra.mxu0 0.0
        %1407 = vmatprep.subr.mxu0 0.0
        %1408 = vmatpush1.msra.mxu0 0.0
        %1409 = vmatprep.subr.mxu0 0.0
        %1410 = vmatpush1.msra.mxu0 0.0
        %1411 = vmatprep.subr.mxu0 0.0
        %1412 = vmatpush1.msra.mxu0 0.0
        %1413 = vmatprep.subr.mxu0 0.0
        %1414 = vmatpush1.msra.mxu0 0.0
        %1415 = vmatprep.subr.mxu0 0.0
        %1416 = vmatpush1.msra.mxu0 0.0
        %1417 = vmatprep.subr.mxu0 0.0
        %1418 = vmatpush1.msra.mxu0 0.0
        %1419 = vmatprep.mubr.f32.mxu0 0.0
        %1420 = vmatmul.mubr.f32.gmra.mrb[0].mxu0 %v1304
        %v1421 = vpop.f32.mrb[0].mxu0
        %v1422 = vadd.f32 0.0, %v1421
        %v1423 = vpop.f32.mrb[0].mxu0
        %1424 = vmatprep.mubr.f32.mxu0 0.0
        %1425 = vmatmul.mubr.f32.gmra.mrb[0].mxu0 %v1307
        %v1426 = vpop.f32.mrb[0].mxu0
        %v1427 = vadd.f32 0.0, %v1426
        %v1428 = vpop.f32.mrb[0].mxu0
        %1429 = vmatprep.mubr.f32.mxu0 0.0
        %1430 = vmatmul.mubr.f32.gmra.mrb[0].mxu0 %v1310
        %v1431 = vpop.f32.mrb[0].mxu0
        %v1432 = vadd.f32 0.0, %v1431
        %v1433 = vpop.f32.mrb[0].mxu0
        %1434 = vmatprep.mubr.f32.mxu0 0.0
        %1435 = vmatmul.mubr.f32.gmra.mrb[0].mxu0 %v1313
        %v1436 = vpop.f32.mrb[0].mxu0
        %v1437 = vadd.f32 0.0, %v1436
        %v1438 = vpop.f32.mrb[0].mxu0
        %1439 = vmatprep.mubr.f32.mxu0 0.0
        %1440 = vmatmul.mubr.f32.gmra.mrb[0].mxu0 %v1316
        %v1441 = vpop.f32.mrb[0].mxu0
        %v1442 = vadd.f32 0.0, %v1441
        %v1443 = vpop.f32.mrb[0].mxu0
        %1444 = vmatprep.mubr.f32.mxu0 0.0
        %1445 = vmatmul.mubr.f32.gmra.mrb[0].mxu0 %v1319
        %v1446 = vpop.f32.mrb[0].mxu0
        %v1447 = vadd.f32 0.0, %v1446
        %v1448 = vpop.f32.mrb[0].mxu0
        %1449 = vmatprep.mubr.f32.mxu0 0.0
        %1450 = vmatmul.mubr.f32.gmra.mrb[0].mxu0 %v1322
        %v1451 = vpop.f32.mrb[0].mxu0
        %v1452 = vadd.f32 0.0, %v1451
        %v1453 = vpop.f32.mrb[0].mxu0
        %1454 = vmatprep.mubr.f32.mxu0 0.0
        %1455 = vmatmul.mubr.f32.gmra.mrb[0].mxu0 %v1325
        %v1456 = vpop.f32.mrb[0].mxu0
        %v1457 = vadd.f32 0.0, %v1456
        %v1458 = vpop.f32.mrb[0].mxu0
        %1459 = vmatprep.mubr.f32.mxu0 0.0
        %1460 = vmatmul.mubr.f32.gmra.mrb[0].mxu0 %v1328
        %v1461 = vpop.f32.mrb[0].mxu0
        %v1462 = vadd.f32 0.0, %v1461
        %v1463 = vpop.f32.mrb[0].mxu0
        %1464 = vmatprep.mubr.f32.mxu0 0.0
        %1465 = vmatmul.mubr.f32.gmra.mrb[0].mxu0 %v1331
        %v1466 = vpop.f32.mrb[0].mxu0
        %v1467 = vadd.f32 0.0, %v1466
        %v1468 = vpop.f32.mrb[0].mxu0
        %1469 = vmatprep.mubr.f32.mxu0 0.0
        %1470 = vmatmul.mubr.f32.gmra.mrb[0].mxu0 %v1334
        %v1471 = vpop.f32.mrb[0].mxu0
        %v1472 = vadd.f32 0.0, %v1471
        %v1473 = vpop.f32.mrb[0].mxu0
        %1474 = vmatprep.mubr.f32.mxu0 0.0
        %1475 = vmatmul.mubr.f32.gmra.mrb[0].mxu0 %v1337
        %v1476 = vpop.f32.mrb[0].mxu0
        %v1477 = vadd.f32 0.0, %v1476
        %v1478 = vpop.f32.mrb[0].mxu0
        %1479 = vmatprep.mubr.f32.mxu0 0.0
        %1480 = vmatmul.mubr.f32.gmra.mrb[0].mxu0 %v1340
        %v1481 = vpop.f32.mrb[0].mxu0
        %v1482 = vadd.f32 0.0, %v1481
        %v1483 = vpop.f32.mrb[0].mxu0
        %1484 = vmatprep.mubr.f32.mxu0 0.0
        %1485 = vmatmul.mubr.f32.gmra.mrb[0].mxu0 %v1343
        %v1486 = vpop.f32.mrb[0].mxu0
        %v1487 = vadd.f32 0.0, %v1486
        %v1488 = vpop.f32.mrb[0].mxu0
        %1489 = vmatprep.mubr.f32.mxu0 0.0
        %1490 = vmatmul.mubr.f32.gmra.mrb[0].mxu0 %v1346
        %v1491 = vpop.f32.mrb[0].mxu0
        %v1492 = vadd.f32 0.0, %v1491
        %v1493 = vpop.f32.mrb[0].mxu0
        %1494 = vmatprep.mubr.f32.mxu0 0.0
        %1495 = vmatmul.mubr.f32.gmra.mrb[0].mxu0 %v1349
        %v1496 = vpop.f32.mrb[0].mxu0
        %v1497 = vadd.f32 0.0, %v1496
        %v1498 = vpop.f32.mrb[0].mxu0
        %1499 = vdwg.mxu0
        %v1501 = vsel %vm1027, %v1268, 0
        %v1504 = vsel %vm1027, %v1269, 0
        %v1507 = vsel %vm1027, %v1270, 0
        %v1510 = vsel %vm1027, %v1271, 0
        %v1513 = vsel %vm1027, %v1272, 0
        %v1516 = vsel %vm1027, %v1273, 0
        %v1519 = vsel %vm1027, %v1274, 0
        %v1522 = vsel %vm1027, %v1275, 0
        %v1525 = vsel %vm1027, %v1276, 0
        %v1528 = vsel %vm1027, %v1277, 0
        %v1531 = vsel %vm1027, %v1278, 0
        %v1534 = vsel %vm1027, %v1279, 0
        %v1537 = vsel %vm1027, %v1280, 0
        %v1540 = vsel %vm1027, %v1281, 0
        %v1543 = vsel %vm1027, %v1282, 0
        %v1546 = vsel %vm1027, %v1283, 0
        %v1549 = vsel %vm1351, %v1284, 0
        %1551 = vmatprep.subr.mxu0 0.0
        %1552 = vmatpush1.msra.mxu0 %v1549
        %1553 = vmatprep.subr.mxu0 0.0
        %1554 = vmatpush1.msra.mxu0 0.0
        %1555 = vmatprep.subr.mxu0 0.0
        %1556 = vmatpush1.msra.mxu0 0.0
        %1557 = vmatprep.subr.mxu0 0.0
        %1558 = vmatpush1.msra.mxu0 0.0
        %1559 = vmatprep.subr.mxu0 0.0
        %1560 = vmatpush1.msra.mxu0 0.0
        %1561 = vmatprep.subr.mxu0 0.0
        %1562 = vmatpush1.msra.mxu0 0.0
        %1563 = vmatprep.subr.mxu0 0.0
        %1564 = vmatpush1.msra.mxu0 0.0
        %1565 = vmatprep.subr.mxu0 0.0
        %1566 = vmatpush1.msra.mxu0 0.0
        %1567 = vmatprep.subr.mxu0 0.0
        %1568 = vmatpush1.msra.mxu0 0.0
        %1569 = vmatprep.subr.mxu0 0.0
        %1570 = vmatpush1.msra.mxu0 0.0
        %1571 = vmatprep.subr.mxu0 0.0
        %1572 = vmatpush1.msra.mxu0 0.0
        %1573 = vmatprep.subr.mxu0 0.0
        %1574 = vmatpush1.msra.mxu0 0.0
        %1575 = vmatprep.subr.mxu0 0.0
        %1576 = vmatpush1.msra.mxu0 0.0
        %1577 = vmatprep.subr.mxu0 0.0
        %1578 = vmatpush1.msra.mxu0 0.0
        %1579 = vmatprep.subr.mxu0 0.0
        %1580 = vmatpush1.msra.mxu0 0.0
        %1581 = vmatprep.subr.mxu0 0.0
        %1582 = vmatpush1.msra.mxu0 0.0
        %1583 = vmatprep.subr.mxu0 0.0
        %1584 = vmatpush1.msra.mxu0 0.0
        %1585 = vmatprep.subr.mxu0 0.0
        %1586 = vmatpush1.msra.mxu0 0.0
        %1587 = vmatprep.subr.mxu0 0.0
        %1588 = vmatpush1.msra.mxu0 0.0
        %1589 = vmatprep.subr.mxu0 0.0
        %1590 = vmatpush1.msra.mxu0 0.0
        %1591 = vmatprep.subr.mxu0 0.0
        %1592 = vmatpush1.msra.mxu0 0.0
        %1593 = vmatprep.subr.mxu0 0.0
        %1594 = vmatpush1.msra.mxu0 0.0
        %1595 = vmatprep.subr.mxu0 0.0
        %1596 = vmatpush1.msra.mxu0 0.0
        %1597 = vmatprep.subr.mxu0 0.0
        %1598 = vmatpush1.msra.mxu0 0.0
        %1599 = vmatprep.subr.mxu0 0.0
        %1600 = vmatpush1.msra.mxu0 0.0
        %1601 = vmatprep.subr.mxu0 0.0
        %1602 = vmatpush1.msra.mxu0 0.0
        %1603 = vmatprep.subr.mxu0 0.0
        %1604 = vmatpush1.msra.mxu0 0.0
        %1605 = vmatprep.subr.mxu0 0.0
        %1606 = vmatpush1.msra.mxu0 0.0
        %1607 = vmatprep.subr.mxu0 0.0
        %1608 = vmatpush1.msra.mxu0 0.0
        %1609 = vmatprep.subr.mxu0 0.0
        %1610 = vmatpush1.msra.mxu0 0.0
        %1611 = vmatprep.subr.mxu0 0.0
        %1612 = vmatpush1.msra.mxu0 0.0
        %1613 = vmatprep.subr.mxu0 0.0
        %1614 = vmatpush1.msra.mxu0 0.0
        %1615 = vmatprep.mubr.f32.mxu0 0.0
        %1616 = vmatmul.mubr.f32.gmra.mrb[0].mxu0 %v1501
        %v1617 = vpop.f32.mrb[0].mxu0
        %v1618 = vadd.f32 %v1422, %v1617
        %v1619 = vpop.f32.mrb[0].mxu0
        %1620 = vmatprep.mubr.f32.mxu0 0.0
        %1621 = vmatmul.mubr.f32.gmra.mrb[0].mxu0 %v1504
        %v1622 = vpop.f32.mrb[0].mxu0
        %v1623 = vadd.f32 %v1427, %v1622
        %v1624 = vpop.f32.mrb[0].mxu0
        %1625 = vmatprep.mubr.f32.mxu0 0.0
        %1626 = vmatmul.mubr.f32.gmra.mrb[0].mxu0 %v1507
        %v1627 = vpop.f32.mrb[0].mxu0
        %v1628 = vadd.f32 %v1432, %v1627
        %v1629 = vpop.f32.mrb[0].mxu0
        %1630 = vmatprep.mubr.f32.mxu0 0.0
        %1631 = vmatmul.mubr.f32.gmra.mrb[0].mxu0 %v1510
        %v1632 = vpop.f32.mrb[0].mxu0
        %v1633 = vadd.f32 %v1437, %v1632
        %v1634 = vpop.f32.mrb[0].mxu0
        %1635 = vmatprep.mubr.f32.mxu0 0.0
        %1636 = vmatmul.mubr.f32.gmra.mrb[0].mxu0 %v1513
        %v1637 = vpop.f32.mrb[0].mxu0
        %v1638 = vadd.f32 %v1442, %v1637
        %v1639 = vpop.f32.mrb[0].mxu0
        %1640 = vmatprep.mubr.f32.mxu0 0.0
        %1641 = vmatmul.mubr.f32.gmra.mrb[0].mxu0 %v1516
        %v1642 = vpop.f32.mrb[0].mxu0
        %v1643 = vadd.f32 %v1447, %v1642
        %v1644 = vpop.f32.mrb[0].mxu0
        %1645 = vmatprep.mubr.f32.mxu0 0.0
        %1646 = vmatmul.mubr.f32.gmra.mrb[0].mxu0 %v1519
        %v1647 = vpop.f32.mrb[0].mxu0
        %v1648 = vadd.f32 %v1452, %v1647
        %v1649 = vpop.f32.mrb[0].mxu0
        %1650 = vmatprep.mubr.f32.mxu0 0.0
        %1651 = vmatmul.mubr.f32.gmra.mrb[0].mxu0 %v1522
        %v1652 = vpop.f32.mrb[0].mxu0
        %v1653 = vadd.f32 %v1457, %v1652
        %v1654 = vpop.f32.mrb[0].mxu0
        %1655 = vmatprep.mubr.f32.mxu0 0.0
        %1656 = vmatmul.mubr.f32.gmra.mrb[0].mxu0 %v1525
        %v1657 = vpop.f32.mrb[0].mxu0
        %v1658 = vadd.f32 %v1462, %v1657
        %v1659 = vpop.f32.mrb[0].mxu0
        %1660 = vmatprep.mubr.f32.mxu0 0.0
        %1661 = vmatmul.mubr.f32.gmra.mrb[0].mxu0 %v1528
        %v1662 = vpop.f32.mrb[0].mxu0
        %v1663 = vadd.f32 %v1467, %v1662
        %v1664 = vpop.f32.mrb[0].mxu0
        %1665 = vmatprep.mubr.f32.mxu0 0.0
        %1666 = vmatmul.mubr.f32.gmra.mrb[0].mxu0 %v1531
        %v1667 = vpop.f32.mrb[0].mxu0
        %v1668 = vadd.f32 %v1472, %v1667
        %v1669 = vpop.f32.mrb[0].mxu0
        %1670 = vmatprep.mubr.f32.mxu0 0.0
        %1671 = vmatmul.mubr.f32.gmra.mrb[0].mxu0 %v1534
        %v1672 = vpop.f32.mrb[0].mxu0
        %v1673 = vadd.f32 %v1477, %v1672
        %v1674 = vpop.f32.mrb[0].mxu0
        %1675 = vmatprep.mubr.f32.mxu0 0.0
        %1676 = vmatmul.mubr.f32.gmra.mrb[0].mxu0 %v1537
        %v1677 = vpop.f32.mrb[0].mxu0
        %v1678 = vadd.f32 %v1482, %v1677
        %v1679 = vpop.f32.mrb[0].mxu0
        %1680 = vmatprep.mubr.f32.mxu0 0.0
        %1681 = vmatmul.mubr.f32.gmra.mrb[0].mxu0 %v1540
        %v1682 = vpop.f32.mrb[0].mxu0
        %v1683 = vadd.f32 %v1487, %v1682
        %v1684 = vpop.f32.mrb[0].mxu0
        %1685 = vmatprep.mubr.f32.mxu0 0.0
        %1686 = vmatmul.mubr.f32.gmra.mrb[0].mxu0 %v1543
        %v1687 = vpop.f32.mrb[0].mxu0
        %v1688 = vadd.f32 %v1492, %v1687
        %v1689 = vpop.f32.mrb[0].mxu0
        %1690 = vmatprep.mubr.f32.mxu0 0.0
        %1691 = vmatmul.mubr.f32.gmra.mrb[0].mxu0 %v1546
        %v1692 = vpop.f32.mrb[0].mxu0
        %v1693 = vadd.f32 %v1497, %v1692
        %v1694 = vpop.f32.mrb[0].mxu0
        %1695 = vdwg.mxu0
        %v1696 = vld [vmem:[#allocation2 + $0x2] sm:$0xff]
        %v1697 = vld [vmem:[#allocation2 + $0xa] sm:$0xff]
        %v1698 = vld [vmem:[#allocation2 + $0x1a] sm:$0xff]
        %v1699 = vld [vmem:[#allocation2 + $0x22] sm:$0xff]
        %v1700 = vld [vmem:[#allocation2 + $0x32] sm:$0xff]
        %v1701 = vld [vmem:[#allocation2 + $0x3a] sm:$0xff]
        %v1702 = vld [vmem:[#allocation2 + $0x4a] sm:$0xff]
        %v1703 = vld [vmem:[#allocation2 + $0x52] sm:$0xff]
        %v1704 = vld [vmem:[#allocation2 + $0x62] sm:$0xff]
        %v1705 = vld [vmem:[#allocation2 + $0x6a] sm:$0xff]
        %v1706 = vld [vmem:[#allocation2 + $0x7a] sm:$0xff]
        %v1707 = vld [vmem:[#allocation2 + $0x82] sm:$0xff]
        %v1708 = vld [vmem:[#allocation2 + $0x92] sm:$0xff]
        %v1709 = vld [vmem:[#allocation2 + $0x9a] sm:$0xff]
        %v1710 = vld [vmem:[#allocation2 + $0xaa] sm:$0xff]
        %v1711 = vld [vmem:[#allocation2 + $0xb2] sm:$0xff]
        %s1712 = scalar_lea.vmem [#allocation15], 4
        %v1713 = vld [vmem:[%s1712] sm:$0x3]
        %v1715 = vsel %vm1027, %v1696, 0
        %v1718 = vsel %vm1027, %v1697, 0
        %v1721 = vsel %vm1027, %v1698, 0
        %v1724 = vsel %vm1027, %v1699, 0
        %v1727 = vsel %vm1027, %v1700, 0
        %v1730 = vsel %vm1027, %v1701, 0
        %v1733 = vsel %vm1027, %v1702, 0
        %v1736 = vsel %vm1027, %v1703, 0
        %v1739 = vsel %vm1027, %v1704, 0
        %v1742 = vsel %vm1027, %v1705, 0
        %v1745 = vsel %vm1027, %v1706, 0
        %v1748 = vsel %vm1027, %v1707, 0
        %v1751 = vsel %vm1027, %v1708, 0
        %v1754 = vsel %vm1027, %v1709, 0
        %v1757 = vsel %vm1027, %v1710, 0
        %v1760 = vsel %vm1027, %v1711, 0
        %v1763 = vsel %vm1351, %v1713, 0
        %1765 = vmatprep.subr.mxu0 0.0
        %1766 = vmatpush1.msra.mxu0 %v1763
        %1767 = vmatprep.subr.mxu0 0.0
        %1768 = vmatpush1.msra.mxu0 0.0
        %1769 = vmatprep.subr.mxu0 0.0
        %1770 = vmatpush1.msra.mxu0 0.0
        %1771 = vmatprep.subr.mxu0 0.0
        %1772 = vmatpush1.msra.mxu0 0.0
        %1773 = vmatprep.subr.mxu0 0.0
        %1774 = vmatpush1.msra.mxu0 0.0
        %1775 = vmatprep.subr.mxu0 0.0
        %1776 = vmatpush1.msra.mxu0 0.0
        %1777 = vmatprep.subr.mxu0 0.0
        %1778 = vmatpush1.msra.mxu0 0.0
        %1779 = vmatprep.subr.mxu0 0.0
        %1780 = vmatpush1.msra.mxu0 0.0
        %1781 = vmatprep.subr.mxu0 0.0
        %1782 = vmatpush1.msra.mxu0 0.0
        %1783 = vmatprep.subr.mxu0 0.0
        %1784 = vmatpush1.msra.mxu0 0.0
        %1785 = vmatprep.subr.mxu0 0.0
        %1786 = vmatpush1.msra.mxu0 0.0
        %1787 = vmatprep.subr.mxu0 0.0
        %1788 = vmatpush1.msra.mxu0 0.0
        %1789 = vmatprep.subr.mxu0 0.0
        %1790 = vmatpush1.msra.mxu0 0.0
        %1791 = vmatprep.subr.mxu0 0.0
        %1792 = vmatpush1.msra.mxu0 0.0
        %1793 = vmatprep.subr.mxu0 0.0
        %1794 = vmatpush1.msra.mxu0 0.0
        %1795 = vmatprep.subr.mxu0 0.0
        %1796 = vmatpush1.msra.mxu0 0.0
        %1797 = vmatprep.subr.mxu0 0.0
        %1798 = vmatpush1.msra.mxu0 0.0
        %1799 = vmatprep.subr.mxu0 0.0
        %1800 = vmatpush1.msra.mxu0 0.0
        %1801 = vmatprep.subr.mxu0 0.0
        %1802 = vmatpush1.msra.mxu0 0.0
        %1803 = vmatprep.subr.mxu0 0.0
        %1804 = vmatpush1.msra.mxu0 0.0
        %1805 = vmatprep.subr.mxu0 0.0
        %1806 = vmatpush1.msra.mxu0 0.0
        %1807 = vmatprep.subr.mxu0 0.0
        %1808 = vmatpush1.msra.mxu0 0.0
        %1809 = vmatprep.subr.mxu0 0.0
        %1810 = vmatpush1.msra.mxu0 0.0
        %1811 = vmatprep.subr.mxu0 0.0
        %1812 = vmatpush1.msra.mxu0 0.0
        %1813 = vmatprep.subr.mxu0 0.0
        %1814 = vmatpush1.msra.mxu0 0.0
        %1815 = vmatprep.subr.mxu0 0.0
        %1816 = vmatpush1.msra.mxu0 0.0
        %1817 = vmatprep.subr.mxu0 0.0
        %1818 = vmatpush1.msra.mxu0 0.0
        %1819 = vmatprep.subr.mxu0 0.0
        %1820 = vmatpush1.msra.mxu0 0.0
        %1821 = vmatprep.subr.mxu0 0.0
        %1822 = vmatpush1.msra.mxu0 0.0
        %1823 = vmatprep.subr.mxu0 0.0
        %1824 = vmatpush1.msra.mxu0 0.0
        %1825 = vmatprep.subr.mxu0 0.0
        %1826 = vmatpush1.msra.mxu0 0.0
        %1827 = vmatprep.subr.mxu0 0.0
        %1828 = vmatpush1.msra.mxu0 0.0
        %1829 = vmatprep.mubr.f32.mxu0 0.0
        %1830 = vmatmul.mubr.f32.gmra.mrb[0].mxu0 %v1715
        %v1831 = vpop.f32.mrb[0].mxu0
        %v1832 = vadd.f32 0.0, %v1831
        %v1833 = vpop.f32.mrb[0].mxu0
        %1834 = vmatprep.mubr.f32.mxu0 0.0
        %1835 = vmatmul.mubr.f32.gmra.mrb[0].mxu0 %v1718
        %v1836 = vpop.f32.mrb[0].mxu0
        %v1837 = vadd.f32 0.0, %v1836
        %v1838 = vpop.f32.mrb[0].mxu0
        %1839 = vmatprep.mubr.f32.mxu0 0.0
        %1840 = vmatmul.mubr.f32.gmra.mrb[0].mxu0 %v1721
        %v1841 = vpop.f32.mrb[0].mxu0
        %v1842 = vadd.f32 0.0, %v1841
        %v1843 = vpop.f32.mrb[0].mxu0
        %1844 = vmatprep.mubr.f32.mxu0 0.0
        %1845 = vmatmul.mubr.f32.gmra.mrb[0].mxu0 %v1724
        %v1846 = vpop.f32.mrb[0].mxu0
        %v1847 = vadd.f32 0.0, %v1846
        %v1848 = vpop.f32.mrb[0].mxu0
        %1849 = vmatprep.mubr.f32.mxu0 0.0
        %1850 = vmatmul.mubr.f32.gmra.mrb[0].mxu0 %v1727
        %v1851 = vpop.f32.mrb[0].mxu0
        %v1852 = vadd.f32 0.0, %v1851
        %v1853 = vpop.f32.mrb[0].mxu0
        %1854 = vmatprep.mubr.f32.mxu0 0.0
        %1855 = vmatmul.mubr.f32.gmra.mrb[0].mxu0 %v1730
        %v1856 = vpop.f32.mrb[0].mxu0
        %v1857 = vadd.f32 0.0, %v1856
        %v1858 = vpop.f32.mrb[0].mxu0
        %1859 = vmatprep.mubr.f32.mxu0 0.0
        %1860 = vmatmul.mubr.f32.gmra.mrb[0].mxu0 %v1733
        %v1861 = vpop.f32.mrb[0].mxu0
        %v1862 = vadd.f32 0.0, %v1861
        %v1863 = vpop.f32.mrb[0].mxu0
        %1864 = vmatprep.mubr.f32.mxu0 0.0
        %1865 = vmatmul.mubr.f32.gmra.mrb[0].mxu0 %v1736
        %v1866 = vpop.f32.mrb[0].mxu0
        %v1867 = vadd.f32 0.0, %v1866
        %v1868 = vpop.f32.mrb[0].mxu0
        %1869 = vmatprep.mubr.f32.mxu0 0.0
        %1870 = vmatmul.mubr.f32.gmra.mrb[0].mxu0 %v1739
        %v1871 = vpop.f32.mrb[0].mxu0
        %v1872 = vadd.f32 0.0, %v1871
        %v1873 = vpop.f32.mrb[0].mxu0
        %1874 = vmatprep.mubr.f32.mxu0 0.0
        %1875 = vmatmul.mubr.f32.gmra.mrb[0].mxu0 %v1742
        %v1876 = vpop.f32.mrb[0].mxu0
        %v1877 = vadd.f32 0.0, %v1876
        %v1878 = vpop.f32.mrb[0].mxu0
        %1879 = vmatprep.mubr.f32.mxu0 0.0
        %1880 = vmatmul.mubr.f32.gmra.mrb[0].mxu0 %v1745
        %v1881 = vpop.f32.mrb[0].mxu0
        %v1882 = vadd.f32 0.0, %v1881
        %v1883 = vpop.f32.mrb[0].mxu0
        %1884 = vmatprep.mubr.f32.mxu0 0.0
        %1885 = vmatmul.mubr.f32.gmra.mrb[0].mxu0 %v1748
        %v1886 = vpop.f32.mrb[0].mxu0
        %v1887 = vadd.f32 0.0, %v1886
        %v1888 = vpop.f32.mrb[0].mxu0
        %1889 = vmatprep.mubr.f32.mxu0 0.0
        %1890 = vmatmul.mubr.f32.gmra.mrb[0].mxu0 %v1751
        %v1891 = vpop.f32.mrb[0].mxu0
        %v1892 = vadd.f32 0.0, %v1891
        %v1893 = vpop.f32.mrb[0].mxu0
        %1894 = vmatprep.mubr.f32.mxu0 0.0
        %1895 = vmatmul.mubr.f32.gmra.mrb[0].mxu0 %v1754
        %v1896 = vpop.f32.mrb[0].mxu0
        %v1897 = vadd.f32 0.0, %v1896
        %v1898 = vpop.f32.mrb[0].mxu0
        %1899 = vmatprep.mubr.f32.mxu0 0.0
        %1900 = vmatmul.mubr.f32.gmra.mrb[0].mxu0 %v1757
        %v1901 = vpop.f32.mrb[0].mxu0
        %v1902 = vadd.f32 0.0, %v1901
        %v1903 = vpop.f32.mrb[0].mxu0
        %1904 = vmatprep.mubr.f32.mxu0 0.0
        %1905 = vmatmul.mubr.f32.gmra.mrb[0].mxu0 %v1760
        %v1906 = vpop.f32.mrb[0].mxu0
        %v1907 = vadd.f32 0.0, %v1906
        %v1908 = vpop.f32.mrb[0].mxu0
        %1909 = vdwg.mxu0
        %v1910 = vadd.f32 %v1618, %v1832
        %v1911 = vadd.f32 %v1623, %v1837
        %v1912 = vadd.f32 %v1628, %v1842
        %v1913 = vadd.f32 %v1633, %v1847
        %v1914 = vadd.f32 %v1638, %v1852
        %v1915 = vadd.f32 %v1643, %v1857
        %v1916 = vadd.f32 %v1648, %v1862
        %v1917 = vadd.f32 %v1653, %v1867
        %v1918 = vadd.f32 %v1658, %v1872
        %v1919 = vadd.f32 %v1663, %v1877
        %v1920 = vadd.f32 %v1668, %v1882
        %v1921 = vadd.f32 %v1673, %v1887
        %v1922 = vadd.f32 %v1678, %v1892
        %v1923 = vadd.f32 %v1683, %v1897
        %v1924 = vadd.f32 %v1688, %v1902
        %v1925 = vadd.f32 %v1693, %v1907
        %v1926 = vld [vmem:[%s1026] sm:$0xff]
        %v1927 = vld [vmem:[%s1026 + $0x8] sm:$0xff]
        %v1928 = vld [vmem:[%s1026 + $0x18] sm:$0xff]
        %v1929 = vld [vmem:[%s1026 + $0x20] sm:$0xff]
        %v1930 = vld [vmem:[%s1026 + $0x30] sm:$0xff]
        %v1931 = vld [vmem:[%s1026 + $0x38] sm:$0xff]
        %v1932 = vld [vmem:[%s1026 + $0x48] sm:$0xff]
        %v1933 = vld [vmem:[%s1026 + $0x50] sm:$0xff]
        %v1934 = vld [vmem:[%s1026 + $0x60] sm:$0xff]
        %v1935 = vld [vmem:[%s1026 + $0x68] sm:$0xff]
        %v1936 = vld [vmem:[%s1026 + $0x78] sm:$0xff]
        %v1937 = vld [vmem:[%s1026 + $0x80] sm:$0xff]
        %v1938 = vld [vmem:[%s1026 + $0x90] sm:$0xff]
        %v1939 = vld [vmem:[%s1026 + $0x98] sm:$0xff]
        %v1940 = vld [vmem:[%s1026 + $0xa8] sm:$0xff]
        %v1941 = vld [vmem:[%s1026 + $0xb0] sm:$0xff]
        %s1942 = scalar_lea.vmem [#allocation15], 6
        %v1943 = vld [vmem:[%s1942] sm:$0x3]
        %v1945 = vsel %vm1027, %v1926, 0
        %v1948 = vsel %vm1027, %v1927, 0
        %v1951 = vsel %vm1027, %v1928, 0
        %v1954 = vsel %vm1027, %v1929, 0
        %v1957 = vsel %vm1027, %v1930, 0
        %v1960 = vsel %vm1027, %v1931, 0
        %v1963 = vsel %vm1027, %v1932, 0
        %v1966 = vsel %vm1027, %v1933, 0
        %v1969 = vsel %vm1027, %v1934, 0
        %v1972 = vsel %vm1027, %v1935, 0
        %v1975 = vsel %vm1027, %v1936, 0
        %v1978 = vsel %vm1027, %v1937, 0
        %v1981 = vsel %vm1027, %v1938, 0
        %v1984 = vsel %vm1027, %v1939, 0
        %v1987 = vsel %vm1027, %v1940, 0
        %v1990 = vsel %vm1027, %v1941, 0
        %v1993 = vsel %vm1351, %v1943, 0
        %1995 = vmatprep.subr.mxu0 0.0
        %1996 = vmatpush1.msra.mxu0 %v1993
        %1997 = vmatprep.subr.mxu0 0.0
        %1998 = vmatpush1.msra.mxu0 0.0
        %1999 = vmatprep.subr.mxu0 0.0
        %2000 = vmatpush1.msra.mxu0 0.0
        %2001 = vmatprep.subr.mxu0 0.0
        %2002 = vmatpush1.msra.mxu0 0.0
        %2003 = vmatprep.subr.mxu0 0.0
        %2004 = vmatpush1.msra.mxu0 0.0
        %2005 = vmatprep.subr.mxu0 0.0
        %2006 = vmatpush1.msra.mxu0 0.0
        %2007 = vmatprep.subr.mxu0 0.0
        %2008 = vmatpush1.msra.mxu0 0.0
        %2009 = vmatprep.subr.mxu0 0.0
        %2010 = vmatpush1.msra.mxu0 0.0
        %2011 = vmatprep.subr.mxu0 0.0
        %2012 = vmatpush1.msra.mxu0 0.0
        %2013 = vmatprep.subr.mxu0 0.0
        %2014 = vmatpush1.msra.mxu0 0.0
        %2015 = vmatprep.subr.mxu0 0.0
        %2016 = vmatpush1.msra.mxu0 0.0
        %2017 = vmatprep.subr.mxu0 0.0
        %2018 = vmatpush1.msra.mxu0 0.0
        %2019 = vmatprep.subr.mxu0 0.0
        %2020 = vmatpush1.msra.mxu0 0.0
        %2021 = vmatprep.subr.mxu0 0.0
        %2022 = vmatpush1.msra.mxu0 0.0
        %2023 = vmatprep.subr.mxu0 0.0
        %2024 = vmatpush1.msra.mxu0 0.0
        %2025 = vmatprep.subr.mxu0 0.0
        %2026 = vmatpush1.msra.mxu0 0.0
        %2027 = vmatprep.subr.mxu0 0.0
        %2028 = vmatpush1.msra.mxu0 0.0
        %2029 = vmatprep.subr.mxu0 0.0
        %2030 = vmatpush1.msra.mxu0 0.0
        %2031 = vmatprep.subr.mxu0 0.0
        %2032 = vmatpush1.msra.mxu0 0.0
        %2033 = vmatprep.subr.mxu0 0.0
        %2034 = vmatpush1.msra.mxu0 0.0
        %2035 = vmatprep.subr.mxu0 0.0
        %2036 = vmatpush1.msra.mxu0 0.0
        %2037 = vmatprep.subr.mxu0 0.0
        %2038 = vmatpush1.msra.mxu0 0.0
        %2039 = vmatprep.subr.mxu0 0.0
        %2040 = vmatpush1.msra.mxu0 0.0
        %2041 = vmatprep.subr.mxu0 0.0
        %2042 = vmatpush1.msra.mxu0 0.0
        %2043 = vmatprep.subr.mxu0 0.0
        %2044 = vmatpush1.msra.mxu0 0.0
        %2045 = vmatprep.subr.mxu0 0.0
        %2046 = vmatpush1.msra.mxu0 0.0
        %2047 = vmatprep.subr.mxu0 0.0
        %2048 = vmatpush1.msra.mxu0 0.0
        %2049 = vmatprep.subr.mxu0 0.0
        %2050 = vmatpush1.msra.mxu0 0.0
        %2051 = vmatprep.subr.mxu0 0.0
        %2052 = vmatpush1.msra.mxu0 0.0
        %2053 = vmatprep.subr.mxu0 0.0
        %2054 = vmatpush1.msra.mxu0 0.0
        %2055 = vmatprep.subr.mxu0 0.0
        %2056 = vmatpush1.msra.mxu0 0.0
        %2057 = vmatprep.subr.mxu0 0.0
        %2058 = vmatpush1.msra.mxu0 0.0
        %2059 = vmatprep.mubr.f32.mxu0 0.0
        %2060 = vmatmul.mubr.f32.gmra.mrb[0].mxu0 %v1945
        %v2061 = vpop.f32.mrb[0].mxu0
        %v2062 = vadd.f32 0.0, %v2061
        %v2063 = vpop.f32.mrb[0].mxu0
        %2064 = vmatprep.mubr.f32.mxu0 0.0
        %2065 = vmatmul.mubr.f32.gmra.mrb[0].mxu0 %v1948
        %v2066 = vpop.f32.mrb[0].mxu0
        %v2067 = vadd.f32 0.0, %v2066
        %v2068 = vpop.f32.mrb[0].mxu0
        %2069 = vmatprep.mubr.f32.mxu0 0.0
        %2070 = vmatmul.mubr.f32.gmra.mrb[0].mxu0 %v1951
        %v2071 = vpop.f32.mrb[0].mxu0
        %v2072 = vadd.f32 0.0, %v2071
        %v2073 = vpop.f32.mrb[0].mxu0
        %2074 = vmatprep.mubr.f32.mxu0 0.0
        %2075 = vmatmul.mubr.f32.gmra.mrb[0].mxu0 %v1954
        %v2076 = vpop.f32.mrb[0].mxu0
        %v2077 = vadd.f32 0.0, %v2076
        %v2078 = vpop.f32.mrb[0].mxu0
        %2079 = vmatprep.mubr.f32.mxu0 0.0
        %2080 = vmatmul.mubr.f32.gmra.mrb[0].mxu0 %v1957
        %v2081 = vpop.f32.mrb[0].mxu0
        %v2082 = vadd.f32 0.0, %v2081
        %v2083 = vpop.f32.mrb[0].mxu0
        %2084 = vmatprep.mubr.f32.mxu0 0.0
        %2085 = vmatmul.mubr.f32.gmra.mrb[0].mxu0 %v1960
        %v2086 = vpop.f32.mrb[0].mxu0
        %v2087 = vadd.f32 0.0, %v2086
        %v2088 = vpop.f32.mrb[0].mxu0
        %2089 = vmatprep.mubr.f32.mxu0 0.0
        %2090 = vmatmul.mubr.f32.gmra.mrb[0].mxu0 %v1963
        %v2091 = vpop.f32.mrb[0].mxu0
        %v2092 = vadd.f32 0.0, %v2091
        %v2093 = vpop.f32.mrb[0].mxu0
        %2094 = vmatprep.mubr.f32.mxu0 0.0
        %2095 = vmatmul.mubr.f32.gmra.mrb[0].mxu0 %v1966
        %v2096 = vpop.f32.mrb[0].mxu0
        %v2097 = vadd.f32 0.0, %v2096
        %v2098 = vpop.f32.mrb[0].mxu0
        %2099 = vmatprep.mubr.f32.mxu0 0.0
        %2100 = vmatmul.mubr.f32.gmra.mrb[0].mxu0 %v1969
        %v2101 = vpop.f32.mrb[0].mxu0
        %v2102 = vadd.f32 0.0, %v2101
        %v2103 = vpop.f32.mrb[0].mxu0
        %2104 = vmatprep.mubr.f32.mxu0 0.0
        %2105 = vmatmul.mubr.f32.gmra.mrb[0].mxu0 %v1972
        %v2106 = vpop.f32.mrb[0].mxu0
        %v2107 = vadd.f32 0.0, %v2106
        %v2108 = vpop.f32.mrb[0].mxu0
        %2109 = vmatprep.mubr.f32.mxu0 0.0
        %2110 = vmatmul.mubr.f32.gmra.mrb[0].mxu0 %v1975
        %v2111 = vpop.f32.mrb[0].mxu0
        %v2112 = vadd.f32 0.0, %v2111
        %v2113 = vpop.f32.mrb[0].mxu0
        %2114 = vmatprep.mubr.f32.mxu0 0.0
        %2115 = vmatmul.mubr.f32.gmra.mrb[0].mxu0 %v1978
        %v2116 = vpop.f32.mrb[0].mxu0
        %v2117 = vadd.f32 0.0, %v2116
        %v2118 = vpop.f32.mrb[0].mxu0
        %2119 = vmatprep.mubr.f32.mxu0 0.0
        %2120 = vmatmul.mubr.f32.gmra.mrb[0].mxu0 %v1981
        %v2121 = vpop.f32.mrb[0].mxu0
        %v2122 = vadd.f32 0.0, %v2121
        %v2123 = vpop.f32.mrb[0].mxu0
        %2124 = vmatprep.mubr.f32.mxu0 0.0
        %2125 = vmatmul.mubr.f32.gmra.mrb[0].mxu0 %v1984
        %v2126 = vpop.f32.mrb[0].mxu0
        %v2127 = vadd.f32 0.0, %v2126
        %v2128 = vpop.f32.mrb[0].mxu0
        %2129 = vmatprep.mubr.f32.mxu0 0.0
        %2130 = vmatmul.mubr.f32.gmra.mrb[0].mxu0 %v1987
        %v2131 = vpop.f32.mrb[0].mxu0
        %v2132 = vadd.f32 0.0, %v2131
        %v2133 = vpop.f32.mrb[0].mxu0
        %2134 = vmatprep.mubr.f32.mxu0 0.0
        %2135 = vmatmul.mubr.f32.gmra.mrb[0].mxu0 %v1990
        %v2136 = vpop.f32.mrb[0].mxu0
        %v2137 = vadd.f32 0.0, %v2136
        %v2138 = vpop.f32.mrb[0].mxu0
        %2139 = vdwg.mxu0
        %v2140 = vadd.f32 %v1910, %v2062
        %v2141 = vadd.f32 %v1911, %v2067
        %v2142 = vadd.f32 %v1912, %v2072
        %v2143 = vadd.f32 %v1913, %v2077
        %v2144 = vadd.f32 %v1914, %v2082
        %v2145 = vadd.f32 %v1915, %v2087
        %v2146 = vadd.f32 %v1916, %v2092
        %v2147 = vadd.f32 %v1917, %v2097
        %v2148 = vadd.f32 %v1918, %v2102
        %v2149 = vadd.f32 %v1919, %v2107
        %v2150 = vadd.f32 %v1920, %v2112
        %v2151 = vadd.f32 %v1921, %v2117
        %v2152 = vadd.f32 %v1922, %v2122
        %v2153 = vadd.f32 %v1923, %v2127
        %v2154 = vadd.f32 %v1924, %v2132
        %v2155 = vadd.f32 %v1925, %v2137
        %v2156 = vld [vmem:[%s1026 + $0x1] sm:$0xff]
        %v2157 = vld [vmem:[%s1026 + $0x9] sm:$0xff]
        %v2158 = vld [vmem:[%s1026 + $0x19] sm:$0xff]
        %v2159 = vld [vmem:[%s1026 + $0x21] sm:$0xff]
        %v2160 = vld [vmem:[%s1026 + $0x31] sm:$0xff]
        %v2161 = vld [vmem:[%s1026 + $0x39] sm:$0xff]
        %v2162 = vld [vmem:[%s1026 + $0x49] sm:$0xff]
        %v2163 = vld [vmem:[%s1026 + $0x51] sm:$0xff]
        %v2164 = vld [vmem:[%s1026 + $0x61] sm:$0xff]
        %v2165 = vld [vmem:[%s1026 + $0x69] sm:$0xff]
        %v2166 = vld [vmem:[%s1026 + $0x79] sm:$0xff]
        %v2167 = vld [vmem:[%s1026 + $0x81] sm:$0xff]
        %v2168 = vld [vmem:[%s1026 + $0x91] sm:$0xff]
        %v2169 = vld [vmem:[%s1026 + $0x99] sm:$0xff]
        %v2170 = vld [vmem:[%s1026 + $0xa9] sm:$0xff]
        %v2171 = vld [vmem:[%s1026 + $0xb1] sm:$0xff]
        %s2172 = scalar_lea.vmem [#allocation15], 8
        %v2173 = vld [vmem:[%s2172] sm:$0x3]
        %v2175 = vsel %vm1027, %v2156, 0
        %v2178 = vsel %vm1027, %v2157, 0
        %v2181 = vsel %vm1027, %v2158, 0
        %v2184 = vsel %vm1027, %v2159, 0
        %v2187 = vsel %vm1027, %v2160, 0
        %v2190 = vsel %vm1027, %v2161, 0
        %v2193 = vsel %vm1027, %v2162, 0
        %v2196 = vsel %vm1027, %v2163, 0
        %v2199 = vsel %vm1027, %v2164, 0
        %v2202 = vsel %vm1027, %v2165, 0
        %v2205 = vsel %vm1027, %v2166, 0
        %v2208 = vsel %vm1027, %v2167, 0
        %v2211 = vsel %vm1027, %v2168, 0
        %v2214 = vsel %vm1027, %v2169, 0
        %v2217 = vsel %vm1027, %v2170, 0
        %v2220 = vsel %vm1027, %v2171, 0
        %v2223 = vsel %vm1351, %v2173, 0
        %2225 = vmatprep.subr.mxu0 0.0
        %2226 = vmatpush1.msra.mxu0 %v2223
        %2227 = vmatprep.subr.mxu0 0.0
        %2228 = vmatpush1.msra.mxu0 0.0
        %2229 = vmatprep.subr.mxu0 0.0
        %2230 = vmatpush1.msra.mxu0 0.0
        %2231 = vmatprep.subr.mxu0 0.0
        %2232 = vmatpush1.msra.mxu0 0.0
        %2233 = vmatprep.subr.mxu0 0.0
        %2234 = vmatpush1.msra.mxu0 0.0
        %2235 = vmatprep.subr.mxu0 0.0
        %2236 = vmatpush1.msra.mxu0 0.0
        %2237 = vmatprep.subr.mxu0 0.0
        %2238 = vmatpush1.msra.mxu0 0.0
        %2239 = vmatprep.subr.mxu0 0.0
        %2240 = vmatpush1.msra.mxu0 0.0
        %2241 = vmatprep.subr.mxu0 0.0
        %2242 = vmatpush1.msra.mxu0 0.0
        %2243 = vmatprep.subr.mxu0 0.0
        %2244 = vmatpush1.msra.mxu0 0.0
        %2245 = vmatprep.subr.mxu0 0.0
        %2246 = vmatpush1.msra.mxu0 0.0
        %2247 = vmatprep.subr.mxu0 0.0
        %2248 = vmatpush1.msra.mxu0 0.0
        %2249 = vmatprep.subr.mxu0 0.0
        %2250 = vmatpush1.msra.mxu0 0.0
        %2251 = vmatprep.subr.mxu0 0.0
        %2252 = vmatpush1.msra.mxu0 0.0
        %2253 = vmatprep.subr.mxu0 0.0
        %2254 = vmatpush1.msra.mxu0 0.0
        %2255 = vmatprep.subr.mxu0 0.0
        %2256 = vmatpush1.msra.mxu0 0.0
        %2257 = vmatprep.subr.mxu0 0.0
        %2258 = vmatpush1.msra.mxu0 0.0
        %2259 = vmatprep.subr.mxu0 0.0
        %2260 = vmatpush1.msra.mxu0 0.0
        %2261 = vmatprep.subr.mxu0 0.0
        %2262 = vmatpush1.msra.mxu0 0.0
        %2263 = vmatprep.subr.mxu0 0.0
        %2264 = vmatpush1.msra.mxu0 0.0
        %2265 = vmatprep.subr.mxu0 0.0
        %2266 = vmatpush1.msra.mxu0 0.0
        %2267 = vmatprep.subr.mxu0 0.0
        %2268 = vmatpush1.msra.mxu0 0.0
        %2269 = vmatprep.subr.mxu0 0.0
        %2270 = vmatpush1.msra.mxu0 0.0
        %2271 = vmatprep.subr.mxu0 0.0
        %2272 = vmatpush1.msra.mxu0 0.0
        %2273 = vmatprep.subr.mxu0 0.0
        %2274 = vmatpush1.msra.mxu0 0.0
        %2275 = vmatprep.subr.mxu0 0.0
        %2276 = vmatpush1.msra.mxu0 0.0
        %2277 = vmatprep.subr.mxu0 0.0
        %2278 = vmatpush1.msra.mxu0 0.0
        %2279 = vmatprep.subr.mxu0 0.0
        %2280 = vmatpush1.msra.mxu0 0.0
        %2281 = vmatprep.subr.mxu0 0.0
        %2282 = vmatpush1.msra.mxu0 0.0
        %2283 = vmatprep.subr.mxu0 0.0
        %2284 = vmatpush1.msra.mxu0 0.0
        %2285 = vmatprep.subr.mxu0 0.0
        %2286 = vmatpush1.msra.mxu0 0.0
        %2287 = vmatprep.subr.mxu0 0.0
        %2288 = vmatpush1.msra.mxu0 0.0
        %2289 = vmatprep.mubr.f32.mxu0 0.0
        %2290 = vmatmul.mubr.f32.gmra.mrb[0].mxu0 %v2175
        %v2291 = vpop.f32.mrb[0].mxu0
        %v2292 = vadd.f32 0.0, %v2291
        %v2293 = vpop.f32.mrb[0].mxu0
        %2294 = vmatprep.mubr.f32.mxu0 0.0
        %2295 = vmatmul.mubr.f32.gmra.mrb[0].mxu0 %v2178
        %v2296 = vpop.f32.mrb[0].mxu0
        %v2297 = vadd.f32 0.0, %v2296
        %v2298 = vpop.f32.mrb[0].mxu0
        %2299 = vmatprep.mubr.f32.mxu0 0.0
        %2300 = vmatmul.mubr.f32.gmra.mrb[0].mxu0 %v2181
        %v2301 = vpop.f32.mrb[0].mxu0
        %v2302 = vadd.f32 0.0, %v2301
        %v2303 = vpop.f32.mrb[0].mxu0
        %2304 = vmatprep.mubr.f32.mxu0 0.0
        %2305 = vmatmul.mubr.f32.gmra.mrb[0].mxu0 %v2184
        %v2306 = vpop.f32.mrb[0].mxu0
        %v2307 = vadd.f32 0.0, %v2306
        %v2308 = vpop.f32.mrb[0].mxu0
        %2309 = vmatprep.mubr.f32.mxu0 0.0
        %2310 = vmatmul.mubr.f32.gmra.mrb[0].mxu0 %v2187
        %v2311 = vpop.f32.mrb[0].mxu0
        %v2312 = vadd.f32 0.0, %v2311
        %v2313 = vpop.f32.mrb[0].mxu0
        %2314 = vmatprep.mubr.f32.mxu0 0.0
        %2315 = vmatmul.mubr.f32.gmra.mrb[0].mxu0 %v2190
        %v2316 = vpop.f32.mrb[0].mxu0
        %v2317 = vadd.f32 0.0, %v2316
        %v2318 = vpop.f32.mrb[0].mxu0
        %2319 = vmatprep.mubr.f32.mxu0 0.0
        %2320 = vmatmul.mubr.f32.gmra.mrb[0].mxu0 %v2193
        %v2321 = vpop.f32.mrb[0].mxu0
        %v2322 = vadd.f32 0.0, %v2321
        %v2323 = vpop.f32.mrb[0].mxu0
        %2324 = vmatprep.mubr.f32.mxu0 0.0
        %2325 = vmatmul.mubr.f32.gmra.mrb[0].mxu0 %v2196
        %v2326 = vpop.f32.mrb[0].mxu0
        %v2327 = vadd.f32 0.0, %v2326
        %v2328 = vpop.f32.mrb[0].mxu0
        %2329 = vmatprep.mubr.f32.mxu0 0.0
        %2330 = vmatmul.mubr.f32.gmra.mrb[0].mxu0 %v2199
        %v2331 = vpop.f32.mrb[0].mxu0
        %v2332 = vadd.f32 0.0, %v2331
        %v2333 = vpop.f32.mrb[0].mxu0
        %2334 = vmatprep.mubr.f32.mxu0 0.0
        %2335 = vmatmul.mubr.f32.gmra.mrb[0].mxu0 %v2202
        %v2336 = vpop.f32.mrb[0].mxu0
        %v2337 = vadd.f32 0.0, %v2336
        %v2338 = vpop.f32.mrb[0].mxu0
        %2339 = vmatprep.mubr.f32.mxu0 0.0
        %2340 = vmatmul.mubr.f32.gmra.mrb[0].mxu0 %v2205
        %v2341 = vpop.f32.mrb[0].mxu0
        %v2342 = vadd.f32 0.0, %v2341
        %v2343 = vpop.f32.mrb[0].mxu0
        %2344 = vmatprep.mubr.f32.mxu0 0.0
        %2345 = vmatmul.mubr.f32.gmra.mrb[0].mxu0 %v2208
        %v2346 = vpop.f32.mrb[0].mxu0
        %v2347 = vadd.f32 0.0, %v2346
        %v2348 = vpop.f32.mrb[0].mxu0
        %2349 = vmatprep.mubr.f32.mxu0 0.0
        %2350 = vmatmul.mubr.f32.gmra.mrb[0].mxu0 %v2211
        %v2351 = vpop.f32.mrb[0].mxu0
        %v2352 = vadd.f32 0.0, %v2351
        %v2353 = vpop.f32.mrb[0].mxu0
        %2354 = vmatprep.mubr.f32.mxu0 0.0
        %2355 = vmatmul.mubr.f32.gmra.mrb[0].mxu0 %v2214
        %v2356 = vpop.f32.mrb[0].mxu0
        %v2357 = vadd.f32 0.0, %v2356
        %v2358 = vpop.f32.mrb[0].mxu0
        %2359 = vmatprep.mubr.f32.mxu0 0.0
        %2360 = vmatmul.mubr.f32.gmra.mrb[0].mxu0 %v2217
        %v2361 = vpop.f32.mrb[0].mxu0
        %v2362 = vadd.f32 0.0, %v2361
        %v2363 = vpop.f32.mrb[0].mxu0
        %2364 = vmatprep.mubr.f32.mxu0 0.0
        %2365 = vmatmul.mubr.f32.gmra.mrb[0].mxu0 %v2220
        %v2366 = vpop.f32.mrb[0].mxu0
        %v2367 = vadd.f32 0.0, %v2366
        %v2368 = vpop.f32.mrb[0].mxu0
        %2369 = vdwg.mxu0
        %v2370 = vadd.f32 %v2140, %v2292
        %v2371 = vadd.f32 %v2141, %v2297
        %v2372 = vadd.f32 %v2142, %v2302
        %v2373 = vadd.f32 %v2143, %v2307
        %v2374 = vadd.f32 %v2144, %v2312
        %v2375 = vadd.f32 %v2145, %v2317
        %v2376 = vadd.f32 %v2146, %v2322
        %v2377 = vadd.f32 %v2147, %v2327
        %v2378 = vadd.f32 %v2148, %v2332
        %v2379 = vadd.f32 %v2149, %v2337
        %v2380 = vadd.f32 %v2150, %v2342
        %v2381 = vadd.f32 %v2151, %v2347
        %v2382 = vadd.f32 %v2152, %v2352
        %v2383 = vadd.f32 %v2153, %v2357
        %v2384 = vadd.f32 %v2154, %v2362
        %v2385 = vadd.f32 %v2155, %v2367
        %v2386 = vld [vmem:[%s1026 + $0x2] sm:$0xff]
        %v2387 = vld [vmem:[%s1026 + $0xa] sm:$0xff]
        %v2388 = vld [vmem:[%s1026 + $0x1a] sm:$0xff]
        %v2389 = vld [vmem:[%s1026 + $0x22] sm:$0xff]
        %v2390 = vld [vmem:[%s1026 + $0x32] sm:$0xff]
        %v2391 = vld [vmem:[%s1026 + $0x3a] sm:$0xff]
        %v2392 = vld [vmem:[%s1026 + $0x4a] sm:$0xff]
        %v2393 = vld [vmem:[%s1026 + $0x52] sm:$0xff]
        %v2394 = vld [vmem:[%s1026 + $0x62] sm:$0xff]
        %v2395 = vld [vmem:[%s1026 + $0x6a] sm:$0xff]
        %v2396 = vld [vmem:[%s1026 + $0x7a] sm:$0xff]
        %v2397 = vld [vmem:[%s1026 + $0x82] sm:$0xff]
        %v2398 = vld [vmem:[%s1026 + $0x92] sm:$0xff]
        %v2399 = vld [vmem:[%s1026 + $0x9a] sm:$0xff]
        %v2400 = vld [vmem:[%s1026 + $0xaa] sm:$0xff]
        %v2401 = vld [vmem:[%s1026 + $0xb2] sm:$0xff]
        %s2402 = scalar_lea.vmem [#allocation15], 10
        %v2403 = vld [vmem:[%s2402] sm:$0x3]
        %v2405 = vsel %vm1027, %v2386, 0
        %v2408 = vsel %vm1027, %v2387, 0
        %v2411 = vsel %vm1027, %v2388, 0
        %v2414 = vsel %vm1027, %v2389, 0
        %v2417 = vsel %vm1027, %v2390, 0
        %v2420 = vsel %vm1027, %v2391, 0
        %v2423 = vsel %vm1027, %v2392, 0
        %v2426 = vsel %vm1027, %v2393, 0
        %v2429 = vsel %vm1027, %v2394, 0
        %v2432 = vsel %vm1027, %v2395, 0
        %v2435 = vsel %vm1027, %v2396, 0
        %v2438 = vsel %vm1027, %v2397, 0
        %v2441 = vsel %vm1027, %v2398, 0
        %v2444 = vsel %vm1027, %v2399, 0
        %v2447 = vsel %vm1027, %v2400, 0
        %v2450 = vsel %vm1027, %v2401, 0
        %v2453 = vsel %vm1351, %v2403, 0
        %2455 = vmatprep.subr.mxu0 0.0
        %2456 = vmatpush1.msra.mxu0 %v2453
        %2457 = vmatprep.subr.mxu0 0.0
        %2458 = vmatpush1.msra.mxu0 0.0
        %2459 = vmatprep.subr.mxu0 0.0
        %2460 = vmatpush1.msra.mxu0 0.0
        %2461 = vmatprep.subr.mxu0 0.0
        %2462 = vmatpush1.msra.mxu0 0.0
        %2463 = vmatprep.subr.mxu0 0.0
        %2464 = vmatpush1.msra.mxu0 0.0
        %2465 = vmatprep.subr.mxu0 0.0
        %2466 = vmatpush1.msra.mxu0 0.0
        %2467 = vmatprep.subr.mxu0 0.0
        %2468 = vmatpush1.msra.mxu0 0.0
        %2469 = vmatprep.subr.mxu0 0.0
        %2470 = vmatpush1.msra.mxu0 0.0
        %2471 = vmatprep.subr.mxu0 0.0
        %2472 = vmatpush1.msra.mxu0 0.0
        %2473 = vmatprep.subr.mxu0 0.0
        %2474 = vmatpush1.msra.mxu0 0.0
        %2475 = vmatprep.subr.mxu0 0.0
        %2476 = vmatpush1.msra.mxu0 0.0
        %2477 = vmatprep.subr.mxu0 0.0
        %2478 = vmatpush1.msra.mxu0 0.0
        %2479 = vmatprep.subr.mxu0 0.0
        %2480 = vmatpush1.msra.mxu0 0.0
        %2481 = vmatprep.subr.mxu0 0.0
        %2482 = vmatpush1.msra.mxu0 0.0
        %2483 = vmatprep.subr.mxu0 0.0
        %2484 = vmatpush1.msra.mxu0 0.0
        %2485 = vmatprep.subr.mxu0 0.0
        %2486 = vmatpush1.msra.mxu0 0.0
        %2487 = vmatprep.subr.mxu0 0.0
        %2488 = vmatpush1.msra.mxu0 0.0
        %2489 = vmatprep.subr.mxu0 0.0
        %2490 = vmatpush1.msra.mxu0 0.0
        %2491 = vmatprep.subr.mxu0 0.0
        %2492 = vmatpush1.msra.mxu0 0.0
        %2493 = vmatprep.subr.mxu0 0.0
        %2494 = vmatpush1.msra.mxu0 0.0
        %2495 = vmatprep.subr.mxu0 0.0
        %2496 = vmatpush1.msra.mxu0 0.0
        %2497 = vmatprep.subr.mxu0 0.0
        %2498 = vmatpush1.msra.mxu0 0.0
        %2499 = vmatprep.subr.mxu0 0.0
        %2500 = vmatpush1.msra.mxu0 0.0
        %2501 = vmatprep.subr.mxu0 0.0
        %2502 = vmatpush1.msra.mxu0 0.0
        %2503 = vmatprep.subr.mxu0 0.0
        %2504 = vmatpush1.msra.mxu0 0.0
        %2505 = vmatprep.subr.mxu0 0.0
        %2506 = vmatpush1.msra.mxu0 0.0
        %2507 = vmatprep.subr.mxu0 0.0
        %2508 = vmatpush1.msra.mxu0 0.0
        %2509 = vmatprep.subr.mxu0 0.0
        %2510 = vmatpush1.msra.mxu0 0.0
        %2511 = vmatprep.subr.mxu0 0.0
        %2512 = vmatpush1.msra.mxu0 0.0
        %2513 = vmatprep.subr.mxu0 0.0
        %2514 = vmatpush1.msra.mxu0 0.0
        %2515 = vmatprep.subr.mxu0 0.0
        %2516 = vmatpush1.msra.mxu0 0.0
        %2517 = vmatprep.subr.mxu0 0.0
        %2518 = vmatpush1.msra.mxu0 0.0
        %2519 = vmatprep.mubr.f32.mxu0 0.0
        %2520 = vmatmul.mubr.f32.gmra.mrb[0].mxu0 %v2405
        %v2521 = vpop.f32.mrb[0].mxu0
        %v2522 = vadd.f32 0.0, %v2521
        %v2523 = vpop.f32.mrb[0].mxu0
        %2524 = vmatprep.mubr.f32.mxu0 0.0
        %2525 = vmatmul.mubr.f32.gmra.mrb[0].mxu0 %v2408
        %v2526 = vpop.f32.mrb[0].mxu0
        %v2527 = vadd.f32 0.0, %v2526
        %v2528 = vpop.f32.mrb[0].mxu0
        %2529 = vmatprep.mubr.f32.mxu0 0.0
        %2530 = vmatmul.mubr.f32.gmra.mrb[0].mxu0 %v2411
        %v2531 = vpop.f32.mrb[0].mxu0
        %v2532 = vadd.f32 0.0, %v2531
        %v2533 = vpop.f32.mrb[0].mxu0
        %2534 = vmatprep.mubr.f32.mxu0 0.0
        %2535 = vmatmul.mubr.f32.gmra.mrb[0].mxu0 %v2414
        %v2536 = vpop.f32.mrb[0].mxu0
        %v2537 = vadd.f32 0.0, %v2536
        %v2538 = vpop.f32.mrb[0].mxu0
        %2539 = vmatprep.mubr.f32.mxu0 0.0
        %2540 = vmatmul.mubr.f32.gmra.mrb[0].mxu0 %v2417
        %v2541 = vpop.f32.mrb[0].mxu0
        %v2542 = vadd.f32 0.0, %v2541
        %v2543 = vpop.f32.mrb[0].mxu0
        %2544 = vmatprep.mubr.f32.mxu0 0.0
        %2545 = vmatmul.mubr.f32.gmra.mrb[0].mxu0 %v2420
        %v2546 = vpop.f32.mrb[0].mxu0
        %v2547 = vadd.f32 0.0, %v2546
        %v2548 = vpop.f32.mrb[0].mxu0
        %2549 = vmatprep.mubr.f32.mxu0 0.0
        %2550 = vmatmul.mubr.f32.gmra.mrb[0].mxu0 %v2423
        %v2551 = vpop.f32.mrb[0].mxu0
        %v2552 = vadd.f32 0.0, %v2551
        %v2553 = vpop.f32.mrb[0].mxu0
        %2554 = vmatprep.mubr.f32.mxu0 0.0
        %2555 = vmatmul.mubr.f32.gmra.mrb[0].mxu0 %v2426
        %v2556 = vpop.f32.mrb[0].mxu0
        %v2557 = vadd.f32 0.0, %v2556
        %v2558 = vpop.f32.mrb[0].mxu0
        %2559 = vmatprep.mubr.f32.mxu0 0.0
        %2560 = vmatmul.mubr.f32.gmra.mrb[0].mxu0 %v2429
        %v2561 = vpop.f32.mrb[0].mxu0
        %v2562 = vadd.f32 0.0, %v2561
        %v2563 = vpop.f32.mrb[0].mxu0
        %2564 = vmatprep.mubr.f32.mxu0 0.0
        %2565 = vmatmul.mubr.f32.gmra.mrb[0].mxu0 %v2432
        %v2566 = vpop.f32.mrb[0].mxu0
        %v2567 = vadd.f32 0.0, %v2566
        %v2568 = vpop.f32.mrb[0].mxu0
        %2569 = vmatprep.mubr.f32.mxu0 0.0
        %2570 = vmatmul.mubr.f32.gmra.mrb[0].mxu0 %v2435
        %v2571 = vpop.f32.mrb[0].mxu0
        %v2572 = vadd.f32 0.0, %v2571
        %v2573 = vpop.f32.mrb[0].mxu0
        %2574 = vmatprep.mubr.f32.mxu0 0.0
        %2575 = vmatmul.mubr.f32.gmra.mrb[0].mxu0 %v2438
        %v2576 = vpop.f32.mrb[0].mxu0
        %v2577 = vadd.f32 0.0, %v2576
        %v2578 = vpop.f32.mrb[0].mxu0
        %2579 = vmatprep.mubr.f32.mxu0 0.0
        %2580 = vmatmul.mubr.f32.gmra.mrb[0].mxu0 %v2441
        %v2581 = vpop.f32.mrb[0].mxu0
        %v2582 = vadd.f32 0.0, %v2581
        %v2583 = vpop.f32.mrb[0].mxu0
        %2584 = vmatprep.mubr.f32.mxu0 0.0
        %2585 = vmatmul.mubr.f32.gmra.mrb[0].mxu0 %v2444
        %v2586 = vpop.f32.mrb[0].mxu0
        %v2587 = vadd.f32 0.0, %v2586
        %v2588 = vpop.f32.mrb[0].mxu0
        %2589 = vmatprep.mubr.f32.mxu0 0.0
        %2590 = vmatmul.mubr.f32.gmra.mrb[0].mxu0 %v2447
        %v2591 = vpop.f32.mrb[0].mxu0
        %v2592 = vadd.f32 0.0, %v2591
        %v2593 = vpop.f32.mrb[0].mxu0
        %2594 = vmatprep.mubr.f32.mxu0 0.0
        %2595 = vmatmul.mubr.f32.gmra.mrb[0].mxu0 %v2450
        %v2596 = vpop.f32.mrb[0].mxu0
        %v2597 = vadd.f32 0.0, %v2596
        %v2598 = vpop.f32.mrb[0].mxu0
        %2599 = vdwg.mxu0
        %v2600 = vadd.f32 %v2370, %v2522
        %v2601 = vadd.f32 %v2371, %v2527
        %v2602 = vadd.f32 %v2372, %v2532
        %v2603 = vadd.f32 %v2373, %v2537
        %v2604 = vadd.f32 %v2374, %v2542
        %v2605 = vadd.f32 %v2375, %v2547
        %v2606 = vadd.f32 %v2376, %v2552
        %v2607 = vadd.f32 %v2377, %v2557
        %v2608 = vadd.f32 %v2378, %v2562
        %v2609 = vadd.f32 %v2379, %v2567
        %v2610 = vadd.f32 %v2380, %v2572
        %v2611 = vadd.f32 %v2381, %v2577
        %v2612 = vadd.f32 %v2382, %v2582
        %v2613 = vadd.f32 %v2383, %v2587
        %v2614 = vadd.f32 %v2384, %v2592
        %v2615 = vadd.f32 %v2385, %v2597
        %s2616 = scalar_lea.vmem [#allocation2], 48
        %v2617 = vld [vmem:[%s2616] sm:$0xff]
        %v2618 = vld [vmem:[%s2616 + $0x8] sm:$0xff]
        %v2619 = vld [vmem:[%s2616 + $0x18] sm:$0xff]
        %v2620 = vld [vmem:[%s2616 + $0x20] sm:$0xff]
        %v2621 = vld [vmem:[%s2616 + $0x30] sm:$0xff]
        %v2622 = vld [vmem:[%s2616 + $0x38] sm:$0xff]
        %v2623 = vld [vmem:[%s2616 + $0x48] sm:$0xff]
        %v2624 = vld [vmem:[%s2616 + $0x50] sm:$0xff]
        %v2625 = vld [vmem:[%s2616 + $0x60] sm:$0xff]
        %v2626 = vld [vmem:[%s2616 + $0x68] sm:$0xff]
        %v2627 = vld [vmem:[%s2616 + $0x78] sm:$0xff]
        %v2628 = vld [vmem:[%s2616 + $0x80] sm:$0xff]
        %v2629 = vld [vmem:[%s2616 + $0x90] sm:$0xff]
        %v2630 = vld [vmem:[%s2616 + $0x98] sm:$0xff]
        %v2631 = vld [vmem:[%s2616 + $0xa8] sm:$0xff]
        %v2632 = vld [vmem:[%s2616 + $0xb0] sm:$0xff]
        %s2633 = scalar_lea.vmem [#allocation15], 12
        %v2634 = vld [vmem:[%s2633] sm:$0x3]
        %v2636 = vsel %vm1027, %v2617, 0
        %v2639 = vsel %vm1027, %v2618, 0
        %v2642 = vsel %vm1027, %v2619, 0
        %v2645 = vsel %vm1027, %v2620, 0
        %v2648 = vsel %vm1027, %v2621, 0
        %v2651 = vsel %vm1027, %v2622, 0
        %v2654 = vsel %vm1027, %v2623, 0
        %v2657 = vsel %vm1027, %v2624, 0
        %v2660 = vsel %vm1027, %v2625, 0
        %v2663 = vsel %vm1027, %v2626, 0
        %v2666 = vsel %vm1027, %v2627, 0
        %v2669 = vsel %vm1027, %v2628, 0
        %v2672 = vsel %vm1027, %v2629, 0
        %v2675 = vsel %vm1027, %v2630, 0
        %v2678 = vsel %vm1027, %v2631, 0
        %v2681 = vsel %vm1027, %v2632, 0
        %v2684 = vsel %vm1351, %v2634, 0
        %2686 = vmatprep.subr.mxu0 0.0
        %2687 = vmatpush1.msra.mxu0 %v2684
        %2688 = vmatprep.subr.mxu0 0.0
        %2689 = vmatpush1.msra.mxu0 0.0
        %2690 = vmatprep.subr.mxu0 0.0
        %2691 = vmatpush1.msra.mxu0 0.0
        %2692 = vmatprep.subr.mxu0 0.0
        %2693 = vmatpush1.msra.mxu0 0.0
        %2694 = vmatprep.subr.mxu0 0.0
        %2695 = vmatpush1.msra.mxu0 0.0
        %2696 = vmatprep.subr.mxu0 0.0
        %2697 = vmatpush1.msra.mxu0 0.0
        %2698 = vmatprep.subr.mxu0 0.0
        %2699 = vmatpush1.msra.mxu0 0.0
        %2700 = vmatprep.subr.mxu0 0.0
        %2701 = vmatpush1.msra.mxu0 0.0
        %2702 = vmatprep.subr.mxu0 0.0
        %2703 = vmatpush1.msra.mxu0 0.0
        %2704 = vmatprep.subr.mxu0 0.0
        %2705 = vmatpush1.msra.mxu0 0.0
        %2706 = vmatprep.subr.mxu0 0.0
        %2707 = vmatpush1.msra.mxu0 0.0
        %2708 = vmatprep.subr.mxu0 0.0
        %2709 = vmatpush1.msra.mxu0 0.0
        %2710 = vmatprep.subr.mxu0 0.0
        %2711 = vmatpush1.msra.mxu0 0.0
        %2712 = vmatprep.subr.mxu0 0.0
        %2713 = vmatpush1.msra.mxu0 0.0
        %2714 = vmatprep.subr.mxu0 0.0
        %2715 = vmatpush1.msra.mxu0 0.0
        %2716 = vmatprep.subr.mxu0 0.0
        %2717 = vmatpush1.msra.mxu0 0.0
        %2718 = vmatprep.subr.mxu0 0.0
        %2719 = vmatpush1.msra.mxu0 0.0
        %2720 = vmatprep.subr.mxu0 0.0
        %2721 = vmatpush1.msra.mxu0 0.0
        %2722 = vmatprep.subr.mxu0 0.0
        %2723 = vmatpush1.msra.mxu0 0.0
        %2724 = vmatprep.subr.mxu0 0.0
        %2725 = vmatpush1.msra.mxu0 0.0
        %2726 = vmatprep.subr.mxu0 0.0
        %2727 = vmatpush1.msra.mxu0 0.0
        %2728 = vmatprep.subr.mxu0 0.0
        %2729 = vmatpush1.msra.mxu0 0.0
        %2730 = vmatprep.subr.mxu0 0.0
        %2731 = vmatpush1.msra.mxu0 0.0
        %2732 = vmatprep.subr.mxu0 0.0
        %2733 = vmatpush1.msra.mxu0 0.0
        %2734 = vmatprep.subr.mxu0 0.0
        %2735 = vmatpush1.msra.mxu0 0.0
        %2736 = vmatprep.subr.mxu0 0.0
        %2737 = vmatpush1.msra.mxu0 0.0
        %2738 = vmatprep.subr.mxu0 0.0
        %2739 = vmatpush1.msra.mxu0 0.0
        %2740 = vmatprep.subr.mxu0 0.0
        %2741 = vmatpush1.msra.mxu0 0.0
        %2742 = vmatprep.subr.mxu0 0.0
        %2743 = vmatpush1.msra.mxu0 0.0
        %2744 = vmatprep.subr.mxu0 0.0
        %2745 = vmatpush1.msra.mxu0 0.0
        %2746 = vmatprep.subr.mxu0 0.0
        %2747 = vmatpush1.msra.mxu0 0.0
        %2748 = vmatprep.subr.mxu0 0.0
        %2749 = vmatpush1.msra.mxu0 0.0
        %2750 = vmatprep.mubr.f32.mxu0 0.0
        %2751 = vmatmul.mubr.f32.gmra.mrb[0].mxu0 %v2636
        %v2752 = vpop.f32.mrb[0].mxu0
        %v2753 = vadd.f32 0.0, %v2752
        %v2754 = vpop.f32.mrb[0].mxu0
        %2755 = vmatprep.mubr.f32.mxu0 0.0
        %2756 = vmatmul.mubr.f32.gmra.mrb[0].mxu0 %v2639
        %v2757 = vpop.f32.mrb[0].mxu0
        %v2758 = vadd.f32 0.0, %v2757
        %v2759 = vpop.f32.mrb[0].mxu0
        %2760 = vmatprep.mubr.f32.mxu0 0.0
        %2761 = vmatmul.mubr.f32.gmra.mrb[0].mxu0 %v2642
        %v2762 = vpop.f32.mrb[0].mxu0
        %v2763 = vadd.f32 0.0, %v2762
        %v2764 = vpop.f32.mrb[0].mxu0
        %2765 = vmatprep.mubr.f32.mxu0 0.0
        %2766 = vmatmul.mubr.f32.gmra.mrb[0].mxu0 %v2645
        %v2767 = vpop.f32.mrb[0].mxu0
        %v2768 = vadd.f32 0.0, %v2767
        %v2769 = vpop.f32.mrb[0].mxu0
        %2770 = vmatprep.mubr.f32.mxu0 0.0
        %2771 = vmatmul.mubr.f32.gmra.mrb[0].mxu0 %v2648
        %v2772 = vpop.f32.mrb[0].mxu0
        %v2773 = vadd.f32 0.0, %v2772
        %v2774 = vpop.f32.mrb[0].mxu0
        %2775 = vmatprep.mubr.f32.mxu0 0.0
        %2776 = vmatmul.mubr.f32.gmra.mrb[0].mxu0 %v2651
        %v2777 = vpop.f32.mrb[0].mxu0
        %v2778 = vadd.f32 0.0, %v2777
        %v2779 = vpop.f32.mrb[0].mxu0
        %2780 = vmatprep.mubr.f32.mxu0 0.0
        %2781 = vmatmul.mubr.f32.gmra.mrb[0].mxu0 %v2654
        %v2782 = vpop.f32.mrb[0].mxu0
        %v2783 = vadd.f32 0.0, %v2782
        %v2784 = vpop.f32.mrb[0].mxu0
        %2785 = vmatprep.mubr.f32.mxu0 0.0
        %2786 = vmatmul.mubr.f32.gmra.mrb[0].mxu0 %v2657
        %v2787 = vpop.f32.mrb[0].mxu0
        %v2788 = vadd.f32 0.0, %v2787
        %v2789 = vpop.f32.mrb[0].mxu0
        %2790 = vmatprep.mubr.f32.mxu0 0.0
        %2791 = vmatmul.mubr.f32.gmra.mrb[0].mxu0 %v2660
        %v2792 = vpop.f32.mrb[0].mxu0
        %v2793 = vadd.f32 0.0, %v2792
        %v2794 = vpop.f32.mrb[0].mxu0
        %2795 = vmatprep.mubr.f32.mxu0 0.0
        %2796 = vmatmul.mubr.f32.gmra.mrb[0].mxu0 %v2663
        %v2797 = vpop.f32.mrb[0].mxu0
        %v2798 = vadd.f32 0.0, %v2797
        %v2799 = vpop.f32.mrb[0].mxu0
        %2800 = vmatprep.mubr.f32.mxu0 0.0
        %2801 = vmatmul.mubr.f32.gmra.mrb[0].mxu0 %v2666
        %v2802 = vpop.f32.mrb[0].mxu0
        %v2803 = vadd.f32 0.0, %v2802
        %v2804 = vpop.f32.mrb[0].mxu0
        %2805 = vmatprep.mubr.f32.mxu0 0.0
        %2806 = vmatmul.mubr.f32.gmra.mrb[0].mxu0 %v2669
        %v2807 = vpop.f32.mrb[0].mxu0
        %v2808 = vadd.f32 0.0, %v2807
        %v2809 = vpop.f32.mrb[0].mxu0
        %2810 = vmatprep.mubr.f32.mxu0 0.0
        %2811 = vmatmul.mubr.f32.gmra.mrb[0].mxu0 %v2672
        %v2812 = vpop.f32.mrb[0].mxu0
        %v2813 = vadd.f32 0.0, %v2812
        %v2814 = vpop.f32.mrb[0].mxu0
        %2815 = vmatprep.mubr.f32.mxu0 0.0
        %2816 = vmatmul.mubr.f32.gmra.mrb[0].mxu0 %v2675
        %v2817 = vpop.f32.mrb[0].mxu0
        %v2818 = vadd.f32 0.0, %v2817
        %v2819 = vpop.f32.mrb[0].mxu0
        %2820 = vmatprep.mubr.f32.mxu0 0.0
        %2821 = vmatmul.mubr.f32.gmra.mrb[0].mxu0 %v2678
        %v2822 = vpop.f32.mrb[0].mxu0
        %v2823 = vadd.f32 0.0, %v2822
        %v2824 = vpop.f32.mrb[0].mxu0
        %2825 = vmatprep.mubr.f32.mxu0 0.0
        %2826 = vmatmul.mubr.f32.gmra.mrb[0].mxu0 %v2681
        %v2827 = vpop.f32.mrb[0].mxu0
        %v2828 = vadd.f32 0.0, %v2827
        %v2829 = vpop.f32.mrb[0].mxu0
        %2830 = vdwg.mxu0
        %v2831 = vadd.f32 %v2600, %v2753
        %v2832 = vadd.f32 %v2601, %v2758
        %v2833 = vadd.f32 %v2602, %v2763
        %v2834 = vadd.f32 %v2603, %v2768
        %v2835 = vadd.f32 %v2604, %v2773
        %v2836 = vadd.f32 %v2605, %v2778
        %v2837 = vadd.f32 %v2606, %v2783
        %v2838 = vadd.f32 %v2607, %v2788
        %v2839 = vadd.f32 %v2608, %v2793
        %v2840 = vadd.f32 %v2609, %v2798
        %v2841 = vadd.f32 %v2610, %v2803
        %v2842 = vadd.f32 %v2611, %v2808
        %v2843 = vadd.f32 %v2612, %v2813
        %v2844 = vadd.f32 %v2613, %v2818
        %v2845 = vadd.f32 %v2614, %v2823
        %v2846 = vadd.f32 %v2615, %v2828
        %v2847 = vld [vmem:[%s2616 + $0x1] sm:$0xff]
        %v2848 = vld [vmem:[%s2616 + $0x9] sm:$0xff]
        %v2849 = vld [vmem:[%s2616 + $0x19] sm:$0xff]
        %v2850 = vld [vmem:[%s2616 + $0x21] sm:$0xff]
        %v2851 = vld [vmem:[%s2616 + $0x31] sm:$0xff]
        %v2852 = vld [vmem:[%s2616 + $0x39] sm:$0xff]
        %v2853 = vld [vmem:[%s2616 + $0x49] sm:$0xff]
        %v2854 = vld [vmem:[%s2616 + $0x51] sm:$0xff]
        %v2855 = vld [vmem:[%s2616 + $0x61] sm:$0xff]
        %v2856 = vld [vmem:[%s2616 + $0x69] sm:$0xff]
        %v2857 = vld [vmem:[%s2616 + $0x79] sm:$0xff]
        %v2858 = vld [vmem:[%s2616 + $0x81] sm:$0xff]
        %v2859 = vld [vmem:[%s2616 + $0x91] sm:$0xff]
        %v2860 = vld [vmem:[%s2616 + $0x99] sm:$0xff]
        %v2861 = vld [vmem:[%s2616 + $0xa9] sm:$0xff]
        %v2862 = vld [vmem:[%s2616 + $0xb1] sm:$0xff]
        %s2863 = scalar_lea.vmem [#allocation15], 14
        %v2864 = vld [vmem:[%s2863] sm:$0x3]
        %v2866 = vsel %vm1027, %v2847, 0
        %v2869 = vsel %vm1027, %v2848, 0
        %v2872 = vsel %vm1027, %v2849, 0
        %v2875 = vsel %vm1027, %v2850, 0
        %v2878 = vsel %vm1027, %v2851, 0
        %v2881 = vsel %vm1027, %v2852, 0
        %v2884 = vsel %vm1027, %v2853, 0
        %v2887 = vsel %vm1027, %v2854, 0
        %v2890 = vsel %vm1027, %v2855, 0
        %v2893 = vsel %vm1027, %v2856, 0
        %v2896 = vsel %vm1027, %v2857, 0
        %v2899 = vsel %vm1027, %v2858, 0
        %v2902 = vsel %vm1027, %v2859, 0
        %v2905 = vsel %vm1027, %v2860, 0
        %v2908 = vsel %vm1027, %v2861, 0
        %v2911 = vsel %vm1027, %v2862, 0
        %v2914 = vsel %vm1351, %v2864, 0
        %2916 = vmatprep.subr.mxu0 0.0
        %2917 = vmatpush1.msra.mxu0 %v2914
        %2918 = vmatprep.subr.mxu0 0.0
        %2919 = vmatpush1.msra.mxu0 0.0
        %2920 = vmatprep.subr.mxu0 0.0
        %2921 = vmatpush1.msra.mxu0 0.0
        %2922 = vmatprep.subr.mxu0 0.0
        %2923 = vmatpush1.msra.mxu0 0.0
        %2924 = vmatprep.subr.mxu0 0.0
        %2925 = vmatpush1.msra.mxu0 0.0
        %2926 = vmatprep.subr.mxu0 0.0
        %2927 = vmatpush1.msra.mxu0 0.0
        %2928 = vmatprep.subr.mxu0 0.0
        %2929 = vmatpush1.msra.mxu0 0.0
        %2930 = vmatprep.subr.mxu0 0.0
        %2931 = vmatpush1.msra.mxu0 0.0
        %2932 = vmatprep.subr.mxu0 0.0
        %2933 = vmatpush1.msra.mxu0 0.0
        %2934 = vmatprep.subr.mxu0 0.0
        %2935 = vmatpush1.msra.mxu0 0.0
        %2936 = vmatprep.subr.mxu0 0.0
        %2937 = vmatpush1.msra.mxu0 0.0
        %2938 = vmatprep.subr.mxu0 0.0
        %2939 = vmatpush1.msra.mxu0 0.0
        %2940 = vmatprep.subr.mxu0 0.0
        %2941 = vmatpush1.msra.mxu0 0.0
        %2942 = vmatprep.subr.mxu0 0.0
        %2943 = vmatpush1.msra.mxu0 0.0
        %2944 = vmatprep.subr.mxu0 0.0
        %2945 = vmatpush1.msra.mxu0 0.0
        %2946 = vmatprep.subr.mxu0 0.0
        %2947 = vmatpush1.msra.mxu0 0.0
        %2948 = vmatprep.subr.mxu0 0.0
        %2949 = vmatpush1.msra.mxu0 0.0
        %2950 = vmatprep.subr.mxu0 0.0
        %2951 = vmatpush1.msra.mxu0 0.0
        %2952 = vmatprep.subr.mxu0 0.0
        %2953 = vmatpush1.msra.mxu0 0.0
        %2954 = vmatprep.subr.mxu0 0.0
        %2955 = vmatpush1.msra.mxu0 0.0
        %2956 = vmatprep.subr.mxu0 0.0
        %2957 = vmatpush1.msra.mxu0 0.0
        %2958 = vmatprep.subr.mxu0 0.0
        %2959 = vmatpush1.msra.mxu0 0.0
        %2960 = vmatprep.subr.mxu0 0.0
        %2961 = vmatpush1.msra.mxu0 0.0
        %2962 = vmatprep.subr.mxu0 0.0
        %2963 = vmatpush1.msra.mxu0 0.0
        %2964 = vmatprep.subr.mxu0 0.0
        %2965 = vmatpush1.msra.mxu0 0.0
        %2966 = vmatprep.subr.mxu0 0.0
        %2967 = vmatpush1.msra.mxu0 0.0
        %2968 = vmatprep.subr.mxu0 0.0
        %2969 = vmatpush1.msra.mxu0 0.0
        %2970 = vmatprep.subr.mxu0 0.0
        %2971 = vmatpush1.msra.mxu0 0.0
        %2972 = vmatprep.subr.mxu0 0.0
        %2973 = vmatpush1.msra.mxu0 0.0
        %2974 = vmatprep.subr.mxu0 0.0
        %2975 = vmatpush1.msra.mxu0 0.0
        %2976 = vmatprep.subr.mxu0 0.0
        %2977 = vmatpush1.msra.mxu0 0.0
        %2978 = vmatprep.subr.mxu0 0.0
        %2979 = vmatpush1.msra.mxu0 0.0
        %2980 = vmatprep.mubr.f32.mxu0 0.0
        %2981 = vmatmul.mubr.f32.gmra.mrb[0].mxu0 %v2866
        %v2982 = vpop.f32.mrb[0].mxu0
        %v2983 = vadd.f32 0.0, %v2982
        %v2984 = vpop.f32.mrb[0].mxu0
        %2985 = vmatprep.mubr.f32.mxu0 0.0
        %2986 = vmatmul.mubr.f32.gmra.mrb[0].mxu0 %v2869
        %v2987 = vpop.f32.mrb[0].mxu0
        %v2988 = vadd.f32 0.0, %v2987
        %v2989 = vpop.f32.mrb[0].mxu0
        %2990 = vmatprep.mubr.f32.mxu0 0.0
        %2991 = vmatmul.mubr.f32.gmra.mrb[0].mxu0 %v2872
        %v2992 = vpop.f32.mrb[0].mxu0
        %v2993 = vadd.f32 0.0, %v2992
        %v2994 = vpop.f32.mrb[0].mxu0
        %2995 = vmatprep.mubr.f32.mxu0 0.0
        %2996 = vmatmul.mubr.f32.gmra.mrb[0].mxu0 %v2875
        %v2997 = vpop.f32.mrb[0].mxu0
        %v2998 = vadd.f32 0.0, %v2997
        %v2999 = vpop.f32.mrb[0].mxu0
        %3000 = vmatprep.mubr.f32.mxu0 0.0
        %3001 = vmatmul.mubr.f32.gmra.mrb[0].mxu0 %v2878
        %v3002 = vpop.f32.mrb[0].mxu0
        %v3003 = vadd.f32 0.0, %v3002
        %v3004 = vpop.f32.mrb[0].mxu0
        %3005 = vmatprep.mubr.f32.mxu0 0.0
        %3006 = vmatmul.mubr.f32.gmra.mrb[0].mxu0 %v2881
        %v3007 = vpop.f32.mrb[0].mxu0
        %v3008 = vadd.f32 0.0, %v3007
        %v3009 = vpop.f32.mrb[0].mxu0
        %3010 = vmatprep.mubr.f32.mxu0 0.0
        %3011 = vmatmul.mubr.f32.gmra.mrb[0].mxu0 %v2884
        %v3012 = vpop.f32.mrb[0].mxu0
        %v3013 = vadd.f32 0.0, %v3012
        %v3014 = vpop.f32.mrb[0].mxu0
        %3015 = vmatprep.mubr.f32.mxu0 0.0
        %3016 = vmatmul.mubr.f32.gmra.mrb[0].mxu0 %v2887
        %v3017 = vpop.f32.mrb[0].mxu0
        %v3018 = vadd.f32 0.0, %v3017
        %v3019 = vpop.f32.mrb[0].mxu0
        %3020 = vmatprep.mubr.f32.mxu0 0.0
        %3021 = vmatmul.mubr.f32.gmra.mrb[0].mxu0 %v2890
        %v3022 = vpop.f32.mrb[0].mxu0
        %v3023 = vadd.f32 0.0, %v3022
        %v3024 = vpop.f32.mrb[0].mxu0
        %3025 = vmatprep.mubr.f32.mxu0 0.0
        %3026 = vmatmul.mubr.f32.gmra.mrb[0].mxu0 %v2893
        %v3027 = vpop.f32.mrb[0].mxu0
        %v3028 = vadd.f32 0.0, %v3027
        %v3029 = vpop.f32.mrb[0].mxu0
        %3030 = vmatprep.mubr.f32.mxu0 0.0
        %3031 = vmatmul.mubr.f32.gmra.mrb[0].mxu0 %v2896
        %v3032 = vpop.f32.mrb[0].mxu0
        %v3033 = vadd.f32 0.0, %v3032
        %v3034 = vpop.f32.mrb[0].mxu0
        %3035 = vmatprep.mubr.f32.mxu0 0.0
        %3036 = vmatmul.mubr.f32.gmra.mrb[0].mxu0 %v2899
        %v3037 = vpop.f32.mrb[0].mxu0
        %v3038 = vadd.f32 0.0, %v3037
        %v3039 = vpop.f32.mrb[0].mxu0
        %3040 = vmatprep.mubr.f32.mxu0 0.0
        %3041 = vmatmul.mubr.f32.gmra.mrb[0].mxu0 %v2902
        %v3042 = vpop.f32.mrb[0].mxu0
        %v3043 = vadd.f32 0.0, %v3042
        %v3044 = vpop.f32.mrb[0].mxu0
        %3045 = vmatprep.mubr.f32.mxu0 0.0
        %3046 = vmatmul.mubr.f32.gmra.mrb[0].mxu0 %v2905
        %v3047 = vpop.f32.mrb[0].mxu0
        %v3048 = vadd.f32 0.0, %v3047
        %v3049 = vpop.f32.mrb[0].mxu0
        %3050 = vmatprep.mubr.f32.mxu0 0.0
        %3051 = vmatmul.mubr.f32.gmra.mrb[0].mxu0 %v2908
        %v3052 = vpop.f32.mrb[0].mxu0
        %v3053 = vadd.f32 0.0, %v3052
        %v3054 = vpop.f32.mrb[0].mxu0
        %3055 = vmatprep.mubr.f32.mxu0 0.0
        %3056 = vmatmul.mubr.f32.gmra.mrb[0].mxu0 %v2911
        %v3057 = vpop.f32.mrb[0].mxu0
        %v3058 = vadd.f32 0.0, %v3057
        %v3059 = vpop.f32.mrb[0].mxu0
        %3060 = vdwg.mxu0
        %v3061 = vadd.f32 %v2831, %v2983
        %v3062 = vadd.f32 %v2832, %v2988
        %v3063 = vadd.f32 %v2833, %v2993
        %v3064 = vadd.f32 %v2834, %v2998
        %v3065 = vadd.f32 %v2835, %v3003
        %v3066 = vadd.f32 %v2836, %v3008
        %v3067 = vadd.f32 %v2837, %v3013
        %v3068 = vadd.f32 %v2838, %v3018
        %v3069 = vadd.f32 %v2839, %v3023
        %v3070 = vadd.f32 %v2840, %v3028
        %v3071 = vadd.f32 %v2841, %v3033
        %v3072 = vadd.f32 %v2842, %v3038
        %v3073 = vadd.f32 %v2843, %v3043
        %v3074 = vadd.f32 %v2844, %v3048
        %v3075 = vadd.f32 %v2845, %v3053
        %v3076 = vadd.f32 %v2846, %v3058
        %v3077 = vld [vmem:[%s2616 + $0x2] sm:$0xff]
        %v3078 = vld [vmem:[%s2616 + $0xa] sm:$0xff]
        %v3079 = vld [vmem:[%s2616 + $0x1a] sm:$0xff]
        %v3080 = vld [vmem:[%s2616 + $0x22] sm:$0xff]
        %v3081 = vld [vmem:[%s2616 + $0x32] sm:$0xff]
        %v3082 = vld [vmem:[%s2616 + $0x3a] sm:$0xff]
        %v3083 = vld [vmem:[%s2616 + $0x4a] sm:$0xff]
        %v3084 = vld [vmem:[%s2616 + $0x52] sm:$0xff]
        %v3085 = vld [vmem:[%s2616 + $0x62] sm:$0xff]
        %v3086 = vld [vmem:[%s2616 + $0x6a] sm:$0xff]
        %v3087 = vld [vmem:[%s2616 + $0x7a] sm:$0xff]
        %v3088 = vld [vmem:[%s2616 + $0x82] sm:$0xff]
        %v3089 = vld [vmem:[%s2616 + $0x92] sm:$0xff]
        %v3090 = vld [vmem:[%s2616 + $0x9a] sm:$0xff]
        %v3091 = vld [vmem:[%s2616 + $0xaa] sm:$0xff]
        %v3092 = vld [vmem:[%s2616 + $0xb2] sm:$0xff]
        %s3093 = scalar_lea.vmem [#allocation15], 16
        %v3094 = vld [vmem:[%s3093] sm:$0x3]
        %v3096 = vsel %vm1027, %v3077, 0
        %v3099 = vsel %vm1027, %v3078, 0
        %v3102 = vsel %vm1027, %v3079, 0
        %v3105 = vsel %vm1027, %v3080, 0
        %v3108 = vsel %vm1027, %v3081, 0
        %v3111 = vsel %vm1027, %v3082, 0
        %v3114 = vsel %vm1027, %v3083, 0
        %v3117 = vsel %vm1027, %v3084, 0
        %v3120 = vsel %vm1027, %v3085, 0
        %v3123 = vsel %vm1027, %v3086, 0
        %v3126 = vsel %vm1027, %v3087, 0
        %v3129 = vsel %vm1027, %v3088, 0
        %v3132 = vsel %vm1027, %v3089, 0
        %v3135 = vsel %vm1027, %v3090, 0
        %v3138 = vsel %vm1027, %v3091, 0
        %v3141 = vsel %vm1027, %v3092, 0
        %v3144 = vsel %vm1351, %v3094, 0
        %3146 = vmatprep.subr.mxu0 0.0
        %3147 = vmatpush1.msra.mxu0 %v3144
        %3148 = vmatprep.subr.mxu0 0.0
        %3149 = vmatpush1.msra.mxu0 0.0
        %3150 = vmatprep.subr.mxu0 0.0
        %3151 = vmatpush1.msra.mxu0 0.0
        %3152 = vmatprep.subr.mxu0 0.0
        %3153 = vmatpush1.msra.mxu0 0.0
        %3154 = vmatprep.subr.mxu0 0.0
        %3155 = vmatpush1.msra.mxu0 0.0
        %3156 = vmatprep.subr.mxu0 0.0
        %3157 = vmatpush1.msra.mxu0 0.0
        %3158 = vmatprep.subr.mxu0 0.0
        %3159 = vmatpush1.msra.mxu0 0.0
        %3160 = vmatprep.subr.mxu0 0.0
        %3161 = vmatpush1.msra.mxu0 0.0
        %3162 = vmatprep.subr.mxu0 0.0
        %3163 = vmatpush1.msra.mxu0 0.0
        %3164 = vmatprep.subr.mxu0 0.0
        %3165 = vmatpush1.msra.mxu0 0.0
        %3166 = vmatprep.subr.mxu0 0.0
        %3167 = vmatpush1.msra.mxu0 0.0
        %3168 = vmatprep.subr.mxu0 0.0
        %3169 = vmatpush1.msra.mxu0 0.0
        %3170 = vmatprep.subr.mxu0 0.0
        %3171 = vmatpush1.msra.mxu0 0.0
        %3172 = vmatprep.subr.mxu0 0.0
        %3173 = vmatpush1.msra.mxu0 0.0
        %3174 = vmatprep.subr.mxu0 0.0
        %3175 = vmatpush1.msra.mxu0 0.0
        %3176 = vmatprep.subr.mxu0 0.0
        %3177 = vmatpush1.msra.mxu0 0.0
        %3178 = vmatprep.subr.mxu0 0.0
        %3179 = vmatpush1.msra.mxu0 0.0
        %3180 = vmatprep.subr.mxu0 0.0
        %3181 = vmatpush1.msra.mxu0 0.0
        %3182 = vmatprep.subr.mxu0 0.0
        %3183 = vmatpush1.msra.mxu0 0.0
        %3184 = vmatprep.subr.mxu0 0.0
        %3185 = vmatpush1.msra.mxu0 0.0
        %3186 = vmatprep.subr.mxu0 0.0
        %3187 = vmatpush1.msra.mxu0 0.0
        %3188 = vmatprep.subr.mxu0 0.0
        %3189 = vmatpush1.msra.mxu0 0.0
        %3190 = vmatprep.subr.mxu0 0.0
        %3191 = vmatpush1.msra.mxu0 0.0
        %3192 = vmatprep.subr.mxu0 0.0
        %3193 = vmatpush1.msra.mxu0 0.0
        %3194 = vmatprep.subr.mxu0 0.0
        %3195 = vmatpush1.msra.mxu0 0.0
        %3196 = vmatprep.subr.mxu0 0.0
        %3197 = vmatpush1.msra.mxu0 0.0
        %3198 = vmatprep.subr.mxu0 0.0
        %3199 = vmatpush1.msra.mxu0 0.0
        %3200 = vmatprep.subr.mxu0 0.0
        %3201 = vmatpush1.msra.mxu0 0.0
        %3202 = vmatprep.subr.mxu0 0.0
        %3203 = vmatpush1.msra.mxu0 0.0
        %3204 = vmatprep.subr.mxu0 0.0
        %3205 = vmatpush1.msra.mxu0 0.0
        %3206 = vmatprep.subr.mxu0 0.0
        %3207 = vmatpush1.msra.mxu0 0.0
        %3208 = vmatprep.subr.mxu0 0.0
        %3209 = vmatpush1.msra.mxu0 0.0
        %3210 = vmatprep.mubr.f32.mxu0 0.0
        %3211 = vmatmul.mubr.f32.gmra.mrb[0].mxu0 %v3096
        %v3212 = vpop.f32.mrb[0].mxu0
        %v3213 = vadd.f32 0.0, %v3212
        %v3214 = vpop.f32.mrb[0].mxu0
        %3215 = vmatprep.mubr.f32.mxu0 0.0
        %3216 = vmatmul.mubr.f32.gmra.mrb[0].mxu0 %v3099
        %v3217 = vpop.f32.mrb[0].mxu0
        %v3218 = vadd.f32 0.0, %v3217
        %v3219 = vpop.f32.mrb[0].mxu0
        %3220 = vmatprep.mubr.f32.mxu0 0.0
        %3221 = vmatmul.mubr.f32.gmra.mrb[0].mxu0 %v3102
        %v3222 = vpop.f32.mrb[0].mxu0
        %v3223 = vadd.f32 0.0, %v3222
        %v3224 = vpop.f32.mrb[0].mxu0
        %3225 = vmatprep.mubr.f32.mxu0 0.0
        %3226 = vmatmul.mubr.f32.gmra.mrb[0].mxu0 %v3105
        %v3227 = vpop.f32.mrb[0].mxu0
        %v3228 = vadd.f32 0.0, %v3227
        %v3229 = vpop.f32.mrb[0].mxu0
        %3230 = vmatprep.mubr.f32.mxu0 0.0
        %3231 = vmatmul.mubr.f32.gmra.mrb[0].mxu0 %v3108
        %v3232 = vpop.f32.mrb[0].mxu0
        %v3233 = vadd.f32 0.0, %v3232
        %v3234 = vpop.f32.mrb[0].mxu0
        %3235 = vmatprep.mubr.f32.mxu0 0.0
        %3236 = vmatmul.mubr.f32.gmra.mrb[0].mxu0 %v3111
        %v3237 = vpop.f32.mrb[0].mxu0
        %v3238 = vadd.f32 0.0, %v3237
        %v3239 = vpop.f32.mrb[0].mxu0
        %3240 = vmatprep.mubr.f32.mxu0 0.0
        %3241 = vmatmul.mubr.f32.gmra.mrb[0].mxu0 %v3114
        %v3242 = vpop.f32.mrb[0].mxu0
        %v3243 = vadd.f32 0.0, %v3242
        %v3244 = vpop.f32.mrb[0].mxu0
        %3245 = vmatprep.mubr.f32.mxu0 0.0
        %3246 = vmatmul.mubr.f32.gmra.mrb[0].mxu0 %v3117
        %v3247 = vpop.f32.mrb[0].mxu0
        %v3248 = vadd.f32 0.0, %v3247
        %v3249 = vpop.f32.mrb[0].mxu0
        %3250 = vmatprep.mubr.f32.mxu0 0.0
        %3251 = vmatmul.mubr.f32.gmra.mrb[0].mxu0 %v3120
        %v3252 = vpop.f32.mrb[0].mxu0
        %v3253 = vadd.f32 0.0, %v3252
        %v3254 = vpop.f32.mrb[0].mxu0
        %3255 = vmatprep.mubr.f32.mxu0 0.0
        %3256 = vmatmul.mubr.f32.gmra.mrb[0].mxu0 %v3123
        %v3257 = vpop.f32.mrb[0].mxu0
        %v3258 = vadd.f32 0.0, %v3257
        %v3259 = vpop.f32.mrb[0].mxu0
        %3260 = vmatprep.mubr.f32.mxu0 0.0
        %3261 = vmatmul.mubr.f32.gmra.mrb[0].mxu0 %v3126
        %v3262 = vpop.f32.mrb[0].mxu0
        %v3263 = vadd.f32 0.0, %v3262
        %v3264 = vpop.f32.mrb[0].mxu0
        %3265 = vmatprep.mubr.f32.mxu0 0.0
        %3266 = vmatmul.mubr.f32.gmra.mrb[0].mxu0 %v3129
        %v3267 = vpop.f32.mrb[0].mxu0
        %v3268 = vadd.f32 0.0, %v3267
        %v3269 = vpop.f32.mrb[0].mxu0
        %3270 = vmatprep.mubr.f32.mxu0 0.0
        %3271 = vmatmul.mubr.f32.gmra.mrb[0].mxu0 %v3132
        %v3272 = vpop.f32.mrb[0].mxu0
        %v3273 = vadd.f32 0.0, %v3272
        %v3274 = vpop.f32.mrb[0].mxu0
        %3275 = vmatprep.mubr.f32.mxu0 0.0
        %3276 = vmatmul.mubr.f32.gmra.mrb[0].mxu0 %v3135
        %v3277 = vpop.f32.mrb[0].mxu0
        %v3278 = vadd.f32 0.0, %v3277
        %v3279 = vpop.f32.mrb[0].mxu0
        %3280 = vmatprep.mubr.f32.mxu0 0.0
        %3281 = vmatmul.mubr.f32.gmra.mrb[0].mxu0 %v3138
        %v3282 = vpop.f32.mrb[0].mxu0
        %v3283 = vadd.f32 0.0, %v3282
        %v3284 = vpop.f32.mrb[0].mxu0
        %3285 = vmatprep.mubr.f32.mxu0 0.0
        %3286 = vmatmul.mubr.f32.gmra.mrb[0].mxu0 %v3141
        %v3287 = vpop.f32.mrb[0].mxu0
        %v3288 = vadd.f32 0.0, %v3287
        %v3289 = vpop.f32.mrb[0].mxu0
        %3290 = vdwg.mxu0
        %v3291 = vadd.f32 %v3061, %v3213
        %v3292 = vadd.f32 %v3062, %v3218
        %v3293 = vadd.f32 %v3063, %v3223
        %v3294 = vadd.f32 %v3064, %v3228
        %v3295 = vadd.f32 %v3065, %v3233
        %v3296 = vadd.f32 %v3066, %v3238
        %v3297 = vadd.f32 %v3067, %v3243
        %v3298 = vadd.f32 %v3068, %v3248
        %v3299 = vadd.f32 %v3069, %v3253
        %v3300 = vadd.f32 %v3070, %v3258
        %v3301 = vadd.f32 %v3071, %v3263
        %v3302 = vadd.f32 %v3072, %v3268
        %v3303 = vadd.f32 %v3073, %v3273
        %v3304 = vadd.f32 %v3074, %v3278
        %v3305 = vadd.f32 %v3075, %v3283
        %v3306 = vadd.f32 %v3076, %v3288
        %v3307 = vld [vmem:[#allocation17] sm:$0x1]
        %v3309 = vlaneseq
        %v3310 = vshrl.u32 %v3309, 7
        %v3311 = vsub.s32 0, %v3310
        %v3312 = vrot.slane %v3307, %v3311
        %v3314 = vadd.f32 %v3291, %v3312
        %v3315 = vadd.f32 %v3292, %v3312
        %v3316 = vadd.f32 %v3293, %v3312
        %v3317 = vadd.f32 %v3294, %v3312
        %v3318 = vadd.f32 %v3295, %v3312
        %v3319 = vadd.f32 %v3296, %v3312
        %v3320 = vadd.f32 %v3297, %v3312
        %v3321 = vadd.f32 %v3298, %v3312
        %v3322 = vadd.f32 %v3299, %v3312
        %v3323 = vadd.f32 %v3300, %v3312
        %v3324 = vadd.f32 %v3301, %v3312
        %v3325 = vadd.f32 %v3302, %v3312
        %v3326 = vadd.f32 %v3303, %v3312
        %v3327 = vadd.f32 %v3304, %v3312
        %v3328 = vadd.f32 %v3305, %v3312
        %v3329 = vadd.f32 %v3306, %v3312
        %vm3330 = vcmp.ge.f32.partialorder %v3314, 0.0
        %vm3331 = vcmp.ge.f32.partialorder %v3315, 0.0
        %vm3332 = vcmp.ge.f32.partialorder %v3316, 0.0
        %vm3333 = vcmp.ge.f32.partialorder %v3317, 0.0
        %vm3334 = vcmp.ge.f32.partialorder %v3318, 0.0
        %vm3335 = vcmp.ge.f32.partialorder %v3319, 0.0
        %vm3336 = vcmp.ge.f32.partialorder %v3320, 0.0
        %vm3337 = vcmp.ge.f32.partialorder %v3321, 0.0
        %vm3338 = vcmp.ge.f32.partialorder %v3322, 0.0
        %vm3339 = vcmp.ge.f32.partialorder %v3323, 0.0
        %vm3340 = vcmp.ge.f32.partialorder %v3324, 0.0
        %vm3341 = vcmp.ge.f32.partialorder %v3325, 0.0
        %vm3342 = vcmp.ge.f32.partialorder %v3326, 0.0
        %vm3343 = vcmp.ge.f32.partialorder %v3327, 0.0
        %vm3344 = vcmp.ge.f32.partialorder %v3328, 0.0
        %vm3345 = vcmp.ge.f32.partialorder %v3329, 0.0
        %v3346 = vmul.f32 %v3314, 0.01
        %v3347 = vmul.f32 %v3315, 0.01
        %v3348 = vmul.f32 %v3316, 0.01
        %v3349 = vmul.f32 %v3317, 0.01
        %v3350 = vmul.f32 %v3318, 0.01
        %v3351 = vmul.f32 %v3319, 0.01
        %v3352 = vmul.f32 %v3320, 0.01
        %v3353 = vmul.f32 %v3321, 0.01
        %v3354 = vmul.f32 %v3322, 0.01
        %v3355 = vmul.f32 %v3323, 0.01
        %v3356 = vmul.f32 %v3324, 0.01
        %v3357 = vmul.f32 %v3325, 0.01
        %v3358 = vmul.f32 %v3326, 0.01
        %v3359 = vmul.f32 %v3327, 0.01
        %v3360 = vmul.f32 %v3328, 0.01
        %v3361 = vmul.f32 %v3329, 0.01
        %v3362 = vsel %vm3330, %v3314, %v3346
        %v3363 = vsel %vm3331, %v3315, %v3347
        %v3364 = vsel %vm3332, %v3316, %v3348
        %v3365 = vsel %vm3333, %v3317, %v3349
        %v3366 = vsel %vm3334, %v3318, %v3350
        %v3367 = vsel %vm3335, %v3319, %v3351
        %v3368 = vsel %vm3336, %v3320, %v3352
        %v3369 = vsel %vm3337, %v3321, %v3353
        %v3370 = vsel %vm3338, %v3322, %v3354
        %v3371 = vsel %vm3339, %v3323, %v3355
        %v3372 = vsel %vm3340, %v3324, %v3356
        %v3373 = vsel %vm3341, %v3325, %v3357
        %v3374 = vsel %vm3342, %v3326, %v3358
        %v3375 = vsel %vm3343, %v3327, %v3359
        %v3376 = vsel %vm3344, %v3328, %v3360
        %v3377 = vsel %vm3345, %v3329, %v3361
        %v3378 = vld [vmem:[#allocation18] sm:$0x3]
        %v3379 = vld [vmem:[#allocation20] sm:$0x1]
        %v3381 = vlaneseq
        %v3382 = vshrl.u32 %v3381, 7
        %v3383 = vsub.s32 0, %v3382
        %v3384 = vrot.slane %v3379, %v3383
        %v3387 = vsel %vm1027, %v3362, 0
        %v3390 = vsel %vm1027, %v3363, 0
        %v3393 = vsel %vm1027, %v3364, 0
        %v3396 = vsel %vm1027, %v3365, 0
        %v3399 = vsel %vm1027, %v3366, 0
        %v3402 = vsel %vm1027, %v3367, 0
        %v3405 = vsel %vm1027, %v3368, 0
        %v3408 = vsel %vm1027, %v3369, 0
        %v3411 = vsel %vm1027, %v3370, 0
        %v3414 = vsel %vm1027, %v3371, 0
        %v3417 = vsel %vm1027, %v3372, 0
        %v3420 = vsel %vm1027, %v3373, 0
        %v3423 = vsel %vm1027, %v3374, 0
        %v3426 = vsel %vm1027, %v3375, 0
        %v3429 = vsel %vm1027, %v3376, 0
        %v3432 = vsel %vm1027, %v3377, 0
        %v3435 = vsel %vm1351, %v3378, 0
        %3437 = vmatprep.subr.mxu0 0.0
        %3438 = vmatpush1.msra.mxu0 %v3435
        %3439 = vmatprep.subr.mxu0 0.0
        %3440 = vmatpush1.msra.mxu0 0.0
        %3441 = vmatprep.subr.mxu0 0.0
        %3442 = vmatpush1.msra.mxu0 0.0
        %3443 = vmatprep.subr.mxu0 0.0
        %3444 = vmatpush1.msra.mxu0 0.0
        %3445 = vmatprep.subr.mxu0 0.0
        %3446 = vmatpush1.msra.mxu0 0.0
        %3447 = vmatprep.subr.mxu0 0.0
        %3448 = vmatpush1.msra.mxu0 0.0
        %3449 = vmatprep.subr.mxu0 0.0
        %3450 = vmatpush1.msra.mxu0 0.0
        %3451 = vmatprep.subr.mxu0 0.0
        %3452 = vmatpush1.msra.mxu0 0.0
        %3453 = vmatprep.subr.mxu0 0.0
        %3454 = vmatpush1.msra.mxu0 0.0
        %3455 = vmatprep.subr.mxu0 0.0
        %3456 = vmatpush1.msra.mxu0 0.0
        %3457 = vmatprep.subr.mxu0 0.0
        %3458 = vmatpush1.msra.mxu0 0.0
        %3459 = vmatprep.subr.mxu0 0.0
        %3460 = vmatpush1.msra.mxu0 0.0
        %3461 = vmatprep.subr.mxu0 0.0
        %3462 = vmatpush1.msra.mxu0 0.0
        %3463 = vmatprep.subr.mxu0 0.0
        %3464 = vmatpush1.msra.mxu0 0.0
        %3465 = vmatprep.subr.mxu0 0.0
        %3466 = vmatpush1.msra.mxu0 0.0
        %3467 = vmatprep.subr.mxu0 0.0
        %3468 = vmatpush1.msra.mxu0 0.0
        %3469 = vmatprep.subr.mxu0 0.0
        %3470 = vmatpush1.msra.mxu0 0.0
        %3471 = vmatprep.subr.mxu0 0.0
        %3472 = vmatpush1.msra.mxu0 0.0
        %3473 = vmatprep.subr.mxu0 0.0
        %3474 = vmatpush1.msra.mxu0 0.0
        %3475 = vmatprep.subr.mxu0 0.0
        %3476 = vmatpush1.msra.mxu0 0.0
        %3477 = vmatprep.subr.mxu0 0.0
        %3478 = vmatpush1.msra.mxu0 0.0
        %3479 = vmatprep.subr.mxu0 0.0
        %3480 = vmatpush1.msra.mxu0 0.0
        %3481 = vmatprep.subr.mxu0 0.0
        %3482 = vmatpush1.msra.mxu0 0.0
        %3483 = vmatprep.subr.mxu0 0.0
        %3484 = vmatpush1.msra.mxu0 0.0
        %3485 = vmatprep.subr.mxu0 0.0
        %3486 = vmatpush1.msra.mxu0 0.0
        %3487 = vmatprep.subr.mxu0 0.0
        %3488 = vmatpush1.msra.mxu0 0.0
        %3489 = vmatprep.subr.mxu0 0.0
        %3490 = vmatpush1.msra.mxu0 0.0
        %3491 = vmatprep.subr.mxu0 0.0
        %3492 = vmatpush1.msra.mxu0 0.0
        %3493 = vmatprep.subr.mxu0 0.0
        %3494 = vmatpush1.msra.mxu0 0.0
        %3495 = vmatprep.subr.mxu0 0.0
        %3496 = vmatpush1.msra.mxu0 0.0
        %3497 = vmatprep.subr.mxu0 0.0
        %3498 = vmatpush1.msra.mxu0 0.0
        %3499 = vmatprep.subr.mxu0 0.0
        %3500 = vmatpush1.msra.mxu0 0.0
        %3501 = vmatprep.mubr.f32.mxu0 0.0
        %3502 = vmatmul.mubr.f32.gmra.mrb[0].mxu0 %v3387
        %v3503 = vpop.f32.mrb[0].mxu0
        %v3504 = vadd.f32 %v3384, %v3503
        %v3505 = vpop.f32.mrb[0].mxu0
        %3506 = vmatprep.mubr.f32.mxu0 0.0
        %3507 = vmatmul.mubr.f32.gmra.mrb[0].mxu0 %v3390
        %v3508 = vpop.f32.mrb[0].mxu0
        %v3509 = vadd.f32 %v3384, %v3508
        %v3510 = vpop.f32.mrb[0].mxu0
        %3511 = vmatprep.mubr.f32.mxu0 0.0
        %3512 = vmatmul.mubr.f32.gmra.mrb[0].mxu0 %v3393
        %v3513 = vpop.f32.mrb[0].mxu0
        %v3514 = vadd.f32 %v3384, %v3513
        %v3515 = vpop.f32.mrb[0].mxu0
        %3516 = vmatprep.mubr.f32.mxu0 0.0
        %3517 = vmatmul.mubr.f32.gmra.mrb[0].mxu0 %v3396
        %v3518 = vpop.f32.mrb[0].mxu0
        %v3519 = vadd.f32 %v3384, %v3518
        %v3520 = vpop.f32.mrb[0].mxu0
        %3521 = vmatprep.mubr.f32.mxu0 0.0
        %3522 = vmatmul.mubr.f32.gmra.mrb[0].mxu0 %v3399
        %v3523 = vpop.f32.mrb[0].mxu0
        %v3524 = vadd.f32 %v3384, %v3523
        %v3525 = vpop.f32.mrb[0].mxu0
        %3526 = vmatprep.mubr.f32.mxu0 0.0
        %3527 = vmatmul.mubr.f32.gmra.mrb[0].mxu0 %v3402
        %v3528 = vpop.f32.mrb[0].mxu0
        %v3529 = vadd.f32 %v3384, %v3528
        %v3530 = vpop.f32.mrb[0].mxu0
        %3531 = vmatprep.mubr.f32.mxu0 0.0
        %3532 = vmatmul.mubr.f32.gmra.mrb[0].mxu0 %v3405
        %v3533 = vpop.f32.mrb[0].mxu0
        %v3534 = vadd.f32 %v3384, %v3533
        %v3535 = vpop.f32.mrb[0].mxu0
        %3536 = vmatprep.mubr.f32.mxu0 0.0
        %3537 = vmatmul.mubr.f32.gmra.mrb[0].mxu0 %v3408
        %v3538 = vpop.f32.mrb[0].mxu0
        %v3539 = vadd.f32 %v3384, %v3538
        %v3540 = vpop.f32.mrb[0].mxu0
        %3541 = vmatprep.mubr.f32.mxu0 0.0
        %3542 = vmatmul.mubr.f32.gmra.mrb[0].mxu0 %v3411
        %v3543 = vpop.f32.mrb[0].mxu0
        %v3544 = vadd.f32 %v3384, %v3543
        %v3545 = vpop.f32.mrb[0].mxu0
        %3546 = vmatprep.mubr.f32.mxu0 0.0
        %3547 = vmatmul.mubr.f32.gmra.mrb[0].mxu0 %v3414
        %v3548 = vpop.f32.mrb[0].mxu0
        %v3549 = vadd.f32 %v3384, %v3548
        %v3550 = vpop.f32.mrb[0].mxu0
        %3551 = vmatprep.mubr.f32.mxu0 0.0
        %3552 = vmatmul.mubr.f32.gmra.mrb[0].mxu0 %v3417
        %v3553 = vpop.f32.mrb[0].mxu0
        %v3554 = vadd.f32 %v3384, %v3553
        %v3555 = vpop.f32.mrb[0].mxu0
        %3556 = vmatprep.mubr.f32.mxu0 0.0
        %3557 = vmatmul.mubr.f32.gmra.mrb[0].mxu0 %v3420
        %v3558 = vpop.f32.mrb[0].mxu0
        %v3559 = vadd.f32 %v3384, %v3558
        %v3560 = vpop.f32.mrb[0].mxu0
        %3561 = vmatprep.mubr.f32.mxu0 0.0
        %3562 = vmatmul.mubr.f32.gmra.mrb[0].mxu0 %v3423
        %v3563 = vpop.f32.mrb[0].mxu0
        %v3564 = vadd.f32 %v3384, %v3563
        %v3565 = vpop.f32.mrb[0].mxu0
        %3566 = vmatprep.mubr.f32.mxu0 0.0
        %3567 = vmatmul.mubr.f32.gmra.mrb[0].mxu0 %v3426
        %v3568 = vpop.f32.mrb[0].mxu0
        %v3569 = vadd.f32 %v3384, %v3568
        %v3570 = vpop.f32.mrb[0].mxu0
        %3571 = vmatprep.mubr.f32.mxu0 0.0
        %3572 = vmatmul.mubr.f32.gmra.mrb[0].mxu0 %v3429
        %v3573 = vpop.f32.mrb[0].mxu0
        %v3574 = vadd.f32 %v3384, %v3573
        %v3575 = vpop.f32.mrb[0].mxu0
        %3576 = vmatprep.mubr.f32.mxu0 0.0
        %3577 = vmatmul.mubr.f32.gmra.mrb[0].mxu0 %v3432
        %v3578 = vpop.f32.mrb[0].mxu0
        %v3579 = vadd.f32 %v3384, %v3578
        %v3580 = vpop.f32.mrb[0].mxu0
        %3581 = vdwg.mxu0
        %v3582 = vadd.f32 %v758, %v3504
        %v3583 = vadd.f32 %v759, %v3509
        %v3584 = vadd.f32 %v760, %v3514
        %v3585 = vadd.f32 %v761, %v3519
        %v3586 = vadd.f32 %v762, %v3524
        %v3587 = vadd.f32 %v763, %v3529
        %v3588 = vadd.f32 %v764, %v3534
        %v3589 = vadd.f32 %v765, %v3539
        %v3590 = vadd.f32 %v766, %v3544
        %v3591 = vadd.f32 %v767, %v3549
        %v3592 = vadd.f32 %v768, %v3554
        %v3593 = vadd.f32 %v769, %v3559
        %v3594 = vadd.f32 %v770, %v3564
        %v3595 = vadd.f32 %v771, %v3569
        %v3596 = vadd.f32 %v772, %v3574
        %v3597 = vadd.f32 %v773, %v3579
        %vm3598 = vcmp.ge.f32.partialorder %v3582, 0.0
        %vm3599 = vcmp.ge.f32.partialorder %v3583, 0.0
        %vm3600 = vcmp.ge.f32.partialorder %v3584, 0.0
        %vm3601 = vcmp.ge.f32.partialorder %v3585, 0.0
        %vm3602 = vcmp.ge.f32.partialorder %v3586, 0.0
        %vm3603 = vcmp.ge.f32.partialorder %v3587, 0.0
        %vm3604 = vcmp.ge.f32.partialorder %v3588, 0.0
        %vm3605 = vcmp.ge.f32.partialorder %v3589, 0.0
        %vm3606 = vcmp.ge.f32.partialorder %v3590, 0.0
        %vm3607 = vcmp.ge.f32.partialorder %v3591, 0.0
        %vm3608 = vcmp.ge.f32.partialorder %v3592, 0.0
        %vm3609 = vcmp.ge.f32.partialorder %v3593, 0.0
        %vm3610 = vcmp.ge.f32.partialorder %v3594, 0.0
        %vm3611 = vcmp.ge.f32.partialorder %v3595, 0.0
        %vm3612 = vcmp.ge.f32.partialorder %v3596, 0.0
        %vm3613 = vcmp.ge.f32.partialorder %v3597, 0.0
        %v3614 = vmul.f32 %v3582, 0.01
        %v3615 = vmul.f32 %v3583, 0.01
        %v3616 = vmul.f32 %v3584, 0.01
        %v3617 = vmul.f32 %v3585, 0.01
        %v3618 = vmul.f32 %v3586, 0.01
        %v3619 = vmul.f32 %v3587, 0.01
        %v3620 = vmul.f32 %v3588, 0.01
        %v3621 = vmul.f32 %v3589, 0.01
        %v3622 = vmul.f32 %v3590, 0.01
        %v3623 = vmul.f32 %v3591, 0.01
        %v3624 = vmul.f32 %v3592, 0.01
        %v3625 = vmul.f32 %v3593, 0.01
        %v3626 = vmul.f32 %v3594, 0.01
        %v3627 = vmul.f32 %v3595, 0.01
        %v3628 = vmul.f32 %v3596, 0.01
        %v3629 = vmul.f32 %v3597, 0.01
        %v3630 = vsel %vm3598, %v3582, %v3614
        %v3631 = vsel %vm3599, %v3583, %v3615
        %v3632 = vsel %vm3600, %v3584, %v3616
        %v3633 = vsel %vm3601, %v3585, %v3617
        %v3634 = vsel %vm3602, %v3586, %v3618
        %v3635 = vsel %vm3603, %v3587, %v3619
        %v3636 = vsel %vm3604, %v3588, %v3620
        %v3637 = vsel %vm3605, %v3589, %v3621
        %v3638 = vsel %vm3606, %v3590, %v3622
        %v3639 = vsel %vm3607, %v3591, %v3623
        %v3640 = vsel %vm3608, %v3592, %v3624
        %v3641 = vsel %vm3609, %v3593, %v3625
        %v3642 = vsel %vm3610, %v3594, %v3626
        %v3643 = vsel %vm3611, %v3595, %v3627
        %v3644 = vsel %vm3612, %v3596, %v3628
        %v3645 = vsel %vm3613, %v3597, %v3629
        %v3646 = vld [vmem:[#allocation21] sm:$0xf]
        %v3647 = vld [vmem:[#allocation23] sm:$0x1]
        %v3649 = vlaneseq
        %v3650 = vshrl.u32 %v3649, 7
        %v3651 = vsub.s32 0, %v3650
        %v3652 = vrot.slane %v3647, %v3651
        %v3655 = vsel %vm780, %v3630, 0
        %v3658 = vsel %vm780, %v3631, 0
        %v3661 = vsel %vm780, %v3632, 0
        %v3664 = vsel %vm780, %v3633, 0
        %v3667 = vsel %vm780, %v3634, 0
        %v3670 = vsel %vm780, %v3635, 0
        %v3673 = vsel %vm780, %v3636, 0
        %v3676 = vsel %vm780, %v3637, 0
        %v3679 = vsel %vm780, %v3638, 0
        %v3682 = vsel %vm780, %v3639, 0
        %v3685 = vsel %vm780, %v3640, 0
        %v3688 = vsel %vm780, %v3641, 0
        %v3691 = vsel %vm780, %v3642, 0
        %v3694 = vsel %vm780, %v3643, 0
        %v3697 = vsel %vm780, %v3644, 0
        %v3700 = vsel %vm780, %v3645, 0
        %v3703 = vsel %vm829, %v3646, 0
        %3705 = vmatprep.subr.mxu0 0.0
        %3706 = vmatpush1.msra.mxu0 %v3703
        %3707 = vmatprep.subr.mxu0 0.0
        %3708 = vmatpush1.msra.mxu0 0.0
        %3709 = vmatprep.subr.mxu0 0.0
        %3710 = vmatpush1.msra.mxu0 0.0
        %3711 = vmatprep.subr.mxu0 0.0
        %3712 = vmatpush1.msra.mxu0 0.0
        %3713 = vmatprep.subr.mxu0 0.0
        %3714 = vmatpush1.msra.mxu0 0.0
        %3715 = vmatprep.subr.mxu0 0.0
        %3716 = vmatpush1.msra.mxu0 0.0
        %3717 = vmatprep.subr.mxu0 0.0
        %3718 = vmatpush1.msra.mxu0 0.0
        %3719 = vmatprep.subr.mxu0 0.0
        %3720 = vmatpush1.msra.mxu0 0.0
        %3721 = vmatprep.subr.mxu0 0.0
        %3722 = vmatpush1.msra.mxu0 0.0
        %3723 = vmatprep.subr.mxu0 0.0
        %3724 = vmatpush1.msra.mxu0 0.0
        %3725 = vmatprep.subr.mxu0 0.0
        %3726 = vmatpush1.msra.mxu0 0.0
        %3727 = vmatprep.subr.mxu0 0.0
        %3728 = vmatpush1.msra.mxu0 0.0
        %3729 = vmatprep.subr.mxu0 0.0
        %3730 = vmatpush1.msra.mxu0 0.0
        %3731 = vmatprep.subr.mxu0 0.0
        %3732 = vmatpush1.msra.mxu0 0.0
        %3733 = vmatprep.subr.mxu0 0.0
        %3734 = vmatpush1.msra.mxu0 0.0
        %3735 = vmatprep.subr.mxu0 0.0
        %3736 = vmatpush1.msra.mxu0 0.0
        %3737 = vmatprep.subr.mxu0 0.0
        %3738 = vmatpush1.msra.mxu0 0.0
        %3739 = vmatprep.subr.mxu0 0.0
        %3740 = vmatpush1.msra.mxu0 0.0
        %3741 = vmatprep.subr.mxu0 0.0
        %3742 = vmatpush1.msra.mxu0 0.0
        %3743 = vmatprep.subr.mxu0 0.0
        %3744 = vmatpush1.msra.mxu0 0.0
        %3745 = vmatprep.subr.mxu0 0.0
        %3746 = vmatpush1.msra.mxu0 0.0
        %3747 = vmatprep.subr.mxu0 0.0
        %3748 = vmatpush1.msra.mxu0 0.0
        %3749 = vmatprep.subr.mxu0 0.0
        %3750 = vmatpush1.msra.mxu0 0.0
        %3751 = vmatprep.subr.mxu0 0.0
        %3752 = vmatpush1.msra.mxu0 0.0
        %3753 = vmatprep.subr.mxu0 0.0
        %3754 = vmatpush1.msra.mxu0 0.0
        %3755 = vmatprep.subr.mxu0 0.0
        %3756 = vmatpush1.msra.mxu0 0.0
        %3757 = vmatprep.subr.mxu0 0.0
        %3758 = vmatpush1.msra.mxu0 0.0
        %3759 = vmatprep.subr.mxu0 0.0
        %3760 = vmatpush1.msra.mxu0 0.0
        %3761 = vmatprep.subr.mxu0 0.0
        %3762 = vmatpush1.msra.mxu0 0.0
        %3763 = vmatprep.subr.mxu0 0.0
        %3764 = vmatpush1.msra.mxu0 0.0
        %3765 = vmatprep.subr.mxu0 0.0
        %3766 = vmatpush1.msra.mxu0 0.0
        %3767 = vmatprep.subr.mxu0 0.0
        %3768 = vmatpush1.msra.mxu0 0.0
        %3769 = vmatprep.mubr.f32.mxu0 0.0
        %3770 = vmatmul.mubr.f32.gmra.mrb[0].mxu0 %v3655
        %v3771 = vpop.f32.mrb[0].mxu0
        %v3772 = vadd.f32 %v3652, %v3771
        %v3773 = vpop.f32.mrb[0].mxu0
        %3774 = vmatprep.mubr.f32.mxu0 0.0
        %3775 = vmatmul.mubr.f32.gmra.mrb[0].mxu0 %v3658
        %v3776 = vpop.f32.mrb[0].mxu0
        %v3777 = vadd.f32 %v3652, %v3776
        %v3778 = vpop.f32.mrb[0].mxu0
        %3779 = vmatprep.mubr.f32.mxu0 0.0
        %3780 = vmatmul.mubr.f32.gmra.mrb[0].mxu0 %v3661
        %v3781 = vpop.f32.mrb[0].mxu0
        %v3782 = vadd.f32 %v3652, %v3781
        %v3783 = vpop.f32.mrb[0].mxu0
        %3784 = vmatprep.mubr.f32.mxu0 0.0
        %3785 = vmatmul.mubr.f32.gmra.mrb[0].mxu0 %v3664
        %v3786 = vpop.f32.mrb[0].mxu0
        %v3787 = vadd.f32 %v3652, %v3786
        %v3788 = vpop.f32.mrb[0].mxu0
        %3789 = vmatprep.mubr.f32.mxu0 0.0
        %3790 = vmatmul.mubr.f32.gmra.mrb[0].mxu0 %v3667
        %v3791 = vpop.f32.mrb[0].mxu0
        %v3792 = vadd.f32 %v3652, %v3791
        %v3793 = vpop.f32.mrb[0].mxu0
        %3794 = vmatprep.mubr.f32.mxu0 0.0
        %3795 = vmatmul.mubr.f32.gmra.mrb[0].mxu0 %v3670
        %v3796 = vpop.f32.mrb[0].mxu0
        %v3797 = vadd.f32 %v3652, %v3796
        %v3798 = vpop.f32.mrb[0].mxu0
        %3799 = vmatprep.mubr.f32.mxu0 0.0
        %3800 = vmatmul.mubr.f32.gmra.mrb[0].mxu0 %v3673
        %v3801 = vpop.f32.mrb[0].mxu0
        %v3802 = vadd.f32 %v3652, %v3801
        %v3803 = vpop.f32.mrb[0].mxu0
        %3804 = vmatprep.mubr.f32.mxu0 0.0
        %3805 = vmatmul.mubr.f32.gmra.mrb[0].mxu0 %v3676
        %v3806 = vpop.f32.mrb[0].mxu0
        %v3807 = vadd.f32 %v3652, %v3806
        %v3808 = vpop.f32.mrb[0].mxu0
        %3809 = vmatprep.mubr.f32.mxu0 0.0
        %3810 = vmatmul.mubr.f32.gmra.mrb[0].mxu0 %v3679
        %v3811 = vpop.f32.mrb[0].mxu0
        %v3812 = vadd.f32 %v3652, %v3811
        %v3813 = vpop.f32.mrb[0].mxu0
        %3814 = vmatprep.mubr.f32.mxu0 0.0
        %3815 = vmatmul.mubr.f32.gmra.mrb[0].mxu0 %v3682
        %v3816 = vpop.f32.mrb[0].mxu0
        %v3817 = vadd.f32 %v3652, %v3816
        %v3818 = vpop.f32.mrb[0].mxu0
        %3819 = vmatprep.mubr.f32.mxu0 0.0
        %3820 = vmatmul.mubr.f32.gmra.mrb[0].mxu0 %v3685
        %v3821 = vpop.f32.mrb[0].mxu0
        %v3822 = vadd.f32 %v3652, %v3821
        %v3823 = vpop.f32.mrb[0].mxu0
        %3824 = vmatprep.mubr.f32.mxu0 0.0
        %3825 = vmatmul.mubr.f32.gmra.mrb[0].mxu0 %v3688
        %v3826 = vpop.f32.mrb[0].mxu0
        %v3827 = vadd.f32 %v3652, %v3826
        %v3828 = vpop.f32.mrb[0].mxu0
        %3829 = vmatprep.mubr.f32.mxu0 0.0
        %3830 = vmatmul.mubr.f32.gmra.mrb[0].mxu0 %v3691
        %v3831 = vpop.f32.mrb[0].mxu0
        %v3832 = vadd.f32 %v3652, %v3831
        %v3833 = vpop.f32.mrb[0].mxu0
        %3834 = vmatprep.mubr.f32.mxu0 0.0
        %3835 = vmatmul.mubr.f32.gmra.mrb[0].mxu0 %v3694
        %v3836 = vpop.f32.mrb[0].mxu0
        %v3837 = vadd.f32 %v3652, %v3836
        %v3838 = vpop.f32.mrb[0].mxu0
        %3839 = vmatprep.mubr.f32.mxu0 0.0
        %3840 = vmatmul.mubr.f32.gmra.mrb[0].mxu0 %v3697
        %v3841 = vpop.f32.mrb[0].mxu0
        %v3842 = vadd.f32 %v3652, %v3841
        %v3843 = vpop.f32.mrb[0].mxu0
        %3844 = vmatprep.mubr.f32.mxu0 0.0
        %3845 = vmatmul.mubr.f32.gmra.mrb[0].mxu0 %v3700
        %v3846 = vpop.f32.mrb[0].mxu0
        %v3847 = vadd.f32 %v3652, %v3846
        %v3848 = vpop.f32.mrb[0].mxu0
        %3849 = vdwg.mxu0
        %v3850 = vxor.u32 %v3772, 2147483648
        %v3851 = vxor.u32 %v3777, 2147483648
        %v3852 = vxor.u32 %v3782, 2147483648
        %v3853 = vxor.u32 %v3787, 2147483648
        %v3854 = vxor.u32 %v3792, 2147483648
        %v3855 = vxor.u32 %v3797, 2147483648
        %v3856 = vxor.u32 %v3802, 2147483648
        %v3857 = vxor.u32 %v3807, 2147483648
        %v3858 = vxor.u32 %v3812, 2147483648
        %v3859 = vxor.u32 %v3817, 2147483648
        %v3860 = vxor.u32 %v3822, 2147483648
        %v3861 = vxor.u32 %v3827, 2147483648
        %v3862 = vxor.u32 %v3832, 2147483648
        %v3863 = vxor.u32 %v3837, 2147483648
        %v3864 = vxor.u32 %v3842, 2147483648
        %v3865 = vxor.u32 %v3847, 2147483648
        %v3866 = vmul.f32 %v3850, 1.442695
        %v3867 = vpow.pop %v3866
        %v3868 = vmul.f32 %v3851, 1.442695
        %v3869 = vpow.pop %v3868
        %v3870 = vmul.f32 %v3852, 1.442695
        %v3871 = vpow.pop %v3870
        %v3872 = vmul.f32 %v3853, 1.442695
        %v3873 = vpow.pop %v3872
        %v3874 = vmul.f32 %v3854, 1.442695
        %v3875 = vpow.pop %v3874
        %v3876 = vmul.f32 %v3855, 1.442695
        %v3877 = vpow.pop %v3876
        %v3878 = vmul.f32 %v3856, 1.442695
        %v3879 = vpow.pop %v3878
        %v3880 = vmul.f32 %v3857, 1.442695
        %v3881 = vpow.pop %v3880
        %v3882 = vmul.f32 %v3858, 1.442695
        %v3883 = vpow.pop %v3882
        %v3884 = vmul.f32 %v3859, 1.442695
        %v3885 = vpow.pop %v3884
        %v3886 = vmul.f32 %v3860, 1.442695
        %v3887 = vpow.pop %v3886
        %v3888 = vmul.f32 %v3861, 1.442695
        %v3889 = vpow.pop %v3888
        %v3890 = vmul.f32 %v3862, 1.442695
        %v3891 = vpow.pop %v3890
        %v3892 = vmul.f32 %v3863, 1.442695
        %v3893 = vpow.pop %v3892
        %v3894 = vmul.f32 %v3864, 1.442695
        %v3895 = vpow.pop %v3894
        %v3896 = vmul.f32 %v3865, 1.442695
        %v3897 = vpow.pop %v3896
        %v3898 = vadd.f32 %v3867, 1.0
        %v3899 = vadd.f32 %v3869, 1.0
        %v3900 = vadd.f32 %v3871, 1.0
        %v3901 = vadd.f32 %v3873, 1.0
        %v3902 = vadd.f32 %v3875, 1.0
        %v3903 = vadd.f32 %v3877, 1.0
        %v3904 = vadd.f32 %v3879, 1.0
        %v3905 = vadd.f32 %v3881, 1.0
        %v3906 = vadd.f32 %v3883, 1.0
        %v3907 = vadd.f32 %v3885, 1.0
        %v3908 = vadd.f32 %v3887, 1.0
        %v3909 = vadd.f32 %v3889, 1.0
        %v3910 = vadd.f32 %v3891, 1.0
        %v3911 = vadd.f32 %v3893, 1.0
        %v3912 = vadd.f32 %v3895, 1.0
        %v3913 = vadd.f32 %v3897, 1.0
        %v3914 = vrcp.pop %v3898
        %v3915 = vmul.f32 1.0, %v3914
        %v3916 = vrcp.pop %v3899
        %v3917 = vmul.f32 1.0, %v3916
        %v3918 = vrcp.pop %v3900
        %v3919 = vmul.f32 1.0, %v3918
        %v3920 = vrcp.pop %v3901
        %v3921 = vmul.f32 1.0, %v3920
        %v3922 = vrcp.pop %v3902
        %v3923 = vmul.f32 1.0, %v3922
        %v3924 = vrcp.pop %v3903
        %v3925 = vmul.f32 1.0, %v3924
        %v3926 = vrcp.pop %v3904
        %v3927 = vmul.f32 1.0, %v3926
        %v3928 = vrcp.pop %v3905
        %v3929 = vmul.f32 1.0, %v3928
        %v3930 = vrcp.pop %v3906
        %v3931 = vmul.f32 1.0, %v3930
        %v3932 = vrcp.pop %v3907
        %v3933 = vmul.f32 1.0, %v3932
        %v3934 = vrcp.pop %v3908
        %v3935 = vmul.f32 1.0, %v3934
        %v3936 = vrcp.pop %v3909
        %v3937 = vmul.f32 1.0, %v3936
        %v3938 = vrcp.pop %v3910
        %v3939 = vmul.f32 1.0, %v3938
        %v3940 = vrcp.pop %v3911
        %v3941 = vmul.f32 1.0, %v3940
        %v3942 = vrcp.pop %v3912
        %v3943 = vmul.f32 1.0, %v3942
        %v3944 = vrcp.pop %v3913
        %v3945 = vmul.f32 1.0, %v3944
        %v3946 = vld [vmem:[%s648] sm:$0xff]
        %v3947 = vld [vmem:[%s648 + $0x8] sm:$0xff]
        %v3948 = vld [vmem:[%s648 + $0x10] sm:$0xff]
        %v3949 = vld [vmem:[%s648 + $0x18] sm:$0xff]
        %v3950 = vld [vmem:[%s648 + $0x20] sm:$0xff]
        %v3951 = vld [vmem:[%s648 + $0x28] sm:$0xff]
        %v3952 = vld [vmem:[%s648 + $0x30] sm:$0xff]
        %v3953 = vld [vmem:[%s648 + $0x38] sm:$0xff]
        %v3954 = vld [vmem:[%s648 + $0x40] sm:$0xff]
        %v3955 = vld [vmem:[%s648 + $0x48] sm:$0xff]
        %v3956 = vld [vmem:[%s648 + $0x50] sm:$0xff]
        %v3957 = vld [vmem:[%s648 + $0x58] sm:$0xff]
        %v3958 = vld [vmem:[%s648 + $0x60] sm:$0xff]
        %v3959 = vld [vmem:[%s648 + $0x68] sm:$0xff]
        %v3960 = vld [vmem:[%s648 + $0x70] sm:$0xff]
        %v3961 = vld [vmem:[%s648 + $0x78] sm:$0xff]
        %v3962 = vmul.f32 %v3946, %v3915
        %v3963 = vmul.f32 %v3947, %v3917
        %v3964 = vmul.f32 %v3948, %v3919
        %v3965 = vmul.f32 %v3949, %v3921
        %v3966 = vmul.f32 %v3950, %v3923
        %v3967 = vmul.f32 %v3951, %v3925
        %v3968 = vmul.f32 %v3952, %v3927
        %v3969 = vmul.f32 %v3953, %v3929
        %v3970 = vmul.f32 %v3954, %v3931
        %v3971 = vmul.f32 %v3955, %v3933
        %v3972 = vmul.f32 %v3956, %v3935
        %v3973 = vmul.f32 %v3957, %v3937
        %v3974 = vmul.f32 %v3958, %v3939
        %v3975 = vmul.f32 %v3959, %v3941
        %v3976 = vmul.f32 %v3960, %v3943
        %v3977 = vmul.f32 %v3961, %v3945
        %v3978 = vld [vmem:[%s657] sm:$0xff]
        %v3979 = vld [vmem:[%s657 + $0x8] sm:$0xff]
        %v3980 = vld [vmem:[%s657 + $0x10] sm:$0xff]
        %v3981 = vld [vmem:[%s657 + $0x18] sm:$0xff]
        %v3982 = vld [vmem:[%s657 + $0x20] sm:$0xff]
        %v3983 = vld [vmem:[%s657 + $0x28] sm:$0xff]
        %v3984 = vld [vmem:[%s657 + $0x30] sm:$0xff]
        %v3985 = vld [vmem:[%s657 + $0x38] sm:$0xff]
        %v3986 = vld [vmem:[%s657 + $0x40] sm:$0xff]
        %v3987 = vld [vmem:[%s657 + $0x48] sm:$0xff]
        %v3988 = vld [vmem:[%s657 + $0x50] sm:$0xff]
        %v3989 = vld [vmem:[%s657 + $0x58] sm:$0xff]
        %v3990 = vld [vmem:[%s657 + $0x60] sm:$0xff]
        %v3991 = vld [vmem:[%s657 + $0x68] sm:$0xff]
        %v3992 = vld [vmem:[%s657 + $0x70] sm:$0xff]
        %v3993 = vld [vmem:[%s657 + $0x78] sm:$0xff]
        %v3994 = vadd.f32 %v3962, %v3978
        %v3995 = vadd.f32 %v3963, %v3979
        %v3996 = vadd.f32 %v3964, %v3980
        %v3997 = vadd.f32 %v3965, %v3981
        %v3998 = vadd.f32 %v3966, %v3982
        %v3999 = vadd.f32 %v3967, %v3983
        %v4000 = vadd.f32 %v3968, %v3984
        %v4001 = vadd.f32 %v3969, %v3985
        %v4002 = vadd.f32 %v3970, %v3986
        %v4003 = vadd.f32 %v3971, %v3987
        %v4004 = vadd.f32 %v3972, %v3988
        %v4005 = vadd.f32 %v3973, %v3989
        %v4006 = vadd.f32 %v3974, %v3990
        %v4007 = vadd.f32 %v3975, %v3991
        %v4008 = vadd.f32 %v3976, %v3992
        %v4009 = vadd.f32 %v3977, %v3993
        %4010 = vst.msk [vmem:[%s751] sm:$0xff] %vm780, %v3994
        %4011 = vst.msk [vmem:[%s751 + $0x8] sm:$0xff] %vm780, %v3995
        %4012 = vst.msk [vmem:[%s751 + $0x10] sm:$0xff] %vm780, %v3996
        %4013 = vst.msk [vmem:[%s751 + $0x18] sm:$0xff] %vm780, %v3997
        %4014 = vst.msk [vmem:[%s751 + $0x20] sm:$0xff] %vm780, %v3998
        %4015 = vst.msk [vmem:[%s751 + $0x28] sm:$0xff] %vm780, %v3999
        %4016 = vst.msk [vmem:[%s751 + $0x30] sm:$0xff] %vm780, %v4000
        %4017 = vst.msk [vmem:[%s751 + $0x38] sm:$0xff] %vm780, %v4001
        %4018 = vst.msk [vmem:[%s751 + $0x40] sm:$0xff] %vm780, %v4002
        %4019 = vst.msk [vmem:[%s751 + $0x48] sm:$0xff] %vm780, %v4003
        %4020 = vst.msk [vmem:[%s751 + $0x50] sm:$0xff] %vm780, %v4004
        %4021 = vst.msk [vmem:[%s751 + $0x58] sm:$0xff] %vm780, %v4005
        %4022 = vst.msk [vmem:[%s751 + $0x60] sm:$0xff] %vm780, %v4006
        %4023 = vst.msk [vmem:[%s751 + $0x68] sm:$0xff] %vm780, %v4007
        %4024 = vst.msk [vmem:[%s751 + $0x70] sm:$0xff] %vm780, %v4008
        %4025 = vst.msk [vmem:[%s751 + $0x78] sm:$0xff] %vm780, %v4009
        %s4026 = sand.u32 %s370, 1
        %s4027 = scalar_lea.sflag [#allocation5], %s4026
        %s4028 = sand.u32 %s370, 1
        %s4029 = smul.addr %s4028, 128
        %s4030 = scalar_lea.vmem [#allocation24], %s4029
        // Predicated region
        $region125: #{simplified_attention.11} parent=71 // pred_check
          %p4031 = pneg %p380
        $region126: #{simplified_attention.11} parent=71 // pred_check_branch
          %4033 = sbr.rel (%p4031) target = $region128
        $region127: #{simplified_attention.11} parent=71 // pred_region
          %s4034 = smul.u32 8, %s45
          %s4036 = ssub.s32 2048, 2048
          %4037 = vsyncadd %s4027, %s4036
          %s4038 = smul.addr %s4034, 2
          %s4039 = smul.addr %s44, 32
          %s4040 = sadd.s32 %s4038, %s4039
          %s4041 = smul.addr %s4040, 128
          %s4042 = scalar_lea.hbm %s13, %s4041
          %s4043 = sshll.u32 %s4030, 4
          %s4044 = int_to_ptr.vmem [resolvable:$true] %s4043
          %4049 = dma.vmem_to_hbm [thread:$0]  %s4044, 2048, %s4042, %s4027, 128, 128, 8
        $region128: #{simplified_attention.11} parent=71 // pred_fallthru
          _
      $region72: #{simplified_attention.11} parent=5 // pred_fallthru
        _
      %p4050 = scmp.le.s32.totalorder 2, %s35
      // Predicated region
      $region129: #{simplified_attention.11} parent=5 // pred_check
        %p4051 = pneg %p4050
      $region130: #{simplified_attention.11} parent=5 // pred_check_branch
        %4053 = sbr.rel (%p4051) target = $region132
      $region131: #{simplified_attention.11} parent=5 // pred_region
        %s4054 = ssub.s32 %s35, 2
        // Predicated region
        $region133: #{simplified_attention.11} parent=131 // pred_check
          %p4055 = pneg %p386
        $region134: #{simplified_attention.11} parent=131 // pred_check_branch
          %4057 = sbr.rel (%p4055) target = $region136
        $region135: #{simplified_attention.11} parent=131 // pred_region
          %s4058 = sand.u32 %s371, 1
          %s4059 = scalar_lea.sflag [#allocation5], %s4058
          %s4060 = sand.u32 %s371, 1
          %s4061 = smul.addr %s4060, 128
          %s4062 = scalar_lea.vmem [#allocation24], %s4061
          %4063 = dma.done %s4059, 2048
        $region136: #{simplified_attention.11} parent=131 // pred_fallthru
          _
      $region132: #{simplified_attention.11} parent=5 // pred_fallthru
        _
    $region6: #{simplified_attention.11} parent=1 // loop_footer
      %s39 = sadd.s32 1, %s35
    $region7: #{simplified_attention.11} parent=1 // loop_footer_branch
      %34 = sbr.rel target = $region3
    $region8: #{simplified_attention.11} parent=1 // loop_exit
      _
    %4064 = vsyncpa [#allocation4], 1
    %s4065 = scalar_lea.sflag [#allocation4], 1
    %4066 = vsyncpa %s4065, 1
    %4067 = vsyncpa [#allocation7], 1
    %s4068 = scalar_lea.sflag [#allocation7], 1
    %4069 = vsyncpa %s4068, 1
    %4070 = vsyncpa [#allocation10], 1
    %s4071 = scalar_lea.sflag [#allocation10], 1
    %4072 = vsyncpa %s4071, 1
    %4073 = vsyncpa [#allocation13], 1
    %4074 = vsyncpa [#allocation16], 1
    %4075 = vsyncpa [#allocation19], 1
    %4076 = vsyncpa [#allocation22], 1
    %4077 = vsyncpa [#allocation5], 1
    %s4078 = scalar_lea.sflag [#allocation5], 1
    %4079 = vsyncpa %s4078, 1

</llo_original>
